<compile_context>
chip_gen: v6e
topology: v6e:2x2x1
jax: 0.10.0
libtpu: 0.0.40
codegen_flags: <defaults>
</compile_context>

<pallas_src>
import jax
import jax.numpy as jnp
import numpy as np
from jax.experimental import pallas as pl
from jax.experimental.pallas import tpu as pltpu

EPS = 0.8  # nn.BatchNorm2d(channels, 0.8): 0.8 is eps (positional), not momentum


def _residual_block_kernel(x_ref, w1_ref, b1_ref, g1_ref, be1_ref,
                           w2_ref, b2_ref, g2_ref, be2_ref, a_ref,
                           out_ref, patch_sc):
    N, H, W, C = x_ref.shape
    M = N * H * W
    K = 9 * C

    # hoisted halo zero strips (bf16, matches patch_sc dtype)
    zrow = jnp.zeros((N, 1, W, C), jnp.bfloat16)
    zcol = jnp.zeros((N, H, 1, C), jnp.bfloat16)

    def fill_patches(src):
        """im2col for a 3x3 / stride-1 / pad-1 conv.

        src: (N, H, W, C) f32 activation. Fills the (N, H, W, 9*C) bf16 patch
        scratch tap by tap. Out-of-image taps are zeroed by writing only the
        one-pixel halo strips (no full-buffer clear, no padded copy).
        """
        src16 = src.astype(jnp.bfloat16)
        for kh in range(3):
            for kw in range(3):
                dh, dw = kh - 1, kw - 1
                t = kh * 3 + kw
                c0, c1 = t * C, (t + 1) * C
                oh0, oh1 = max(0, -dh), H - max(0, dh)
                ow0, ow1 = max(0, -dw), W - max(0, dw)
                if dh != 0:
                    zh = 0 if dh < 0 else H - 1
                    patch_sc[:, zh:zh + 1, :, c0:c1] = zrow
                if dw != 0:
                    zw = 0 if dw < 0 else W - 1
                    patch_sc[:, :, zw:zw + 1, c0:c1] = zcol
                patch_sc[:, oh0:oh1, ow0:ow1, c0:c1] = (
                    src16[:, oh0 + dh:oh1 + dh, ow0 + dw:ow1 + dw, :])

    def conv3x3(w_ref, b_ref):
        # single fused matmul per conv: (M, 9C) x (9C, C), bf16 in / f32 acc
        p = patch_sc[...].reshape(M, K)
        y = jnp.dot(p, w_ref[...], preferred_element_type=jnp.float32)
        return y + b_ref[...]            # (1, C) bias broadcast, one VPU add

    def batchnorm(y, g_ref, be_ref):
        # training-mode BN: biased batch stats per channel (reduce over N*H*W)
        mean = jnp.mean(y, axis=0, keepdims=True)
        var = jnp.mean(jnp.square(y - mean), axis=0, keepdims=True)
        return (y - mean) * jax.lax.rsqrt(var + EPS) * g_ref[...] + be_ref[...]

    x = x_ref[...]                       # (N, H, W, C) f32, loaded once

    # conv1 -> bn1 -> prelu
    fill_patches(x)
    y = batchnorm(conv3x3(w1_ref, b1_ref), g1_ref, be1_ref)
    a = a_ref[0]                         # PReLU shared slope (SMEM scalar)
    y = jnp.where(y > 0.0, y, a * y)

    # conv2 -> bn2  (patch scratch reused; no padded intermediate buffer)
    fill_patches(y.reshape(N, H, W, C))
    y2 = batchnorm(conv3x3(w2_ref, b2_ref), g2_ref, be2_ref)

    # residual add (exact f32 x)
    out_ref[...] = (x.reshape(M, C) + y2).reshape(N, H, W, C)


def residual_block(x_nchw, params):
    x = jnp.transpose(x_nchw, (0, 2, 3, 1)).astype(jnp.float32)  # NCHW -> NHWC
    N, H, W, C = x.shape

    def conv_w(w):
        # PyTorch (Cout, Cin, 3, 3) -> (9*Cin, Cout) with (kh, kw, cin) rows,
        # cast to bf16 for the MXU (accumulation stays f32 in-kernel).
        return jnp.transpose(w, (2, 3, 1, 0)).reshape(9 * C, C).astype(jnp.bfloat16)

    row = lambda v: v.reshape(1, C).astype(jnp.float32)

    vmem = pl.BlockSpec(memory_space=pltpu.MemorySpace.VMEM)
    smem = pl.BlockSpec(memory_space=pltpu.MemorySpace.SMEM)

    out_nhwc = pl.pallas_call(
        _residual_block_kernel,
        out_shape=jax.ShapeDtypeStruct((N, H, W, C), jnp.float32),
        in_specs=[vmem] * 9 + [smem],
        out_specs=vmem,
        scratch_shapes=[pltpu.VMEM((N, H, W, 9 * C), jnp.bfloat16)],
    )(x,
      conv_w(params["w1"]), row(params["b1"]), row(params["g1"]), row(params["be1"]),
      conv_w(params["w2"]), row(params["b2"]), row(params["g2"]), row(params["be2"]),
      params["prelu_a"])
    return jnp.transpose(out_nhwc, (0, 3, 1, 2))  # back to NCHW


def residual_block_ref(x, p):
    """Pure-JAX reference matching PyTorch training-mode forward (f32)."""
    def conv(x, w, b):
        y = jax.lax.conv_general_dilated(
            x, w, (1, 1), ((1, 1), (1, 1)),
            dimension_numbers=("NCHW", "OIHW", "NCHW"))
        return y + b.reshape(1, -1, 1, 1)

    def bn(y, g, be):
        mean = jnp.mean(y, axis=(0, 2, 3), keepdims=True)
        var = jnp.mean((y - mean) ** 2, axis=(0, 2, 3), keepdims=True)
        return ((y - mean) * jax.lax.rsqrt(var + EPS)
                * g.reshape(1, -1, 1, 1) + be.reshape(1, -1, 1, 1))

    r = bn(conv(x, p["w1"], p["b1"]), p["g1"], p["be1"])
    a = p["prelu_a"][0]
    r = jnp.where(r > 0.0, r, a * r)
    r = bn(conv(r, p["w2"], p["b2"]), p["g2"], p["be2"])
    return x + r


if __name__ == "__main__":
    key = jax.random.PRNGKey(0)
    N, C, H, W = 2, 8, 16, 16
    kx, kw1, kb1, kw2, kb2 = jax.random.split(key, 5)

    x = jax.random.normal(kx, (N, C, H, W), jnp.float32)
    fan_in = C * 3 * 3
    params = dict(
        w1=jax.random.normal(kw1, (C, C, 3, 3), jnp.float32) / np.sqrt(fan_in),
        b1=0.1 * jax.random.normal(kb1, (C,), jnp.float32),
        g1=jnp.ones((C,), jnp.float32),    # BatchNorm default init
        be1=jnp.zeros((C,), jnp.float32),
        w2=jax.random.normal(kw2, (C, C, 3, 3), jnp.float32) / np.sqrt(fan_in),
        b2=0.1 * jax.random.normal(kb2, (C,), jnp.float32),
        g2=jnp.ones((C,), jnp.float32),
        be2=jnp.zeros((C,), jnp.float32),
        prelu_a=jnp.full((1,), 0.25, jnp.float32),  # PReLU default init
    )

    out = jax.block_until_ready(residual_block(x, params))
    ref = jax.block_until_ready(residual_block_ref(x, params))
    # bf16 MXU operands (f32 accumulation) vs the pure-f32 reference => ~1e-2
    # level agreement; BN's large eps (0.8) keeps it comfortably within 3e-2.
    np.testing.assert_allclose(np.asarray(out), np.asarray(ref), rtol=3e-2, atol=3e-2)
    print("KERNEL_OK")
</pallas_src>

<mosaic_0001>
module attributes {stable_mosaic.version = 11 : i64} {
  func.func @_residual_block_kernel(%arg0: memref<2x16x16x8xf32, #tpu.memory_space<vmem>>, %arg1: memref<72x8xbf16, #tpu.memory_space<vmem>>, %arg2: memref<1x8xf32, #tpu.memory_space<vmem>>, %arg3: memref<1x8xf32, #tpu.memory_space<vmem>>, %arg4: memref<1x8xf32, #tpu.memory_space<vmem>>, %arg5: memref<72x8xbf16, #tpu.memory_space<vmem>>, %arg6: memref<1x8xf32, #tpu.memory_space<vmem>>, %arg7: memref<1x8xf32, #tpu.memory_space<vmem>>, %arg8: memref<1x8xf32, #tpu.memory_space<vmem>>, %arg9: memref<1xf32, #tpu.memory_space<smem>>, %arg10: memref<2x16x16x8xf32, #tpu.memory_space<vmem>>, %arg11: memref<2x16x16x72xbf16, #tpu.memory_space<vmem>>) attributes {dimension_semantics = [], scalar_prefetch = 0 : i64, scratch_operands = 1 : i64, tpu.core_type = #tpu.core_type<tc>} {
    %cst = arith.constant 0.000000e+00 : bf16
    %0 = vector.broadcast %cst : bf16 to vector<2x1x16x8xbf16>
    %cst_0 = arith.constant 0.000000e+00 : bf16
    %1 = vector.broadcast %cst_0 : bf16 to vector<2x16x1x8xbf16>
    %c0 = arith.constant 0 : index
    %c0_1 = arith.constant 0 : index
    %c0_2 = arith.constant 0 : index
    %c0_3 = arith.constant 0 : index
    %2 = vector.load %arg0[%c0, %c0_1, %c0_2, %c0_3] : memref<2x16x16x8xf32, #tpu.memory_space<vmem>>, vector<2x16x16x8xf32>
    %3 = arith.truncf %2 : vector<2x16x16x8xf32> to vector<2x16x16x8xbf16>
    %c0_4 = arith.constant 0 : index
    %c0_5 = arith.constant 0 : index
    %c0_6 = arith.constant 0 : index
    %c0_7 = arith.constant 0 : index
    %4 = vector.load %arg11[%c0_4, %c0_5, %c0_6, %c0_7] : memref<2x16x16x72xbf16, #tpu.memory_space<vmem>>, vector<2x1x16x8xbf16>
    tpu.vector_store %arg11[%c0_4, %c0_5, %c0_6, %c0_7], %0 {strides = array<i32>} : memref<2x16x16x72xbf16, #tpu.memory_space<vmem>>, vector<2x1x16x8xbf16>,
    %c0_8 = arith.constant 0 : index
    %c0_9 = arith.constant 0 : index
    %c0_10 = arith.constant 0 : index
    %c0_11 = arith.constant 0 : index
    %5 = vector.load %arg11[%c0_8, %c0_9, %c0_10, %c0_11] : memref<2x16x16x72xbf16, #tpu.memory_space<vmem>>, vector<2x16x1x8xbf16>
    tpu.vector_store %arg11[%c0_8, %c0_9, %c0_10, %c0_11], %1 {strides = array<i32>} : memref<2x16x16x72xbf16, #tpu.memory_space<vmem>>, vector<2x16x1x8xbf16>,
    %6 = vector.extract_strided_slice %3 {offsets = [0, 0, 0, 0], sizes = [2, 15, 15, 8], strides = [1, 1, 1, 1]} : vector<2x16x16x8xbf16> to vector<2x15x15x8xbf16>
    %c0_12 = arith.constant 0 : index
    %c1 = arith.constant 1 : index
    %c1_13 = arith.constant 1 : index
    %c0_14 = arith.constant 0 : index
    %7 = vector.load %arg11[%c0_12, %c1, %c1_13, %c0_14] : memref<2x16x16x72xbf16, #tpu.memory_space<vmem>>, vector<2x15x15x8xbf16>
    tpu.vector_store %arg11[%c0_12, %c1, %c1_13, %c0_14], %6 {strides = array<i32>} : memref<2x16x16x72xbf16, #tpu.memory_space<vmem>>, vector<2x15x15x8xbf16>,
    %c0_15 = arith.constant 0 : index
    %c0_16 = arith.constant 0 : index
    %c0_17 = arith.constant 0 : index
    %c8 = arith.constant 8 : index
    %8 = vector.load %arg11[%c0_15, %c0_16, %c0_17, %c8] : memref<2x16x16x72xbf16, #tpu.memory_space<vmem>>, vector<2x1x16x8xbf16>
    tpu.vector_store %arg11[%c0_15, %c0_16, %c0_17, %c8], %0 {strides = array<i32>} : memref<2x16x16x72xbf16, #tpu.memory_space<vmem>>, vector<2x1x16x8xbf16>,
    %9 = vector.extract_strided_slice %3 {offsets = [0, 0, 0, 0], sizes = [2, 15, 16, 8], strides = [1, 1, 1, 1]} : vector<2x16x16x8xbf16> to vector<2x15x16x8xbf16>
    %c0_18 = arith.constant 0 : index
    %c1_19 = arith.constant 1 : index
    %c0_20 = arith.constant 0 : index
    %c8_21 = arith.constant 8 : index
    %10 = vector.load %arg11[%c0_18, %c1_19, %c0_20, %c8_21] : memref<2x16x16x72xbf16, #tpu.memory_space<vmem>>, vector<2x15x16x8xbf16>
    tpu.vector_store %arg11[%c0_18, %c1_19, %c0_20, %c8_21], %9 {strides = array<i32>} : memref<2x16x16x72xbf16, #tpu.memory_space<vmem>>, vector<2x15x16x8xbf16>,
    %c0_22 = arith.constant 0 : index
    %c0_23 = arith.constant 0 : index
    %c0_24 = arith.constant 0 : index
    %c16 = arith.constant 16 : index
    %11 = vector.load %arg11[%c0_22, %c0_23, %c0_24, %c16] : memref<2x16x16x72xbf16, #tpu.memory_space<vmem>>, vector<2x1x16x8xbf16>
    tpu.vector_store %arg11[%c0_22, %c0_23, %c0_24, %c16], %0 {strides = array<i32>} : memref<2x16x16x72xbf16, #tpu.memory_space<vmem>>, vector<2x1x16x8xbf16>,
    %c0_25 = arith.constant 0 : index
    %c0_26 = arith.constant 0 : index
    %c15 = arith.constant 15 : index
    %c16_27 = arith.constant 16 : index
    %12 = vector.load %arg11[%c0_25, %c0_26, %c15, %c16_27] : memref<2x16x16x72xbf16, #tpu.memory_space<vmem>>, vector<2x16x1x8xbf16>
    tpu.vector_store %arg11[%c0_25, %c0_26, %c15, %c16_27], %1 {strides = array<i32>} : memref<2x16x16x72xbf16, #tpu.memory_space<vmem>>, vector<2x16x1x8xbf16>,
    %13 = vector.extract_strided_slice %3 {offsets = [0, 0, 1, 0], sizes = [2, 15, 15, 8], strides = [1, 1, 1, 1]} : vector<2x16x16x8xbf16> to vector<2x15x15x8xbf16>
    %c0_28 = arith.constant 0 : index
    %c1_29 = arith.constant 1 : index
    %c0_30 = arith.constant 0 : index
    %c16_31 = arith.constant 16 : index
    %14 = vector.load %arg11[%c0_28, %c1_29, %c0_30, %c16_31] : memref<2x16x16x72xbf16, #tpu.memory_space<vmem>>, vector<2x15x15x8xbf16>
    tpu.vector_store %arg11[%c0_28, %c1_29, %c0_30, %c16_31], %13 {strides = array<i32>} : memref<2x16x16x72xbf16, #tpu.memory_space<vmem>>, vector<2x15x15x8xbf16>,
    %c0_32 = arith.constant 0 : index
    %c0_33 = arith.constant 0 : index
    %c0_34 = arith.constant 0 : index
    %c24 = arith.constant 24 : index
    %15 = vector.load %arg11[%c0_32, %c0_33, %c0_34, %c24] : memref<2x16x16x72xbf16, #tpu.memory_space<vmem>>, vector<2x16x1x8xbf16>
    tpu.vector_store %arg11[%c0_32, %c0_33, %c0_34, %c24], %1 {strides = array<i32>} : memref<2x16x16x72xbf16, #tpu.memory_space<vmem>>, vector<2x16x1x8xbf16>,
    %16 = vector.extract_strided_slice %3 {offsets = [0, 0, 0, 0], sizes = [2, 16, 15, 8], strides = [1, 1, 1, 1]} : vector<2x16x16x8xbf16> to vector<2x16x15x8xbf16>
    %c0_35 = arith.constant 0 : index
    %c0_36 = arith.constant 0 : index
    %c1_37 = arith.constant 1 : index
    %c24_38 = arith.constant 24 : index
    %17 = vector.load %arg11[%c0_35, %c0_36, %c1_37, %c24_38] : memref<2x16x16x72xbf16, #tpu.memory_space<vmem>>, vector<2x16x15x8xbf16>
    tpu.vector_store %arg11[%c0_35, %c0_36, %c1_37, %c24_38], %16 {strides = array<i32>} : memref<2x16x16x72xbf16, #tpu.memory_space<vmem>>, vector<2x16x15x8xbf16>,
    %c0_39 = arith.constant 0 : index
    %c0_40 = arith.constant 0 : index
    %c0_41 = arith.constant 0 : index
    %c32 = arith.constant 32 : index
    %18 = vector.load %arg11[%c0_39, %c0_40, %c0_41, %c32] : memref<2x16x16x72xbf16, #tpu.memory_space<vmem>>, vector<2x16x16x8xbf16>
    tpu.vector_store %arg11[%c0_39, %c0_40, %c0_41, %c32], %3 {strides = array<i32>} : memref<2x16x16x72xbf16, #tpu.memory_space<vmem>>, vector<2x16x16x8xbf16>,
    %c0_42 = arith.constant 0 : index
    %c0_43 = arith.constant 0 : index
    %c15_44 = arith.constant 15 : index
    %c40 = arith.constant 40 : index
    %19 = vector.load %arg11[%c0_42, %c0_43, %c15_44, %c40] : memref<2x16x16x72xbf16, #tpu.memory_space<vmem>>, vector<2x16x1x8xbf16>
    tpu.vector_store %arg11[%c0_42, %c0_43, %c15_44, %c40], %1 {strides = array<i32>} : memref<2x16x16x72xbf16, #tpu.memory_space<vmem>>, vector<2x16x1x8xbf16>,
    %20 = vector.extract_strided_slice %3 {offsets = [0, 0, 1, 0], sizes = [2, 16, 15, 8], strides = [1, 1, 1, 1]} : vector<2x16x16x8xbf16> to vector<2x16x15x8xbf16>
    %c0_45 = arith.constant 0 : index
    %c0_46 = arith.constant 0 : index
    %c0_47 = arith.constant 0 : index
    %c40_48 = arith.constant 40 : index
    %21 = vector.load %arg11[%c0_45, %c0_46, %c0_47, %c40_48] : memref<2x16x16x72xbf16, #tpu.memory_space<vmem>>, vector<2x16x15x8xbf16>
    tpu.vector_store %arg11[%c0_45, %c0_46, %c0_47, %c40_48], %20 {strides = array<i32>} : memref<2x16x16x72xbf16, #tpu.memory_space<vmem>>, vector<2x16x15x8xbf16>,
    %c0_49 = arith.constant 0 : index
    %c15_50 = arith.constant 15 : index
    %c0_51 = arith.constant 0 : index
    %c48 = arith.constant 48 : index
    %22 = vector.load %arg11[%c0_49, %c15_50, %c0_51, %c48] : memref<2x16x16x72xbf16, #tpu.memory_space<vmem>>, vector<2x1x16x8xbf16>
    tpu.vector_store %arg11[%c0_49, %c15_50, %c0_51, %c48], %0 {strides = array<i32>} : memref<2x16x16x72xbf16, #tpu.memory_space<vmem>>, vector<2x1x16x8xbf16>,
    %c0_52 = arith.constant 0 : index
    %c0_53 = arith.constant 0 : index
    %c0_54 = arith.constant 0 : index
    %c48_55 = arith.constant 48 : index
    %23 = vector.load %arg11[%c0_52, %c0_53, %c0_54, %c48_55] : memref<2x16x16x72xbf16, #tpu.memory_space<vmem>>, vector<2x16x1x8xbf16>
    tpu.vector_store %arg11[%c0_52, %c0_53, %c0_54, %c48_55], %1 {strides = array<i32>} : memref<2x16x16x72xbf16, #tpu.memory_space<vmem>>, vector<2x16x1x8xbf16>,
    %24 = vector.extract_strided_slice %3 {offsets = [0, 1, 0, 0], sizes = [2, 15, 15, 8], strides = [1, 1, 1, 1]} : vector<2x16x16x8xbf16> to vector<2x15x15x8xbf16>
    %c0_56 = arith.constant 0 : index
    %c0_57 = arith.constant 0 : index
    %c1_58 = arith.constant 1 : index
    %c48_59 = arith.constant 48 : index
    %25 = vector.load %arg11[%c0_56, %c0_57, %c1_58, %c48_59] : memref<2x16x16x72xbf16, #tpu.memory_space<vmem>>, vector<2x15x15x8xbf16>
    tpu.vector_store %arg11[%c0_56, %c0_57, %c1_58, %c48_59], %24 {strides = array<i32>} : memref<2x16x16x72xbf16, #tpu.memory_space<vmem>>, vector<2x15x15x8xbf16>,
    %c0_60 = arith.constant 0 : index
    %c15_61 = arith.constant 15 : index
    %c0_62 = arith.constant 0 : index
    %c56 = arith.constant 56 : index
    %26 = vector.load %arg11[%c0_60, %c15_61, %c0_62, %c56] : memref<2x16x16x72xbf16, #tpu.memory_space<vmem>>, vector<2x1x16x8xbf16>
    tpu.vector_store %arg11[%c0_60, %c15_61, %c0_62, %c56], %0 {strides = array<i32>} : memref<2x16x16x72xbf16, #tpu.memory_space<vmem>>, vector<2x1x16x8xbf16>,
    %27 = vector.extract_strided_slice %3 {offsets = [0, 1, 0, 0], sizes = [2, 15, 16, 8], strides = [1, 1, 1, 1]} : vector<2x16x16x8xbf16> to vector<2x15x16x8xbf16>
    %c0_63 = arith.constant 0 : index
    %c0_64 = arith.constant 0 : index
    %c0_65 = arith.constant 0 : index
    %c56_66 = arith.constant 56 : index
    %28 = vector.load %arg11[%c0_63, %c0_64, %c0_65, %c56_66] : memref<2x16x16x72xbf16, #tpu.memory_space<vmem>>, vector<2x15x16x8xbf16>
    tpu.vector_store %arg11[%c0_63, %c0_64, %c0_65, %c56_66], %27 {strides = array<i32>} : memref<2x16x16x72xbf16, #tpu.memory_space<vmem>>, vector<2x15x16x8xbf16>,
    %c0_67 = arith.constant 0 : index
    %c15_68 = arith.constant 15 : index
    %c0_69 = arith.constant 0 : index
    %c64 = arith.constant 64 : index
    %29 = vector.load %arg11[%c0_67, %c15_68, %c0_69, %c64] : memref<2x16x16x72xbf16, #tpu.memory_space<vmem>>, vector<2x1x16x8xbf16>
    tpu.vector_store %arg11[%c0_67, %c15_68, %c0_69, %c64], %0 {strides = array<i32>} : memref<2x16x16x72xbf16, #tpu.memory_space<vmem>>, vector<2x1x16x8xbf16>,
    %c0_70 = arith.constant 0 : index
    %c0_71 = arith.constant 0 : index
    %c15_72 = arith.constant 15 : index
    %c64_73 = arith.constant 64 : index
    %30 = vector.load %arg11[%c0_70, %c0_71, %c15_72, %c64_73] : memref<2x16x16x72xbf16, #tpu.memory_space<vmem>>, vector<2x16x1x8xbf16>
    tpu.vector_store %arg11[%c0_70, %c0_71, %c15_72, %c64_73], %1 {strides = array<i32>} : memref<2x16x16x72xbf16, #tpu.memory_space<vmem>>, vector<2x16x1x8xbf16>,
    %31 = vector.extract_strided_slice %3 {offsets = [0, 1, 1, 0], sizes = [2, 15, 15, 8], strides = [1, 1, 1, 1]} : vector<2x16x16x8xbf16> to vector<2x15x15x8xbf16>
    %c0_74 = arith.constant 0 : index
    %c0_75 = arith.constant 0 : index
    %c0_76 = arith.constant 0 : index
    %c64_77 = arith.constant 64 : index
    %32 = vector.load %arg11[%c0_74, %c0_75, %c0_76, %c64_77] : memref<2x16x16x72xbf16, #tpu.memory_space<vmem>>, vector<2x15x15x8xbf16>
    tpu.vector_store %arg11[%c0_74, %c0_75, %c0_76, %c64_77], %31 {strides = array<i32>} : memref<2x16x16x72xbf16, #tpu.memory_space<vmem>>, vector<2x15x15x8xbf16>,
    %c0_78 = arith.constant 0 : index
    %c0_79 = arith.constant 0 : index
    %c0_80 = arith.constant 0 : index
    %c0_81 = arith.constant 0 : index
    %33 = vector.load %arg11[%c0_78, %c0_79, %c0_80, %c0_81] : memref<2x16x16x72xbf16, #tpu.memory_space<vmem>>, vector<2x16x16x72xbf16>
    %34 = vector.shape_cast %33 : vector<2x16x16x72xbf16> to vector<512x72xbf16>
    %c0_82 = arith.constant 0 : index
    %c0_83 = arith.constant 0 : index
    %35 = vector.load %arg1[%c0_82, %c0_83] : memref<72x8xbf16, #tpu.memory_space<vmem>>, vector<72x8xbf16>
    %cst_84 = arith.constant dense<0.000000e+00> : vector<512x8xf32>
    %36 = tpu.matmul %34, %35, %cst_84 {dimension_numbers = #tpu.dot_dimension_numbers<[1], [0], [0], [1], [0, 0, 1, 1], [], []>} : vector<512x72xbf16>, vector<72x8xbf16>, vector<512x8xf32> -> vector<512x8xf32>
    %c0_85 = arith.constant 0 : index
    %c0_86 = arith.constant 0 : index
    %37 = vector.load %arg2[%c0_85, %c0_86] : memref<1x8xf32, #tpu.memory_space<vmem>>, vector<1x8xf32>
    %38 = vector.broadcast %37 : vector<1x8xf32> to vector<512x8xf32>
    %39 = arith.addf %36, %38 : vector<512x8xf32>
    %cst_87 = arith.constant dense<0.000000e+00> : vector<8xf32>
    %40 = vector.multi_reduction <add>, %39, %cst_87 [0] : vector<512x8xf32> to vector<8xf32>
    %41 = vector.shape_cast %40 : vector<8xf32> to vector<1x8xf32>
    %cst_88 = arith.constant 5.120000e+02 : f32
    %42 = vector.broadcast %cst_88 : f32 to vector<1x8xf32>
    %43 = arith.divf %41, %42 : vector<1x8xf32>
    %44 = vector.broadcast %43 : vector<1x8xf32> to vector<512x8xf32>
    %45 = arith.subf %39, %44 : vector<512x8xf32>
    %46 = arith.mulf %45, %45 : vector<512x8xf32>
    %cst_89 = arith.constant dense<0.000000e+00> : vector<8xf32>
    %47 = vector.multi_reduction <add>, %46, %cst_89 [0] : vector<512x8xf32> to vector<8xf32>
    %48 = vector.shape_cast %47 : vector<8xf32> to vector<1x8xf32>
    %cst_90 = arith.constant 5.120000e+02 : f32
    %49 = vector.broadcast %cst_90 : f32 to vector<1x8xf32>
    %50 = arith.divf %48, %49 : vector<1x8xf32>
    %51 = vector.broadcast %43 : vector<1x8xf32> to vector<512x8xf32>
    %52 = arith.subf %39, %51 : vector<512x8xf32>
    %cst_91 = arith.constant 8.000000e-01 : f32
    %53 = vector.broadcast %cst_91 : f32 to vector<1x8xf32>
    %54 = arith.addf %50, %53 : vector<1x8xf32>
    %55 = math.rsqrt %54 : vector<1x8xf32>
    %56 = vector.broadcast %55 : vector<1x8xf32> to vector<512x8xf32>
    %57 = arith.mulf %52, %56 : vector<512x8xf32>
    %c0_92 = arith.constant 0 : index
    %c0_93 = arith.constant 0 : index
    %58 = vector.load %arg3[%c0_92, %c0_93] : memref<1x8xf32, #tpu.memory_space<vmem>>, vector<1x8xf32>
    %59 = vector.broadcast %58 : vector<1x8xf32> to vector<512x8xf32>
    %60 = arith.mulf %57, %59 : vector<512x8xf32>
    %c0_94 = arith.constant 0 : index
    %c0_95 = arith.constant 0 : index
    %61 = vector.load %arg4[%c0_94, %c0_95] : memref<1x8xf32, #tpu.memory_space<vmem>>, vector<1x8xf32>
    %62 = vector.broadcast %61 : vector<1x8xf32> to vector<512x8xf32>
    %63 = arith.addf %60, %62 : vector<512x8xf32>
    %c0_96 = arith.constant 0 : index
    %64 = memref.load %arg9[%c0_96] : memref<1xf32, #tpu.memory_space<smem>>
    %cst_97 = arith.constant 0.000000e+00 : f32
    %65 = vector.broadcast %cst_97 : f32 to vector<512x8xf32>
    %66 = arith.cmpf ogt, %63, %65 : vector<512x8xf32>
    %67 = vector.broadcast %64 : f32 to vector<512x8xf32>
    %68 = arith.mulf %67, %63 : vector<512x8xf32>
    %69 = arith.select %66, %63, %68 : vector<512x8xi1>, vector<512x8xf32>
    %70 = vector.shape_cast %69 : vector<512x8xf32> to vector<2x16x16x8xf32>
    %71 = arith.truncf %70 : vector<2x16x16x8xf32> to vector<2x16x16x8xbf16>
    %c0_98 = arith.constant 0 : index
    %c0_99 = arith.constant 0 : index
    %c0_100 = arith.constant 0 : index
    %c0_101 = arith.constant 0 : index
    %72 = vector.load %arg11[%c0_98, %c0_99, %c0_100, %c0_101] : memref<2x16x16x72xbf16, #tpu.memory_space<vmem>>, vector<2x1x16x8xbf16>
    tpu.vector_store %arg11[%c0_98, %c0_99, %c0_100, %c0_101], %0 {strides = array<i32>} : memref<2x16x16x72xbf16, #tpu.memory_space<vmem>>, vector<2x1x16x8xbf16>,
    %c0_102 = arith.constant 0 : index
    %c0_103 = arith.constant 0 : index
    %c0_104 = arith.constant 0 : index
    %c0_105 = arith.constant 0 : index
    %73 = vector.load %arg11[%c0_102, %c0_103, %c0_104, %c0_105] : memref<2x16x16x72xbf16, #tpu.memory_space<vmem>>, vector<2x16x1x8xbf16>
    tpu.vector_store %arg11[%c0_102, %c0_103, %c0_104, %c0_105], %1 {strides = array<i32>} : memref<2x16x16x72xbf16, #tpu.memory_space<vmem>>, vector<2x16x1x8xbf16>,
    %74 = vector.extract_strided_slice %71 {offsets = [0, 0, 0, 0], sizes = [2, 15, 15, 8], strides = [1, 1, 1, 1]} : vector<2x16x16x8xbf16> to vector<2x15x15x8xbf16>
    %c0_106 = arith.constant 0 : index
    %c1_107 = arith.constant 1 : index
    %c1_108 = arith.constant 1 : index
    %c0_109 = arith.constant 0 : index
    %75 = vector.load %arg11[%c0_106, %c1_107, %c1_108, %c0_109] : memref<2x16x16x72xbf16, #tpu.memory_space<vmem>>, vector<2x15x15x8xbf16>
    tpu.vector_store %arg11[%c0_106, %c1_107, %c1_108, %c0_109], %74 {strides = array<i32>} : memref<2x16x16x72xbf16, #tpu.memory_space<vmem>>, vector<2x15x15x8xbf16>,
    %c0_110 = arith.constant 0 : index
    %c0_111 = arith.constant 0 : index
    %c0_112 = arith.constant 0 : index
    %c8_113 = arith.constant 8 : index
    %76 = vector.load %arg11[%c0_110, %c0_111, %c0_112, %c8_113] : memref<2x16x16x72xbf16, #tpu.memory_space<vmem>>, vector<2x1x16x8xbf16>
    tpu.vector_store %arg11[%c0_110, %c0_111, %c0_112, %c8_113], %0 {strides = array<i32>} : memref<2x16x16x72xbf16, #tpu.memory_space<vmem>>, vector<2x1x16x8xbf16>,
    %77 = vector.extract_strided_slice %71 {offsets = [0, 0, 0, 0], sizes = [2, 15, 16, 8], strides = [1, 1, 1, 1]} : vector<2x16x16x8xbf16> to vector<2x15x16x8xbf16>
    %c0_114 = arith.constant 0 : index
    %c1_115 = arith.constant 1 : index
    %c0_116 = arith.constant 0 : index
    %c8_117 = arith.constant 8 : index
    %78 = vector.load %arg11[%c0_114, %c1_115, %c0_116, %c8_117] : memref<2x16x16x72xbf16, #tpu.memory_space<vmem>>, vector<2x15x16x8xbf16>
    tpu.vector_store %arg11[%c0_114, %c1_115, %c0_116, %c8_117], %77 {strides = array<i32>} : memref<2x16x16x72xbf16, #tpu.memory_space<vmem>>, vector<2x15x16x8xbf16>,
    %c0_118 = arith.constant 0 : index
    %c0_119 = arith.constant 0 : index
    %c0_120 = arith.constant 0 : index
    %c16_121 = arith.constant 16 : index
    %79 = vector.load %arg11[%c0_118, %c0_119, %c0_120, %c16_121] : memref<2x16x16x72xbf16, #tpu.memory_space<vmem>>, vector<2x1x16x8xbf16>
    tpu.vector_store %arg11[%c0_118, %c0_119, %c0_120, %c16_121], %0 {strides = array<i32>} : memref<2x16x16x72xbf16, #tpu.memory_space<vmem>>, vector<2x1x16x8xbf16>,
    %c0_122 = arith.constant 0 : index
    %c0_123 = arith.constant 0 : index
    %c15_124 = arith.constant 15 : index
    %c16_125 = arith.constant 16 : index
    %80 = vector.load %arg11[%c0_122, %c0_123, %c15_124, %c16_125] : memref<2x16x16x72xbf16, #tpu.memory_space<vmem>>, vector<2x16x1x8xbf16>
    tpu.vector_store %arg11[%c0_122, %c0_123, %c15_124, %c16_125], %1 {strides = array<i32>} : memref<2x16x16x72xbf16, #tpu.memory_space<vmem>>, vector<2x16x1x8xbf16>,
    %81 = vector.extract_strided_slice %71 {offsets = [0, 0, 1, 0], sizes = [2, 15, 15, 8], strides = [1, 1, 1, 1]} : vector<2x16x16x8xbf16> to vector<2x15x15x8xbf16>
    %c0_126 = arith.constant 0 : index
    %c1_127 = arith.constant 1 : index
    %c0_128 = arith.constant 0 : index
    %c16_129 = arith.constant 16 : index
    %82 = vector.load %arg11[%c0_126, %c1_127, %c0_128, %c16_129] : memref<2x16x16x72xbf16, #tpu.memory_space<vmem>>, vector<2x15x15x8xbf16>
    tpu.vector_store %arg11[%c0_126, %c1_127, %c0_128, %c16_129], %81 {strides = array<i32>} : memref<2x16x16x72xbf16, #tpu.memory_space<vmem>>, vector<2x15x15x8xbf16>,
    %c0_130 = arith.constant 0 : index
    %c0_131 = arith.constant 0 : index
    %c0_132 = arith.constant 0 : index
    %c24_133 = arith.constant 24 : index
    %83 = vector.load %arg11[%c0_130, %c0_131, %c0_132, %c24_133] : memref<2x16x16x72xbf16, #tpu.memory_space<vmem>>, vector<2x16x1x8xbf16>
    tpu.vector_store %arg11[%c0_130, %c0_131, %c0_132, %c24_133], %1 {strides = array<i32>} : memref<2x16x16x72xbf16, #tpu.memory_space<vmem>>, vector<2x16x1x8xbf16>,
    %84 = vector.extract_strided_slice %71 {offsets = [0, 0, 0, 0], sizes = [2, 16, 15, 8], strides = [1, 1, 1, 1]} : vector<2x16x16x8xbf16> to vector<2x16x15x8xbf16>
    %c0_134 = arith.constant 0 : index
    %c0_135 = arith.constant 0 : index
    %c1_136 = arith.constant 1 : index
    %c24_137 = arith.constant 24 : index
    %85 = vector.load %arg11[%c0_134, %c0_135, %c1_136, %c24_137] : memref<2x16x16x72xbf16, #tpu.memory_space<vmem>>, vector<2x16x15x8xbf16>
    tpu.vector_store %arg11[%c0_134, %c0_135, %c1_136, %c24_137], %84 {strides = array<i32>} : memref<2x16x16x72xbf16, #tpu.memory_space<vmem>>, vector<2x16x15x8xbf16>,
    %c0_138 = arith.constant 0 : index
    %c0_139 = arith.constant 0 : index
    %c0_140 = arith.constant 0 : index
    %c32_141 = arith.constant 32 : index
    %86 = vector.load %arg11[%c0_138, %c0_139, %c0_140, %c32_141] : memref<2x16x16x72xbf16, #tpu.memory_space<vmem>>, vector<2x16x16x8xbf16>
    tpu.vector_store %arg11[%c0_138, %c0_139, %c0_140, %c32_141], %71 {strides = array<i32>} : memref<2x16x16x72xbf16, #tpu.memory_space<vmem>>, vector<2x16x16x8xbf16>,
    %c0_142 = arith.constant 0 : index
    %c0_143 = arith.constant 0 : index
    %c15_144 = arith.constant 15 : index
    %c40_145 = arith.constant 40 : index
    %87 = vector.load %arg11[%c0_142, %c0_143, %c15_144, %c40_145] : memref<2x16x16x72xbf16, #tpu.memory_space<vmem>>, vector<2x16x1x8xbf16>
    tpu.vector_store %arg11[%c0_142, %c0_143, %c15_144, %c40_145], %1 {strides = array<i32>} : memref<2x16x16x72xbf16, #tpu.memory_space<vmem>>, vector<2x16x1x8xbf16>,
    %88 = vector.extract_strided_slice %71 {offsets = [0, 0, 1, 0], sizes = [2, 16, 15, 8], strides = [1, 1, 1, 1]} : vector<2x16x16x8xbf16> to vector<2x16x15x8xbf16>
    %c0_146 = arith.constant 0 : index
    %c0_147 = arith.constant 0 : index
    %c0_148 = arith.constant 0 : index
    %c40_149 = arith.constant 40 : index
    %89 = vector.load %arg11[%c0_146, %c0_147, %c0_148, %c40_149] : memref<2x16x16x72xbf16, #tpu.memory_space<vmem>>, vector<2x16x15x8xbf16>
    tpu.vector_store %arg11[%c0_146, %c0_147, %c0_148, %c40_149], %88 {strides = array<i32>} : memref<2x16x16x72xbf16, #tpu.memory_space<vmem>>, vector<2x16x15x8xbf16>,
    %c0_150 = arith.constant 0 : index
    %c15_151 = arith.constant 15 : index
    %c0_152 = arith.constant 0 : index
    %c48_153 = arith.constant 48 : index
    %90 = vector.load %arg11[%c0_150, %c15_151, %c0_152, %c48_153] : memref<2x16x16x72xbf16, #tpu.memory_space<vmem>>, vector<2x1x16x8xbf16>
    tpu.vector_store %arg11[%c0_150, %c15_151, %c0_152, %c48_153], %0 {strides = array<i32>} : memref<2x16x16x72xbf16, #tpu.memory_space<vmem>>, vector<2x1x16x8xbf16>,
    %c0_154 = arith.constant 0 : index
    %c0_155 = arith.constant 0 : index
    %c0_156 = arith.constant 0 : index
    %c48_157 = arith.constant 48 : index
    %91 = vector.load %arg11[%c0_154, %c0_155, %c0_156, %c48_157] : memref<2x16x16x72xbf16, #tpu.memory_space<vmem>>, vector<2x16x1x8xbf16>
    tpu.vector_store %arg11[%c0_154, %c0_155, %c0_156, %c48_157], %1 {strides = array<i32>} : memref<2x16x16x72xbf16, #tpu.memory_space<vmem>>, vector<2x16x1x8xbf16>,
    %92 = vector.extract_strided_slice %71 {offsets = [0, 1, 0, 0], sizes = [2, 15, 15, 8], strides = [1, 1, 1, 1]} : vector<2x16x16x8xbf16> to vector<2x15x15x8xbf16>
    %c0_158 = arith.constant 0 : index
    %c0_159 = arith.constant 0 : index
    %c1_160 = arith.constant 1 : index
    %c48_161 = arith.constant 48 : index
    %93 = vector.load %arg11[%c0_158, %c0_159, %c1_160, %c48_161] : memref<2x16x16x72xbf16, #tpu.memory_space<vmem>>, vector<2x15x15x8xbf16>
    tpu.vector_store %arg11[%c0_158, %c0_159, %c1_160, %c48_161], %92 {strides = array<i32>} : memref<2x16x16x72xbf16, #tpu.memory_space<vmem>>, vector<2x15x15x8xbf16>,
    %c0_162 = arith.constant 0 : index
    %c15_163 = arith.constant 15 : index
    %c0_164 = arith.constant 0 : index
    %c56_165 = arith.constant 56 : index
    %94 = vector.load %arg11[%c0_162, %c15_163, %c0_164, %c56_165] : memref<2x16x16x72xbf16, #tpu.memory_space<vmem>>, vector<2x1x16x8xbf16>
    tpu.vector_store %arg11[%c0_162, %c15_163, %c0_164, %c56_165], %0 {strides = array<i32>} : memref<2x16x16x72xbf16, #tpu.memory_space<vmem>>, vector<2x1x16x8xbf16>,
    %95 = vector.extract_strided_slice %71 {offsets = [0, 1, 0, 0], sizes = [2, 15, 16, 8], strides = [1, 1, 1, 1]} : vector<2x16x16x8xbf16> to vector<2x15x16x8xbf16>
    %c0_166 = arith.constant 0 : index
    %c0_167 = arith.constant 0 : index
    %c0_168 = arith.constant 0 : index
    %c56_169 = arith.constant 56 : index
    %96 = vector.load %arg11[%c0_166, %c0_167, %c0_168, %c56_169] : memref<2x16x16x72xbf16, #tpu.memory_space<vmem>>, vector<2x15x16x8xbf16>
    tpu.vector_store %arg11[%c0_166, %c0_167, %c0_168, %c56_169], %95 {strides = array<i32>} : memref<2x16x16x72xbf16, #tpu.memory_space<vmem>>, vector<2x15x16x8xbf16>,
    %c0_170 = arith.constant 0 : index
    %c15_171 = arith.constant 15 : index
    %c0_172 = arith.constant 0 : index
    %c64_173 = arith.constant 64 : index
    %97 = vector.load %arg11[%c0_170, %c15_171, %c0_172, %c64_173] : memref<2x16x16x72xbf16, #tpu.memory_space<vmem>>, vector<2x1x16x8xbf16>
    tpu.vector_store %arg11[%c0_170, %c15_171, %c0_172, %c64_173], %0 {strides = array<i32>} : memref<2x16x16x72xbf16, #tpu.memory_space<vmem>>, vector<2x1x16x8xbf16>,
    %c0_174 = arith.constant 0 : index
    %c0_175 = arith.constant 0 : index
    %c15_176 = arith.constant 15 : index
    %c64_177 = arith.constant 64 : index
    %98 = vector.load %arg11[%c0_174, %c0_175, %c15_176, %c64_177] : memref<2x16x16x72xbf16, #tpu.memory_space<vmem>>, vector<2x16x1x8xbf16>
    tpu.vector_store %arg11[%c0_174, %c0_175, %c15_176, %c64_177], %1 {strides = array<i32>} : memref<2x16x16x72xbf16, #tpu.memory_space<vmem>>, vector<2x16x1x8xbf16>,
    %99 = vector.extract_strided_slice %71 {offsets = [0, 1, 1, 0], sizes = [2, 15, 15, 8], strides = [1, 1, 1, 1]} : vector<2x16x16x8xbf16> to vector<2x15x15x8xbf16>
    %c0_178 = arith.constant 0 : index
    %c0_179 = arith.constant 0 : index
    %c0_180 = arith.constant 0 : index
    %c64_181 = arith.constant 64 : index
    %100 = vector.load %arg11[%c0_178, %c0_179, %c0_180, %c64_181] : memref<2x16x16x72xbf16, #tpu.memory_space<vmem>>, vector<2x15x15x8xbf16>
    tpu.vector_store %arg11[%c0_178, %c0_179, %c0_180, %c64_181], %99 {strides = array<i32>} : memref<2x16x16x72xbf16, #tpu.memory_space<vmem>>, vector<2x15x15x8xbf16>,
    %c0_182 = arith.constant 0 : index
    %c0_183 = arith.constant 0 : index
    %c0_184 = arith.constant 0 : index
    %c0_185 = arith.constant 0 : index
    %101 = vector.load %arg11[%c0_182, %c0_183, %c0_184, %c0_185] : memref<2x16x16x72xbf16, #tpu.memory_space<vmem>>, vector<2x16x16x72xbf16>
    %102 = vector.shape_cast %101 : vector<2x16x16x72xbf16> to vector<512x72xbf16>
    %c0_186 = arith.constant 0 : index
    %c0_187 = arith.constant 0 : index
    %103 = vector.load %arg5[%c0_186, %c0_187] : memref<72x8xbf16, #tpu.memory_space<vmem>>, vector<72x8xbf16>
    %cst_188 = arith.constant dense<0.000000e+00> : vector<512x8xf32>
    %104 = tpu.matmul %102, %103, %cst_188 {dimension_numbers = #tpu.dot_dimension_numbers<[1], [0], [0], [1], [0, 0, 1, 1], [], []>} : vector<512x72xbf16>, vector<72x8xbf16>, vector<512x8xf32> -> vector<512x8xf32>
    %c0_189 = arith.constant 0 : index
    %c0_190 = arith.constant 0 : index
    %105 = vector.load %arg6[%c0_189, %c0_190] : memref<1x8xf32, #tpu.memory_space<vmem>>, vector<1x8xf32>
    %106 = vector.broadcast %105 : vector<1x8xf32> to vector<512x8xf32>
    %107 = arith.addf %104, %106 : vector<512x8xf32>
    %cst_191 = arith.constant dense<0.000000e+00> : vector<8xf32>
    %108 = vector.multi_reduction <add>, %107, %cst_191 [0] : vector<512x8xf32> to vector<8xf32>
    %109 = vector.shape_cast %108 : vector<8xf32> to vector<1x8xf32>
    %cst_192 = arith.constant 5.120000e+02 : f32
    %110 = vector.broadcast %cst_192 : f32 to vector<1x8xf32>
    %111 = arith.divf %109, %110 : vector<1x8xf32>
    %112 = vector.broadcast %111 : vector<1x8xf32> to vector<512x8xf32>
    %113 = arith.subf %107, %112 : vector<512x8xf32>
    %114 = arith.mulf %113, %113 : vector<512x8xf32>
    %cst_193 = arith.constant dense<0.000000e+00> : vector<8xf32>
    %115 = vector.multi_reduction <add>, %114, %cst_193 [0] : vector<512x8xf32> to vector<8xf32>
    %116 = vector.shape_cast %115 : vector<8xf32> to vector<1x8xf32>
    %cst_194 = arith.constant 5.120000e+02 : f32
    %117 = vector.broadcast %cst_194 : f32 to vector<1x8xf32>
    %118 = arith.divf %116, %117 : vector<1x8xf32>
    %119 = vector.broadcast %111 : vector<1x8xf32> to vector<512x8xf32>
    %120 = arith.subf %107, %119 : vector<512x8xf32>
    %cst_195 = arith.constant 8.000000e-01 : f32
    %121 = vector.broadcast %cst_195 : f32 to vector<1x8xf32>
    %122 = arith.addf %118, %121 : vector<1x8xf32>
    %123 = math.rsqrt %122 : vector<1x8xf32>
    %124 = vector.broadcast %123 : vector<1x8xf32> to vector<512x8xf32>
    %125 = arith.mulf %120, %124 : vector<512x8xf32>
    %c0_196 = arith.constant 0 : index
    %c0_197 = arith.constant 0 : index
    %126 = vector.load %arg7[%c0_196, %c0_197] : memref<1x8xf32, #tpu.memory_space<vmem>>, vector<1x8xf32>
    %127 = vector.broadcast %126 : vector<1x8xf32> to vector<512x8xf32>
    %128 = arith.mulf %125, %127 : vector<512x8xf32>
    %c0_198 = arith.constant 0 : index
    %c0_199 = arith.constant 0 : index
    %129 = vector.load %arg8[%c0_198, %c0_199] : memref<1x8xf32, #tpu.memory_space<vmem>>, vector<1x8xf32>
    %130 = vector.broadcast %129 : vector<1x8xf32> to vector<512x8xf32>
    %131 = arith.addf %128, %130 : vector<512x8xf32>
    %132 = vector.shape_cast %2 : vector<2x16x16x8xf32> to vector<512x8xf32>
    %133 = arith.addf %132, %131 : vector<512x8xf32>
    %134 = vector.shape_cast %133 : vector<512x8xf32> to vector<2x16x16x8xf32>
    %c0_200 = arith.constant 0 : index
    %c0_201 = arith.constant 0 : index
    %c0_202 = arith.constant 0 : index
    %c0_203 = arith.constant 0 : index
    %135 = vector.load %arg10[%c0_200, %c0_201, %c0_202, %c0_203] : memref<2x16x16x8xf32, #tpu.memory_space<vmem>>, vector<2x16x16x8xf32>
    tpu.vector_store %arg10[%c0_200, %c0_201, %c0_202, %c0_203], %134 {strides = array<i32>} : memref<2x16x16x8xf32, #tpu.memory_space<vmem>>, vector<2x16x16x8xf32>,
    return
  }
}

</mosaic_0001>

<llo_original>
// kernel: tpu_custom_call.1
$region0: #{tpu_custom_call.1}
  #allocation0 [shape = 'u32[]', space=smem, size = 0x4, offset = 0x4, fixed_abs, tag = 'smem constant byte address 0x4 - core index']
  #allocation1 [shape = 'u32[144,128]{1,0:T(1,128)}', space=vmem, size = 0x12000, scoped, tag = 'internal scratch']
  #allocation2 [shape = 'bf16[2,16,16,72]{3,2,1,0:T(8,128)(2,1)}', space=vmem, size = 0x20000, scoped, tag = 'scratch operand']
  #allocation3 [shape = 'f32[1]{0:T(128)S(6)}', space=smem, size = 0x200, scoped, tag = 'scoped memory for tpu_custom_call.1']
  %s0 = inlined_call_operand.vmem [shape: f32[2,16,16,8], index: 0, kind: input, shape index: {}]
  %s1 = inlined_call_operand.vmem [shape: bf16[72,8], index: 1, kind: input, shape index: {}]
  %s2 = inlined_call_operand.vmem [shape: f32[1,8], index: 2, kind: input, shape index: {}]
  %s3 = inlined_call_operand.vmem [shape: f32[1,8], index: 3, kind: input, shape index: {}]
  %s4 = inlined_call_operand.vmem [shape: f32[1,8], index: 4, kind: input, shape index: {}]
  %s5 = inlined_call_operand.vmem [shape: bf16[72,8], index: 5, kind: input, shape index: {}]
  %s6 = inlined_call_operand.vmem [shape: f32[1,8], index: 6, kind: input, shape index: {}]
  %s7 = inlined_call_operand.vmem [shape: f32[1,8], index: 7, kind: input, shape index: {}]
  %s8 = inlined_call_operand.vmem [shape: f32[1,8], index: 8, kind: input, shape index: {}]
  %s9 = inlined_call_operand.<no memory space> [shape: f32[1], index: 9, kind: input, shape index: {}]
  %s10 = inlined_call_operand.vmem [shape: f32[2,16,16,8], index: 10, kind: output, shape index: {}]
  %s11 = sld [smem:[#allocation0]]
  $region50: #{tpu_custom_call.1} parent=0
    _
  %s13 = ssub.s32 1, %s11
  %s14 = scalar_select 0, %s13, %s11
  %15 = sst [smem:[#allocation3]] %s9
  // Predicated region
  $region2: #{tpu_custom_call.1} parent=0 // pred_check
    _
  $region3: #{tpu_custom_call.1} parent=0 // pred_check_branch
    %17 = sbr.rel (0) target = $region5
  $region4: #{tpu_custom_call.1} parent=0 // pred_region
    _
  $region5: #{tpu_custom_call.1} parent=0 // pred_fallthru
    _
  // Predicated region
  $region6: #{tpu_custom_call.1} parent=0 // pred_check
    _
  $region7: #{tpu_custom_call.1} parent=0 // pred_check_branch
    %19 = sbr.rel (0) target = $region9
  $region8: #{tpu_custom_call.1} parent=0 // pred_region
    _
  $region9: #{tpu_custom_call.1} parent=0 // pred_fallthru
    _
  // Predicated region
  $region10: #{tpu_custom_call.1} parent=0 // pred_check
    _
  $region11: #{tpu_custom_call.1} parent=0 // pred_check_branch
    %21 = sbr.rel (0) target = $region13
  $region12: #{tpu_custom_call.1} parent=0 // pred_region
    _
  $region13: #{tpu_custom_call.1} parent=0 // pred_fallthru
    _
  // Predicated region
  $region14: #{tpu_custom_call.1} parent=0 // pred_check
    _
  $region15: #{tpu_custom_call.1} parent=0 // pred_check_branch
    %23 = sbr.rel (0) target = $region17
  $region16: #{tpu_custom_call.1} parent=0 // pred_region
    _
  $region17: #{tpu_custom_call.1} parent=0 // pred_fallthru
    _
  // Predicated region
  $region18: #{tpu_custom_call.1} parent=0 // pred_check
    _
  $region19: #{tpu_custom_call.1} parent=0 // pred_check_branch
    %25 = sbr.rel (0) target = $region21
  $region20: #{tpu_custom_call.1} parent=0 // pred_region
    _
  $region21: #{tpu_custom_call.1} parent=0 // pred_fallthru
    _
  // Predicated region
  $region22: #{tpu_custom_call.1} parent=0 // pred_check
    _
  $region23: #{tpu_custom_call.1} parent=0 // pred_check_branch
    %27 = sbr.rel (0) target = $region25
  $region24: #{tpu_custom_call.1} parent=0 // pred_region
    _
  $region25: #{tpu_custom_call.1} parent=0 // pred_fallthru
    _
  // Predicated region
  $region26: #{tpu_custom_call.1} parent=0 // pred_check
    _
  $region27: #{tpu_custom_call.1} parent=0 // pred_check_branch
    %29 = sbr.rel (0) target = $region29
  $region28: #{tpu_custom_call.1} parent=0 // pred_region
    _
  $region29: #{tpu_custom_call.1} parent=0 // pred_fallthru
    _
  // Predicated region
  $region30: #{tpu_custom_call.1} parent=0 // pred_check
    _
  $region31: #{tpu_custom_call.1} parent=0 // pred_check_branch
    %31 = sbr.rel (0) target = $region33
  $region32: #{tpu_custom_call.1} parent=0 // pred_region
    _
  $region33: #{tpu_custom_call.1} parent=0 // pred_fallthru
    _
  // Predicated region
  $region34: #{tpu_custom_call.1} parent=0 // pred_check
    _
  $region35: #{tpu_custom_call.1} parent=0 // pred_check_branch
    %33 = sbr.rel (0) target = $region37
  $region36: #{tpu_custom_call.1} parent=0 // pred_region
    _
  $region37: #{tpu_custom_call.1} parent=0 // pred_fallthru
    _
  // Predicated region
  $region38: #{tpu_custom_call.1} parent=0 // pred_check
    _
  $region39: #{tpu_custom_call.1} parent=0 // pred_check_branch
    %35 = sbr.rel (0) target = $region41
  $region40: #{tpu_custom_call.1} parent=0 // pred_region
    _
  $region41: #{tpu_custom_call.1} parent=0 // pred_fallthru
    _
  %v37 = vld [vmem:[%s0] sm:$0xff]
  %v38 = vld [vmem:[%s0 + $0x8] sm:$0xff]
  %v39 = vld [vmem:[%s0 + $0x10] sm:$0xff]
  %v40 = vld [vmem:[%s0 + $0x18] sm:$0xff]
  %v41 = vld [vmem:[%s0 + $0x20] sm:$0xff]
  %v42 = vld [vmem:[%s0 + $0x28] sm:$0xff]
  %v43 = vld [vmem:[%s0 + $0x30] sm:$0xff]
  %v44 = vld [vmem:[%s0 + $0x38] sm:$0xff]
  %v45 = vld [vmem:[%s0 + $0x40] sm:$0xff]
  %v46 = vld [vmem:[%s0 + $0x48] sm:$0xff]
  %v47 = vld [vmem:[%s0 + $0x50] sm:$0xff]
  %v48 = vld [vmem:[%s0 + $0x58] sm:$0xff]
  %v49 = vld [vmem:[%s0 + $0x60] sm:$0xff]
  %v50 = vld [vmem:[%s0 + $0x68] sm:$0xff]
  %v51 = vld [vmem:[%s0 + $0x70] sm:$0xff]
  %v52 = vld [vmem:[%s0 + $0x78] sm:$0xff]
  %v53 = vld [vmem:[%s0 + $0x80] sm:$0xff]
  %v54 = vld [vmem:[%s0 + $0x88] sm:$0xff]
  %v55 = vld [vmem:[%s0 + $0x90] sm:$0xff]
  %v56 = vld [vmem:[%s0 + $0x98] sm:$0xff]
  %v57 = vld [vmem:[%s0 + $0xa0] sm:$0xff]
  %v58 = vld [vmem:[%s0 + $0xa8] sm:$0xff]
  %v59 = vld [vmem:[%s0 + $0xb0] sm:$0xff]
  %v60 = vld [vmem:[%s0 + $0xb8] sm:$0xff]
  %v61 = vld [vmem:[%s0 + $0xc0] sm:$0xff]
  %v62 = vld [vmem:[%s0 + $0xc8] sm:$0xff]
  %v63 = vld [vmem:[%s0 + $0xd0] sm:$0xff]
  %v64 = vld [vmem:[%s0 + $0xd8] sm:$0xff]
  %v65 = vld [vmem:[%s0 + $0xe0] sm:$0xff]
  %v66 = vld [vmem:[%s0 + $0xe8] sm:$0xff]
  %v67 = vld [vmem:[%s0 + $0xf0] sm:$0xff]
  %v68 = vld [vmem:[%s0 + $0xf8] sm:$0xff]
  %v69 = vld [vmem:[%s0 + $0x100] sm:$0xff]
  %v70 = vld [vmem:[%s0 + $0x108] sm:$0xff]
  %v71 = vld [vmem:[%s0 + $0x110] sm:$0xff]
  %v72 = vld [vmem:[%s0 + $0x118] sm:$0xff]
  %v73 = vld [vmem:[%s0 + $0x120] sm:$0xff]
  %v74 = vld [vmem:[%s0 + $0x128] sm:$0xff]
  %v75 = vld [vmem:[%s0 + $0x130] sm:$0xff]
  %v76 = vld [vmem:[%s0 + $0x138] sm:$0xff]
  %v77 = vld [vmem:[%s0 + $0x140] sm:$0xff]
  %v78 = vld [vmem:[%s0 + $0x148] sm:$0xff]
  %v79 = vld [vmem:[%s0 + $0x150] sm:$0xff]
  %v80 = vld [vmem:[%s0 + $0x158] sm:$0xff]
  %v81 = vld [vmem:[%s0 + $0x160] sm:$0xff]
  %v82 = vld [vmem:[%s0 + $0x168] sm:$0xff]
  %v83 = vld [vmem:[%s0 + $0x170] sm:$0xff]
  %v84 = vld [vmem:[%s0 + $0x178] sm:$0xff]
  %v85 = vld [vmem:[%s0 + $0x180] sm:$0xff]
  %v86 = vld [vmem:[%s0 + $0x188] sm:$0xff]
  %v87 = vld [vmem:[%s0 + $0x190] sm:$0xff]
  %v88 = vld [vmem:[%s0 + $0x198] sm:$0xff]
  %v89 = vld [vmem:[%s0 + $0x1a0] sm:$0xff]
  %v90 = vld [vmem:[%s0 + $0x1a8] sm:$0xff]
  %v91 = vld [vmem:[%s0 + $0x1b0] sm:$0xff]
  %v92 = vld [vmem:[%s0 + $0x1b8] sm:$0xff]
  %v93 = vld [vmem:[%s0 + $0x1c0] sm:$0xff]
  %v94 = vld [vmem:[%s0 + $0x1c8] sm:$0xff]
  %v95 = vld [vmem:[%s0 + $0x1d0] sm:$0xff]
  %v96 = vld [vmem:[%s0 + $0x1d8] sm:$0xff]
  %v97 = vld [vmem:[%s0 + $0x1e0] sm:$0xff]
  %v98 = vld [vmem:[%s0 + $0x1e8] sm:$0xff]
  %v99 = vld [vmem:[%s0 + $0x1f0] sm:$0xff]
  %v100 = vld [vmem:[%s0 + $0x1f8] sm:$0xff]
  %v101 = vpack.c.bf16 %v38, %v37
  %v102 = vpack.c.bf16 %v40, %v39
  %v103 = vpack.c.bf16 %v42, %v41
  %v104 = vpack.c.bf16 %v44, %v43
  %v105 = vpack.c.bf16 %v46, %v45
  %v106 = vpack.c.bf16 %v48, %v47
  %v107 = vpack.c.bf16 %v50, %v49
  %v108 = vpack.c.bf16 %v52, %v51
  %v109 = vpack.c.bf16 %v54, %v53
  %v110 = vpack.c.bf16 %v56, %v55
  %v111 = vpack.c.bf16 %v58, %v57
  %v112 = vpack.c.bf16 %v60, %v59
  %v113 = vpack.c.bf16 %v62, %v61
  %v114 = vpack.c.bf16 %v64, %v63
  %v115 = vpack.c.bf16 %v66, %v65
  %v116 = vpack.c.bf16 %v68, %v67
  %v117 = vpack.c.bf16 %v70, %v69
  %v118 = vpack.c.bf16 %v72, %v71
  %v119 = vpack.c.bf16 %v74, %v73
  %v120 = vpack.c.bf16 %v76, %v75
  %v121 = vpack.c.bf16 %v78, %v77
  %v122 = vpack.c.bf16 %v80, %v79
  %v123 = vpack.c.bf16 %v82, %v81
  %v124 = vpack.c.bf16 %v84, %v83
  %v125 = vpack.c.bf16 %v86, %v85
  %v126 = vpack.c.bf16 %v88, %v87
  %v127 = vpack.c.bf16 %v90, %v89
  %v128 = vpack.c.bf16 %v92, %v91
  %v129 = vpack.c.bf16 %v94, %v93
  %v130 = vpack.c.bf16 %v96, %v95
  %v131 = vpack.c.bf16 %v98, %v97
  %v132 = vpack.c.bf16 %v100, %v99
  %vm133 = vcmask 60416
  %134 = vst.msk [vmem:[#allocation2] sm:$0xf] %vm133, 0
  %135 = vst.msk [vmem:[#allocation2 + $0x4] sm:$0xf] %vm133, 0
  %136 = vst.msk [vmem:[#allocation2 + $0x80] sm:$0xf] %vm133, 0
  %137 = vst.msk [vmem:[#allocation2 + $0x84] sm:$0xf] %vm133, 0
  %vm138 = vcmask 57344
  %vm139 = vsmask.f32 256
  %vm140 = vmand %vm138, %vm139
  %v141 = vld [vmem:[#allocation2] sm:$0x1]
  %v142 = vsel %vm140, 0, %v141
  %143 = vst [vmem:[#allocation2] sm:$0x1] %v142
  %v144 = vld [vmem:[#allocation2 + $0x8] sm:$0x1]
  %v145 = vsel %vm140, 0, %v144
  %146 = vst [vmem:[#allocation2 + $0x8] sm:$0x1] %v145
  %v147 = vld [vmem:[#allocation2 + $0x10] sm:$0x1]
  %v148 = vsel %vm140, 0, %v147
  %149 = vst [vmem:[#allocation2 + $0x10] sm:$0x1] %v148
  %v150 = vld [vmem:[#allocation2 + $0x18] sm:$0x1]
  %v151 = vsel %vm140, 0, %v150
  %152 = vst [vmem:[#allocation2 + $0x18] sm:$0x1] %v151
  %v153 = vld [vmem:[#allocation2 + $0x20] sm:$0x1]
  %v154 = vsel %vm140, 0, %v153
  %155 = vst [vmem:[#allocation2 + $0x20] sm:$0x1] %v154
  %v156 = vld [vmem:[#allocation2 + $0x28] sm:$0x1]
  %v157 = vsel %vm140, 0, %v156
  %158 = vst [vmem:[#allocation2 + $0x28] sm:$0x1] %v157
  %v159 = vld [vmem:[#allocation2 + $0x30] sm:$0x1]
  %v160 = vsel %vm140, 0, %v159
  %161 = vst [vmem:[#allocation2 + $0x30] sm:$0x1] %v160
  %v162 = vld [vmem:[#allocation2 + $0x38] sm:$0x1]
  %v163 = vsel %vm140, 0, %v162
  %164 = vst [vmem:[#allocation2 + $0x38] sm:$0x1] %v163
  %v165 = vld [vmem:[#allocation2 + $0x40] sm:$0x1]
  %v166 = vsel %vm140, 0, %v165
  %167 = vst [vmem:[#allocation2 + $0x40] sm:$0x1] %v166
  %v168 = vld [vmem:[#allocation2 + $0x48] sm:$0x1]
  %v169 = vsel %vm140, 0, %v168
  %170 = vst [vmem:[#allocation2 + $0x48] sm:$0x1] %v169
  %v171 = vld [vmem:[#allocation2 + $0x50] sm:$0x1]
  %v172 = vsel %vm140, 0, %v171
  %173 = vst [vmem:[#allocation2 + $0x50] sm:$0x1] %v172
  %v174 = vld [vmem:[#allocation2 + $0x58] sm:$0x1]
  %v175 = vsel %vm140, 0, %v174
  %176 = vst [vmem:[#allocation2 + $0x58] sm:$0x1] %v175
  %v177 = vld [vmem:[#allocation2 + $0x60] sm:$0x1]
  %v178 = vsel %vm140, 0, %v177
  %179 = vst [vmem:[#allocation2 + $0x60] sm:$0x1] %v178
  %v180 = vld [vmem:[#allocation2 + $0x68] sm:$0x1]
  %v181 = vsel %vm140, 0, %v180
  %182 = vst [vmem:[#allocation2 + $0x68] sm:$0x1] %v181
  %v183 = vld [vmem:[#allocation2 + $0x70] sm:$0x1]
  %v184 = vsel %vm140, 0, %v183
  %185 = vst [vmem:[#allocation2 + $0x70] sm:$0x1] %v184
  %v186 = vld [vmem:[#allocation2 + $0x78] sm:$0x1]
  %v187 = vsel %vm140, 0, %v186
  %188 = vst [vmem:[#allocation2 + $0x78] sm:$0x1] %v187
  %v189 = vld [vmem:[#allocation2 + $0x80] sm:$0x1]
  %v190 = vsel %vm140, 0, %v189
  %191 = vst [vmem:[#allocation2 + $0x80] sm:$0x1] %v190
  %v192 = vld [vmem:[#allocation2 + $0x88] sm:$0x1]
  %v193 = vsel %vm140, 0, %v192
  %194 = vst [vmem:[#allocation2 + $0x88] sm:$0x1] %v193
  %v195 = vld [vmem:[#allocation2 + $0x90] sm:$0x1]
  %v196 = vsel %vm140, 0, %v195
  %197 = vst [vmem:[#allocation2 + $0x90] sm:$0x1] %v196
  %v198 = vld [vmem:[#allocation2 + $0x98] sm:$0x1]
  %v199 = vsel %vm140, 0, %v198
  %200 = vst [vmem:[#allocation2 + $0x98] sm:$0x1] %v199
  %v201 = vld [vmem:[#allocation2 + $0xa0] sm:$0x1]
  %v202 = vsel %vm140, 0, %v201
  %203 = vst [vmem:[#allocation2 + $0xa0] sm:$0x1] %v202
  %v204 = vld [vmem:[#allocation2 + $0xa8] sm:$0x1]
  %v205 = vsel %vm140, 0, %v204
  %206 = vst [vmem:[#allocation2 + $0xa8] sm:$0x1] %v205
  %v207 = vld [vmem:[#allocation2 + $0xb0] sm:$0x1]
  %v208 = vsel %vm140, 0, %v207
  %209 = vst [vmem:[#allocation2 + $0xb0] sm:$0x1] %v208
  %v210 = vld [vmem:[#allocation2 + $0xb8] sm:$0x1]
  %v211 = vsel %vm140, 0, %v210
  %212 = vst [vmem:[#allocation2 + $0xb8] sm:$0x1] %v211
  %v213 = vld [vmem:[#allocation2 + $0xc0] sm:$0x1]
  %v214 = vsel %vm140, 0, %v213
  %215 = vst [vmem:[#allocation2 + $0xc0] sm:$0x1] %v214
  %v216 = vld [vmem:[#allocation2 + $0xc8] sm:$0x1]
  %v217 = vsel %vm140, 0, %v216
  %218 = vst [vmem:[#allocation2 + $0xc8] sm:$0x1] %v217
  %v219 = vld [vmem:[#allocation2 + $0xd0] sm:$0x1]
  %v220 = vsel %vm140, 0, %v219
  %221 = vst [vmem:[#allocation2 + $0xd0] sm:$0x1] %v220
  %v222 = vld [vmem:[#allocation2 + $0xd8] sm:$0x1]
  %v223 = vsel %vm140, 0, %v222
  %224 = vst [vmem:[#allocation2 + $0xd8] sm:$0x1] %v223
  %v225 = vld [vmem:[#allocation2 + $0xe0] sm:$0x1]
  %v226 = vsel %vm140, 0, %v225
  %227 = vst [vmem:[#allocation2 + $0xe0] sm:$0x1] %v226
  %v228 = vld [vmem:[#allocation2 + $0xe8] sm:$0x1]
  %v229 = vsel %vm140, 0, %v228
  %230 = vst [vmem:[#allocation2 + $0xe8] sm:$0x1] %v229
  %v231 = vld [vmem:[#allocation2 + $0xf0] sm:$0x1]
  %v232 = vsel %vm140, 0, %v231
  %233 = vst [vmem:[#allocation2 + $0xf0] sm:$0x1] %v232
  %v234 = vld [vmem:[#allocation2 + $0xf8] sm:$0x1]
  %v235 = vsel %vm140, 0, %v234
  %236 = vst [vmem:[#allocation2 + $0xf8] sm:$0x1] %v235
  %v267 = vunpack.c.l.b16 %v101
  %v268 = vunpack.c.h.b16 %v101
  %v269 = vunpack.c.l.b16 %v102
  %v270 = vunpack.c.h.b16 %v102
  %v271 = vunpack.c.l.b16 %v103
  %v272 = vunpack.c.h.b16 %v103
  %v273 = vunpack.c.l.b16 %v104
  %v274 = vunpack.c.h.b16 %v104
  %v275 = vunpack.c.l.b16 %v105
  %v276 = vunpack.c.h.b16 %v105
  %v277 = vunpack.c.l.b16 %v106
  %v278 = vunpack.c.h.b16 %v106
  %v279 = vunpack.c.l.b16 %v107
  %v280 = vunpack.c.h.b16 %v107
  %v281 = vunpack.c.l.b16 %v108
  %v282 = vunpack.c.h.b16 %v108
  %v283 = vunpack.c.l.b16 %v109
  %v284 = vunpack.c.h.b16 %v109
  %v285 = vunpack.c.l.b16 %v110
  %v286 = vunpack.c.h.b16 %v110
  %v287 = vunpack.c.l.b16 %v111
  %v288 = vunpack.c.h.b16 %v111
  %v289 = vunpack.c.l.b16 %v112
  %v290 = vunpack.c.h.b16 %v112
  %v291 = vunpack.c.l.b16 %v113
  %v292 = vunpack.c.h.b16 %v113
  %v293 = vunpack.c.l.b16 %v114
  %v294 = vunpack.c.h.b16 %v114
  %v295 = vunpack.c.l.b16 %v115
  %v296 = vunpack.c.h.b16 %v115
  %v297 = vunpack.c.l.b16 %v117
  %v298 = vunpack.c.h.b16 %v117
  %v299 = vunpack.c.l.b16 %v118
  %v300 = vunpack.c.h.b16 %v118
  %v301 = vunpack.c.l.b16 %v119
  %v302 = vunpack.c.h.b16 %v119
  %v303 = vunpack.c.l.b16 %v120
  %v304 = vunpack.c.h.b16 %v120
  %v305 = vunpack.c.l.b16 %v121
  %v306 = vunpack.c.h.b16 %v121
  %v307 = vunpack.c.l.b16 %v122
  %v308 = vunpack.c.h.b16 %v122
  %v309 = vunpack.c.l.b16 %v123
  %v310 = vunpack.c.h.b16 %v123
  %v311 = vunpack.c.l.b16 %v124
  %v312 = vunpack.c.h.b16 %v124
  %v313 = vunpack.c.l.b16 %v125
  %v314 = vunpack.c.h.b16 %v125
  %v315 = vunpack.c.l.b16 %v126
  %v316 = vunpack.c.h.b16 %v126
  %v317 = vunpack.c.l.b16 %v127
  %v318 = vunpack.c.h.b16 %v127
  %v319 = vunpack.c.l.b16 %v128
  %v320 = vunpack.c.h.b16 %v128
  %v321 = vunpack.c.l.b16 %v129
  %v322 = vunpack.c.h.b16 %v129
  %v323 = vunpack.c.l.b16 %v130
  %v324 = vunpack.c.h.b16 %v130
  %v325 = vunpack.c.l.b16 %v131
  %v326 = vunpack.c.h.b16 %v131
  %v327 = vpack.c.b16 %v267, %v267
  %v328 = vpack.c.b16 %v268, %v268
  %v329 = vpack.c.b16 %v269, %v269
  %v330 = vpack.c.b16 %v270, %v270
  %v331 = vpack.c.b16 %v271, %v271
  %v332 = vpack.c.b16 %v272, %v272
  %v333 = vpack.c.b16 %v273, %v273
  %v334 = vpack.c.b16 %v274, %v274
  %v335 = vpack.c.b16 %v275, %v275
  %v336 = vpack.c.b16 %v276, %v276
  %v337 = vpack.c.b16 %v277, %v277
  %v338 = vpack.c.b16 %v278, %v278
  %v339 = vpack.c.b16 %v279, %v279
  %v340 = vpack.c.b16 %v280, %v280
  %v341 = vpack.c.b16 %v281, %v281
  %v342 = vpack.c.b16 %v282, %v282
  %v343 = vpack.c.b16 %v283, %v283
  %v344 = vpack.c.b16 %v284, %v284
  %v345 = vpack.c.b16 %v285, %v285
  %v346 = vpack.c.b16 %v286, %v286
  %v347 = vpack.c.b16 %v287, %v287
  %v348 = vpack.c.b16 %v288, %v288
  %v349 = vpack.c.b16 %v289, %v289
  %v350 = vpack.c.b16 %v290, %v290
  %v351 = vpack.c.b16 %v291, %v291
  %v352 = vpack.c.b16 %v292, %v292
  %v353 = vpack.c.b16 %v293, %v293
  %v354 = vpack.c.b16 %v294, %v294
  %v355 = vpack.c.b16 %v295, %v295
  %v356 = vpack.c.b16 %v296, %v296
  %v357 = vpack.c.b16 %v297, %v297
  %v358 = vpack.c.b16 %v298, %v298
  %v359 = vpack.c.b16 %v299, %v299
  %v360 = vpack.c.b16 %v300, %v300
  %v361 = vpack.c.b16 %v301, %v301
  %v362 = vpack.c.b16 %v302, %v302
  %v363 = vpack.c.b16 %v303, %v303
  %v364 = vpack.c.b16 %v304, %v304
  %v365 = vpack.c.b16 %v305, %v305
  %v366 = vpack.c.b16 %v306, %v306
  %v367 = vpack.c.b16 %v307, %v307
  %v368 = vpack.c.b16 %v308, %v308
  %v369 = vpack.c.b16 %v309, %v309
  %v370 = vpack.c.b16 %v310, %v310
  %v371 = vpack.c.b16 %v311, %v311
  %v372 = vpack.c.b16 %v312, %v312
  %v373 = vpack.c.b16 %v313, %v313
  %v374 = vpack.c.b16 %v314, %v314
  %v375 = vpack.c.b16 %v315, %v315
  %v376 = vpack.c.b16 %v316, %v316
  %v377 = vpack.c.b16 %v317, %v317
  %v378 = vpack.c.b16 %v318, %v318
  %v379 = vpack.c.b16 %v319, %v319
  %v380 = vpack.c.b16 %v320, %v320
  %v381 = vpack.c.b16 %v321, %v321
  %v382 = vpack.c.b16 %v322, %v322
  %v383 = vpack.c.b16 %v323, %v323
  %v384 = vpack.c.b16 %v324, %v324
  %v385 = vpack.c.b16 %v325, %v325
  %v386 = vpack.c.b16 %v326, %v326
  %vm387 = vsmask.f32 4368
  %vm388 = vmor %vm139, %vm387
  %v390 = vshrl.u32 %v327, 16
  %v392 = vrot.slane %v390, 7
  %v393 = vshll.u32 %v327, 16
  %v395 = vor.u32 %v392, %v393
  %v396 = vrot.slane %v392, 4
  %v398 = vshrl.u32 %v328, 16
  %v400 = vrot.slane %v398, 7
  %v401 = vshll.u32 %v328, 16
  %v403 = vor.u32 %v400, %v401
  %v404 = vsel %vm388, %v396, %v403
  %v406 = vshrl.u32 %v329, 16
  %v408 = vrot.slane %v406, 7
  %v409 = vshll.u32 %v329, 16
  %v411 = vor.u32 %v408, %v409
  %v412 = vrot.slane %v408, 4
  %v414 = vshrl.u32 %v330, 16
  %v416 = vrot.slane %v414, 7
  %v417 = vshll.u32 %v330, 16
  %v419 = vor.u32 %v416, %v417
  %v420 = vsel %vm388, %v412, %v419
  %v422 = vshrl.u32 %v331, 16
  %v424 = vrot.slane %v422, 7
  %v425 = vshll.u32 %v331, 16
  %v427 = vor.u32 %v424, %v425
  %v428 = vrot.slane %v424, 4
  %v430 = vshrl.u32 %v332, 16
  %v432 = vrot.slane %v430, 7
  %v433 = vshll.u32 %v332, 16
  %v435 = vor.u32 %v432, %v433
  %v436 = vsel %vm388, %v428, %v435
  %v438 = vshrl.u32 %v333, 16
  %v440 = vrot.slane %v438, 7
  %v441 = vshll.u32 %v333, 16
  %v443 = vor.u32 %v440, %v441
  %v444 = vrot.slane %v440, 4
  %v446 = vshrl.u32 %v334, 16
  %v448 = vrot.slane %v446, 7
  %v449 = vshll.u32 %v334, 16
  %v451 = vor.u32 %v448, %v449
  %v452 = vsel %vm388, %v444, %v451
  %v454 = vshrl.u32 %v335, 16
  %v456 = vrot.slane %v454, 7
  %v457 = vshll.u32 %v335, 16
  %v459 = vor.u32 %v456, %v457
  %v460 = vrot.slane %v456, 4
  %v462 = vshrl.u32 %v336, 16
  %v464 = vrot.slane %v462, 7
  %v465 = vshll.u32 %v336, 16
  %v467 = vor.u32 %v464, %v465
  %v468 = vsel %vm388, %v460, %v467
  %v470 = vshrl.u32 %v337, 16
  %v472 = vrot.slane %v470, 7
  %v473 = vshll.u32 %v337, 16
  %v475 = vor.u32 %v472, %v473
  %v476 = vrot.slane %v472, 4
  %v478 = vshrl.u32 %v338, 16
  %v480 = vrot.slane %v478, 7
  %v481 = vshll.u32 %v338, 16
  %v483 = vor.u32 %v480, %v481
  %v484 = vsel %vm388, %v476, %v483
  %v486 = vshrl.u32 %v339, 16
  %v488 = vrot.slane %v486, 7
  %v489 = vshll.u32 %v339, 16
  %v491 = vor.u32 %v488, %v489
  %v492 = vrot.slane %v488, 4
  %v494 = vshrl.u32 %v340, 16
  %v496 = vrot.slane %v494, 7
  %v497 = vshll.u32 %v340, 16
  %v499 = vor.u32 %v496, %v497
  %v500 = vsel %vm388, %v492, %v499
  %v502 = vshrl.u32 %v341, 16
  %v504 = vrot.slane %v502, 7
  %v505 = vshll.u32 %v341, 16
  %v507 = vor.u32 %v504, %v505
  %v508 = vrot.slane %v504, 4
  %v510 = vshrl.u32 %v342, 16
  %v512 = vrot.slane %v510, 7
  %v513 = vshll.u32 %v342, 16
  %v515 = vor.u32 %v512, %v513
  %v516 = vsel %vm388, %v508, %v515
  %v518 = vshrl.u32 %v343, 16
  %v520 = vrot.slane %v518, 7
  %v521 = vshll.u32 %v343, 16
  %v523 = vor.u32 %v520, %v521
  %v524 = vrot.slane %v520, 4
  %v526 = vshrl.u32 %v344, 16
  %v528 = vrot.slane %v526, 7
  %v529 = vshll.u32 %v344, 16
  %v531 = vor.u32 %v528, %v529
  %v532 = vsel %vm388, %v524, %v531
  %v534 = vshrl.u32 %v345, 16
  %v536 = vrot.slane %v534, 7
  %v537 = vshll.u32 %v345, 16
  %v539 = vor.u32 %v536, %v537
  %v540 = vrot.slane %v536, 4
  %v542 = vshrl.u32 %v346, 16
  %v544 = vrot.slane %v542, 7
  %v545 = vshll.u32 %v346, 16
  %v547 = vor.u32 %v544, %v545
  %v548 = vsel %vm388, %v540, %v547
  %v550 = vshrl.u32 %v347, 16
  %v552 = vrot.slane %v550, 7
  %v553 = vshll.u32 %v347, 16
  %v555 = vor.u32 %v552, %v553
  %v556 = vrot.slane %v552, 4
  %v558 = vshrl.u32 %v348, 16
  %v560 = vrot.slane %v558, 7
  %v561 = vshll.u32 %v348, 16
  %v563 = vor.u32 %v560, %v561
  %v564 = vsel %vm388, %v556, %v563
  %v566 = vshrl.u32 %v349, 16
  %v568 = vrot.slane %v566, 7
  %v569 = vshll.u32 %v349, 16
  %v571 = vor.u32 %v568, %v569
  %v572 = vrot.slane %v568, 4
  %v574 = vshrl.u32 %v350, 16
  %v576 = vrot.slane %v574, 7
  %v577 = vshll.u32 %v350, 16
  %v579 = vor.u32 %v576, %v577
  %v580 = vsel %vm388, %v572, %v579
  %v582 = vshrl.u32 %v351, 16
  %v584 = vrot.slane %v582, 7
  %v585 = vshll.u32 %v351, 16
  %v587 = vor.u32 %v584, %v585
  %v588 = vrot.slane %v584, 4
  %v590 = vshrl.u32 %v352, 16
  %v592 = vrot.slane %v590, 7
  %v593 = vshll.u32 %v352, 16
  %v595 = vor.u32 %v592, %v593
  %v596 = vsel %vm388, %v588, %v595
  %v598 = vshrl.u32 %v353, 16
  %v600 = vrot.slane %v598, 7
  %v601 = vshll.u32 %v353, 16
  %v603 = vor.u32 %v600, %v601
  %v604 = vrot.slane %v600, 4
  %v606 = vshrl.u32 %v354, 16
  %v608 = vrot.slane %v606, 7
  %v609 = vshll.u32 %v354, 16
  %v611 = vor.u32 %v608, %v609
  %v612 = vsel %vm388, %v604, %v611
  %v614 = vshrl.u32 %v355, 16
  %v616 = vrot.slane %v614, 7
  %v617 = vshll.u32 %v355, 16
  %v619 = vor.u32 %v616, %v617
  %v620 = vrot.slane %v616, 4
  %v622 = vshrl.u32 %v356, 16
  %v624 = vrot.slane %v622, 7
  %v625 = vshll.u32 %v356, 16
  %v627 = vor.u32 %v624, %v625
  %v628 = vsel %vm388, %v620, %v627
  %v630 = vshrl.u32 %v357, 16
  %v632 = vrot.slane %v630, 7
  %v633 = vshll.u32 %v357, 16
  %v635 = vor.u32 %v632, %v633
  %v636 = vrot.slane %v632, 4
  %v638 = vshrl.u32 %v358, 16
  %v640 = vrot.slane %v638, 7
  %v641 = vshll.u32 %v358, 16
  %v643 = vor.u32 %v640, %v641
  %v644 = vsel %vm388, %v636, %v643
  %v646 = vshrl.u32 %v359, 16
  %v648 = vrot.slane %v646, 7
  %v649 = vshll.u32 %v359, 16
  %v651 = vor.u32 %v648, %v649
  %v652 = vrot.slane %v648, 4
  %v654 = vshrl.u32 %v360, 16
  %v656 = vrot.slane %v654, 7
  %v657 = vshll.u32 %v360, 16
  %v659 = vor.u32 %v656, %v657
  %v660 = vsel %vm388, %v652, %v659
  %v662 = vshrl.u32 %v361, 16
  %v664 = vrot.slane %v662, 7
  %v665 = vshll.u32 %v361, 16
  %v667 = vor.u32 %v664, %v665
  %v668 = vrot.slane %v664, 4
  %v670 = vshrl.u32 %v362, 16
  %v672 = vrot.slane %v670, 7
  %v673 = vshll.u32 %v362, 16
  %v675 = vor.u32 %v672, %v673
  %v676 = vsel %vm388, %v668, %v675
  %v678 = vshrl.u32 %v363, 16
  %v680 = vrot.slane %v678, 7
  %v681 = vshll.u32 %v363, 16
  %v683 = vor.u32 %v680, %v681
  %v684 = vrot.slane %v680, 4
  %v686 = vshrl.u32 %v364, 16
  %v688 = vrot.slane %v686, 7
  %v689 = vshll.u32 %v364, 16
  %v691 = vor.u32 %v688, %v689
  %v692 = vsel %vm388, %v684, %v691
  %v694 = vshrl.u32 %v365, 16
  %v696 = vrot.slane %v694, 7
  %v697 = vshll.u32 %v365, 16
  %v699 = vor.u32 %v696, %v697
  %v700 = vrot.slane %v696, 4
  %v702 = vshrl.u32 %v366, 16
  %v704 = vrot.slane %v702, 7
  %v705 = vshll.u32 %v366, 16
  %v707 = vor.u32 %v704, %v705
  %v708 = vsel %vm388, %v700, %v707
  %v710 = vshrl.u32 %v367, 16
  %v712 = vrot.slane %v710, 7
  %v713 = vshll.u32 %v367, 16
  %v715 = vor.u32 %v712, %v713
  %v716 = vrot.slane %v712, 4
  %v718 = vshrl.u32 %v368, 16
  %v720 = vrot.slane %v718, 7
  %v721 = vshll.u32 %v368, 16
  %v723 = vor.u32 %v720, %v721
  %v724 = vsel %vm388, %v716, %v723
  %v726 = vshrl.u32 %v369, 16
  %v728 = vrot.slane %v726, 7
  %v729 = vshll.u32 %v369, 16
  %v731 = vor.u32 %v728, %v729
  %v732 = vrot.slane %v728, 4
  %v734 = vshrl.u32 %v370, 16
  %v736 = vrot.slane %v734, 7
  %v737 = vshll.u32 %v370, 16
  %v739 = vor.u32 %v736, %v737
  %v740 = vsel %vm388, %v732, %v739
  %v742 = vshrl.u32 %v371, 16
  %v744 = vrot.slane %v742, 7
  %v745 = vshll.u32 %v371, 16
  %v747 = vor.u32 %v744, %v745
  %v748 = vrot.slane %v744, 4
  %v750 = vshrl.u32 %v372, 16
  %v752 = vrot.slane %v750, 7
  %v753 = vshll.u32 %v372, 16
  %v755 = vor.u32 %v752, %v753
  %v756 = vsel %vm388, %v748, %v755
  %v758 = vshrl.u32 %v373, 16
  %v760 = vrot.slane %v758, 7
  %v761 = vshll.u32 %v373, 16
  %v763 = vor.u32 %v760, %v761
  %v764 = vrot.slane %v760, 4
  %v766 = vshrl.u32 %v374, 16
  %v768 = vrot.slane %v766, 7
  %v769 = vshll.u32 %v374, 16
  %v771 = vor.u32 %v768, %v769
  %v772 = vsel %vm388, %v764, %v771
  %v774 = vshrl.u32 %v375, 16
  %v776 = vrot.slane %v774, 7
  %v777 = vshll.u32 %v375, 16
  %v779 = vor.u32 %v776, %v777
  %v780 = vrot.slane %v776, 4
  %v782 = vshrl.u32 %v376, 16
  %v784 = vrot.slane %v782, 7
  %v785 = vshll.u32 %v376, 16
  %v787 = vor.u32 %v784, %v785
  %v788 = vsel %vm388, %v780, %v787
  %v790 = vshrl.u32 %v377, 16
  %v792 = vrot.slane %v790, 7
  %v793 = vshll.u32 %v377, 16
  %v795 = vor.u32 %v792, %v793
  %v796 = vrot.slane %v792, 4
  %v798 = vshrl.u32 %v378, 16
  %v800 = vrot.slane %v798, 7
  %v801 = vshll.u32 %v378, 16
  %v803 = vor.u32 %v800, %v801
  %v804 = vsel %vm388, %v796, %v803
  %v806 = vshrl.u32 %v379, 16
  %v808 = vrot.slane %v806, 7
  %v809 = vshll.u32 %v379, 16
  %v811 = vor.u32 %v808, %v809
  %v812 = vrot.slane %v808, 4
  %v814 = vshrl.u32 %v380, 16
  %v816 = vrot.slane %v814, 7
  %v817 = vshll.u32 %v380, 16
  %v819 = vor.u32 %v816, %v817
  %v820 = vsel %vm388, %v812, %v819
  %v822 = vshrl.u32 %v381, 16
  %v824 = vrot.slane %v822, 7
  %v825 = vshll.u32 %v381, 16
  %v827 = vor.u32 %v824, %v825
  %v828 = vrot.slane %v824, 4
  %v830 = vshrl.u32 %v382, 16
  %v832 = vrot.slane %v830, 7
  %v833 = vshll.u32 %v382, 16
  %v835 = vor.u32 %v832, %v833
  %v836 = vsel %vm388, %v828, %v835
  %v838 = vshrl.u32 %v383, 16
  %v840 = vrot.slane %v838, 7
  %v841 = vshll.u32 %v383, 16
  %v843 = vor.u32 %v840, %v841
  %v844 = vrot.slane %v840, 4
  %v846 = vshrl.u32 %v384, 16
  %v848 = vrot.slane %v846, 7
  %v849 = vshll.u32 %v384, 16
  %v851 = vor.u32 %v848, %v849
  %v852 = vsel %vm388, %v844, %v851
  %v854 = vshrl.u32 %v385, 16
  %v856 = vrot.slane %v854, 7
  %v857 = vshll.u32 %v385, 16
  %v859 = vor.u32 %v856, %v857
  %v860 = vrot.slane %v856, 4
  %v862 = vshrl.u32 %v386, 16
  %v864 = vrot.slane %v862, 7
  %v865 = vshll.u32 %v386, 16
  %v867 = vor.u32 %v864, %v865
  %v868 = vsel %vm388, %v860, %v867
  %s929 = scalar_lea.vmem [#allocation2], 8
  %vm930 = vcmask 60416
  %vm931 = vsmask.f32 7938
  %vm932 = vmand %vm930, %vm931
  %v933 = vld [vmem:[%s929] sm:$0xf]
  %v934 = vsel %vm932, %v395, %v933
  %935 = vst [vmem:[%s929] sm:$0xf] %v934
  %936 = vst.msk [vmem:[%s929 + $0x4] sm:$0xf] %vm133, %v404
  %v937 = vld [vmem:[%s929 + $0x8] sm:$0xf]
  %v938 = vsel %vm932, %v411, %v937
  %939 = vst [vmem:[%s929 + $0x8] sm:$0xf] %v938
  %940 = vst.msk [vmem:[%s929 + $0xc] sm:$0xf] %vm133, %v420
  %v941 = vld [vmem:[%s929 + $0x10] sm:$0xf]
  %v942 = vsel %vm932, %v427, %v941
  %943 = vst [vmem:[%s929 + $0x10] sm:$0xf] %v942
  %944 = vst.msk [vmem:[%s929 + $0x14] sm:$0xf] %vm133, %v436
  %v945 = vld [vmem:[%s929 + $0x18] sm:$0xf]
  %v946 = vsel %vm932, %v443, %v945
  %947 = vst [vmem:[%s929 + $0x18] sm:$0xf] %v946
  %948 = vst.msk [vmem:[%s929 + $0x1c] sm:$0xf] %vm133, %v452
  %v949 = vld [vmem:[%s929 + $0x20] sm:$0xf]
  %v950 = vsel %vm932, %v459, %v949
  %951 = vst [vmem:[%s929 + $0x20] sm:$0xf] %v950
  %952 = vst.msk [vmem:[%s929 + $0x24] sm:$0xf] %vm133, %v468
  %v953 = vld [vmem:[%s929 + $0x28] sm:$0xf]
  %v954 = vsel %vm932, %v475, %v953
  %955 = vst [vmem:[%s929 + $0x28] sm:$0xf] %v954
  %956 = vst.msk [vmem:[%s929 + $0x2c] sm:$0xf] %vm133, %v484
  %v957 = vld [vmem:[%s929 + $0x30] sm:$0xf]
  %v958 = vsel %vm932, %v491, %v957
  %959 = vst [vmem:[%s929 + $0x30] sm:$0xf] %v958
  %960 = vst.msk [vmem:[%s929 + $0x34] sm:$0xf] %vm133, %v500
  %v961 = vld [vmem:[%s929 + $0x38] sm:$0xf]
  %v962 = vsel %vm932, %v507, %v961
  %963 = vst [vmem:[%s929 + $0x38] sm:$0xf] %v962
  %964 = vst.msk [vmem:[%s929 + $0x3c] sm:$0xf] %vm133, %v516
  %v965 = vld [vmem:[%s929 + $0x40] sm:$0xf]
  %v966 = vsel %vm932, %v523, %v965
  %967 = vst [vmem:[%s929 + $0x40] sm:$0xf] %v966
  %968 = vst.msk [vmem:[%s929 + $0x44] sm:$0xf] %vm133, %v532
  %v969 = vld [vmem:[%s929 + $0x48] sm:$0xf]
  %v970 = vsel %vm932, %v539, %v969
  %971 = vst [vmem:[%s929 + $0x48] sm:$0xf] %v970
  %972 = vst.msk [vmem:[%s929 + $0x4c] sm:$0xf] %vm133, %v548
  %v973 = vld [vmem:[%s929 + $0x50] sm:$0xf]
  %v974 = vsel %vm932, %v555, %v973
  %975 = vst [vmem:[%s929 + $0x50] sm:$0xf] %v974
  %976 = vst.msk [vmem:[%s929 + $0x54] sm:$0xf] %vm133, %v564
  %v977 = vld [vmem:[%s929 + $0x58] sm:$0xf]
  %v978 = vsel %vm932, %v571, %v977
  %979 = vst [vmem:[%s929 + $0x58] sm:$0xf] %v978
  %980 = vst.msk [vmem:[%s929 + $0x5c] sm:$0xf] %vm133, %v580
  %v981 = vld [vmem:[%s929 + $0x60] sm:$0xf]
  %v982 = vsel %vm932, %v587, %v981
  %983 = vst [vmem:[%s929 + $0x60] sm:$0xf] %v982
  %984 = vst.msk [vmem:[%s929 + $0x64] sm:$0xf] %vm133, %v596
  %v985 = vld [vmem:[%s929 + $0x68] sm:$0xf]
  %v986 = vsel %vm932, %v603, %v985
  %987 = vst [vmem:[%s929 + $0x68] sm:$0xf] %v986
  %988 = vst.msk [vmem:[%s929 + $0x6c] sm:$0xf] %vm133, %v612
  %v989 = vld [vmem:[%s929 + $0x70] sm:$0xf]
  %v990 = vsel %vm932, %v619, %v989
  %991 = vst [vmem:[%s929 + $0x70] sm:$0xf] %v990
  %992 = vst.msk [vmem:[%s929 + $0x74] sm:$0xf] %vm133, %v628
  %v993 = vld [vmem:[%s929 + $0x80] sm:$0xf]
  %v994 = vsel %vm932, %v635, %v993
  %995 = vst [vmem:[%s929 + $0x80] sm:$0xf] %v994
  %996 = vst.msk [vmem:[%s929 + $0x84] sm:$0xf] %vm133, %v644
  %v997 = vld [vmem:[%s929 + $0x88] sm:$0xf]
  %v998 = vsel %vm932, %v651, %v997
  %999 = vst [vmem:[%s929 + $0x88] sm:$0xf] %v998
  %1000 = vst.msk [vmem:[%s929 + $0x8c] sm:$0xf] %vm133, %v660
  %v1001 = vld [vmem:[%s929 + $0x90] sm:$0xf]
  %v1002 = vsel %vm932, %v667, %v1001
  %1003 = vst [vmem:[%s929 + $0x90] sm:$0xf] %v1002
  %1004 = vst.msk [vmem:[%s929 + $0x94] sm:$0xf] %vm133, %v676
  %v1005 = vld [vmem:[%s929 + $0x98] sm:$0xf]
  %v1006 = vsel %vm932, %v683, %v1005
  %1007 = vst [vmem:[%s929 + $0x98] sm:$0xf] %v1006
  %1008 = vst.msk [vmem:[%s929 + $0x9c] sm:$0xf] %vm133, %v692
  %v1009 = vld [vmem:[%s929 + $0xa0] sm:$0xf]
  %v1010 = vsel %vm932, %v699, %v1009
  %1011 = vst [vmem:[%s929 + $0xa0] sm:$0xf] %v1010
  %1012 = vst.msk [vmem:[%s929 + $0xa4] sm:$0xf] %vm133, %v708
  %v1013 = vld [vmem:[%s929 + $0xa8] sm:$0xf]
  %v1014 = vsel %vm932, %v715, %v1013
  %1015 = vst [vmem:[%s929 + $0xa8] sm:$0xf] %v1014
  %1016 = vst.msk [vmem:[%s929 + $0xac] sm:$0xf] %vm133, %v724
  %v1017 = vld [vmem:[%s929 + $0xb0] sm:$0xf]
  %v1018 = vsel %vm932, %v731, %v1017
  %1019 = vst [vmem:[%s929 + $0xb0] sm:$0xf] %v1018
  %1020 = vst.msk [vmem:[%s929 + $0xb4] sm:$0xf] %vm133, %v740
  %v1021 = vld [vmem:[%s929 + $0xb8] sm:$0xf]
  %v1022 = vsel %vm932, %v747, %v1021
  %1023 = vst [vmem:[%s929 + $0xb8] sm:$0xf] %v1022
  %1024 = vst.msk [vmem:[%s929 + $0xbc] sm:$0xf] %vm133, %v756
  %v1025 = vld [vmem:[%s929 + $0xc0] sm:$0xf]
  %v1026 = vsel %vm932, %v763, %v1025
  %1027 = vst [vmem:[%s929 + $0xc0] sm:$0xf] %v1026
  %1028 = vst.msk [vmem:[%s929 + $0xc4] sm:$0xf] %vm133, %v772
  %v1029 = vld [vmem:[%s929 + $0xc8] sm:$0xf]
  %v1030 = vsel %vm932, %v779, %v1029
  %1031 = vst [vmem:[%s929 + $0xc8] sm:$0xf] %v1030
  %1032 = vst.msk [vmem:[%s929 + $0xcc] sm:$0xf] %vm133, %v788
  %v1033 = vld [vmem:[%s929 + $0xd0] sm:$0xf]
  %v1034 = vsel %vm932, %v795, %v1033
  %1035 = vst [vmem:[%s929 + $0xd0] sm:$0xf] %v1034
  %1036 = vst.msk [vmem:[%s929 + $0xd4] sm:$0xf] %vm133, %v804
  %v1037 = vld [vmem:[%s929 + $0xd8] sm:$0xf]
  %v1038 = vsel %vm932, %v811, %v1037
  %1039 = vst [vmem:[%s929 + $0xd8] sm:$0xf] %v1038
  %1040 = vst.msk [vmem:[%s929 + $0xdc] sm:$0xf] %vm133, %v820
  %v1041 = vld [vmem:[%s929 + $0xe0] sm:$0xf]
  %v1042 = vsel %vm932, %v827, %v1041
  %1043 = vst [vmem:[%s929 + $0xe0] sm:$0xf] %v1042
  %1044 = vst.msk [vmem:[%s929 + $0xe4] sm:$0xf] %vm133, %v836
  %v1045 = vld [vmem:[%s929 + $0xe8] sm:$0xf]
  %v1046 = vsel %vm932, %v843, %v1045
  %1047 = vst [vmem:[%s929 + $0xe8] sm:$0xf] %v1046
  %1048 = vst.msk [vmem:[%s929 + $0xec] sm:$0xf] %vm133, %v852
  %v1049 = vld [vmem:[%s929 + $0xf0] sm:$0xf]
  %v1050 = vsel %vm932, %v859, %v1049
  %1051 = vst [vmem:[%s929 + $0xf0] sm:$0xf] %v1050
  %1052 = vst.msk [vmem:[%s929 + $0xf4] sm:$0xf] %vm133, %v868
  %vm1053 = vcmask 126016
  %1054 = vst.msk [vmem:[#allocation2] sm:$0xf] %vm1053, 0
  %1055 = vst.msk [vmem:[#allocation2 + $0x4] sm:$0xf] %vm1053, 0
  %1056 = vst.msk [vmem:[#allocation2 + $0x80] sm:$0xf] %vm1053, 0
  %1057 = vst.msk [vmem:[#allocation2 + $0x84] sm:$0xf] %vm1053, 0
  %1058 = vrot.lane.b32.xlu0 %v327, 8
  %v1059 = vpop.permute.xlu0 %1058
  %1060 = vrot.lane.b32.xlu0 %v328, 8
  %v1061 = vpop.permute.xlu0 %1060
  %1062 = vrot.lane.b32.xlu0 %v329, 8
  %v1063 = vpop.permute.xlu0 %1062
  %1064 = vrot.lane.b32.xlu0 %v330, 8
  %v1065 = vpop.permute.xlu0 %1064
  %1066 = vrot.lane.b32.xlu0 %v331, 8
  %v1067 = vpop.permute.xlu0 %1066
  %1068 = vrot.lane.b32.xlu0 %v332, 8
  %v1069 = vpop.permute.xlu0 %1068
  %1070 = vrot.lane.b32.xlu0 %v333, 8
  %v1071 = vpop.permute.xlu0 %1070
  %1072 = vrot.lane.b32.xlu0 %v334, 8
  %v1073 = vpop.permute.xlu0 %1072
  %1074 = vrot.lane.b32.xlu0 %v335, 8
  %v1075 = vpop.permute.xlu0 %1074
  %1076 = vrot.lane.b32.xlu0 %v336, 8
  %v1077 = vpop.permute.xlu0 %1076
  %1078 = vrot.lane.b32.xlu0 %v337, 8
  %v1079 = vpop.permute.xlu0 %1078
  %1080 = vrot.lane.b32.xlu0 %v338, 8
  %v1081 = vpop.permute.xlu0 %1080
  %1082 = vrot.lane.b32.xlu0 %v339, 8
  %v1083 = vpop.permute.xlu0 %1082
  %1084 = vrot.lane.b32.xlu0 %v340, 8
  %v1085 = vpop.permute.xlu0 %1084
  %1086 = vrot.lane.b32.xlu0 %v341, 8
  %v1087 = vpop.permute.xlu0 %1086
  %1088 = vrot.lane.b32.xlu0 %v342, 8
  %v1089 = vpop.permute.xlu0 %1088
  %1090 = vrot.lane.b32.xlu0 %v343, 8
  %v1091 = vpop.permute.xlu0 %1090
  %1092 = vrot.lane.b32.xlu0 %v344, 8
  %v1093 = vpop.permute.xlu0 %1092
  %1094 = vrot.lane.b32.xlu0 %v345, 8
  %v1095 = vpop.permute.xlu0 %1094
  %1096 = vrot.lane.b32.xlu0 %v346, 8
  %v1097 = vpop.permute.xlu0 %1096
  %1098 = vrot.lane.b32.xlu0 %v347, 8
  %v1099 = vpop.permute.xlu0 %1098
  %1100 = vrot.lane.b32.xlu0 %v348, 8
  %v1101 = vpop.permute.xlu0 %1100
  %1102 = vrot.lane.b32.xlu0 %v349, 8
  %v1103 = vpop.permute.xlu0 %1102
  %1104 = vrot.lane.b32.xlu0 %v350, 8
  %v1105 = vpop.permute.xlu0 %1104
  %1106 = vrot.lane.b32.xlu0 %v351, 8
  %v1107 = vpop.permute.xlu0 %1106
  %1108 = vrot.lane.b32.xlu0 %v352, 8
  %v1109 = vpop.permute.xlu0 %1108
  %1110 = vrot.lane.b32.xlu0 %v353, 8
  %v1111 = vpop.permute.xlu0 %1110
  %1112 = vrot.lane.b32.xlu0 %v354, 8
  %v1113 = vpop.permute.xlu0 %1112
  %1114 = vrot.lane.b32.xlu0 %v355, 8
  %v1115 = vpop.permute.xlu0 %1114
  %1116 = vrot.lane.b32.xlu0 %v356, 8
  %v1117 = vpop.permute.xlu0 %1116
  %1118 = vrot.lane.b32.xlu0 %v357, 8
  %v1119 = vpop.permute.xlu0 %1118
  %1120 = vrot.lane.b32.xlu0 %v358, 8
  %v1121 = vpop.permute.xlu0 %1120
  %1122 = vrot.lane.b32.xlu0 %v359, 8
  %v1123 = vpop.permute.xlu0 %1122
  %1124 = vrot.lane.b32.xlu0 %v360, 8
  %v1125 = vpop.permute.xlu0 %1124
  %1126 = vrot.lane.b32.xlu0 %v361, 8
  %v1127 = vpop.permute.xlu0 %1126
  %1128 = vrot.lane.b32.xlu0 %v362, 8
  %v1129 = vpop.permute.xlu0 %1128
  %1130 = vrot.lane.b32.xlu0 %v363, 8
  %v1131 = vpop.permute.xlu0 %1130
  %1132 = vrot.lane.b32.xlu0 %v364, 8
  %v1133 = vpop.permute.xlu0 %1132
  %1134 = vrot.lane.b32.xlu0 %v365, 8
  %v1135 = vpop.permute.xlu0 %1134
  %1136 = vrot.lane.b32.xlu0 %v366, 8
  %v1137 = vpop.permute.xlu0 %1136
  %1138 = vrot.lane.b32.xlu0 %v367, 8
  %v1139 = vpop.permute.xlu0 %1138
  %1140 = vrot.lane.b32.xlu0 %v368, 8
  %v1141 = vpop.permute.xlu0 %1140
  %1142 = vrot.lane.b32.xlu0 %v369, 8
  %v1143 = vpop.permute.xlu0 %1142
  %1144 = vrot.lane.b32.xlu0 %v370, 8
  %v1145 = vpop.permute.xlu0 %1144
  %1146 = vrot.lane.b32.xlu0 %v371, 8
  %v1147 = vpop.permute.xlu0 %1146
  %1148 = vrot.lane.b32.xlu0 %v372, 8
  %v1149 = vpop.permute.xlu0 %1148
  %1150 = vrot.lane.b32.xlu0 %v373, 8
  %v1151 = vpop.permute.xlu0 %1150
  %1152 = vrot.lane.b32.xlu0 %v374, 8
  %v1153 = vpop.permute.xlu0 %1152
  %1154 = vrot.lane.b32.xlu0 %v375, 8
  %v1155 = vpop.permute.xlu0 %1154
  %1156 = vrot.lane.b32.xlu0 %v376, 8
  %v1157 = vpop.permute.xlu0 %1156
  %1158 = vrot.lane.b32.xlu0 %v377, 8
  %v1159 = vpop.permute.xlu0 %1158
  %1160 = vrot.lane.b32.xlu0 %v378, 8
  %v1161 = vpop.permute.xlu0 %1160
  %1162 = vrot.lane.b32.xlu0 %v379, 8
  %v1163 = vpop.permute.xlu0 %1162
  %1164 = vrot.lane.b32.xlu0 %v380, 8
  %v1165 = vpop.permute.xlu0 %1164
  %1166 = vrot.lane.b32.xlu0 %v381, 8
  %v1167 = vpop.permute.xlu0 %1166
  %1168 = vrot.lane.b32.xlu0 %v382, 8
  %v1169 = vpop.permute.xlu0 %1168
  %1170 = vrot.lane.b32.xlu0 %v383, 8
  %v1171 = vpop.permute.xlu0 %1170
  %1172 = vrot.lane.b32.xlu0 %v384, 8
  %v1173 = vpop.permute.xlu0 %1172
  %1174 = vrot.lane.b32.xlu0 %v385, 8
  %v1175 = vpop.permute.xlu0 %1174
  %1176 = vrot.lane.b32.xlu0 %v386, 8
  %v1177 = vpop.permute.xlu0 %1176
  %1238 = vst.msk [vmem:[%s929] sm:$0xf] %vm1053, %v1059
  %1239 = vst.msk [vmem:[%s929 + $0x4] sm:$0xf] %vm1053, %v1061
  %1240 = vst.msk [vmem:[%s929 + $0x8] sm:$0xf] %vm1053, %v1063
  %1241 = vst.msk [vmem:[%s929 + $0xc] sm:$0xf] %vm1053, %v1065
  %1242 = vst.msk [vmem:[%s929 + $0x10] sm:$0xf] %vm1053, %v1067
  %1243 = vst.msk [vmem:[%s929 + $0x14] sm:$0xf] %vm1053, %v1069
  %1244 = vst.msk [vmem:[%s929 + $0x18] sm:$0xf] %vm1053, %v1071
  %1245 = vst.msk [vmem:[%s929 + $0x1c] sm:$0xf] %vm1053, %v1073
  %1246 = vst.msk [vmem:[%s929 + $0x20] sm:$0xf] %vm1053, %v1075
  %1247 = vst.msk [vmem:[%s929 + $0x24] sm:$0xf] %vm1053, %v1077
  %1248 = vst.msk [vmem:[%s929 + $0x28] sm:$0xf] %vm1053, %v1079
  %1249 = vst.msk [vmem:[%s929 + $0x2c] sm:$0xf] %vm1053, %v1081
  %1250 = vst.msk [vmem:[%s929 + $0x30] sm:$0xf] %vm1053, %v1083
  %1251 = vst.msk [vmem:[%s929 + $0x34] sm:$0xf] %vm1053, %v1085
  %1252 = vst.msk [vmem:[%s929 + $0x38] sm:$0xf] %vm1053, %v1087
  %1253 = vst.msk [vmem:[%s929 + $0x3c] sm:$0xf] %vm1053, %v1089
  %1254 = vst.msk [vmem:[%s929 + $0x40] sm:$0xf] %vm1053, %v1091
  %1255 = vst.msk [vmem:[%s929 + $0x44] sm:$0xf] %vm1053, %v1093
  %1256 = vst.msk [vmem:[%s929 + $0x48] sm:$0xf] %vm1053, %v1095
  %1257 = vst.msk [vmem:[%s929 + $0x4c] sm:$0xf] %vm1053, %v1097
  %1258 = vst.msk [vmem:[%s929 + $0x50] sm:$0xf] %vm1053, %v1099
  %1259 = vst.msk [vmem:[%s929 + $0x54] sm:$0xf] %vm1053, %v1101
  %1260 = vst.msk [vmem:[%s929 + $0x58] sm:$0xf] %vm1053, %v1103
  %1261 = vst.msk [vmem:[%s929 + $0x5c] sm:$0xf] %vm1053, %v1105
  %1262 = vst.msk [vmem:[%s929 + $0x60] sm:$0xf] %vm1053, %v1107
  %1263 = vst.msk [vmem:[%s929 + $0x64] sm:$0xf] %vm1053, %v1109
  %1264 = vst.msk [vmem:[%s929 + $0x68] sm:$0xf] %vm1053, %v1111
  %1265 = vst.msk [vmem:[%s929 + $0x6c] sm:$0xf] %vm1053, %v1113
  %1266 = vst.msk [vmem:[%s929 + $0x70] sm:$0xf] %vm1053, %v1115
  %1267 = vst.msk [vmem:[%s929 + $0x74] sm:$0xf] %vm1053, %v1117
  %1268 = vst.msk [vmem:[%s929 + $0x80] sm:$0xf] %vm1053, %v1119
  %1269 = vst.msk [vmem:[%s929 + $0x84] sm:$0xf] %vm1053, %v1121
  %1270 = vst.msk [vmem:[%s929 + $0x88] sm:$0xf] %vm1053, %v1123
  %1271 = vst.msk [vmem:[%s929 + $0x8c] sm:$0xf] %vm1053, %v1125
  %1272 = vst.msk [vmem:[%s929 + $0x90] sm:$0xf] %vm1053, %v1127
  %1273 = vst.msk [vmem:[%s929 + $0x94] sm:$0xf] %vm1053, %v1129
  %1274 = vst.msk [vmem:[%s929 + $0x98] sm:$0xf] %vm1053, %v1131
  %1275 = vst.msk [vmem:[%s929 + $0x9c] sm:$0xf] %vm1053, %v1133
  %1276 = vst.msk [vmem:[%s929 + $0xa0] sm:$0xf] %vm1053, %v1135
  %1277 = vst.msk [vmem:[%s929 + $0xa4] sm:$0xf] %vm1053, %v1137
  %1278 = vst.msk [vmem:[%s929 + $0xa8] sm:$0xf] %vm1053, %v1139
  %1279 = vst.msk [vmem:[%s929 + $0xac] sm:$0xf] %vm1053, %v1141
  %1280 = vst.msk [vmem:[%s929 + $0xb0] sm:$0xf] %vm1053, %v1143
  %1281 = vst.msk [vmem:[%s929 + $0xb4] sm:$0xf] %vm1053, %v1145
  %1282 = vst.msk [vmem:[%s929 + $0xb8] sm:$0xf] %vm1053, %v1147
  %1283 = vst.msk [vmem:[%s929 + $0xbc] sm:$0xf] %vm1053, %v1149
  %1284 = vst.msk [vmem:[%s929 + $0xc0] sm:$0xf] %vm1053, %v1151
  %1285 = vst.msk [vmem:[%s929 + $0xc4] sm:$0xf] %vm1053, %v1153
  %1286 = vst.msk [vmem:[%s929 + $0xc8] sm:$0xf] %vm1053, %v1155
  %1287 = vst.msk [vmem:[%s929 + $0xcc] sm:$0xf] %vm1053, %v1157
  %1288 = vst.msk [vmem:[%s929 + $0xd0] sm:$0xf] %vm1053, %v1159
  %1289 = vst.msk [vmem:[%s929 + $0xd4] sm:$0xf] %vm1053, %v1161
  %1290 = vst.msk [vmem:[%s929 + $0xd8] sm:$0xf] %vm1053, %v1163
  %1291 = vst.msk [vmem:[%s929 + $0xdc] sm:$0xf] %vm1053, %v1165
  %1292 = vst.msk [vmem:[%s929 + $0xe0] sm:$0xf] %vm1053, %v1167
  %1293 = vst.msk [vmem:[%s929 + $0xe4] sm:$0xf] %vm1053, %v1169
  %1294 = vst.msk [vmem:[%s929 + $0xe8] sm:$0xf] %vm1053, %v1171
  %1295 = vst.msk [vmem:[%s929 + $0xec] sm:$0xf] %vm1053, %v1173
  %1296 = vst.msk [vmem:[%s929 + $0xf0] sm:$0xf] %vm1053, %v1175
  %1297 = vst.msk [vmem:[%s929 + $0xf4] sm:$0xf] %vm1053, %v1177
  %vm1298 = vcmask 191616
  %1299 = vst.msk [vmem:[#allocation2] sm:$0xf] %vm1298, 0
  %1300 = vst.msk [vmem:[#allocation2 + $0x4] sm:$0xf] %vm1298, 0
  %1301 = vst.msk [vmem:[#allocation2 + $0x80] sm:$0xf] %vm1298, 0
  %1302 = vst.msk [vmem:[#allocation2 + $0x84] sm:$0xf] %vm1298, 0
  %vm1303 = vcmask 191619
  %vm1304 = vsmask.f32 7950
  %vm1305 = vmand %vm1303, %vm1304
  %v1306 = vld [vmem:[#allocation2 + $0x4] sm:$0x8]
  %v1307 = vsel %vm1305, 0, %v1306
  %1308 = vst [vmem:[#allocation2 + $0x4] sm:$0x8] %v1307
  %v1309 = vld [vmem:[#allocation2 + $0xc] sm:$0x8]
  %v1310 = vsel %vm1305, 0, %v1309
  %1311 = vst [vmem:[#allocation2 + $0xc] sm:$0x8] %v1310
  %v1312 = vld [vmem:[#allocation2 + $0x14] sm:$0x8]
  %v1313 = vsel %vm1305, 0, %v1312
  %1314 = vst [vmem:[#allocation2 + $0x14] sm:$0x8] %v1313
  %v1315 = vld [vmem:[#allocation2 + $0x1c] sm:$0x8]
  %v1316 = vsel %vm1305, 0, %v1315
  %1317 = vst [vmem:[#allocation2 + $0x1c] sm:$0x8] %v1316
  %v1318 = vld [vmem:[#allocation2 + $0x24] sm:$0x8]
  %v1319 = vsel %vm1305, 0, %v1318
  %1320 = vst [vmem:[#allocation2 + $0x24] sm:$0x8] %v1319
  %v1321 = vld [vmem:[#allocation2 + $0x2c] sm:$0x8]
  %v1322 = vsel %vm1305, 0, %v1321
  %1323 = vst [vmem:[#allocation2 + $0x2c] sm:$0x8] %v1322
  %v1324 = vld [vmem:[#allocation2 + $0x34] sm:$0x8]
  %v1325 = vsel %vm1305, 0, %v1324
  %1326 = vst [vmem:[#allocation2 + $0x34] sm:$0x8] %v1325
  %v1327 = vld [vmem:[#allocation2 + $0x3c] sm:$0x8]
  %v1328 = vsel %vm1305, 0, %v1327
  %1329 = vst [vmem:[#allocation2 + $0x3c] sm:$0x8] %v1328
  %v1330 = vld [vmem:[#allocation2 + $0x44] sm:$0x8]
  %v1331 = vsel %vm1305, 0, %v1330
  %1332 = vst [vmem:[#allocation2 + $0x44] sm:$0x8] %v1331
  %v1333 = vld [vmem:[#allocation2 + $0x4c] sm:$0x8]
  %v1334 = vsel %vm1305, 0, %v1333
  %1335 = vst [vmem:[#allocation2 + $0x4c] sm:$0x8] %v1334
  %v1336 = vld [vmem:[#allocation2 + $0x54] sm:$0x8]
  %v1337 = vsel %vm1305, 0, %v1336
  %1338 = vst [vmem:[#allocation2 + $0x54] sm:$0x8] %v1337
  %v1339 = vld [vmem:[#allocation2 + $0x5c] sm:$0x8]
  %v1340 = vsel %vm1305, 0, %v1339
  %1341 = vst [vmem:[#allocation2 + $0x5c] sm:$0x8] %v1340
  %v1342 = vld [vmem:[#allocation2 + $0x64] sm:$0x8]
  %v1343 = vsel %vm1305, 0, %v1342
  %1344 = vst [vmem:[#allocation2 + $0x64] sm:$0x8] %v1343
  %v1345 = vld [vmem:[#allocation2 + $0x6c] sm:$0x8]
  %v1346 = vsel %vm1305, 0, %v1345
  %1347 = vst [vmem:[#allocation2 + $0x6c] sm:$0x8] %v1346
  %v1348 = vld [vmem:[#allocation2 + $0x74] sm:$0x8]
  %v1349 = vsel %vm1305, 0, %v1348
  %1350 = vst [vmem:[#allocation2 + $0x74] sm:$0x8] %v1349
  %v1351 = vld [vmem:[#allocation2 + $0x7c] sm:$0x8]
  %v1352 = vsel %vm1305, 0, %v1351
  %1353 = vst [vmem:[#allocation2 + $0x7c] sm:$0x8] %v1352
  %v1354 = vld [vmem:[#allocation2 + $0x84] sm:$0x8]
  %v1355 = vsel %vm1305, 0, %v1354
  %1356 = vst [vmem:[#allocation2 + $0x84] sm:$0x8] %v1355
  %v1357 = vld [vmem:[#allocation2 + $0x8c] sm:$0x8]
  %v1358 = vsel %vm1305, 0, %v1357
  %1359 = vst [vmem:[#allocation2 + $0x8c] sm:$0x8] %v1358
  %v1360 = vld [vmem:[#allocation2 + $0x94] sm:$0x8]
  %v1361 = vsel %vm1305, 0, %v1360
  %1362 = vst [vmem:[#allocation2 + $0x94] sm:$0x8] %v1361
  %v1363 = vld [vmem:[#allocation2 + $0x9c] sm:$0x8]
  %v1364 = vsel %vm1305, 0, %v1363
  %1365 = vst [vmem:[#allocation2 + $0x9c] sm:$0x8] %v1364
  %v1366 = vld [vmem:[#allocation2 + $0xa4] sm:$0x8]
  %v1367 = vsel %vm1305, 0, %v1366
  %1368 = vst [vmem:[#allocation2 + $0xa4] sm:$0x8] %v1367
  %v1369 = vld [vmem:[#allocation2 + $0xac] sm:$0x8]
  %v1370 = vsel %vm1305, 0, %v1369
  %1371 = vst [vmem:[#allocation2 + $0xac] sm:$0x8] %v1370
  %v1372 = vld [vmem:[#allocation2 + $0xb4] sm:$0x8]
  %v1373 = vsel %vm1305, 0, %v1372
  %1374 = vst [vmem:[#allocation2 + $0xb4] sm:$0x8] %v1373
  %v1375 = vld [vmem:[#allocation2 + $0xbc] sm:$0x8]
  %v1376 = vsel %vm1305, 0, %v1375
  %1377 = vst [vmem:[#allocation2 + $0xbc] sm:$0x8] %v1376
  %v1378 = vld [vmem:[#allocation2 + $0xc4] sm:$0x8]
  %v1379 = vsel %vm1305, 0, %v1378
  %1380 = vst [vmem:[#allocation2 + $0xc4] sm:$0x8] %v1379
  %v1381 = vld [vmem:[#allocation2 + $0xcc] sm:$0x8]
  %v1382 = vsel %vm1305, 0, %v1381
  %1383 = vst [vmem:[#allocation2 + $0xcc] sm:$0x8] %v1382
  %v1384 = vld [vmem:[#allocation2 + $0xd4] sm:$0x8]
  %v1385 = vsel %vm1305, 0, %v1384
  %1386 = vst [vmem:[#allocation2 + $0xd4] sm:$0x8] %v1385
  %v1387 = vld [vmem:[#allocation2 + $0xdc] sm:$0x8]
  %v1388 = vsel %vm1305, 0, %v1387
  %1389 = vst [vmem:[#allocation2 + $0xdc] sm:$0x8] %v1388
  %v1390 = vld [vmem:[#allocation2 + $0xe4] sm:$0x8]
  %v1391 = vsel %vm1305, 0, %v1390
  %1392 = vst [vmem:[#allocation2 + $0xe4] sm:$0x8] %v1391
  %v1393 = vld [vmem:[#allocation2 + $0xec] sm:$0x8]
  %v1394 = vsel %vm1305, 0, %v1393
  %1395 = vst [vmem:[#allocation2 + $0xec] sm:$0x8] %v1394
  %v1396 = vld [vmem:[#allocation2 + $0xf4] sm:$0x8]
  %v1397 = vsel %vm1305, 0, %v1396
  %1398 = vst [vmem:[#allocation2 + $0xf4] sm:$0x8] %v1397
  %v1399 = vld [vmem:[#allocation2 + $0xfc] sm:$0x8]
  %v1400 = vsel %vm1305, 0, %v1399
  %1401 = vst [vmem:[#allocation2 + $0xfc] sm:$0x8] %v1400
  %vm1402 = vsmask.f32 3328
  %vm1403 = vsmask.f32 7440
  %vm1404 = vmor %vm1402, %vm1403
  %v1405 = vrot.slane %v390, 4
  %v1406 = vrot.slane %v393, 5
  %v1407 = vor.u32 %v1405, %v1406
  %v1408 = vrot.slane %v1407, 4
  %v1409 = vrot.slane %v401, 5
  %v1410 = vsel %vm1404, %v1408, %v1409
  %v1411 = vrot.slane %v398, 4
  %v1412 = vor.u32 %v1411, %v1409
  %v1413 = vrot.slane %v1412, 4
  %v1414 = vrot.slane %v406, 4
  %v1415 = vrot.slane %v409, 5
  %v1416 = vor.u32 %v1414, %v1415
  %v1417 = vrot.slane %v1416, 4
  %v1418 = vrot.slane %v417, 5
  %v1419 = vsel %vm1404, %v1417, %v1418
  %v1420 = vrot.slane %v414, 4
  %v1421 = vor.u32 %v1420, %v1418
  %v1422 = vrot.slane %v1421, 4
  %v1423 = vrot.slane %v422, 4
  %v1424 = vrot.slane %v425, 5
  %v1425 = vor.u32 %v1423, %v1424
  %v1426 = vrot.slane %v1425, 4
  %v1427 = vrot.slane %v433, 5
  %v1428 = vsel %vm1404, %v1426, %v1427
  %v1429 = vrot.slane %v430, 4
  %v1430 = vor.u32 %v1429, %v1427
  %v1431 = vrot.slane %v1430, 4
  %v1432 = vrot.slane %v438, 4
  %v1433 = vrot.slane %v441, 5
  %v1434 = vor.u32 %v1432, %v1433
  %v1435 = vrot.slane %v1434, 4
  %v1436 = vrot.slane %v449, 5
  %v1437 = vsel %vm1404, %v1435, %v1436
  %v1438 = vrot.slane %v446, 4
  %v1439 = vor.u32 %v1438, %v1436
  %v1440 = vrot.slane %v1439, 4
  %v1441 = vrot.slane %v454, 4
  %v1442 = vrot.slane %v457, 5
  %v1443 = vor.u32 %v1441, %v1442
  %v1444 = vrot.slane %v1443, 4
  %v1445 = vrot.slane %v465, 5
  %v1446 = vsel %vm1404, %v1444, %v1445
  %v1447 = vrot.slane %v462, 4
  %v1448 = vor.u32 %v1447, %v1445
  %v1449 = vrot.slane %v1448, 4
  %v1450 = vrot.slane %v470, 4
  %v1451 = vrot.slane %v473, 5
  %v1452 = vor.u32 %v1450, %v1451
  %v1453 = vrot.slane %v1452, 4
  %v1454 = vrot.slane %v481, 5
  %v1455 = vsel %vm1404, %v1453, %v1454
  %v1456 = vrot.slane %v478, 4
  %v1457 = vor.u32 %v1456, %v1454
  %v1458 = vrot.slane %v1457, 4
  %v1459 = vrot.slane %v486, 4
  %v1460 = vrot.slane %v489, 5
  %v1461 = vor.u32 %v1459, %v1460
  %v1462 = vrot.slane %v1461, 4
  %v1463 = vrot.slane %v497, 5
  %v1464 = vsel %vm1404, %v1462, %v1463
  %v1465 = vrot.slane %v494, 4
  %v1466 = vor.u32 %v1465, %v1463
  %v1467 = vrot.slane %v1466, 4
  %v1468 = vrot.slane %v502, 4
  %v1469 = vrot.slane %v505, 5
  %v1470 = vor.u32 %v1468, %v1469
  %v1471 = vrot.slane %v1470, 4
  %v1472 = vrot.slane %v513, 5
  %v1473 = vsel %vm1404, %v1471, %v1472
  %v1474 = vrot.slane %v510, 4
  %v1475 = vor.u32 %v1474, %v1472
  %v1476 = vrot.slane %v1475, 4
  %v1477 = vrot.slane %v518, 4
  %v1478 = vrot.slane %v521, 5
  %v1479 = vor.u32 %v1477, %v1478
  %v1480 = vrot.slane %v1479, 4
  %v1481 = vrot.slane %v529, 5
  %v1482 = vsel %vm1404, %v1480, %v1481
  %v1483 = vrot.slane %v526, 4
  %v1484 = vor.u32 %v1483, %v1481
  %v1485 = vrot.slane %v1484, 4
  %v1486 = vrot.slane %v534, 4
  %v1487 = vrot.slane %v537, 5
  %v1488 = vor.u32 %v1486, %v1487
  %v1489 = vrot.slane %v1488, 4
  %v1490 = vrot.slane %v545, 5
  %v1491 = vsel %vm1404, %v1489, %v1490
  %v1492 = vrot.slane %v542, 4
  %v1493 = vor.u32 %v1492, %v1490
  %v1494 = vrot.slane %v1493, 4
  %v1495 = vrot.slane %v550, 4
  %v1496 = vrot.slane %v553, 5
  %v1497 = vor.u32 %v1495, %v1496
  %v1498 = vrot.slane %v1497, 4
  %v1499 = vrot.slane %v561, 5
  %v1500 = vsel %vm1404, %v1498, %v1499
  %v1501 = vrot.slane %v558, 4
  %v1502 = vor.u32 %v1501, %v1499
  %v1503 = vrot.slane %v1502, 4
  %v1504 = vrot.slane %v566, 4
  %v1505 = vrot.slane %v569, 5
  %v1506 = vor.u32 %v1504, %v1505
  %v1507 = vrot.slane %v1506, 4
  %v1508 = vrot.slane %v577, 5
  %v1509 = vsel %vm1404, %v1507, %v1508
  %v1510 = vrot.slane %v574, 4
  %v1511 = vor.u32 %v1510, %v1508
  %v1512 = vrot.slane %v1511, 4
  %v1513 = vrot.slane %v582, 4
  %v1514 = vrot.slane %v585, 5
  %v1515 = vor.u32 %v1513, %v1514
  %v1516 = vrot.slane %v1515, 4
  %v1517 = vrot.slane %v593, 5
  %v1518 = vsel %vm1404, %v1516, %v1517
  %v1519 = vrot.slane %v590, 4
  %v1520 = vor.u32 %v1519, %v1517
  %v1521 = vrot.slane %v1520, 4
  %v1522 = vrot.slane %v598, 4
  %v1523 = vrot.slane %v601, 5
  %v1524 = vor.u32 %v1522, %v1523
  %v1525 = vrot.slane %v1524, 4
  %v1526 = vrot.slane %v609, 5
  %v1527 = vsel %vm1404, %v1525, %v1526
  %v1528 = vrot.slane %v606, 4
  %v1529 = vor.u32 %v1528, %v1526
  %v1530 = vrot.slane %v1529, 4
  %v1531 = vrot.slane %v614, 4
  %v1532 = vrot.slane %v617, 5
  %v1533 = vor.u32 %v1531, %v1532
  %v1534 = vrot.slane %v1533, 4
  %v1535 = vrot.slane %v625, 5
  %v1536 = vsel %vm1404, %v1534, %v1535
  %v1537 = vrot.slane %v622, 4
  %v1538 = vor.u32 %v1537, %v1535
  %v1539 = vrot.slane %v1538, 4
  %v1540 = vrot.slane %v630, 4
  %v1541 = vrot.slane %v633, 5
  %v1542 = vor.u32 %v1540, %v1541
  %v1543 = vrot.slane %v1542, 4
  %v1544 = vrot.slane %v641, 5
  %v1545 = vsel %vm1404, %v1543, %v1544
  %v1546 = vrot.slane %v638, 4
  %v1547 = vor.u32 %v1546, %v1544
  %v1548 = vrot.slane %v1547, 4
  %v1549 = vrot.slane %v646, 4
  %v1550 = vrot.slane %v649, 5
  %v1551 = vor.u32 %v1549, %v1550
  %v1552 = vrot.slane %v1551, 4
  %v1553 = vrot.slane %v657, 5
  %v1554 = vsel %vm1404, %v1552, %v1553
  %v1555 = vrot.slane %v654, 4
  %v1556 = vor.u32 %v1555, %v1553
  %v1557 = vrot.slane %v1556, 4
  %v1558 = vrot.slane %v662, 4
  %v1559 = vrot.slane %v665, 5
  %v1560 = vor.u32 %v1558, %v1559
  %v1561 = vrot.slane %v1560, 4
  %v1562 = vrot.slane %v673, 5
  %v1563 = vsel %vm1404, %v1561, %v1562
  %v1564 = vrot.slane %v670, 4
  %v1565 = vor.u32 %v1564, %v1562
  %v1566 = vrot.slane %v1565, 4
  %v1567 = vrot.slane %v678, 4
  %v1568 = vrot.slane %v681, 5
  %v1569 = vor.u32 %v1567, %v1568
  %v1570 = vrot.slane %v1569, 4
  %v1571 = vrot.slane %v689, 5
  %v1572 = vsel %vm1404, %v1570, %v1571
  %v1573 = vrot.slane %v686, 4
  %v1574 = vor.u32 %v1573, %v1571
  %v1575 = vrot.slane %v1574, 4
  %v1576 = vrot.slane %v694, 4
  %v1577 = vrot.slane %v697, 5
  %v1578 = vor.u32 %v1576, %v1577
  %v1579 = vrot.slane %v1578, 4
  %v1580 = vrot.slane %v705, 5
  %v1581 = vsel %vm1404, %v1579, %v1580
  %v1582 = vrot.slane %v702, 4
  %v1583 = vor.u32 %v1582, %v1580
  %v1584 = vrot.slane %v1583, 4
  %v1585 = vrot.slane %v710, 4
  %v1586 = vrot.slane %v713, 5
  %v1587 = vor.u32 %v1585, %v1586
  %v1588 = vrot.slane %v1587, 4
  %v1589 = vrot.slane %v721, 5
  %v1590 = vsel %vm1404, %v1588, %v1589
  %v1591 = vrot.slane %v718, 4
  %v1592 = vor.u32 %v1591, %v1589
  %v1593 = vrot.slane %v1592, 4
  %v1594 = vrot.slane %v726, 4
  %v1595 = vrot.slane %v729, 5
  %v1596 = vor.u32 %v1594, %v1595
  %v1597 = vrot.slane %v1596, 4
  %v1598 = vrot.slane %v737, 5
  %v1599 = vsel %vm1404, %v1597, %v1598
  %v1600 = vrot.slane %v734, 4
  %v1601 = vor.u32 %v1600, %v1598
  %v1602 = vrot.slane %v1601, 4
  %v1603 = vrot.slane %v742, 4
  %v1604 = vrot.slane %v745, 5
  %v1605 = vor.u32 %v1603, %v1604
  %v1606 = vrot.slane %v1605, 4
  %v1607 = vrot.slane %v753, 5
  %v1608 = vsel %vm1404, %v1606, %v1607
  %v1609 = vrot.slane %v750, 4
  %v1610 = vor.u32 %v1609, %v1607
  %v1611 = vrot.slane %v1610, 4
  %v1612 = vrot.slane %v758, 4
  %v1613 = vrot.slane %v761, 5
  %v1614 = vor.u32 %v1612, %v1613
  %v1615 = vrot.slane %v1614, 4
  %v1616 = vrot.slane %v769, 5
  %v1617 = vsel %vm1404, %v1615, %v1616
  %v1618 = vrot.slane %v766, 4
  %v1619 = vor.u32 %v1618, %v1616
  %v1620 = vrot.slane %v1619, 4
  %v1621 = vrot.slane %v774, 4
  %v1622 = vrot.slane %v777, 5
  %v1623 = vor.u32 %v1621, %v1622
  %v1624 = vrot.slane %v1623, 4
  %v1625 = vrot.slane %v785, 5
  %v1626 = vsel %vm1404, %v1624, %v1625
  %v1627 = vrot.slane %v782, 4
  %v1628 = vor.u32 %v1627, %v1625
  %v1629 = vrot.slane %v1628, 4
  %v1630 = vrot.slane %v790, 4
  %v1631 = vrot.slane %v793, 5
  %v1632 = vor.u32 %v1630, %v1631
  %v1633 = vrot.slane %v1632, 4
  %v1634 = vrot.slane %v801, 5
  %v1635 = vsel %vm1404, %v1633, %v1634
  %v1636 = vrot.slane %v798, 4
  %v1637 = vor.u32 %v1636, %v1634
  %v1638 = vrot.slane %v1637, 4
  %v1639 = vrot.slane %v806, 4
  %v1640 = vrot.slane %v809, 5
  %v1641 = vor.u32 %v1639, %v1640
  %v1642 = vrot.slane %v1641, 4
  %v1643 = vrot.slane %v817, 5
  %v1644 = vsel %vm1404, %v1642, %v1643
  %v1645 = vrot.slane %v814, 4
  %v1646 = vor.u32 %v1645, %v1643
  %v1647 = vrot.slane %v1646, 4
  %v1648 = vrot.slane %v822, 4
  %v1649 = vrot.slane %v825, 5
  %v1650 = vor.u32 %v1648, %v1649
  %v1651 = vrot.slane %v1650, 4
  %v1652 = vrot.slane %v833, 5
  %v1653 = vsel %vm1404, %v1651, %v1652
  %v1654 = vrot.slane %v830, 4
  %v1655 = vor.u32 %v1654, %v1652
  %v1656 = vrot.slane %v1655, 4
  %v1657 = vrot.slane %v838, 4
  %v1658 = vrot.slane %v841, 5
  %v1659 = vor.u32 %v1657, %v1658
  %v1660 = vrot.slane %v1659, 4
  %v1661 = vrot.slane %v849, 5
  %v1662 = vsel %vm1404, %v1660, %v1661
  %v1663 = vrot.slane %v846, 4
  %v1664 = vor.u32 %v1663, %v1661
  %v1665 = vrot.slane %v1664, 4
  %v1666 = vrot.slane %v854, 4
  %v1667 = vrot.slane %v857, 5
  %v1668 = vor.u32 %v1666, %v1667
  %v1669 = vrot.slane %v1668, 4
  %v1670 = vrot.slane %v865, 5
  %v1671 = vsel %vm1404, %v1669, %v1670
  %v1672 = vrot.slane %v862, 4
  %v1673 = vor.u32 %v1672, %v1670
  %v1674 = vrot.slane %v1673, 4
  %1675 = vrot.lane.b32.xlu0 %v1410, 16
  %v1676 = vpop.permute.xlu0 %1675
  %1677 = vrot.lane.b32.xlu0 %v1413, 16
  %v1678 = vpop.permute.xlu0 %1677
  %1679 = vrot.lane.b32.xlu0 %v1419, 16
  %v1680 = vpop.permute.xlu0 %1679
  %1681 = vrot.lane.b32.xlu0 %v1422, 16
  %v1682 = vpop.permute.xlu0 %1681
  %1683 = vrot.lane.b32.xlu0 %v1428, 16
  %v1684 = vpop.permute.xlu0 %1683
  %1685 = vrot.lane.b32.xlu0 %v1431, 16
  %v1686 = vpop.permute.xlu0 %1685
  %1687 = vrot.lane.b32.xlu0 %v1437, 16
  %v1688 = vpop.permute.xlu0 %1687
  %1689 = vrot.lane.b32.xlu0 %v1440, 16
  %v1690 = vpop.permute.xlu0 %1689
  %1691 = vrot.lane.b32.xlu0 %v1446, 16
  %v1692 = vpop.permute.xlu0 %1691
  %1693 = vrot.lane.b32.xlu0 %v1449, 16
  %v1694 = vpop.permute.xlu0 %1693
  %1695 = vrot.lane.b32.xlu0 %v1455, 16
  %v1696 = vpop.permute.xlu0 %1695
  %1697 = vrot.lane.b32.xlu0 %v1458, 16
  %v1698 = vpop.permute.xlu0 %1697
  %1699 = vrot.lane.b32.xlu0 %v1464, 16
  %v1700 = vpop.permute.xlu0 %1699
  %1701 = vrot.lane.b32.xlu0 %v1467, 16
  %v1702 = vpop.permute.xlu0 %1701
  %1703 = vrot.lane.b32.xlu0 %v1473, 16
  %v1704 = vpop.permute.xlu0 %1703
  %1705 = vrot.lane.b32.xlu0 %v1476, 16
  %v1706 = vpop.permute.xlu0 %1705
  %1707 = vrot.lane.b32.xlu0 %v1482, 16
  %v1708 = vpop.permute.xlu0 %1707
  %1709 = vrot.lane.b32.xlu0 %v1485, 16
  %v1710 = vpop.permute.xlu0 %1709
  %1711 = vrot.lane.b32.xlu0 %v1491, 16
  %v1712 = vpop.permute.xlu0 %1711
  %1713 = vrot.lane.b32.xlu0 %v1494, 16
  %v1714 = vpop.permute.xlu0 %1713
  %1715 = vrot.lane.b32.xlu0 %v1500, 16
  %v1716 = vpop.permute.xlu0 %1715
  %1717 = vrot.lane.b32.xlu0 %v1503, 16
  %v1718 = vpop.permute.xlu0 %1717
  %1719 = vrot.lane.b32.xlu0 %v1509, 16
  %v1720 = vpop.permute.xlu0 %1719
  %1721 = vrot.lane.b32.xlu0 %v1512, 16
  %v1722 = vpop.permute.xlu0 %1721
  %1723 = vrot.lane.b32.xlu0 %v1518, 16
  %v1724 = vpop.permute.xlu0 %1723
  %1725 = vrot.lane.b32.xlu0 %v1521, 16
  %v1726 = vpop.permute.xlu0 %1725
  %1727 = vrot.lane.b32.xlu0 %v1527, 16
  %v1728 = vpop.permute.xlu0 %1727
  %1729 = vrot.lane.b32.xlu0 %v1530, 16
  %v1730 = vpop.permute.xlu0 %1729
  %1731 = vrot.lane.b32.xlu0 %v1536, 16
  %v1732 = vpop.permute.xlu0 %1731
  %1733 = vrot.lane.b32.xlu0 %v1539, 16
  %v1734 = vpop.permute.xlu0 %1733
  %1735 = vrot.lane.b32.xlu0 %v1545, 16
  %v1736 = vpop.permute.xlu0 %1735
  %1737 = vrot.lane.b32.xlu0 %v1548, 16
  %v1738 = vpop.permute.xlu0 %1737
  %1739 = vrot.lane.b32.xlu0 %v1554, 16
  %v1740 = vpop.permute.xlu0 %1739
  %1741 = vrot.lane.b32.xlu0 %v1557, 16
  %v1742 = vpop.permute.xlu0 %1741
  %1743 = vrot.lane.b32.xlu0 %v1563, 16
  %v1744 = vpop.permute.xlu0 %1743
  %1745 = vrot.lane.b32.xlu0 %v1566, 16
  %v1746 = vpop.permute.xlu0 %1745
  %1747 = vrot.lane.b32.xlu0 %v1572, 16
  %v1748 = vpop.permute.xlu0 %1747
  %1749 = vrot.lane.b32.xlu0 %v1575, 16
  %v1750 = vpop.permute.xlu0 %1749
  %1751 = vrot.lane.b32.xlu0 %v1581, 16
  %v1752 = vpop.permute.xlu0 %1751
  %1753 = vrot.lane.b32.xlu0 %v1584, 16
  %v1754 = vpop.permute.xlu0 %1753
  %1755 = vrot.lane.b32.xlu0 %v1590, 16
  %v1756 = vpop.permute.xlu0 %1755
  %1757 = vrot.lane.b32.xlu0 %v1593, 16
  %v1758 = vpop.permute.xlu0 %1757
  %1759 = vrot.lane.b32.xlu0 %v1599, 16
  %v1760 = vpop.permute.xlu0 %1759
  %1761 = vrot.lane.b32.xlu0 %v1602, 16
  %v1762 = vpop.permute.xlu0 %1761
  %1763 = vrot.lane.b32.xlu0 %v1608, 16
  %v1764 = vpop.permute.xlu0 %1763
  %1765 = vrot.lane.b32.xlu0 %v1611, 16
  %v1766 = vpop.permute.xlu0 %1765
  %1767 = vrot.lane.b32.xlu0 %v1617, 16
  %v1768 = vpop.permute.xlu0 %1767
  %1769 = vrot.lane.b32.xlu0 %v1620, 16
  %v1770 = vpop.permute.xlu0 %1769
  %1771 = vrot.lane.b32.xlu0 %v1626, 16
  %v1772 = vpop.permute.xlu0 %1771
  %1773 = vrot.lane.b32.xlu0 %v1629, 16
  %v1774 = vpop.permute.xlu0 %1773
  %1775 = vrot.lane.b32.xlu0 %v1635, 16
  %v1776 = vpop.permute.xlu0 %1775
  %1777 = vrot.lane.b32.xlu0 %v1638, 16
  %v1778 = vpop.permute.xlu0 %1777
  %1779 = vrot.lane.b32.xlu0 %v1644, 16
  %v1780 = vpop.permute.xlu0 %1779
  %1781 = vrot.lane.b32.xlu0 %v1647, 16
  %v1782 = vpop.permute.xlu0 %1781
  %1783 = vrot.lane.b32.xlu0 %v1653, 16
  %v1784 = vpop.permute.xlu0 %1783
  %1785 = vrot.lane.b32.xlu0 %v1656, 16
  %v1786 = vpop.permute.xlu0 %1785
  %1787 = vrot.lane.b32.xlu0 %v1662, 16
  %v1788 = vpop.permute.xlu0 %1787
  %1789 = vrot.lane.b32.xlu0 %v1665, 16
  %v1790 = vpop.permute.xlu0 %1789
  %1791 = vrot.lane.b32.xlu0 %v1671, 16
  %v1792 = vpop.permute.xlu0 %1791
  %1793 = vrot.lane.b32.xlu0 %v1674, 16
  %v1794 = vpop.permute.xlu0 %1793
  %1855 = vst.msk [vmem:[%s929] sm:$0xf] %vm1298, %v1676
  %vm1856 = vcmask 191616
  %vm1857 = vmand %vm1856, %vm1402
  %v1858 = vld [vmem:[%s929 + $0x4] sm:$0xf]
  %v1859 = vsel %vm1857, %v1678, %v1858
  %1860 = vst [vmem:[%s929 + $0x4] sm:$0xf] %v1859
  %1861 = vst.msk [vmem:[%s929 + $0x8] sm:$0xf] %vm1298, %v1680
  %v1862 = vld [vmem:[%s929 + $0xc] sm:$0xf]
  %v1863 = vsel %vm1857, %v1682, %v1862
  %1864 = vst [vmem:[%s929 + $0xc] sm:$0xf] %v1863
  %1865 = vst.msk [vmem:[%s929 + $0x10] sm:$0xf] %vm1298, %v1684
  %v1866 = vld [vmem:[%s929 + $0x14] sm:$0xf]
  %v1867 = vsel %vm1857, %v1686, %v1866
  %1868 = vst [vmem:[%s929 + $0x14] sm:$0xf] %v1867
  %1869 = vst.msk [vmem:[%s929 + $0x18] sm:$0xf] %vm1298, %v1688
  %v1870 = vld [vmem:[%s929 + $0x1c] sm:$0xf]
  %v1871 = vsel %vm1857, %v1690, %v1870
  %1872 = vst [vmem:[%s929 + $0x1c] sm:$0xf] %v1871
  %1873 = vst.msk [vmem:[%s929 + $0x20] sm:$0xf] %vm1298, %v1692
  %v1874 = vld [vmem:[%s929 + $0x24] sm:$0xf]
  %v1875 = vsel %vm1857, %v1694, %v1874
  %1876 = vst [vmem:[%s929 + $0x24] sm:$0xf] %v1875
  %1877 = vst.msk [vmem:[%s929 + $0x28] sm:$0xf] %vm1298, %v1696
  %v1878 = vld [vmem:[%s929 + $0x2c] sm:$0xf]
  %v1879 = vsel %vm1857, %v1698, %v1878
  %1880 = vst [vmem:[%s929 + $0x2c] sm:$0xf] %v1879
  %1881 = vst.msk [vmem:[%s929 + $0x30] sm:$0xf] %vm1298, %v1700
  %v1882 = vld [vmem:[%s929 + $0x34] sm:$0xf]
  %v1883 = vsel %vm1857, %v1702, %v1882
  %1884 = vst [vmem:[%s929 + $0x34] sm:$0xf] %v1883
  %1885 = vst.msk [vmem:[%s929 + $0x38] sm:$0xf] %vm1298, %v1704
  %v1886 = vld [vmem:[%s929 + $0x3c] sm:$0xf]
  %v1887 = vsel %vm1857, %v1706, %v1886
  %1888 = vst [vmem:[%s929 + $0x3c] sm:$0xf] %v1887
  %1889 = vst.msk [vmem:[%s929 + $0x40] sm:$0xf] %vm1298, %v1708
  %v1890 = vld [vmem:[%s929 + $0x44] sm:$0xf]
  %v1891 = vsel %vm1857, %v1710, %v1890
  %1892 = vst [vmem:[%s929 + $0x44] sm:$0xf] %v1891
  %1893 = vst.msk [vmem:[%s929 + $0x48] sm:$0xf] %vm1298, %v1712
  %v1894 = vld [vmem:[%s929 + $0x4c] sm:$0xf]
  %v1895 = vsel %vm1857, %v1714, %v1894
  %1896 = vst [vmem:[%s929 + $0x4c] sm:$0xf] %v1895
  %1897 = vst.msk [vmem:[%s929 + $0x50] sm:$0xf] %vm1298, %v1716
  %v1898 = vld [vmem:[%s929 + $0x54] sm:$0xf]
  %v1899 = vsel %vm1857, %v1718, %v1898
  %1900 = vst [vmem:[%s929 + $0x54] sm:$0xf] %v1899
  %1901 = vst.msk [vmem:[%s929 + $0x58] sm:$0xf] %vm1298, %v1720
  %v1902 = vld [vmem:[%s929 + $0x5c] sm:$0xf]
  %v1903 = vsel %vm1857, %v1722, %v1902
  %1904 = vst [vmem:[%s929 + $0x5c] sm:$0xf] %v1903
  %1905 = vst.msk [vmem:[%s929 + $0x60] sm:$0xf] %vm1298, %v1724
  %v1906 = vld [vmem:[%s929 + $0x64] sm:$0xf]
  %v1907 = vsel %vm1857, %v1726, %v1906
  %1908 = vst [vmem:[%s929 + $0x64] sm:$0xf] %v1907
  %1909 = vst.msk [vmem:[%s929 + $0x68] sm:$0xf] %vm1298, %v1728
  %v1910 = vld [vmem:[%s929 + $0x6c] sm:$0xf]
  %v1911 = vsel %vm1857, %v1730, %v1910
  %1912 = vst [vmem:[%s929 + $0x6c] sm:$0xf] %v1911
  %1913 = vst.msk [vmem:[%s929 + $0x70] sm:$0xf] %vm1298, %v1732
  %v1914 = vld [vmem:[%s929 + $0x74] sm:$0xf]
  %v1915 = vsel %vm1857, %v1734, %v1914
  %1916 = vst [vmem:[%s929 + $0x74] sm:$0xf] %v1915
  %1917 = vst.msk [vmem:[%s929 + $0x80] sm:$0xf] %vm1298, %v1736
  %v1918 = vld [vmem:[%s929 + $0x84] sm:$0xf]
  %v1919 = vsel %vm1857, %v1738, %v1918
  %1920 = vst [vmem:[%s929 + $0x84] sm:$0xf] %v1919
  %1921 = vst.msk [vmem:[%s929 + $0x88] sm:$0xf] %vm1298, %v1740
  %v1922 = vld [vmem:[%s929 + $0x8c] sm:$0xf]
  %v1923 = vsel %vm1857, %v1742, %v1922
  %1924 = vst [vmem:[%s929 + $0x8c] sm:$0xf] %v1923
  %1925 = vst.msk [vmem:[%s929 + $0x90] sm:$0xf] %vm1298, %v1744
  %v1926 = vld [vmem:[%s929 + $0x94] sm:$0xf]
  %v1927 = vsel %vm1857, %v1746, %v1926
  %1928 = vst [vmem:[%s929 + $0x94] sm:$0xf] %v1927
  %1929 = vst.msk [vmem:[%s929 + $0x98] sm:$0xf] %vm1298, %v1748
  %v1930 = vld [vmem:[%s929 + $0x9c] sm:$0xf]
  %v1931 = vsel %vm1857, %v1750, %v1930
  %1932 = vst [vmem:[%s929 + $0x9c] sm:$0xf] %v1931
  %1933 = vst.msk [vmem:[%s929 + $0xa0] sm:$0xf] %vm1298, %v1752
  %v1934 = vld [vmem:[%s929 + $0xa4] sm:$0xf]
  %v1935 = vsel %vm1857, %v1754, %v1934
  %1936 = vst [vmem:[%s929 + $0xa4] sm:$0xf] %v1935
  %1937 = vst.msk [vmem:[%s929 + $0xa8] sm:$0xf] %vm1298, %v1756
  %v1938 = vld [vmem:[%s929 + $0xac] sm:$0xf]
  %v1939 = vsel %vm1857, %v1758, %v1938
  %1940 = vst [vmem:[%s929 + $0xac] sm:$0xf] %v1939
  %1941 = vst.msk [vmem:[%s929 + $0xb0] sm:$0xf] %vm1298, %v1760
  %v1942 = vld [vmem:[%s929 + $0xb4] sm:$0xf]
  %v1943 = vsel %vm1857, %v1762, %v1942
  %1944 = vst [vmem:[%s929 + $0xb4] sm:$0xf] %v1943
  %1945 = vst.msk [vmem:[%s929 + $0xb8] sm:$0xf] %vm1298, %v1764
  %v1946 = vld [vmem:[%s929 + $0xbc] sm:$0xf]
  %v1947 = vsel %vm1857, %v1766, %v1946
  %1948 = vst [vmem:[%s929 + $0xbc] sm:$0xf] %v1947
  %1949 = vst.msk [vmem:[%s929 + $0xc0] sm:$0xf] %vm1298, %v1768
  %v1950 = vld [vmem:[%s929 + $0xc4] sm:$0xf]
  %v1951 = vsel %vm1857, %v1770, %v1950
  %1952 = vst [vmem:[%s929 + $0xc4] sm:$0xf] %v1951
  %1953 = vst.msk [vmem:[%s929 + $0xc8] sm:$0xf] %vm1298, %v1772
  %v1954 = vld [vmem:[%s929 + $0xcc] sm:$0xf]
  %v1955 = vsel %vm1857, %v1774, %v1954
  %1956 = vst [vmem:[%s929 + $0xcc] sm:$0xf] %v1955
  %1957 = vst.msk [vmem:[%s929 + $0xd0] sm:$0xf] %vm1298, %v1776
  %v1958 = vld [vmem:[%s929 + $0xd4] sm:$0xf]
  %v1959 = vsel %vm1857, %v1778, %v1958
  %1960 = vst [vmem:[%s929 + $0xd4] sm:$0xf] %v1959
  %1961 = vst.msk [vmem:[%s929 + $0xd8] sm:$0xf] %vm1298, %v1780
  %v1962 = vld [vmem:[%s929 + $0xdc] sm:$0xf]
  %v1963 = vsel %vm1857, %v1782, %v1962
  %1964 = vst [vmem:[%s929 + $0xdc] sm:$0xf] %v1963
  %1965 = vst.msk [vmem:[%s929 + $0xe0] sm:$0xf] %vm1298, %v1784
  %v1966 = vld [vmem:[%s929 + $0xe4] sm:$0xf]
  %v1967 = vsel %vm1857, %v1786, %v1966
  %1968 = vst [vmem:[%s929 + $0xe4] sm:$0xf] %v1967
  %1969 = vst.msk [vmem:[%s929 + $0xe8] sm:$0xf] %vm1298, %v1788
  %v1970 = vld [vmem:[%s929 + $0xec] sm:$0xf]
  %v1971 = vsel %vm1857, %v1790, %v1970
  %1972 = vst [vmem:[%s929 + $0xec] sm:$0xf] %v1971
  %1973 = vst.msk [vmem:[%s929 + $0xf0] sm:$0xf] %vm1298, %v1792
  %v1974 = vld [vmem:[%s929 + $0xf4] sm:$0xf]
  %v1975 = vsel %vm1857, %v1794, %v1974
  %1976 = vst [vmem:[%s929 + $0xf4] sm:$0xf] %v1975
  %vm1977 = vcmask 254144
  %vm1978 = vmand %vm1977, %vm139
  %v1979 = vld [vmem:[#allocation2] sm:$0x1]
  %v1980 = vsel %vm1978, 0, %v1979
  %1981 = vst [vmem:[#allocation2] sm:$0x1] %v1980
  %v1982 = vld [vmem:[#allocation2 + $0x8] sm:$0x1]
  %v1983 = vsel %vm1978, 0, %v1982
  %1984 = vst [vmem:[#allocation2 + $0x8] sm:$0x1] %v1983
  %v1985 = vld [vmem:[#allocation2 + $0x10] sm:$0x1]
  %v1986 = vsel %vm1978, 0, %v1985
  %1987 = vst [vmem:[#allocation2 + $0x10] sm:$0x1] %v1986
  %v1988 = vld [vmem:[#allocation2 + $0x18] sm:$0x1]
  %v1989 = vsel %vm1978, 0, %v1988
  %1990 = vst [vmem:[#allocation2 + $0x18] sm:$0x1] %v1989
  %v1991 = vld [vmem:[#allocation2 + $0x20] sm:$0x1]
  %v1992 = vsel %vm1978, 0, %v1991
  %1993 = vst [vmem:[#allocation2 + $0x20] sm:$0x1] %v1992
  %v1994 = vld [vmem:[#allocation2 + $0x28] sm:$0x1]
  %v1995 = vsel %vm1978, 0, %v1994
  %1996 = vst [vmem:[#allocation2 + $0x28] sm:$0x1] %v1995
  %v1997 = vld [vmem:[#allocation2 + $0x30] sm:$0x1]
  %v1998 = vsel %vm1978, 0, %v1997
  %1999 = vst [vmem:[#allocation2 + $0x30] sm:$0x1] %v1998
  %v2000 = vld [vmem:[#allocation2 + $0x38] sm:$0x1]
  %v2001 = vsel %vm1978, 0, %v2000
  %2002 = vst [vmem:[#allocation2 + $0x38] sm:$0x1] %v2001
  %v2003 = vld [vmem:[#allocation2 + $0x40] sm:$0x1]
  %v2004 = vsel %vm1978, 0, %v2003
  %2005 = vst [vmem:[#allocation2 + $0x40] sm:$0x1] %v2004
  %v2006 = vld [vmem:[#allocation2 + $0x48] sm:$0x1]
  %v2007 = vsel %vm1978, 0, %v2006
  %2008 = vst [vmem:[#allocation2 + $0x48] sm:$0x1] %v2007
  %v2009 = vld [vmem:[#allocation2 + $0x50] sm:$0x1]
  %v2010 = vsel %vm1978, 0, %v2009
  %2011 = vst [vmem:[#allocation2 + $0x50] sm:$0x1] %v2010
  %v2012 = vld [vmem:[#allocation2 + $0x58] sm:$0x1]
  %v2013 = vsel %vm1978, 0, %v2012
  %2014 = vst [vmem:[#allocation2 + $0x58] sm:$0x1] %v2013
  %v2015 = vld [vmem:[#allocation2 + $0x60] sm:$0x1]
  %v2016 = vsel %vm1978, 0, %v2015
  %2017 = vst [vmem:[#allocation2 + $0x60] sm:$0x1] %v2016
  %v2018 = vld [vmem:[#allocation2 + $0x68] sm:$0x1]
  %v2019 = vsel %vm1978, 0, %v2018
  %2020 = vst [vmem:[#allocation2 + $0x68] sm:$0x1] %v2019
  %v2021 = vld [vmem:[#allocation2 + $0x70] sm:$0x1]
  %v2022 = vsel %vm1978, 0, %v2021
  %2023 = vst [vmem:[#allocation2 + $0x70] sm:$0x1] %v2022
  %v2024 = vld [vmem:[#allocation2 + $0x78] sm:$0x1]
  %v2025 = vsel %vm1978, 0, %v2024
  %2026 = vst [vmem:[#allocation2 + $0x78] sm:$0x1] %v2025
  %v2027 = vld [vmem:[#allocation2 + $0x80] sm:$0x1]
  %v2028 = vsel %vm1978, 0, %v2027
  %2029 = vst [vmem:[#allocation2 + $0x80] sm:$0x1] %v2028
  %v2030 = vld [vmem:[#allocation2 + $0x88] sm:$0x1]
  %v2031 = vsel %vm1978, 0, %v2030
  %2032 = vst [vmem:[#allocation2 + $0x88] sm:$0x1] %v2031
  %v2033 = vld [vmem:[#allocation2 + $0x90] sm:$0x1]
  %v2034 = vsel %vm1978, 0, %v2033
  %2035 = vst [vmem:[#allocation2 + $0x90] sm:$0x1] %v2034
  %v2036 = vld [vmem:[#allocation2 + $0x98] sm:$0x1]
  %v2037 = vsel %vm1978, 0, %v2036
  %2038 = vst [vmem:[#allocation2 + $0x98] sm:$0x1] %v2037
  %v2039 = vld [vmem:[#allocation2 + $0xa0] sm:$0x1]
  %v2040 = vsel %vm1978, 0, %v2039
  %2041 = vst [vmem:[#allocation2 + $0xa0] sm:$0x1] %v2040
  %v2042 = vld [vmem:[#allocation2 + $0xa8] sm:$0x1]
  %v2043 = vsel %vm1978, 0, %v2042
  %2044 = vst [vmem:[#allocation2 + $0xa8] sm:$0x1] %v2043
  %v2045 = vld [vmem:[#allocation2 + $0xb0] sm:$0x1]
  %v2046 = vsel %vm1978, 0, %v2045
  %2047 = vst [vmem:[#allocation2 + $0xb0] sm:$0x1] %v2046
  %v2048 = vld [vmem:[#allocation2 + $0xb8] sm:$0x1]
  %v2049 = vsel %vm1978, 0, %v2048
  %2050 = vst [vmem:[#allocation2 + $0xb8] sm:$0x1] %v2049
  %v2051 = vld [vmem:[#allocation2 + $0xc0] sm:$0x1]
  %v2052 = vsel %vm1978, 0, %v2051
  %2053 = vst [vmem:[#allocation2 + $0xc0] sm:$0x1] %v2052
  %v2054 = vld [vmem:[#allocation2 + $0xc8] sm:$0x1]
  %v2055 = vsel %vm1978, 0, %v2054
  %2056 = vst [vmem:[#allocation2 + $0xc8] sm:$0x1] %v2055
  %v2057 = vld [vmem:[#allocation2 + $0xd0] sm:$0x1]
  %v2058 = vsel %vm1978, 0, %v2057
  %2059 = vst [vmem:[#allocation2 + $0xd0] sm:$0x1] %v2058
  %v2060 = vld [vmem:[#allocation2 + $0xd8] sm:$0x1]
  %v2061 = vsel %vm1978, 0, %v2060
  %2062 = vst [vmem:[#allocation2 + $0xd8] sm:$0x1] %v2061
  %v2063 = vld [vmem:[#allocation2 + $0xe0] sm:$0x1]
  %v2064 = vsel %vm1978, 0, %v2063
  %2065 = vst [vmem:[#allocation2 + $0xe0] sm:$0x1] %v2064
  %v2066 = vld [vmem:[#allocation2 + $0xe8] sm:$0x1]
  %v2067 = vsel %vm1978, 0, %v2066
  %2068 = vst [vmem:[#allocation2 + $0xe8] sm:$0x1] %v2067
  %v2069 = vld [vmem:[#allocation2 + $0xf0] sm:$0x1]
  %v2070 = vsel %vm1978, 0, %v2069
  %2071 = vst [vmem:[#allocation2 + $0xf0] sm:$0x1] %v2070
  %v2072 = vld [vmem:[#allocation2 + $0xf8] sm:$0x1]
  %v2073 = vsel %vm1978, 0, %v2072
  %2074 = vst [vmem:[#allocation2 + $0xf8] sm:$0x1] %v2073
  %v2077 = vunpack.c.l.b16 %v116
  %v2078 = vunpack.c.h.b16 %v116
  %v2079 = vunpack.c.l.b16 %v132
  %v2080 = vunpack.c.h.b16 %v132
  %v2081 = vpack.c.b16 %v2077, %v2077
  %v2082 = vpack.c.b16 %v2078, %v2078
  %v2083 = vpack.c.b16 %v2079, %v2079
  %v2084 = vpack.c.b16 %v2080, %v2080
  %v2086 = vshrl.u32 %v2081, 16
  %v2088 = vrot.slane %v2086, 7
  %v2089 = vshll.u32 %v2081, 16
  %v2091 = vor.u32 %v2088, %v2089
  %v2092 = vrot.slane %v2088, 4
  %v2094 = vshrl.u32 %v2082, 16
  %v2096 = vrot.slane %v2094, 7
  %v2097 = vshll.u32 %v2082, 16
  %v2099 = vor.u32 %v2096, %v2097
  %v2100 = vsel %vm388, %v2092, %v2099
  %v2102 = vshrl.u32 %v2083, 16
  %v2104 = vrot.slane %v2102, 7
  %v2105 = vshll.u32 %v2083, 16
  %v2107 = vor.u32 %v2104, %v2105
  %v2108 = vrot.slane %v2104, 4
  %v2110 = vshrl.u32 %v2084, 16
  %v2112 = vrot.slane %v2110, 7
  %v2113 = vshll.u32 %v2084, 16
  %v2115 = vor.u32 %v2112, %v2113
  %v2116 = vsel %vm388, %v2108, %v2115
  %2117 = vrot.lane.b32.xlu0 %v395, 24
  %v2118 = vpop.permute.xlu0 %2117
  %2119 = vrot.lane.b32.xlu0 %v404, 24
  %v2120 = vpop.permute.xlu0 %2119
  %2121 = vrot.lane.b32.xlu0 %v411, 24
  %v2122 = vpop.permute.xlu0 %2121
  %2123 = vrot.lane.b32.xlu0 %v420, 24
  %v2124 = vpop.permute.xlu0 %2123
  %2125 = vrot.lane.b32.xlu0 %v427, 24
  %v2126 = vpop.permute.xlu0 %2125
  %2127 = vrot.lane.b32.xlu0 %v436, 24
  %v2128 = vpop.permute.xlu0 %2127
  %2129 = vrot.lane.b32.xlu0 %v443, 24
  %v2130 = vpop.permute.xlu0 %2129
  %2131 = vrot.lane.b32.xlu0 %v452, 24
  %v2132 = vpop.permute.xlu0 %2131
  %2133 = vrot.lane.b32.xlu0 %v459, 24
  %v2134 = vpop.permute.xlu0 %2133
  %2135 = vrot.lane.b32.xlu0 %v468, 24
  %v2136 = vpop.permute.xlu0 %2135
  %2137 = vrot.lane.b32.xlu0 %v475, 24
  %v2138 = vpop.permute.xlu0 %2137
  %2139 = vrot.lane.b32.xlu0 %v484, 24
  %v2140 = vpop.permute.xlu0 %2139
  %2141 = vrot.lane.b32.xlu0 %v491, 24
  %v2142 = vpop.permute.xlu0 %2141
  %2143 = vrot.lane.b32.xlu0 %v500, 24
  %v2144 = vpop.permute.xlu0 %2143
  %2145 = vrot.lane.b32.xlu0 %v507, 24
  %v2146 = vpop.permute.xlu0 %2145
  %2147 = vrot.lane.b32.xlu0 %v516, 24
  %v2148 = vpop.permute.xlu0 %2147
  %2149 = vrot.lane.b32.xlu0 %v523, 24
  %v2150 = vpop.permute.xlu0 %2149
  %2151 = vrot.lane.b32.xlu0 %v532, 24
  %v2152 = vpop.permute.xlu0 %2151
  %2153 = vrot.lane.b32.xlu0 %v539, 24
  %v2154 = vpop.permute.xlu0 %2153
  %2155 = vrot.lane.b32.xlu0 %v548, 24
  %v2156 = vpop.permute.xlu0 %2155
  %2157 = vrot.lane.b32.xlu0 %v555, 24
  %v2158 = vpop.permute.xlu0 %2157
  %2159 = vrot.lane.b32.xlu0 %v564, 24
  %v2160 = vpop.permute.xlu0 %2159
  %2161 = vrot.lane.b32.xlu0 %v571, 24
  %v2162 = vpop.permute.xlu0 %2161
  %2163 = vrot.lane.b32.xlu0 %v580, 24
  %v2164 = vpop.permute.xlu0 %2163
  %2165 = vrot.lane.b32.xlu0 %v587, 24
  %v2166 = vpop.permute.xlu0 %2165
  %2167 = vrot.lane.b32.xlu0 %v596, 24
  %v2168 = vpop.permute.xlu0 %2167
  %2169 = vrot.lane.b32.xlu0 %v603, 24
  %v2170 = vpop.permute.xlu0 %2169
  %2171 = vrot.lane.b32.xlu0 %v612, 24
  %v2172 = vpop.permute.xlu0 %2171
  %2173 = vrot.lane.b32.xlu0 %v619, 24
  %v2174 = vpop.permute.xlu0 %2173
  %2175 = vrot.lane.b32.xlu0 %v628, 24
  %v2176 = vpop.permute.xlu0 %2175
  %2177 = vrot.lane.b32.xlu0 %v2091, 24
  %v2178 = vpop.permute.xlu0 %2177
  %2179 = vrot.lane.b32.xlu0 %v2100, 24
  %v2180 = vpop.permute.xlu0 %2179
  %2181 = vrot.lane.b32.xlu0 %v635, 24
  %v2182 = vpop.permute.xlu0 %2181
  %2183 = vrot.lane.b32.xlu0 %v644, 24
  %v2184 = vpop.permute.xlu0 %2183
  %2185 = vrot.lane.b32.xlu0 %v651, 24
  %v2186 = vpop.permute.xlu0 %2185
  %2187 = vrot.lane.b32.xlu0 %v660, 24
  %v2188 = vpop.permute.xlu0 %2187
  %2189 = vrot.lane.b32.xlu0 %v667, 24
  %v2190 = vpop.permute.xlu0 %2189
  %2191 = vrot.lane.b32.xlu0 %v676, 24
  %v2192 = vpop.permute.xlu0 %2191
  %2193 = vrot.lane.b32.xlu0 %v683, 24
  %v2194 = vpop.permute.xlu0 %2193
  %2195 = vrot.lane.b32.xlu0 %v692, 24
  %v2196 = vpop.permute.xlu0 %2195
  %2197 = vrot.lane.b32.xlu0 %v699, 24
  %v2198 = vpop.permute.xlu0 %2197
  %2199 = vrot.lane.b32.xlu0 %v708, 24
  %v2200 = vpop.permute.xlu0 %2199
  %2201 = vrot.lane.b32.xlu0 %v715, 24
  %v2202 = vpop.permute.xlu0 %2201
  %2203 = vrot.lane.b32.xlu0 %v724, 24
  %v2204 = vpop.permute.xlu0 %2203
  %2205 = vrot.lane.b32.xlu0 %v731, 24
  %v2206 = vpop.permute.xlu0 %2205
  %2207 = vrot.lane.b32.xlu0 %v740, 24
  %v2208 = vpop.permute.xlu0 %2207
  %2209 = vrot.lane.b32.xlu0 %v747, 24
  %v2210 = vpop.permute.xlu0 %2209
  %2211 = vrot.lane.b32.xlu0 %v756, 24
  %v2212 = vpop.permute.xlu0 %2211
  %2213 = vrot.lane.b32.xlu0 %v763, 24
  %v2214 = vpop.permute.xlu0 %2213
  %2215 = vrot.lane.b32.xlu0 %v772, 24
  %v2216 = vpop.permute.xlu0 %2215
  %2217 = vrot.lane.b32.xlu0 %v779, 24
  %v2218 = vpop.permute.xlu0 %2217
  %2219 = vrot.lane.b32.xlu0 %v788, 24
  %v2220 = vpop.permute.xlu0 %2219
  %2221 = vrot.lane.b32.xlu0 %v795, 24
  %v2222 = vpop.permute.xlu0 %2221
  %2223 = vrot.lane.b32.xlu0 %v804, 24
  %v2224 = vpop.permute.xlu0 %2223
  %2225 = vrot.lane.b32.xlu0 %v811, 24
  %v2226 = vpop.permute.xlu0 %2225
  %2227 = vrot.lane.b32.xlu0 %v820, 24
  %v2228 = vpop.permute.xlu0 %2227
  %2229 = vrot.lane.b32.xlu0 %v827, 24
  %v2230 = vpop.permute.xlu0 %2229
  %2231 = vrot.lane.b32.xlu0 %v836, 24
  %v2232 = vpop.permute.xlu0 %2231
  %2233 = vrot.lane.b32.xlu0 %v843, 24
  %v2234 = vpop.permute.xlu0 %2233
  %2235 = vrot.lane.b32.xlu0 %v852, 24
  %v2236 = vpop.permute.xlu0 %2235
  %2237 = vrot.lane.b32.xlu0 %v859, 24
  %v2238 = vpop.permute.xlu0 %2237
  %2239 = vrot.lane.b32.xlu0 %v868, 24
  %v2240 = vpop.permute.xlu0 %2239
  %2241 = vrot.lane.b32.xlu0 %v2107, 24
  %v2242 = vpop.permute.xlu0 %2241
  %2243 = vrot.lane.b32.xlu0 %v2116, 24
  %v2244 = vpop.permute.xlu0 %2243
  %vm2309 = vcmask 257216
  %vm2310 = vmand %vm2309, %vm931
  %v2311 = vld [vmem:[#allocation2] sm:$0xf]
  %v2312 = vsel %vm2310, %v2118, %v2311
  %2313 = vst [vmem:[#allocation2] sm:$0xf] %v2312
  %vm2314 = vcmask 257216
  %2315 = vst.msk [vmem:[#allocation2 + $0x4] sm:$0xf] %vm2314, %v2120
  %v2316 = vld [vmem:[#allocation2 + $0x8] sm:$0xf]
  %v2317 = vsel %vm2310, %v2122, %v2316
  %2318 = vst [vmem:[#allocation2 + $0x8] sm:$0xf] %v2317
  %2319 = vst.msk [vmem:[#allocation2 + $0xc] sm:$0xf] %vm2314, %v2124
  %v2320 = vld [vmem:[#allocation2 + $0x10] sm:$0xf]
  %v2321 = vsel %vm2310, %v2126, %v2320
  %2322 = vst [vmem:[#allocation2 + $0x10] sm:$0xf] %v2321
  %2323 = vst.msk [vmem:[#allocation2 + $0x14] sm:$0xf] %vm2314, %v2128
  %v2324 = vld [vmem:[#allocation2 + $0x18] sm:$0xf]
  %v2325 = vsel %vm2310, %v2130, %v2324
  %2326 = vst [vmem:[#allocation2 + $0x18] sm:$0xf] %v2325
  %2327 = vst.msk [vmem:[#allocation2 + $0x1c] sm:$0xf] %vm2314, %v2132
  %v2328 = vld [vmem:[#allocation2 + $0x20] sm:$0xf]
  %v2329 = vsel %vm2310, %v2134, %v2328
  %2330 = vst [vmem:[#allocation2 + $0x20] sm:$0xf] %v2329
  %2331 = vst.msk [vmem:[#allocation2 + $0x24] sm:$0xf] %vm2314, %v2136
  %v2332 = vld [vmem:[#allocation2 + $0x28] sm:$0xf]
  %v2333 = vsel %vm2310, %v2138, %v2332
  %2334 = vst [vmem:[#allocation2 + $0x28] sm:$0xf] %v2333
  %2335 = vst.msk [vmem:[#allocation2 + $0x2c] sm:$0xf] %vm2314, %v2140
  %v2336 = vld [vmem:[#allocation2 + $0x30] sm:$0xf]
  %v2337 = vsel %vm2310, %v2142, %v2336
  %2338 = vst [vmem:[#allocation2 + $0x30] sm:$0xf] %v2337
  %2339 = vst.msk [vmem:[#allocation2 + $0x34] sm:$0xf] %vm2314, %v2144
  %v2340 = vld [vmem:[#allocation2 + $0x38] sm:$0xf]
  %v2341 = vsel %vm2310, %v2146, %v2340
  %2342 = vst [vmem:[#allocation2 + $0x38] sm:$0xf] %v2341
  %2343 = vst.msk [vmem:[#allocation2 + $0x3c] sm:$0xf] %vm2314, %v2148
  %v2344 = vld [vmem:[#allocation2 + $0x40] sm:$0xf]
  %v2345 = vsel %vm2310, %v2150, %v2344
  %2346 = vst [vmem:[#allocation2 + $0x40] sm:$0xf] %v2345
  %2347 = vst.msk [vmem:[#allocation2 + $0x44] sm:$0xf] %vm2314, %v2152
  %v2348 = vld [vmem:[#allocation2 + $0x48] sm:$0xf]
  %v2349 = vsel %vm2310, %v2154, %v2348
  %2350 = vst [vmem:[#allocation2 + $0x48] sm:$0xf] %v2349
  %2351 = vst.msk [vmem:[#allocation2 + $0x4c] sm:$0xf] %vm2314, %v2156
  %v2352 = vld [vmem:[#allocation2 + $0x50] sm:$0xf]
  %v2353 = vsel %vm2310, %v2158, %v2352
  %2354 = vst [vmem:[#allocation2 + $0x50] sm:$0xf] %v2353
  %2355 = vst.msk [vmem:[#allocation2 + $0x54] sm:$0xf] %vm2314, %v2160
  %v2356 = vld [vmem:[#allocation2 + $0x58] sm:$0xf]
  %v2357 = vsel %vm2310, %v2162, %v2356
  %2358 = vst [vmem:[#allocation2 + $0x58] sm:$0xf] %v2357
  %2359 = vst.msk [vmem:[#allocation2 + $0x5c] sm:$0xf] %vm2314, %v2164
  %v2360 = vld [vmem:[#allocation2 + $0x60] sm:$0xf]
  %v2361 = vsel %vm2310, %v2166, %v2360
  %2362 = vst [vmem:[#allocation2 + $0x60] sm:$0xf] %v2361
  %2363 = vst.msk [vmem:[#allocation2 + $0x64] sm:$0xf] %vm2314, %v2168
  %v2364 = vld [vmem:[#allocation2 + $0x68] sm:$0xf]
  %v2365 = vsel %vm2310, %v2170, %v2364
  %2366 = vst [vmem:[#allocation2 + $0x68] sm:$0xf] %v2365
  %2367 = vst.msk [vmem:[#allocation2 + $0x6c] sm:$0xf] %vm2314, %v2172
  %v2368 = vld [vmem:[#allocation2 + $0x70] sm:$0xf]
  %v2369 = vsel %vm2310, %v2174, %v2368
  %2370 = vst [vmem:[#allocation2 + $0x70] sm:$0xf] %v2369
  %2371 = vst.msk [vmem:[#allocation2 + $0x74] sm:$0xf] %vm2314, %v2176
  %v2372 = vld [vmem:[#allocation2 + $0x78] sm:$0xf]
  %v2373 = vsel %vm2310, %v2178, %v2372
  %2374 = vst [vmem:[#allocation2 + $0x78] sm:$0xf] %v2373
  %2375 = vst.msk [vmem:[#allocation2 + $0x7c] sm:$0xf] %vm2314, %v2180
  %v2376 = vld [vmem:[#allocation2 + $0x80] sm:$0xf]
  %v2377 = vsel %vm2310, %v2182, %v2376
  %2378 = vst [vmem:[#allocation2 + $0x80] sm:$0xf] %v2377
  %2379 = vst.msk [vmem:[#allocation2 + $0x84] sm:$0xf] %vm2314, %v2184
  %v2380 = vld [vmem:[#allocation2 + $0x88] sm:$0xf]
  %v2381 = vsel %vm2310, %v2186, %v2380
  %2382 = vst [vmem:[#allocation2 + $0x88] sm:$0xf] %v2381
  %2383 = vst.msk [vmem:[#allocation2 + $0x8c] sm:$0xf] %vm2314, %v2188
  %v2384 = vld [vmem:[#allocation2 + $0x90] sm:$0xf]
  %v2385 = vsel %vm2310, %v2190, %v2384
  %2386 = vst [vmem:[#allocation2 + $0x90] sm:$0xf] %v2385
  %2387 = vst.msk [vmem:[#allocation2 + $0x94] sm:$0xf] %vm2314, %v2192
  %v2388 = vld [vmem:[#allocation2 + $0x98] sm:$0xf]
  %v2389 = vsel %vm2310, %v2194, %v2388
  %2390 = vst [vmem:[#allocation2 + $0x98] sm:$0xf] %v2389
  %2391 = vst.msk [vmem:[#allocation2 + $0x9c] sm:$0xf] %vm2314, %v2196
  %v2392 = vld [vmem:[#allocation2 + $0xa0] sm:$0xf]
  %v2393 = vsel %vm2310, %v2198, %v2392
  %2394 = vst [vmem:[#allocation2 + $0xa0] sm:$0xf] %v2393
  %2395 = vst.msk [vmem:[#allocation2 + $0xa4] sm:$0xf] %vm2314, %v2200
  %v2396 = vld [vmem:[#allocation2 + $0xa8] sm:$0xf]
  %v2397 = vsel %vm2310, %v2202, %v2396
  %2398 = vst [vmem:[#allocation2 + $0xa8] sm:$0xf] %v2397
  %2399 = vst.msk [vmem:[#allocation2 + $0xac] sm:$0xf] %vm2314, %v2204
  %v2400 = vld [vmem:[#allocation2 + $0xb0] sm:$0xf]
  %v2401 = vsel %vm2310, %v2206, %v2400
  %2402 = vst [vmem:[#allocation2 + $0xb0] sm:$0xf] %v2401
  %2403 = vst.msk [vmem:[#allocation2 + $0xb4] sm:$0xf] %vm2314, %v2208
  %v2404 = vld [vmem:[#allocation2 + $0xb8] sm:$0xf]
  %v2405 = vsel %vm2310, %v2210, %v2404
  %2406 = vst [vmem:[#allocation2 + $0xb8] sm:$0xf] %v2405
  %2407 = vst.msk [vmem:[#allocation2 + $0xbc] sm:$0xf] %vm2314, %v2212
  %v2408 = vld [vmem:[#allocation2 + $0xc0] sm:$0xf]
  %v2409 = vsel %vm2310, %v2214, %v2408
  %2410 = vst [vmem:[#allocation2 + $0xc0] sm:$0xf] %v2409
  %2411 = vst.msk [vmem:[#allocation2 + $0xc4] sm:$0xf] %vm2314, %v2216
  %v2412 = vld [vmem:[#allocation2 + $0xc8] sm:$0xf]
  %v2413 = vsel %vm2310, %v2218, %v2412
  %2414 = vst [vmem:[#allocation2 + $0xc8] sm:$0xf] %v2413
  %2415 = vst.msk [vmem:[#allocation2 + $0xcc] sm:$0xf] %vm2314, %v2220
  %v2416 = vld [vmem:[#allocation2 + $0xd0] sm:$0xf]
  %v2417 = vsel %vm2310, %v2222, %v2416
  %2418 = vst [vmem:[#allocation2 + $0xd0] sm:$0xf] %v2417
  %2419 = vst.msk [vmem:[#allocation2 + $0xd4] sm:$0xf] %vm2314, %v2224
  %v2420 = vld [vmem:[#allocation2 + $0xd8] sm:$0xf]
  %v2421 = vsel %vm2310, %v2226, %v2420
  %2422 = vst [vmem:[#allocation2 + $0xd8] sm:$0xf] %v2421
  %2423 = vst.msk [vmem:[#allocation2 + $0xdc] sm:$0xf] %vm2314, %v2228
  %v2424 = vld [vmem:[#allocation2 + $0xe0] sm:$0xf]
  %v2425 = vsel %vm2310, %v2230, %v2424
  %2426 = vst [vmem:[#allocation2 + $0xe0] sm:$0xf] %v2425
  %2427 = vst.msk [vmem:[#allocation2 + $0xe4] sm:$0xf] %vm2314, %v2232
  %v2428 = vld [vmem:[#allocation2 + $0xe8] sm:$0xf]
  %v2429 = vsel %vm2310, %v2234, %v2428
  %2430 = vst [vmem:[#allocation2 + $0xe8] sm:$0xf] %v2429
  %2431 = vst.msk [vmem:[#allocation2 + $0xec] sm:$0xf] %vm2314, %v2236
  %v2432 = vld [vmem:[#allocation2 + $0xf0] sm:$0xf]
  %v2433 = vsel %vm2310, %v2238, %v2432
  %2434 = vst [vmem:[#allocation2 + $0xf0] sm:$0xf] %v2433
  %2435 = vst.msk [vmem:[#allocation2 + $0xf4] sm:$0xf] %vm2314, %v2240
  %v2436 = vld [vmem:[#allocation2 + $0xf8] sm:$0xf]
  %v2437 = vsel %vm2310, %v2242, %v2436
  %2438 = vst [vmem:[#allocation2 + $0xf8] sm:$0xf] %v2437
  %2439 = vst.msk [vmem:[#allocation2 + $0xfc] sm:$0xf] %vm2314, %v2244
  %2440 = vrot.lane.b32.xlu0 %v327, 32
  %v2441 = vpop.permute.xlu0 %2440
  %2442 = vrot.lane.b32.xlu0 %v328, 32
  %v2443 = vpop.permute.xlu0 %2442
  %2444 = vrot.lane.b32.xlu0 %v329, 32
  %v2445 = vpop.permute.xlu0 %2444
  %2446 = vrot.lane.b32.xlu0 %v330, 32
  %v2447 = vpop.permute.xlu0 %2446
  %2448 = vrot.lane.b32.xlu0 %v331, 32
  %v2449 = vpop.permute.xlu0 %2448
  %2450 = vrot.lane.b32.xlu0 %v332, 32
  %v2451 = vpop.permute.xlu0 %2450
  %2452 = vrot.lane.b32.xlu0 %v333, 32
  %v2453 = vpop.permute.xlu0 %2452
  %2454 = vrot.lane.b32.xlu0 %v334, 32
  %v2455 = vpop.permute.xlu0 %2454
  %2456 = vrot.lane.b32.xlu0 %v335, 32
  %v2457 = vpop.permute.xlu0 %2456
  %2458 = vrot.lane.b32.xlu0 %v336, 32
  %v2459 = vpop.permute.xlu0 %2458
  %2460 = vrot.lane.b32.xlu0 %v337, 32
  %v2461 = vpop.permute.xlu0 %2460
  %2462 = vrot.lane.b32.xlu0 %v338, 32
  %v2463 = vpop.permute.xlu0 %2462
  %2464 = vrot.lane.b32.xlu0 %v339, 32
  %v2465 = vpop.permute.xlu0 %2464
  %2466 = vrot.lane.b32.xlu0 %v340, 32
  %v2467 = vpop.permute.xlu0 %2466
  %2468 = vrot.lane.b32.xlu0 %v341, 32
  %v2469 = vpop.permute.xlu0 %2468
  %2470 = vrot.lane.b32.xlu0 %v342, 32
  %v2471 = vpop.permute.xlu0 %2470
  %2472 = vrot.lane.b32.xlu0 %v343, 32
  %v2473 = vpop.permute.xlu0 %2472
  %2474 = vrot.lane.b32.xlu0 %v344, 32
  %v2475 = vpop.permute.xlu0 %2474
  %2476 = vrot.lane.b32.xlu0 %v345, 32
  %v2477 = vpop.permute.xlu0 %2476
  %2478 = vrot.lane.b32.xlu0 %v346, 32
  %v2479 = vpop.permute.xlu0 %2478
  %2480 = vrot.lane.b32.xlu0 %v347, 32
  %v2481 = vpop.permute.xlu0 %2480
  %2482 = vrot.lane.b32.xlu0 %v348, 32
  %v2483 = vpop.permute.xlu0 %2482
  %2484 = vrot.lane.b32.xlu0 %v349, 32
  %v2485 = vpop.permute.xlu0 %2484
  %2486 = vrot.lane.b32.xlu0 %v350, 32
  %v2487 = vpop.permute.xlu0 %2486
  %2488 = vrot.lane.b32.xlu0 %v351, 32
  %v2489 = vpop.permute.xlu0 %2488
  %2490 = vrot.lane.b32.xlu0 %v352, 32
  %v2491 = vpop.permute.xlu0 %2490
  %2492 = vrot.lane.b32.xlu0 %v353, 32
  %v2493 = vpop.permute.xlu0 %2492
  %2494 = vrot.lane.b32.xlu0 %v354, 32
  %v2495 = vpop.permute.xlu0 %2494
  %2496 = vrot.lane.b32.xlu0 %v355, 32
  %v2497 = vpop.permute.xlu0 %2496
  %2498 = vrot.lane.b32.xlu0 %v356, 32
  %v2499 = vpop.permute.xlu0 %2498
  %2500 = vrot.lane.b32.xlu0 %v2081, 32
  %v2501 = vpop.permute.xlu0 %2500
  %2502 = vrot.lane.b32.xlu0 %v2082, 32
  %v2503 = vpop.permute.xlu0 %2502
  %2504 = vrot.lane.b32.xlu0 %v357, 32
  %v2505 = vpop.permute.xlu0 %2504
  %2506 = vrot.lane.b32.xlu0 %v358, 32
  %v2507 = vpop.permute.xlu0 %2506
  %2508 = vrot.lane.b32.xlu0 %v359, 32
  %v2509 = vpop.permute.xlu0 %2508
  %2510 = vrot.lane.b32.xlu0 %v360, 32
  %v2511 = vpop.permute.xlu0 %2510
  %2512 = vrot.lane.b32.xlu0 %v361, 32
  %v2513 = vpop.permute.xlu0 %2512
  %2514 = vrot.lane.b32.xlu0 %v362, 32
  %v2515 = vpop.permute.xlu0 %2514
  %2516 = vrot.lane.b32.xlu0 %v363, 32
  %v2517 = vpop.permute.xlu0 %2516
  %2518 = vrot.lane.b32.xlu0 %v364, 32
  %v2519 = vpop.permute.xlu0 %2518
  %2520 = vrot.lane.b32.xlu0 %v365, 32
  %v2521 = vpop.permute.xlu0 %2520
  %2522 = vrot.lane.b32.xlu0 %v366, 32
  %v2523 = vpop.permute.xlu0 %2522
  %2524 = vrot.lane.b32.xlu0 %v367, 32
  %v2525 = vpop.permute.xlu0 %2524
  %2526 = vrot.lane.b32.xlu0 %v368, 32
  %v2527 = vpop.permute.xlu0 %2526
  %2528 = vrot.lane.b32.xlu0 %v369, 32
  %v2529 = vpop.permute.xlu0 %2528
  %2530 = vrot.lane.b32.xlu0 %v370, 32
  %v2531 = vpop.permute.xlu0 %2530
  %2532 = vrot.lane.b32.xlu0 %v371, 32
  %v2533 = vpop.permute.xlu0 %2532
  %2534 = vrot.lane.b32.xlu0 %v372, 32
  %v2535 = vpop.permute.xlu0 %2534
  %2536 = vrot.lane.b32.xlu0 %v373, 32
  %v2537 = vpop.permute.xlu0 %2536
  %2538 = vrot.lane.b32.xlu0 %v374, 32
  %v2539 = vpop.permute.xlu0 %2538
  %2540 = vrot.lane.b32.xlu0 %v375, 32
  %v2541 = vpop.permute.xlu0 %2540
  %2542 = vrot.lane.b32.xlu0 %v376, 32
  %v2543 = vpop.permute.xlu0 %2542
  %2544 = vrot.lane.b32.xlu0 %v377, 32
  %v2545 = vpop.permute.xlu0 %2544
  %2546 = vrot.lane.b32.xlu0 %v378, 32
  %v2547 = vpop.permute.xlu0 %2546
  %2548 = vrot.lane.b32.xlu0 %v379, 32
  %v2549 = vpop.permute.xlu0 %2548
  %2550 = vrot.lane.b32.xlu0 %v380, 32
  %v2551 = vpop.permute.xlu0 %2550
  %2552 = vrot.lane.b32.xlu0 %v381, 32
  %v2553 = vpop.permute.xlu0 %2552
  %2554 = vrot.lane.b32.xlu0 %v382, 32
  %v2555 = vpop.permute.xlu0 %2554
  %2556 = vrot.lane.b32.xlu0 %v383, 32
  %v2557 = vpop.permute.xlu0 %2556
  %2558 = vrot.lane.b32.xlu0 %v384, 32
  %v2559 = vpop.permute.xlu0 %2558
  %2560 = vrot.lane.b32.xlu0 %v385, 32
  %v2561 = vpop.permute.xlu0 %2560
  %2562 = vrot.lane.b32.xlu0 %v386, 32
  %v2563 = vpop.permute.xlu0 %2562
  %2564 = vrot.lane.b32.xlu0 %v2083, 32
  %v2565 = vpop.permute.xlu0 %2564
  %2566 = vrot.lane.b32.xlu0 %v2084, 32
  %v2567 = vpop.permute.xlu0 %2566
  %vm2632 = vcmask 322816
  %2633 = vst.msk [vmem:[#allocation2] sm:$0xf] %vm2632, %v2441
  %2634 = vst.msk [vmem:[#allocation2 + $0x4] sm:$0xf] %vm2632, %v2443
  %2635 = vst.msk [vmem:[#allocation2 + $0x8] sm:$0xf] %vm2632, %v2445
  %2636 = vst.msk [vmem:[#allocation2 + $0xc] sm:$0xf] %vm2632, %v2447
  %2637 = vst.msk [vmem:[#allocation2 + $0x10] sm:$0xf] %vm2632, %v2449
  %2638 = vst.msk [vmem:[#allocation2 + $0x14] sm:$0xf] %vm2632, %v2451
  %2639 = vst.msk [vmem:[#allocation2 + $0x18] sm:$0xf] %vm2632, %v2453
  %2640 = vst.msk [vmem:[#allocation2 + $0x1c] sm:$0xf] %vm2632, %v2455
  %2641 = vst.msk [vmem:[#allocation2 + $0x20] sm:$0xf] %vm2632, %v2457
  %2642 = vst.msk [vmem:[#allocation2 + $0x24] sm:$0xf] %vm2632, %v2459
  %2643 = vst.msk [vmem:[#allocation2 + $0x28] sm:$0xf] %vm2632, %v2461
  %2644 = vst.msk [vmem:[#allocation2 + $0x2c] sm:$0xf] %vm2632, %v2463
  %2645 = vst.msk [vmem:[#allocation2 + $0x30] sm:$0xf] %vm2632, %v2465
  %2646 = vst.msk [vmem:[#allocation2 + $0x34] sm:$0xf] %vm2632, %v2467
  %2647 = vst.msk [vmem:[#allocation2 + $0x38] sm:$0xf] %vm2632, %v2469
  %2648 = vst.msk [vmem:[#allocation2 + $0x3c] sm:$0xf] %vm2632, %v2471
  %2649 = vst.msk [vmem:[#allocation2 + $0x40] sm:$0xf] %vm2632, %v2473
  %2650 = vst.msk [vmem:[#allocation2 + $0x44] sm:$0xf] %vm2632, %v2475
  %2651 = vst.msk [vmem:[#allocation2 + $0x48] sm:$0xf] %vm2632, %v2477
  %2652 = vst.msk [vmem:[#allocation2 + $0x4c] sm:$0xf] %vm2632, %v2479
  %2653 = vst.msk [vmem:[#allocation2 + $0x50] sm:$0xf] %vm2632, %v2481
  %2654 = vst.msk [vmem:[#allocation2 + $0x54] sm:$0xf] %vm2632, %v2483
  %2655 = vst.msk [vmem:[#allocation2 + $0x58] sm:$0xf] %vm2632, %v2485
  %2656 = vst.msk [vmem:[#allocation2 + $0x5c] sm:$0xf] %vm2632, %v2487
  %2657 = vst.msk [vmem:[#allocation2 + $0x60] sm:$0xf] %vm2632, %v2489
  %2658 = vst.msk [vmem:[#allocation2 + $0x64] sm:$0xf] %vm2632, %v2491
  %2659 = vst.msk [vmem:[#allocation2 + $0x68] sm:$0xf] %vm2632, %v2493
  %2660 = vst.msk [vmem:[#allocation2 + $0x6c] sm:$0xf] %vm2632, %v2495
  %2661 = vst.msk [vmem:[#allocation2 + $0x70] sm:$0xf] %vm2632, %v2497
  %2662 = vst.msk [vmem:[#allocation2 + $0x74] sm:$0xf] %vm2632, %v2499
  %2663 = vst.msk [vmem:[#allocation2 + $0x78] sm:$0xf] %vm2632, %v2501
  %2664 = vst.msk [vmem:[#allocation2 + $0x7c] sm:$0xf] %vm2632, %v2503
  %2665 = vst.msk [vmem:[#allocation2 + $0x80] sm:$0xf] %vm2632, %v2505
  %2666 = vst.msk [vmem:[#allocation2 + $0x84] sm:$0xf] %vm2632, %v2507
  %2667 = vst.msk [vmem:[#allocation2 + $0x88] sm:$0xf] %vm2632, %v2509
  %2668 = vst.msk [vmem:[#allocation2 + $0x8c] sm:$0xf] %vm2632, %v2511
  %2669 = vst.msk [vmem:[#allocation2 + $0x90] sm:$0xf] %vm2632, %v2513
  %2670 = vst.msk [vmem:[#allocation2 + $0x94] sm:$0xf] %vm2632, %v2515
  %2671 = vst.msk [vmem:[#allocation2 + $0x98] sm:$0xf] %vm2632, %v2517
  %2672 = vst.msk [vmem:[#allocation2 + $0x9c] sm:$0xf] %vm2632, %v2519
  %2673 = vst.msk [vmem:[#allocation2 + $0xa0] sm:$0xf] %vm2632, %v2521
  %2674 = vst.msk [vmem:[#allocation2 + $0xa4] sm:$0xf] %vm2632, %v2523
  %2675 = vst.msk [vmem:[#allocation2 + $0xa8] sm:$0xf] %vm2632, %v2525
  %2676 = vst.msk [vmem:[#allocation2 + $0xac] sm:$0xf] %vm2632, %v2527
  %2677 = vst.msk [vmem:[#allocation2 + $0xb0] sm:$0xf] %vm2632, %v2529
  %2678 = vst.msk [vmem:[#allocation2 + $0xb4] sm:$0xf] %vm2632, %v2531
  %2679 = vst.msk [vmem:[#allocation2 + $0xb8] sm:$0xf] %vm2632, %v2533
  %2680 = vst.msk [vmem:[#allocation2 + $0xbc] sm:$0xf] %vm2632, %v2535
  %2681 = vst.msk [vmem:[#allocation2 + $0xc0] sm:$0xf] %vm2632, %v2537
  %2682 = vst.msk [vmem:[#allocation2 + $0xc4] sm:$0xf] %vm2632, %v2539
  %2683 = vst.msk [vmem:[#allocation2 + $0xc8] sm:$0xf] %vm2632, %v2541
  %2684 = vst.msk [vmem:[#allocation2 + $0xcc] sm:$0xf] %vm2632, %v2543
  %2685 = vst.msk [vmem:[#allocation2 + $0xd0] sm:$0xf] %vm2632, %v2545
  %2686 = vst.msk [vmem:[#allocation2 + $0xd4] sm:$0xf] %vm2632, %v2547
  %2687 = vst.msk [vmem:[#allocation2 + $0xd8] sm:$0xf] %vm2632, %v2549
  %2688 = vst.msk [vmem:[#allocation2 + $0xdc] sm:$0xf] %vm2632, %v2551
  %2689 = vst.msk [vmem:[#allocation2 + $0xe0] sm:$0xf] %vm2632, %v2553
  %2690 = vst.msk [vmem:[#allocation2 + $0xe4] sm:$0xf] %vm2632, %v2555
  %2691 = vst.msk [vmem:[#allocation2 + $0xe8] sm:$0xf] %vm2632, %v2557
  %2692 = vst.msk [vmem:[#allocation2 + $0xec] sm:$0xf] %vm2632, %v2559
  %2693 = vst.msk [vmem:[#allocation2 + $0xf0] sm:$0xf] %vm2632, %v2561
  %2694 = vst.msk [vmem:[#allocation2 + $0xf4] sm:$0xf] %vm2632, %v2563
  %2695 = vst.msk [vmem:[#allocation2 + $0xf8] sm:$0xf] %vm2632, %v2565
  %2696 = vst.msk [vmem:[#allocation2 + $0xfc] sm:$0xf] %vm2632, %v2567
  %vm2697 = vcmask 388419
  %vm2698 = vmand %vm2697, %vm1304
  %v2699 = vld [vmem:[#allocation2 + $0x4] sm:$0x8]
  %v2700 = vsel %vm2698, 0, %v2699
  %2701 = vst [vmem:[#allocation2 + $0x4] sm:$0x8] %v2700
  %v2702 = vld [vmem:[#allocation2 + $0xc] sm:$0x8]
  %v2703 = vsel %vm2698, 0, %v2702
  %2704 = vst [vmem:[#allocation2 + $0xc] sm:$0x8] %v2703
  %v2705 = vld [vmem:[#allocation2 + $0x14] sm:$0x8]
  %v2706 = vsel %vm2698, 0, %v2705
  %2707 = vst [vmem:[#allocation2 + $0x14] sm:$0x8] %v2706
  %v2708 = vld [vmem:[#allocation2 + $0x1c] sm:$0x8]
  %v2709 = vsel %vm2698, 0, %v2708
  %2710 = vst [vmem:[#allocation2 + $0x1c] sm:$0x8] %v2709
  %v2711 = vld [vmem:[#allocation2 + $0x24] sm:$0x8]
  %v2712 = vsel %vm2698, 0, %v2711
  %2713 = vst [vmem:[#allocation2 + $0x24] sm:$0x8] %v2712
  %v2714 = vld [vmem:[#allocation2 + $0x2c] sm:$0x8]
  %v2715 = vsel %vm2698, 0, %v2714
  %2716 = vst [vmem:[#allocation2 + $0x2c] sm:$0x8] %v2715
  %v2717 = vld [vmem:[#allocation2 + $0x34] sm:$0x8]
  %v2718 = vsel %vm2698, 0, %v2717
  %2719 = vst [vmem:[#allocation2 + $0x34] sm:$0x8] %v2718
  %v2720 = vld [vmem:[#allocation2 + $0x3c] sm:$0x8]
  %v2721 = vsel %vm2698, 0, %v2720
  %2722 = vst [vmem:[#allocation2 + $0x3c] sm:$0x8] %v2721
  %v2723 = vld [vmem:[#allocation2 + $0x44] sm:$0x8]
  %v2724 = vsel %vm2698, 0, %v2723
  %2725 = vst [vmem:[#allocation2 + $0x44] sm:$0x8] %v2724
  %v2726 = vld [vmem:[#allocation2 + $0x4c] sm:$0x8]
  %v2727 = vsel %vm2698, 0, %v2726
  %2728 = vst [vmem:[#allocation2 + $0x4c] sm:$0x8] %v2727
  %v2729 = vld [vmem:[#allocation2 + $0x54] sm:$0x8]
  %v2730 = vsel %vm2698, 0, %v2729
  %2731 = vst [vmem:[#allocation2 + $0x54] sm:$0x8] %v2730
  %v2732 = vld [vmem:[#allocation2 + $0x5c] sm:$0x8]
  %v2733 = vsel %vm2698, 0, %v2732
  %2734 = vst [vmem:[#allocation2 + $0x5c] sm:$0x8] %v2733
  %v2735 = vld [vmem:[#allocation2 + $0x64] sm:$0x8]
  %v2736 = vsel %vm2698, 0, %v2735
  %2737 = vst [vmem:[#allocation2 + $0x64] sm:$0x8] %v2736
  %v2738 = vld [vmem:[#allocation2 + $0x6c] sm:$0x8]
  %v2739 = vsel %vm2698, 0, %v2738
  %2740 = vst [vmem:[#allocation2 + $0x6c] sm:$0x8] %v2739
  %v2741 = vld [vmem:[#allocation2 + $0x74] sm:$0x8]
  %v2742 = vsel %vm2698, 0, %v2741
  %2743 = vst [vmem:[#allocation2 + $0x74] sm:$0x8] %v2742
  %v2744 = vld [vmem:[#allocation2 + $0x7c] sm:$0x8]
  %v2745 = vsel %vm2698, 0, %v2744
  %2746 = vst [vmem:[#allocation2 + $0x7c] sm:$0x8] %v2745
  %v2747 = vld [vmem:[#allocation2 + $0x84] sm:$0x8]
  %v2748 = vsel %vm2698, 0, %v2747
  %2749 = vst [vmem:[#allocation2 + $0x84] sm:$0x8] %v2748
  %v2750 = vld [vmem:[#allocation2 + $0x8c] sm:$0x8]
  %v2751 = vsel %vm2698, 0, %v2750
  %2752 = vst [vmem:[#allocation2 + $0x8c] sm:$0x8] %v2751
  %v2753 = vld [vmem:[#allocation2 + $0x94] sm:$0x8]
  %v2754 = vsel %vm2698, 0, %v2753
  %2755 = vst [vmem:[#allocation2 + $0x94] sm:$0x8] %v2754
  %v2756 = vld [vmem:[#allocation2 + $0x9c] sm:$0x8]
  %v2757 = vsel %vm2698, 0, %v2756
  %2758 = vst [vmem:[#allocation2 + $0x9c] sm:$0x8] %v2757
  %v2759 = vld [vmem:[#allocation2 + $0xa4] sm:$0x8]
  %v2760 = vsel %vm2698, 0, %v2759
  %2761 = vst [vmem:[#allocation2 + $0xa4] sm:$0x8] %v2760
  %v2762 = vld [vmem:[#allocation2 + $0xac] sm:$0x8]
  %v2763 = vsel %vm2698, 0, %v2762
  %2764 = vst [vmem:[#allocation2 + $0xac] sm:$0x8] %v2763
  %v2765 = vld [vmem:[#allocation2 + $0xb4] sm:$0x8]
  %v2766 = vsel %vm2698, 0, %v2765
  %2767 = vst [vmem:[#allocation2 + $0xb4] sm:$0x8] %v2766
  %v2768 = vld [vmem:[#allocation2 + $0xbc] sm:$0x8]
  %v2769 = vsel %vm2698, 0, %v2768
  %2770 = vst [vmem:[#allocation2 + $0xbc] sm:$0x8] %v2769
  %v2771 = vld [vmem:[#allocation2 + $0xc4] sm:$0x8]
  %v2772 = vsel %vm2698, 0, %v2771
  %2773 = vst [vmem:[#allocation2 + $0xc4] sm:$0x8] %v2772
  %v2774 = vld [vmem:[#allocation2 + $0xcc] sm:$0x8]
  %v2775 = vsel %vm2698, 0, %v2774
  %2776 = vst [vmem:[#allocation2 + $0xcc] sm:$0x8] %v2775
  %v2777 = vld [vmem:[#allocation2 + $0xd4] sm:$0x8]
  %v2778 = vsel %vm2698, 0, %v2777
  %2779 = vst [vmem:[#allocation2 + $0xd4] sm:$0x8] %v2778
  %v2780 = vld [vmem:[#allocation2 + $0xdc] sm:$0x8]
  %v2781 = vsel %vm2698, 0, %v2780
  %2782 = vst [vmem:[#allocation2 + $0xdc] sm:$0x8] %v2781
  %v2783 = vld [vmem:[#allocation2 + $0xe4] sm:$0x8]
  %v2784 = vsel %vm2698, 0, %v2783
  %2785 = vst [vmem:[#allocation2 + $0xe4] sm:$0x8] %v2784
  %v2786 = vld [vmem:[#allocation2 + $0xec] sm:$0x8]
  %v2787 = vsel %vm2698, 0, %v2786
  %2788 = vst [vmem:[#allocation2 + $0xec] sm:$0x8] %v2787
  %v2789 = vld [vmem:[#allocation2 + $0xf4] sm:$0x8]
  %v2790 = vsel %vm2698, 0, %v2789
  %2791 = vst [vmem:[#allocation2 + $0xf4] sm:$0x8] %v2790
  %v2792 = vld [vmem:[#allocation2 + $0xfc] sm:$0x8]
  %v2793 = vsel %vm2698, 0, %v2792
  %2794 = vst [vmem:[#allocation2 + $0xfc] sm:$0x8] %v2793
  %v2795 = vrot.slane %v2086, 4
  %v2796 = vrot.slane %v2089, 5
  %v2797 = vor.u32 %v2795, %v2796
  %v2798 = vrot.slane %v2797, 4
  %v2799 = vrot.slane %v2097, 5
  %v2800 = vsel %vm1404, %v2798, %v2799
  %v2801 = vrot.slane %v2094, 4
  %v2802 = vor.u32 %v2801, %v2799
  %v2803 = vrot.slane %v2802, 4
  %v2804 = vrot.slane %v2102, 4
  %v2805 = vrot.slane %v2105, 5
  %v2806 = vor.u32 %v2804, %v2805
  %v2807 = vrot.slane %v2806, 4
  %v2808 = vrot.slane %v2113, 5
  %v2809 = vsel %vm1404, %v2807, %v2808
  %v2810 = vrot.slane %v2110, 4
  %v2811 = vor.u32 %v2810, %v2808
  %v2812 = vrot.slane %v2811, 4
  %2813 = vrot.lane.b32.xlu0 %v1410, 40
  %v2814 = vpop.permute.xlu0 %2813
  %2815 = vrot.lane.b32.xlu0 %v1413, 40
  %v2816 = vpop.permute.xlu0 %2815
  %2817 = vrot.lane.b32.xlu0 %v1419, 40
  %v2818 = vpop.permute.xlu0 %2817
  %2819 = vrot.lane.b32.xlu0 %v1422, 40
  %v2820 = vpop.permute.xlu0 %2819
  %2821 = vrot.lane.b32.xlu0 %v1428, 40
  %v2822 = vpop.permute.xlu0 %2821
  %2823 = vrot.lane.b32.xlu0 %v1431, 40
  %v2824 = vpop.permute.xlu0 %2823
  %2825 = vrot.lane.b32.xlu0 %v1437, 40
  %v2826 = vpop.permute.xlu0 %2825
  %2827 = vrot.lane.b32.xlu0 %v1440, 40
  %v2828 = vpop.permute.xlu0 %2827
  %2829 = vrot.lane.b32.xlu0 %v1446, 40
  %v2830 = vpop.permute.xlu0 %2829
  %2831 = vrot.lane.b32.xlu0 %v1449, 40
  %v2832 = vpop.permute.xlu0 %2831
  %2833 = vrot.lane.b32.xlu0 %v1455, 40
  %v2834 = vpop.permute.xlu0 %2833
  %2835 = vrot.lane.b32.xlu0 %v1458, 40
  %v2836 = vpop.permute.xlu0 %2835
  %2837 = vrot.lane.b32.xlu0 %v1464, 40
  %v2838 = vpop.permute.xlu0 %2837
  %2839 = vrot.lane.b32.xlu0 %v1467, 40
  %v2840 = vpop.permute.xlu0 %2839
  %2841 = vrot.lane.b32.xlu0 %v1473, 40
  %v2842 = vpop.permute.xlu0 %2841
  %2843 = vrot.lane.b32.xlu0 %v1476, 40
  %v2844 = vpop.permute.xlu0 %2843
  %2845 = vrot.lane.b32.xlu0 %v1482, 40
  %v2846 = vpop.permute.xlu0 %2845
  %2847 = vrot.lane.b32.xlu0 %v1485, 40
  %v2848 = vpop.permute.xlu0 %2847
  %2849 = vrot.lane.b32.xlu0 %v1491, 40
  %v2850 = vpop.permute.xlu0 %2849
  %2851 = vrot.lane.b32.xlu0 %v1494, 40
  %v2852 = vpop.permute.xlu0 %2851
  %2853 = vrot.lane.b32.xlu0 %v1500, 40
  %v2854 = vpop.permute.xlu0 %2853
  %2855 = vrot.lane.b32.xlu0 %v1503, 40
  %v2856 = vpop.permute.xlu0 %2855
  %2857 = vrot.lane.b32.xlu0 %v1509, 40
  %v2858 = vpop.permute.xlu0 %2857
  %2859 = vrot.lane.b32.xlu0 %v1512, 40
  %v2860 = vpop.permute.xlu0 %2859
  %2861 = vrot.lane.b32.xlu0 %v1518, 40
  %v2862 = vpop.permute.xlu0 %2861
  %2863 = vrot.lane.b32.xlu0 %v1521, 40
  %v2864 = vpop.permute.xlu0 %2863
  %2865 = vrot.lane.b32.xlu0 %v1527, 40
  %v2866 = vpop.permute.xlu0 %2865
  %2867 = vrot.lane.b32.xlu0 %v1530, 40
  %v2868 = vpop.permute.xlu0 %2867
  %2869 = vrot.lane.b32.xlu0 %v1536, 40
  %v2870 = vpop.permute.xlu0 %2869
  %2871 = vrot.lane.b32.xlu0 %v1539, 40
  %v2872 = vpop.permute.xlu0 %2871
  %2873 = vrot.lane.b32.xlu0 %v2800, 40
  %v2874 = vpop.permute.xlu0 %2873
  %2875 = vrot.lane.b32.xlu0 %v2803, 40
  %v2876 = vpop.permute.xlu0 %2875
  %2877 = vrot.lane.b32.xlu0 %v1545, 40
  %v2878 = vpop.permute.xlu0 %2877
  %2879 = vrot.lane.b32.xlu0 %v1548, 40
  %v2880 = vpop.permute.xlu0 %2879
  %2881 = vrot.lane.b32.xlu0 %v1554, 40
  %v2882 = vpop.permute.xlu0 %2881
  %2883 = vrot.lane.b32.xlu0 %v1557, 40
  %v2884 = vpop.permute.xlu0 %2883
  %2885 = vrot.lane.b32.xlu0 %v1563, 40
  %v2886 = vpop.permute.xlu0 %2885
  %2887 = vrot.lane.b32.xlu0 %v1566, 40
  %v2888 = vpop.permute.xlu0 %2887
  %2889 = vrot.lane.b32.xlu0 %v1572, 40
  %v2890 = vpop.permute.xlu0 %2889
  %2891 = vrot.lane.b32.xlu0 %v1575, 40
  %v2892 = vpop.permute.xlu0 %2891
  %2893 = vrot.lane.b32.xlu0 %v1581, 40
  %v2894 = vpop.permute.xlu0 %2893
  %2895 = vrot.lane.b32.xlu0 %v1584, 40
  %v2896 = vpop.permute.xlu0 %2895
  %2897 = vrot.lane.b32.xlu0 %v1590, 40
  %v2898 = vpop.permute.xlu0 %2897
  %2899 = vrot.lane.b32.xlu0 %v1593, 40
  %v2900 = vpop.permute.xlu0 %2899
  %2901 = vrot.lane.b32.xlu0 %v1599, 40
  %v2902 = vpop.permute.xlu0 %2901
  %2903 = vrot.lane.b32.xlu0 %v1602, 40
  %v2904 = vpop.permute.xlu0 %2903
  %2905 = vrot.lane.b32.xlu0 %v1608, 40
  %v2906 = vpop.permute.xlu0 %2905
  %2907 = vrot.lane.b32.xlu0 %v1611, 40
  %v2908 = vpop.permute.xlu0 %2907
  %2909 = vrot.lane.b32.xlu0 %v1617, 40
  %v2910 = vpop.permute.xlu0 %2909
  %2911 = vrot.lane.b32.xlu0 %v1620, 40
  %v2912 = vpop.permute.xlu0 %2911
  %2913 = vrot.lane.b32.xlu0 %v1626, 40
  %v2914 = vpop.permute.xlu0 %2913
  %2915 = vrot.lane.b32.xlu0 %v1629, 40
  %v2916 = vpop.permute.xlu0 %2915
  %2917 = vrot.lane.b32.xlu0 %v1635, 40
  %v2918 = vpop.permute.xlu0 %2917
  %2919 = vrot.lane.b32.xlu0 %v1638, 40
  %v2920 = vpop.permute.xlu0 %2919
  %2921 = vrot.lane.b32.xlu0 %v1644, 40
  %v2922 = vpop.permute.xlu0 %2921
  %2923 = vrot.lane.b32.xlu0 %v1647, 40
  %v2924 = vpop.permute.xlu0 %2923
  %2925 = vrot.lane.b32.xlu0 %v1653, 40
  %v2926 = vpop.permute.xlu0 %2925
  %2927 = vrot.lane.b32.xlu0 %v1656, 40
  %v2928 = vpop.permute.xlu0 %2927
  %2929 = vrot.lane.b32.xlu0 %v1662, 40
  %v2930 = vpop.permute.xlu0 %2929
  %2931 = vrot.lane.b32.xlu0 %v1665, 40
  %v2932 = vpop.permute.xlu0 %2931
  %2933 = vrot.lane.b32.xlu0 %v1671, 40
  %v2934 = vpop.permute.xlu0 %2933
  %2935 = vrot.lane.b32.xlu0 %v1674, 40
  %v2936 = vpop.permute.xlu0 %2935
  %2937 = vrot.lane.b32.xlu0 %v2809, 40
  %v2938 = vpop.permute.xlu0 %2937
  %2939 = vrot.lane.b32.xlu0 %v2812, 40
  %v2940 = vpop.permute.xlu0 %2939
  %vm3005 = vcmask 388416
  %3006 = vst.msk [vmem:[#allocation2] sm:$0xf] %vm3005, %v2814
  %vm3007 = vcmask 388416
  %vm3008 = vmand %vm3007, %vm1402
  %v3009 = vld [vmem:[#allocation2 + $0x4] sm:$0xf]
  %v3010 = vsel %vm3008, %v2816, %v3009
  %3011 = vst [vmem:[#allocation2 + $0x4] sm:$0xf] %v3010
  %3012 = vst.msk [vmem:[#allocation2 + $0x8] sm:$0xf] %vm3005, %v2818
  %v3013 = vld [vmem:[#allocation2 + $0xc] sm:$0xf]
  %v3014 = vsel %vm3008, %v2820, %v3013
  %3015 = vst [vmem:[#allocation2 + $0xc] sm:$0xf] %v3014
  %3016 = vst.msk [vmem:[#allocation2 + $0x10] sm:$0xf] %vm3005, %v2822
  %v3017 = vld [vmem:[#allocation2 + $0x14] sm:$0xf]
  %v3018 = vsel %vm3008, %v2824, %v3017
  %3019 = vst [vmem:[#allocation2 + $0x14] sm:$0xf] %v3018
  %3020 = vst.msk [vmem:[#allocation2 + $0x18] sm:$0xf] %vm3005, %v2826
  %v3021 = vld [vmem:[#allocation2 + $0x1c] sm:$0xf]
  %v3022 = vsel %vm3008, %v2828, %v3021
  %3023 = vst [vmem:[#allocation2 + $0x1c] sm:$0xf] %v3022
  %3024 = vst.msk [vmem:[#allocation2 + $0x20] sm:$0xf] %vm3005, %v2830
  %v3025 = vld [vmem:[#allocation2 + $0x24] sm:$0xf]
  %v3026 = vsel %vm3008, %v2832, %v3025
  %3027 = vst [vmem:[#allocation2 + $0x24] sm:$0xf] %v3026
  %3028 = vst.msk [vmem:[#allocation2 + $0x28] sm:$0xf] %vm3005, %v2834
  %v3029 = vld [vmem:[#allocation2 + $0x2c] sm:$0xf]
  %v3030 = vsel %vm3008, %v2836, %v3029
  %3031 = vst [vmem:[#allocation2 + $0x2c] sm:$0xf] %v3030
  %3032 = vst.msk [vmem:[#allocation2 + $0x30] sm:$0xf] %vm3005, %v2838
  %v3033 = vld [vmem:[#allocation2 + $0x34] sm:$0xf]
  %v3034 = vsel %vm3008, %v2840, %v3033
  %3035 = vst [vmem:[#allocation2 + $0x34] sm:$0xf] %v3034
  %3036 = vst.msk [vmem:[#allocation2 + $0x38] sm:$0xf] %vm3005, %v2842
  %v3037 = vld [vmem:[#allocation2 + $0x3c] sm:$0xf]
  %v3038 = vsel %vm3008, %v2844, %v3037
  %3039 = vst [vmem:[#allocation2 + $0x3c] sm:$0xf] %v3038
  %3040 = vst.msk [vmem:[#allocation2 + $0x40] sm:$0xf] %vm3005, %v2846
  %v3041 = vld [vmem:[#allocation2 + $0x44] sm:$0xf]
  %v3042 = vsel %vm3008, %v2848, %v3041
  %3043 = vst [vmem:[#allocation2 + $0x44] sm:$0xf] %v3042
  %3044 = vst.msk [vmem:[#allocation2 + $0x48] sm:$0xf] %vm3005, %v2850
  %v3045 = vld [vmem:[#allocation2 + $0x4c] sm:$0xf]
  %v3046 = vsel %vm3008, %v2852, %v3045
  %3047 = vst [vmem:[#allocation2 + $0x4c] sm:$0xf] %v3046
  %3048 = vst.msk [vmem:[#allocation2 + $0x50] sm:$0xf] %vm3005, %v2854
  %v3049 = vld [vmem:[#allocation2 + $0x54] sm:$0xf]
  %v3050 = vsel %vm3008, %v2856, %v3049
  %3051 = vst [vmem:[#allocation2 + $0x54] sm:$0xf] %v3050
  %3052 = vst.msk [vmem:[#allocation2 + $0x58] sm:$0xf] %vm3005, %v2858
  %v3053 = vld [vmem:[#allocation2 + $0x5c] sm:$0xf]
  %v3054 = vsel %vm3008, %v2860, %v3053
  %3055 = vst [vmem:[#allocation2 + $0x5c] sm:$0xf] %v3054
  %3056 = vst.msk [vmem:[#allocation2 + $0x60] sm:$0xf] %vm3005, %v2862
  %v3057 = vld [vmem:[#allocation2 + $0x64] sm:$0xf]
  %v3058 = vsel %vm3008, %v2864, %v3057
  %3059 = vst [vmem:[#allocation2 + $0x64] sm:$0xf] %v3058
  %3060 = vst.msk [vmem:[#allocation2 + $0x68] sm:$0xf] %vm3005, %v2866
  %v3061 = vld [vmem:[#allocation2 + $0x6c] sm:$0xf]
  %v3062 = vsel %vm3008, %v2868, %v3061
  %3063 = vst [vmem:[#allocation2 + $0x6c] sm:$0xf] %v3062
  %3064 = vst.msk [vmem:[#allocation2 + $0x70] sm:$0xf] %vm3005, %v2870
  %v3065 = vld [vmem:[#allocation2 + $0x74] sm:$0xf]
  %v3066 = vsel %vm3008, %v2872, %v3065
  %3067 = vst [vmem:[#allocation2 + $0x74] sm:$0xf] %v3066
  %3068 = vst.msk [vmem:[#allocation2 + $0x78] sm:$0xf] %vm3005, %v2874
  %v3069 = vld [vmem:[#allocation2 + $0x7c] sm:$0xf]
  %v3070 = vsel %vm3008, %v2876, %v3069
  %3071 = vst [vmem:[#allocation2 + $0x7c] sm:$0xf] %v3070
  %3072 = vst.msk [vmem:[#allocation2 + $0x80] sm:$0xf] %vm3005, %v2878
  %v3073 = vld [vmem:[#allocation2 + $0x84] sm:$0xf]
  %v3074 = vsel %vm3008, %v2880, %v3073
  %3075 = vst [vmem:[#allocation2 + $0x84] sm:$0xf] %v3074
  %3076 = vst.msk [vmem:[#allocation2 + $0x88] sm:$0xf] %vm3005, %v2882
  %v3077 = vld [vmem:[#allocation2 + $0x8c] sm:$0xf]
  %v3078 = vsel %vm3008, %v2884, %v3077
  %3079 = vst [vmem:[#allocation2 + $0x8c] sm:$0xf] %v3078
  %3080 = vst.msk [vmem:[#allocation2 + $0x90] sm:$0xf] %vm3005, %v2886
  %v3081 = vld [vmem:[#allocation2 + $0x94] sm:$0xf]
  %v3082 = vsel %vm3008, %v2888, %v3081
  %3083 = vst [vmem:[#allocation2 + $0x94] sm:$0xf] %v3082
  %3084 = vst.msk [vmem:[#allocation2 + $0x98] sm:$0xf] %vm3005, %v2890
  %v3085 = vld [vmem:[#allocation2 + $0x9c] sm:$0xf]
  %v3086 = vsel %vm3008, %v2892, %v3085
  %3087 = vst [vmem:[#allocation2 + $0x9c] sm:$0xf] %v3086
  %3088 = vst.msk [vmem:[#allocation2 + $0xa0] sm:$0xf] %vm3005, %v2894
  %v3089 = vld [vmem:[#allocation2 + $0xa4] sm:$0xf]
  %v3090 = vsel %vm3008, %v2896, %v3089
  %3091 = vst [vmem:[#allocation2 + $0xa4] sm:$0xf] %v3090
  %3092 = vst.msk [vmem:[#allocation2 + $0xa8] sm:$0xf] %vm3005, %v2898
  %v3093 = vld [vmem:[#allocation2 + $0xac] sm:$0xf]
  %v3094 = vsel %vm3008, %v2900, %v3093
  %3095 = vst [vmem:[#allocation2 + $0xac] sm:$0xf] %v3094
  %3096 = vst.msk [vmem:[#allocation2 + $0xb0] sm:$0xf] %vm3005, %v2902
  %v3097 = vld [vmem:[#allocation2 + $0xb4] sm:$0xf]
  %v3098 = vsel %vm3008, %v2904, %v3097
  %3099 = vst [vmem:[#allocation2 + $0xb4] sm:$0xf] %v3098
  %3100 = vst.msk [vmem:[#allocation2 + $0xb8] sm:$0xf] %vm3005, %v2906
  %v3101 = vld [vmem:[#allocation2 + $0xbc] sm:$0xf]
  %v3102 = vsel %vm3008, %v2908, %v3101
  %3103 = vst [vmem:[#allocation2 + $0xbc] sm:$0xf] %v3102
  %3104 = vst.msk [vmem:[#allocation2 + $0xc0] sm:$0xf] %vm3005, %v2910
  %v3105 = vld [vmem:[#allocation2 + $0xc4] sm:$0xf]
  %v3106 = vsel %vm3008, %v2912, %v3105
  %3107 = vst [vmem:[#allocation2 + $0xc4] sm:$0xf] %v3106
  %3108 = vst.msk [vmem:[#allocation2 + $0xc8] sm:$0xf] %vm3005, %v2914
  %v3109 = vld [vmem:[#allocation2 + $0xcc] sm:$0xf]
  %v3110 = vsel %vm3008, %v2916, %v3109
  %3111 = vst [vmem:[#allocation2 + $0xcc] sm:$0xf] %v3110
  %3112 = vst.msk [vmem:[#allocation2 + $0xd0] sm:$0xf] %vm3005, %v2918
  %v3113 = vld [vmem:[#allocation2 + $0xd4] sm:$0xf]
  %v3114 = vsel %vm3008, %v2920, %v3113
  %3115 = vst [vmem:[#allocation2 + $0xd4] sm:$0xf] %v3114
  %3116 = vst.msk [vmem:[#allocation2 + $0xd8] sm:$0xf] %vm3005, %v2922
  %v3117 = vld [vmem:[#allocation2 + $0xdc] sm:$0xf]
  %v3118 = vsel %vm3008, %v2924, %v3117
  %3119 = vst [vmem:[#allocation2 + $0xdc] sm:$0xf] %v3118
  %3120 = vst.msk [vmem:[#allocation2 + $0xe0] sm:$0xf] %vm3005, %v2926
  %v3121 = vld [vmem:[#allocation2 + $0xe4] sm:$0xf]
  %v3122 = vsel %vm3008, %v2928, %v3121
  %3123 = vst [vmem:[#allocation2 + $0xe4] sm:$0xf] %v3122
  %3124 = vst.msk [vmem:[#allocation2 + $0xe8] sm:$0xf] %vm3005, %v2930
  %v3125 = vld [vmem:[#allocation2 + $0xec] sm:$0xf]
  %v3126 = vsel %vm3008, %v2932, %v3125
  %3127 = vst [vmem:[#allocation2 + $0xec] sm:$0xf] %v3126
  %3128 = vst.msk [vmem:[#allocation2 + $0xf0] sm:$0xf] %vm3005, %v2934
  %v3129 = vld [vmem:[#allocation2 + $0xf4] sm:$0xf]
  %v3130 = vsel %vm3008, %v2936, %v3129
  %3131 = vst [vmem:[#allocation2 + $0xf4] sm:$0xf] %v3130
  %3132 = vst.msk [vmem:[#allocation2 + $0xf8] sm:$0xf] %vm3005, %v2938
  %v3133 = vld [vmem:[#allocation2 + $0xfc] sm:$0xf]
  %v3134 = vsel %vm3008, %v2940, %v3133
  %3135 = vst [vmem:[#allocation2 + $0xfc] sm:$0xf] %v3134
  %s3136 = scalar_lea.vmem [#allocation2], 120
  %vm3137 = vcmask 454016
  %3138 = vst.msk [vmem:[%s3136] sm:$0xf] %vm3137, 0
  %3139 = vst.msk [vmem:[%s3136 + $0x4] sm:$0xf] %vm3137, 0
  %3140 = vst.msk [vmem:[%s3136 + $0x80] sm:$0xf] %vm3137, 0
  %3141 = vst.msk [vmem:[%s3136 + $0x84] sm:$0xf] %vm3137, 0
  %vm3142 = vcmask 450944
  %vm3143 = vmand %vm3142, %vm139
  %v3144 = vld [vmem:[#allocation2] sm:$0x1]
  %v3145 = vsel %vm3143, 0, %v3144
  %3146 = vst [vmem:[#allocation2] sm:$0x1] %v3145
  %v3147 = vld [vmem:[#allocation2 + $0x8] sm:$0x1]
  %v3148 = vsel %vm3143, 0, %v3147
  %3149 = vst [vmem:[#allocation2 + $0x8] sm:$0x1] %v3148
  %v3150 = vld [vmem:[#allocation2 + $0x10] sm:$0x1]
  %v3151 = vsel %vm3143, 0, %v3150
  %3152 = vst [vmem:[#allocation2 + $0x10] sm:$0x1] %v3151
  %v3153 = vld [vmem:[#allocation2 + $0x18] sm:$0x1]
  %v3154 = vsel %vm3143, 0, %v3153
  %3155 = vst [vmem:[#allocation2 + $0x18] sm:$0x1] %v3154
  %v3156 = vld [vmem:[#allocation2 + $0x20] sm:$0x1]
  %v3157 = vsel %vm3143, 0, %v3156
  %3158 = vst [vmem:[#allocation2 + $0x20] sm:$0x1] %v3157
  %v3159 = vld [vmem:[#allocation2 + $0x28] sm:$0x1]
  %v3160 = vsel %vm3143, 0, %v3159
  %3161 = vst [vmem:[#allocation2 + $0x28] sm:$0x1] %v3160
  %v3162 = vld [vmem:[#allocation2 + $0x30] sm:$0x1]
  %v3163 = vsel %vm3143, 0, %v3162
  %3164 = vst [vmem:[#allocation2 + $0x30] sm:$0x1] %v3163
  %v3165 = vld [vmem:[#allocation2 + $0x38] sm:$0x1]
  %v3166 = vsel %vm3143, 0, %v3165
  %3167 = vst [vmem:[#allocation2 + $0x38] sm:$0x1] %v3166
  %v3168 = vld [vmem:[#allocation2 + $0x40] sm:$0x1]
  %v3169 = vsel %vm3143, 0, %v3168
  %3170 = vst [vmem:[#allocation2 + $0x40] sm:$0x1] %v3169
  %v3171 = vld [vmem:[#allocation2 + $0x48] sm:$0x1]
  %v3172 = vsel %vm3143, 0, %v3171
  %3173 = vst [vmem:[#allocation2 + $0x48] sm:$0x1] %v3172
  %v3174 = vld [vmem:[#allocation2 + $0x50] sm:$0x1]
  %v3175 = vsel %vm3143, 0, %v3174
  %3176 = vst [vmem:[#allocation2 + $0x50] sm:$0x1] %v3175
  %v3177 = vld [vmem:[#allocation2 + $0x58] sm:$0x1]
  %v3178 = vsel %vm3143, 0, %v3177
  %3179 = vst [vmem:[#allocation2 + $0x58] sm:$0x1] %v3178
  %v3180 = vld [vmem:[#allocation2 + $0x60] sm:$0x1]
  %v3181 = vsel %vm3143, 0, %v3180
  %3182 = vst [vmem:[#allocation2 + $0x60] sm:$0x1] %v3181
  %v3183 = vld [vmem:[#allocation2 + $0x68] sm:$0x1]
  %v3184 = vsel %vm3143, 0, %v3183
  %3185 = vst [vmem:[#allocation2 + $0x68] sm:$0x1] %v3184
  %v3186 = vld [vmem:[#allocation2 + $0x70] sm:$0x1]
  %v3187 = vsel %vm3143, 0, %v3186
  %3188 = vst [vmem:[#allocation2 + $0x70] sm:$0x1] %v3187
  %v3189 = vld [vmem:[#allocation2 + $0x78] sm:$0x1]
  %v3190 = vsel %vm3143, 0, %v3189
  %3191 = vst [vmem:[#allocation2 + $0x78] sm:$0x1] %v3190
  %v3192 = vld [vmem:[#allocation2 + $0x80] sm:$0x1]
  %v3193 = vsel %vm3143, 0, %v3192
  %3194 = vst [vmem:[#allocation2 + $0x80] sm:$0x1] %v3193
  %v3195 = vld [vmem:[#allocation2 + $0x88] sm:$0x1]
  %v3196 = vsel %vm3143, 0, %v3195
  %3197 = vst [vmem:[#allocation2 + $0x88] sm:$0x1] %v3196
  %v3198 = vld [vmem:[#allocation2 + $0x90] sm:$0x1]
  %v3199 = vsel %vm3143, 0, %v3198
  %3200 = vst [vmem:[#allocation2 + $0x90] sm:$0x1] %v3199
  %v3201 = vld [vmem:[#allocation2 + $0x98] sm:$0x1]
  %v3202 = vsel %vm3143, 0, %v3201
  %3203 = vst [vmem:[#allocation2 + $0x98] sm:$0x1] %v3202
  %v3204 = vld [vmem:[#allocation2 + $0xa0] sm:$0x1]
  %v3205 = vsel %vm3143, 0, %v3204
  %3206 = vst [vmem:[#allocation2 + $0xa0] sm:$0x1] %v3205
  %v3207 = vld [vmem:[#allocation2 + $0xa8] sm:$0x1]
  %v3208 = vsel %vm3143, 0, %v3207
  %3209 = vst [vmem:[#allocation2 + $0xa8] sm:$0x1] %v3208
  %v3210 = vld [vmem:[#allocation2 + $0xb0] sm:$0x1]
  %v3211 = vsel %vm3143, 0, %v3210
  %3212 = vst [vmem:[#allocation2 + $0xb0] sm:$0x1] %v3211
  %v3213 = vld [vmem:[#allocation2 + $0xb8] sm:$0x1]
  %v3214 = vsel %vm3143, 0, %v3213
  %3215 = vst [vmem:[#allocation2 + $0xb8] sm:$0x1] %v3214
  %v3216 = vld [vmem:[#allocation2 + $0xc0] sm:$0x1]
  %v3217 = vsel %vm3143, 0, %v3216
  %3218 = vst [vmem:[#allocation2 + $0xc0] sm:$0x1] %v3217
  %v3219 = vld [vmem:[#allocation2 + $0xc8] sm:$0x1]
  %v3220 = vsel %vm3143, 0, %v3219
  %3221 = vst [vmem:[#allocation2 + $0xc8] sm:$0x1] %v3220
  %v3222 = vld [vmem:[#allocation2 + $0xd0] sm:$0x1]
  %v3223 = vsel %vm3143, 0, %v3222
  %3224 = vst [vmem:[#allocation2 + $0xd0] sm:$0x1] %v3223
  %v3225 = vld [vmem:[#allocation2 + $0xd8] sm:$0x1]
  %v3226 = vsel %vm3143, 0, %v3225
  %3227 = vst [vmem:[#allocation2 + $0xd8] sm:$0x1] %v3226
  %v3228 = vld [vmem:[#allocation2 + $0xe0] sm:$0x1]
  %v3229 = vsel %vm3143, 0, %v3228
  %3230 = vst [vmem:[#allocation2 + $0xe0] sm:$0x1] %v3229
  %v3231 = vld [vmem:[#allocation2 + $0xe8] sm:$0x1]
  %v3232 = vsel %vm3143, 0, %v3231
  %3233 = vst [vmem:[#allocation2 + $0xe8] sm:$0x1] %v3232
  %v3234 = vld [vmem:[#allocation2 + $0xf0] sm:$0x1]
  %v3235 = vsel %vm3143, 0, %v3234
  %3236 = vst [vmem:[#allocation2 + $0xf0] sm:$0x1] %v3235
  %v3237 = vld [vmem:[#allocation2 + $0xf8] sm:$0x1]
  %v3238 = vsel %vm3143, 0, %v3237
  %3239 = vst [vmem:[#allocation2 + $0xf8] sm:$0x1] %v3238
  %3240 = vrot.lane.b32.xlu0 %v411, 48
  %v3241 = vpop.permute.xlu0 %3240
  %3242 = vrot.lane.b32.xlu0 %v420, 48
  %v3243 = vpop.permute.xlu0 %3242
  %3244 = vrot.lane.b32.xlu0 %v427, 48
  %v3245 = vpop.permute.xlu0 %3244
  %3246 = vrot.lane.b32.xlu0 %v436, 48
  %v3247 = vpop.permute.xlu0 %3246
  %3248 = vrot.lane.b32.xlu0 %v443, 48
  %v3249 = vpop.permute.xlu0 %3248
  %3250 = vrot.lane.b32.xlu0 %v452, 48
  %v3251 = vpop.permute.xlu0 %3250
  %3252 = vrot.lane.b32.xlu0 %v459, 48
  %v3253 = vpop.permute.xlu0 %3252
  %3254 = vrot.lane.b32.xlu0 %v468, 48
  %v3255 = vpop.permute.xlu0 %3254
  %3256 = vrot.lane.b32.xlu0 %v475, 48
  %v3257 = vpop.permute.xlu0 %3256
  %3258 = vrot.lane.b32.xlu0 %v484, 48
  %v3259 = vpop.permute.xlu0 %3258
  %3260 = vrot.lane.b32.xlu0 %v491, 48
  %v3261 = vpop.permute.xlu0 %3260
  %3262 = vrot.lane.b32.xlu0 %v500, 48
  %v3263 = vpop.permute.xlu0 %3262
  %3264 = vrot.lane.b32.xlu0 %v507, 48
  %v3265 = vpop.permute.xlu0 %3264
  %3266 = vrot.lane.b32.xlu0 %v516, 48
  %v3267 = vpop.permute.xlu0 %3266
  %3268 = vrot.lane.b32.xlu0 %v523, 48
  %v3269 = vpop.permute.xlu0 %3268
  %3270 = vrot.lane.b32.xlu0 %v532, 48
  %v3271 = vpop.permute.xlu0 %3270
  %3272 = vrot.lane.b32.xlu0 %v539, 48
  %v3273 = vpop.permute.xlu0 %3272
  %3274 = vrot.lane.b32.xlu0 %v548, 48
  %v3275 = vpop.permute.xlu0 %3274
  %3276 = vrot.lane.b32.xlu0 %v555, 48
  %v3277 = vpop.permute.xlu0 %3276
  %3278 = vrot.lane.b32.xlu0 %v564, 48
  %v3279 = vpop.permute.xlu0 %3278
  %3280 = vrot.lane.b32.xlu0 %v571, 48
  %v3281 = vpop.permute.xlu0 %3280
  %3282 = vrot.lane.b32.xlu0 %v580, 48
  %v3283 = vpop.permute.xlu0 %3282
  %3284 = vrot.lane.b32.xlu0 %v587, 48
  %v3285 = vpop.permute.xlu0 %3284
  %3286 = vrot.lane.b32.xlu0 %v596, 48
  %v3287 = vpop.permute.xlu0 %3286
  %3288 = vrot.lane.b32.xlu0 %v603, 48
  %v3289 = vpop.permute.xlu0 %3288
  %3290 = vrot.lane.b32.xlu0 %v612, 48
  %v3291 = vpop.permute.xlu0 %3290
  %3292 = vrot.lane.b32.xlu0 %v619, 48
  %v3293 = vpop.permute.xlu0 %3292
  %3294 = vrot.lane.b32.xlu0 %v628, 48
  %v3295 = vpop.permute.xlu0 %3294
  %3296 = vrot.lane.b32.xlu0 %v2091, 48
  %v3297 = vpop.permute.xlu0 %3296
  %3298 = vrot.lane.b32.xlu0 %v2100, 48
  %v3299 = vpop.permute.xlu0 %3298
  %3300 = vrot.lane.b32.xlu0 %v651, 48
  %v3301 = vpop.permute.xlu0 %3300
  %3302 = vrot.lane.b32.xlu0 %v660, 48
  %v3303 = vpop.permute.xlu0 %3302
  %3304 = vrot.lane.b32.xlu0 %v667, 48
  %v3305 = vpop.permute.xlu0 %3304
  %3306 = vrot.lane.b32.xlu0 %v676, 48
  %v3307 = vpop.permute.xlu0 %3306
  %3308 = vrot.lane.b32.xlu0 %v683, 48
  %v3309 = vpop.permute.xlu0 %3308
  %3310 = vrot.lane.b32.xlu0 %v692, 48
  %v3311 = vpop.permute.xlu0 %3310
  %3312 = vrot.lane.b32.xlu0 %v699, 48
  %v3313 = vpop.permute.xlu0 %3312
  %3314 = vrot.lane.b32.xlu0 %v708, 48
  %v3315 = vpop.permute.xlu0 %3314
  %3316 = vrot.lane.b32.xlu0 %v715, 48
  %v3317 = vpop.permute.xlu0 %3316
  %3318 = vrot.lane.b32.xlu0 %v724, 48
  %v3319 = vpop.permute.xlu0 %3318
  %3320 = vrot.lane.b32.xlu0 %v731, 48
  %v3321 = vpop.permute.xlu0 %3320
  %3322 = vrot.lane.b32.xlu0 %v740, 48
  %v3323 = vpop.permute.xlu0 %3322
  %3324 = vrot.lane.b32.xlu0 %v747, 48
  %v3325 = vpop.permute.xlu0 %3324
  %3326 = vrot.lane.b32.xlu0 %v756, 48
  %v3327 = vpop.permute.xlu0 %3326
  %3328 = vrot.lane.b32.xlu0 %v763, 48
  %v3329 = vpop.permute.xlu0 %3328
  %3330 = vrot.lane.b32.xlu0 %v772, 48
  %v3331 = vpop.permute.xlu0 %3330
  %3332 = vrot.lane.b32.xlu0 %v779, 48
  %v3333 = vpop.permute.xlu0 %3332
  %3334 = vrot.lane.b32.xlu0 %v788, 48
  %v3335 = vpop.permute.xlu0 %3334
  %3336 = vrot.lane.b32.xlu0 %v795, 48
  %v3337 = vpop.permute.xlu0 %3336
  %3338 = vrot.lane.b32.xlu0 %v804, 48
  %v3339 = vpop.permute.xlu0 %3338
  %3340 = vrot.lane.b32.xlu0 %v811, 48
  %v3341 = vpop.permute.xlu0 %3340
  %3342 = vrot.lane.b32.xlu0 %v820, 48
  %v3343 = vpop.permute.xlu0 %3342
  %3344 = vrot.lane.b32.xlu0 %v827, 48
  %v3345 = vpop.permute.xlu0 %3344
  %3346 = vrot.lane.b32.xlu0 %v836, 48
  %v3347 = vpop.permute.xlu0 %3346
  %3348 = vrot.lane.b32.xlu0 %v843, 48
  %v3349 = vpop.permute.xlu0 %3348
  %3350 = vrot.lane.b32.xlu0 %v852, 48
  %v3351 = vpop.permute.xlu0 %3350
  %3352 = vrot.lane.b32.xlu0 %v859, 48
  %v3353 = vpop.permute.xlu0 %3352
  %3354 = vrot.lane.b32.xlu0 %v868, 48
  %v3355 = vpop.permute.xlu0 %3354
  %3356 = vrot.lane.b32.xlu0 %v2107, 48
  %v3357 = vpop.permute.xlu0 %3356
  %3358 = vrot.lane.b32.xlu0 %v2116, 48
  %v3359 = vpop.permute.xlu0 %3358
  %vm3420 = vcmask 454016
  %vm3421 = vmand %vm3420, %vm931
  %v3422 = vld [vmem:[#allocation2] sm:$0xf]
  %v3423 = vsel %vm3421, %v3241, %v3422
  %3424 = vst [vmem:[#allocation2] sm:$0xf] %v3423
  %3425 = vst.msk [vmem:[#allocation2 + $0x4] sm:$0xf] %vm3137, %v3243
  %v3426 = vld [vmem:[#allocation2 + $0x8] sm:$0xf]
  %v3427 = vsel %vm3421, %v3245, %v3426
  %3428 = vst [vmem:[#allocation2 + $0x8] sm:$0xf] %v3427
  %3429 = vst.msk [vmem:[#allocation2 + $0xc] sm:$0xf] %vm3137, %v3247
  %v3430 = vld [vmem:[#allocation2 + $0x10] sm:$0xf]
  %v3431 = vsel %vm3421, %v3249, %v3430
  %3432 = vst [vmem:[#allocation2 + $0x10] sm:$0xf] %v3431
  %3433 = vst.msk [vmem:[#allocation2 + $0x14] sm:$0xf] %vm3137, %v3251
  %v3434 = vld [vmem:[#allocation2 + $0x18] sm:$0xf]
  %v3435 = vsel %vm3421, %v3253, %v3434
  %3436 = vst [vmem:[#allocation2 + $0x18] sm:$0xf] %v3435
  %3437 = vst.msk [vmem:[#allocation2 + $0x1c] sm:$0xf] %vm3137, %v3255
  %v3438 = vld [vmem:[#allocation2 + $0x20] sm:$0xf]
  %v3439 = vsel %vm3421, %v3257, %v3438
  %3440 = vst [vmem:[#allocation2 + $0x20] sm:$0xf] %v3439
  %3441 = vst.msk [vmem:[#allocation2 + $0x24] sm:$0xf] %vm3137, %v3259
  %v3442 = vld [vmem:[#allocation2 + $0x28] sm:$0xf]
  %v3443 = vsel %vm3421, %v3261, %v3442
  %3444 = vst [vmem:[#allocation2 + $0x28] sm:$0xf] %v3443
  %3445 = vst.msk [vmem:[#allocation2 + $0x2c] sm:$0xf] %vm3137, %v3263
  %v3446 = vld [vmem:[#allocation2 + $0x30] sm:$0xf]
  %v3447 = vsel %vm3421, %v3265, %v3446
  %3448 = vst [vmem:[#allocation2 + $0x30] sm:$0xf] %v3447
  %3449 = vst.msk [vmem:[#allocation2 + $0x34] sm:$0xf] %vm3137, %v3267
  %v3450 = vld [vmem:[#allocation2 + $0x38] sm:$0xf]
  %v3451 = vsel %vm3421, %v3269, %v3450
  %3452 = vst [vmem:[#allocation2 + $0x38] sm:$0xf] %v3451
  %3453 = vst.msk [vmem:[#allocation2 + $0x3c] sm:$0xf] %vm3137, %v3271
  %v3454 = vld [vmem:[#allocation2 + $0x40] sm:$0xf]
  %v3455 = vsel %vm3421, %v3273, %v3454
  %3456 = vst [vmem:[#allocation2 + $0x40] sm:$0xf] %v3455
  %3457 = vst.msk [vmem:[#allocation2 + $0x44] sm:$0xf] %vm3137, %v3275
  %v3458 = vld [vmem:[#allocation2 + $0x48] sm:$0xf]
  %v3459 = vsel %vm3421, %v3277, %v3458
  %3460 = vst [vmem:[#allocation2 + $0x48] sm:$0xf] %v3459
  %3461 = vst.msk [vmem:[#allocation2 + $0x4c] sm:$0xf] %vm3137, %v3279
  %v3462 = vld [vmem:[#allocation2 + $0x50] sm:$0xf]
  %v3463 = vsel %vm3421, %v3281, %v3462
  %3464 = vst [vmem:[#allocation2 + $0x50] sm:$0xf] %v3463
  %3465 = vst.msk [vmem:[#allocation2 + $0x54] sm:$0xf] %vm3137, %v3283
  %v3466 = vld [vmem:[#allocation2 + $0x58] sm:$0xf]
  %v3467 = vsel %vm3421, %v3285, %v3466
  %3468 = vst [vmem:[#allocation2 + $0x58] sm:$0xf] %v3467
  %3469 = vst.msk [vmem:[#allocation2 + $0x5c] sm:$0xf] %vm3137, %v3287
  %v3470 = vld [vmem:[#allocation2 + $0x60] sm:$0xf]
  %v3471 = vsel %vm3421, %v3289, %v3470
  %3472 = vst [vmem:[#allocation2 + $0x60] sm:$0xf] %v3471
  %3473 = vst.msk [vmem:[#allocation2 + $0x64] sm:$0xf] %vm3137, %v3291
  %v3474 = vld [vmem:[#allocation2 + $0x68] sm:$0xf]
  %v3475 = vsel %vm3421, %v3293, %v3474
  %3476 = vst [vmem:[#allocation2 + $0x68] sm:$0xf] %v3475
  %3477 = vst.msk [vmem:[#allocation2 + $0x6c] sm:$0xf] %vm3137, %v3295
  %v3478 = vld [vmem:[#allocation2 + $0x70] sm:$0xf]
  %v3479 = vsel %vm3421, %v3297, %v3478
  %3480 = vst [vmem:[#allocation2 + $0x70] sm:$0xf] %v3479
  %3481 = vst.msk [vmem:[#allocation2 + $0x74] sm:$0xf] %vm3137, %v3299
  %v3482 = vld [vmem:[#allocation2 + $0x80] sm:$0xf]
  %v3483 = vsel %vm3421, %v3301, %v3482
  %3484 = vst [vmem:[#allocation2 + $0x80] sm:$0xf] %v3483
  %3485 = vst.msk [vmem:[#allocation2 + $0x84] sm:$0xf] %vm3137, %v3303
  %v3486 = vld [vmem:[#allocation2 + $0x88] sm:$0xf]
  %v3487 = vsel %vm3421, %v3305, %v3486
  %3488 = vst [vmem:[#allocation2 + $0x88] sm:$0xf] %v3487
  %3489 = vst.msk [vmem:[#allocation2 + $0x8c] sm:$0xf] %vm3137, %v3307
  %v3490 = vld [vmem:[#allocation2 + $0x90] sm:$0xf]
  %v3491 = vsel %vm3421, %v3309, %v3490
  %3492 = vst [vmem:[#allocation2 + $0x90] sm:$0xf] %v3491
  %3493 = vst.msk [vmem:[#allocation2 + $0x94] sm:$0xf] %vm3137, %v3311
  %v3494 = vld [vmem:[#allocation2 + $0x98] sm:$0xf]
  %v3495 = vsel %vm3421, %v3313, %v3494
  %3496 = vst [vmem:[#allocation2 + $0x98] sm:$0xf] %v3495
  %3497 = vst.msk [vmem:[#allocation2 + $0x9c] sm:$0xf] %vm3137, %v3315
  %v3498 = vld [vmem:[#allocation2 + $0xa0] sm:$0xf]
  %v3499 = vsel %vm3421, %v3317, %v3498
  %3500 = vst [vmem:[#allocation2 + $0xa0] sm:$0xf] %v3499
  %3501 = vst.msk [vmem:[#allocation2 + $0xa4] sm:$0xf] %vm3137, %v3319
  %v3502 = vld [vmem:[#allocation2 + $0xa8] sm:$0xf]
  %v3503 = vsel %vm3421, %v3321, %v3502
  %3504 = vst [vmem:[#allocation2 + $0xa8] sm:$0xf] %v3503
  %3505 = vst.msk [vmem:[#allocation2 + $0xac] sm:$0xf] %vm3137, %v3323
  %v3506 = vld [vmem:[#allocation2 + $0xb0] sm:$0xf]
  %v3507 = vsel %vm3421, %v3325, %v3506
  %3508 = vst [vmem:[#allocation2 + $0xb0] sm:$0xf] %v3507
  %3509 = vst.msk [vmem:[#allocation2 + $0xb4] sm:$0xf] %vm3137, %v3327
  %v3510 = vld [vmem:[#allocation2 + $0xb8] sm:$0xf]
  %v3511 = vsel %vm3421, %v3329, %v3510
  %3512 = vst [vmem:[#allocation2 + $0xb8] sm:$0xf] %v3511
  %3513 = vst.msk [vmem:[#allocation2 + $0xbc] sm:$0xf] %vm3137, %v3331
  %v3514 = vld [vmem:[#allocation2 + $0xc0] sm:$0xf]
  %v3515 = vsel %vm3421, %v3333, %v3514
  %3516 = vst [vmem:[#allocation2 + $0xc0] sm:$0xf] %v3515
  %3517 = vst.msk [vmem:[#allocation2 + $0xc4] sm:$0xf] %vm3137, %v3335
  %v3518 = vld [vmem:[#allocation2 + $0xc8] sm:$0xf]
  %v3519 = vsel %vm3421, %v3337, %v3518
  %3520 = vst [vmem:[#allocation2 + $0xc8] sm:$0xf] %v3519
  %3521 = vst.msk [vmem:[#allocation2 + $0xcc] sm:$0xf] %vm3137, %v3339
  %v3522 = vld [vmem:[#allocation2 + $0xd0] sm:$0xf]
  %v3523 = vsel %vm3421, %v3341, %v3522
  %3524 = vst [vmem:[#allocation2 + $0xd0] sm:$0xf] %v3523
  %3525 = vst.msk [vmem:[#allocation2 + $0xd4] sm:$0xf] %vm3137, %v3343
  %v3526 = vld [vmem:[#allocation2 + $0xd8] sm:$0xf]
  %v3527 = vsel %vm3421, %v3345, %v3526
  %3528 = vst [vmem:[#allocation2 + $0xd8] sm:$0xf] %v3527
  %3529 = vst.msk [vmem:[#allocation2 + $0xdc] sm:$0xf] %vm3137, %v3347
  %v3530 = vld [vmem:[#allocation2 + $0xe0] sm:$0xf]
  %v3531 = vsel %vm3421, %v3349, %v3530
  %3532 = vst [vmem:[#allocation2 + $0xe0] sm:$0xf] %v3531
  %3533 = vst.msk [vmem:[#allocation2 + $0xe4] sm:$0xf] %vm3137, %v3351
  %v3534 = vld [vmem:[#allocation2 + $0xe8] sm:$0xf]
  %v3535 = vsel %vm3421, %v3353, %v3534
  %3536 = vst [vmem:[#allocation2 + $0xe8] sm:$0xf] %v3535
  %3537 = vst.msk [vmem:[#allocation2 + $0xec] sm:$0xf] %vm3137, %v3355
  %v3538 = vld [vmem:[#allocation2 + $0xf0] sm:$0xf]
  %v3539 = vsel %vm3421, %v3357, %v3538
  %3540 = vst [vmem:[#allocation2 + $0xf0] sm:$0xf] %v3539
  %3541 = vst.msk [vmem:[#allocation2 + $0xf4] sm:$0xf] %vm3137, %v3359
  %vm3542 = vcmask 519616
  %3543 = vst.msk [vmem:[%s3136] sm:$0xf] %vm3542, 0
  %3544 = vst.msk [vmem:[%s3136 + $0x4] sm:$0xf] %vm3542, 0
  %3545 = vst.msk [vmem:[%s3136 + $0x80] sm:$0xf] %vm3542, 0
  %3546 = vst.msk [vmem:[%s3136 + $0x84] sm:$0xf] %vm3542, 0
  %3547 = vrot.lane.b32.xlu0 %v329, 56
  %v3548 = vpop.permute.xlu0 %3547
  %3549 = vrot.lane.b32.xlu0 %v330, 56
  %v3550 = vpop.permute.xlu0 %3549
  %3551 = vrot.lane.b32.xlu0 %v331, 56
  %v3552 = vpop.permute.xlu0 %3551
  %3553 = vrot.lane.b32.xlu0 %v332, 56
  %v3554 = vpop.permute.xlu0 %3553
  %3555 = vrot.lane.b32.xlu0 %v333, 56
  %v3556 = vpop.permute.xlu0 %3555
  %3557 = vrot.lane.b32.xlu0 %v334, 56
  %v3558 = vpop.permute.xlu0 %3557
  %3559 = vrot.lane.b32.xlu0 %v335, 56
  %v3560 = vpop.permute.xlu0 %3559
  %3561 = vrot.lane.b32.xlu0 %v336, 56
  %v3562 = vpop.permute.xlu0 %3561
  %3563 = vrot.lane.b32.xlu0 %v337, 56
  %v3564 = vpop.permute.xlu0 %3563
  %3565 = vrot.lane.b32.xlu0 %v338, 56
  %v3566 = vpop.permute.xlu0 %3565
  %3567 = vrot.lane.b32.xlu0 %v339, 56
  %v3568 = vpop.permute.xlu0 %3567
  %3569 = vrot.lane.b32.xlu0 %v340, 56
  %v3570 = vpop.permute.xlu0 %3569
  %3571 = vrot.lane.b32.xlu0 %v341, 56
  %v3572 = vpop.permute.xlu0 %3571
  %3573 = vrot.lane.b32.xlu0 %v342, 56
  %v3574 = vpop.permute.xlu0 %3573
  %3575 = vrot.lane.b32.xlu0 %v343, 56
  %v3576 = vpop.permute.xlu0 %3575
  %3577 = vrot.lane.b32.xlu0 %v344, 56
  %v3578 = vpop.permute.xlu0 %3577
  %3579 = vrot.lane.b32.xlu0 %v345, 56
  %v3580 = vpop.permute.xlu0 %3579
  %3581 = vrot.lane.b32.xlu0 %v346, 56
  %v3582 = vpop.permute.xlu0 %3581
  %3583 = vrot.lane.b32.xlu0 %v347, 56
  %v3584 = vpop.permute.xlu0 %3583
  %3585 = vrot.lane.b32.xlu0 %v348, 56
  %v3586 = vpop.permute.xlu0 %3585
  %3587 = vrot.lane.b32.xlu0 %v349, 56
  %v3588 = vpop.permute.xlu0 %3587
  %3589 = vrot.lane.b32.xlu0 %v350, 56
  %v3590 = vpop.permute.xlu0 %3589
  %3591 = vrot.lane.b32.xlu0 %v351, 56
  %v3592 = vpop.permute.xlu0 %3591
  %3593 = vrot.lane.b32.xlu0 %v352, 56
  %v3594 = vpop.permute.xlu0 %3593
  %3595 = vrot.lane.b32.xlu0 %v353, 56
  %v3596 = vpop.permute.xlu0 %3595
  %3597 = vrot.lane.b32.xlu0 %v354, 56
  %v3598 = vpop.permute.xlu0 %3597
  %3599 = vrot.lane.b32.xlu0 %v355, 56
  %v3600 = vpop.permute.xlu0 %3599
  %3601 = vrot.lane.b32.xlu0 %v356, 56
  %v3602 = vpop.permute.xlu0 %3601
  %3603 = vrot.lane.b32.xlu0 %v2081, 56
  %v3604 = vpop.permute.xlu0 %3603
  %3605 = vrot.lane.b32.xlu0 %v2082, 56
  %v3606 = vpop.permute.xlu0 %3605
  %3607 = vrot.lane.b32.xlu0 %v359, 56
  %v3608 = vpop.permute.xlu0 %3607
  %3609 = vrot.lane.b32.xlu0 %v360, 56
  %v3610 = vpop.permute.xlu0 %3609
  %3611 = vrot.lane.b32.xlu0 %v361, 56
  %v3612 = vpop.permute.xlu0 %3611
  %3613 = vrot.lane.b32.xlu0 %v362, 56
  %v3614 = vpop.permute.xlu0 %3613
  %3615 = vrot.lane.b32.xlu0 %v363, 56
  %v3616 = vpop.permute.xlu0 %3615
  %3617 = vrot.lane.b32.xlu0 %v364, 56
  %v3618 = vpop.permute.xlu0 %3617
  %3619 = vrot.lane.b32.xlu0 %v365, 56
  %v3620 = vpop.permute.xlu0 %3619
  %3621 = vrot.lane.b32.xlu0 %v366, 56
  %v3622 = vpop.permute.xlu0 %3621
  %3623 = vrot.lane.b32.xlu0 %v367, 56
  %v3624 = vpop.permute.xlu0 %3623
  %3625 = vrot.lane.b32.xlu0 %v368, 56
  %v3626 = vpop.permute.xlu0 %3625
  %3627 = vrot.lane.b32.xlu0 %v369, 56
  %v3628 = vpop.permute.xlu0 %3627
  %3629 = vrot.lane.b32.xlu0 %v370, 56
  %v3630 = vpop.permute.xlu0 %3629
  %3631 = vrot.lane.b32.xlu0 %v371, 56
  %v3632 = vpop.permute.xlu0 %3631
  %3633 = vrot.lane.b32.xlu0 %v372, 56
  %v3634 = vpop.permute.xlu0 %3633
  %3635 = vrot.lane.b32.xlu0 %v373, 56
  %v3636 = vpop.permute.xlu0 %3635
  %3637 = vrot.lane.b32.xlu0 %v374, 56
  %v3638 = vpop.permute.xlu0 %3637
  %3639 = vrot.lane.b32.xlu0 %v375, 56
  %v3640 = vpop.permute.xlu0 %3639
  %3641 = vrot.lane.b32.xlu0 %v376, 56
  %v3642 = vpop.permute.xlu0 %3641
  %3643 = vrot.lane.b32.xlu0 %v377, 56
  %v3644 = vpop.permute.xlu0 %3643
  %3645 = vrot.lane.b32.xlu0 %v378, 56
  %v3646 = vpop.permute.xlu0 %3645
  %3647 = vrot.lane.b32.xlu0 %v379, 56
  %v3648 = vpop.permute.xlu0 %3647
  %3649 = vrot.lane.b32.xlu0 %v380, 56
  %v3650 = vpop.permute.xlu0 %3649
  %3651 = vrot.lane.b32.xlu0 %v381, 56
  %v3652 = vpop.permute.xlu0 %3651
  %3653 = vrot.lane.b32.xlu0 %v382, 56
  %v3654 = vpop.permute.xlu0 %3653
  %3655 = vrot.lane.b32.xlu0 %v383, 56
  %v3656 = vpop.permute.xlu0 %3655
  %3657 = vrot.lane.b32.xlu0 %v384, 56
  %v3658 = vpop.permute.xlu0 %3657
  %3659 = vrot.lane.b32.xlu0 %v385, 56
  %v3660 = vpop.permute.xlu0 %3659
  %3661 = vrot.lane.b32.xlu0 %v386, 56
  %v3662 = vpop.permute.xlu0 %3661
  %3663 = vrot.lane.b32.xlu0 %v2083, 56
  %v3664 = vpop.permute.xlu0 %3663
  %3665 = vrot.lane.b32.xlu0 %v2084, 56
  %v3666 = vpop.permute.xlu0 %3665
  %3727 = vst.msk [vmem:[#allocation2] sm:$0xf] %vm3542, %v3548
  %3728 = vst.msk [vmem:[#allocation2 + $0x4] sm:$0xf] %vm3542, %v3550
  %3729 = vst.msk [vmem:[#allocation2 + $0x8] sm:$0xf] %vm3542, %v3552
  %3730 = vst.msk [vmem:[#allocation2 + $0xc] sm:$0xf] %vm3542, %v3554
  %3731 = vst.msk [vmem:[#allocation2 + $0x10] sm:$0xf] %vm3542, %v3556
  %3732 = vst.msk [vmem:[#allocation2 + $0x14] sm:$0xf] %vm3542, %v3558
  %3733 = vst.msk [vmem:[#allocation2 + $0x18] sm:$0xf] %vm3542, %v3560
  %3734 = vst.msk [vmem:[#allocation2 + $0x1c] sm:$0xf] %vm3542, %v3562
  %3735 = vst.msk [vmem:[#allocation2 + $0x20] sm:$0xf] %vm3542, %v3564
  %3736 = vst.msk [vmem:[#allocation2 + $0x24] sm:$0xf] %vm3542, %v3566
  %3737 = vst.msk [vmem:[#allocation2 + $0x28] sm:$0xf] %vm3542, %v3568
  %3738 = vst.msk [vmem:[#allocation2 + $0x2c] sm:$0xf] %vm3542, %v3570
  %3739 = vst.msk [vmem:[#allocation2 + $0x30] sm:$0xf] %vm3542, %v3572
  %3740 = vst.msk [vmem:[#allocation2 + $0x34] sm:$0xf] %vm3542, %v3574
  %3741 = vst.msk [vmem:[#allocation2 + $0x38] sm:$0xf] %vm3542, %v3576
  %3742 = vst.msk [vmem:[#allocation2 + $0x3c] sm:$0xf] %vm3542, %v3578
  %3743 = vst.msk [vmem:[#allocation2 + $0x40] sm:$0xf] %vm3542, %v3580
  %3744 = vst.msk [vmem:[#allocation2 + $0x44] sm:$0xf] %vm3542, %v3582
  %3745 = vst.msk [vmem:[#allocation2 + $0x48] sm:$0xf] %vm3542, %v3584
  %3746 = vst.msk [vmem:[#allocation2 + $0x4c] sm:$0xf] %vm3542, %v3586
  %3747 = vst.msk [vmem:[#allocation2 + $0x50] sm:$0xf] %vm3542, %v3588
  %3748 = vst.msk [vmem:[#allocation2 + $0x54] sm:$0xf] %vm3542, %v3590
  %3749 = vst.msk [vmem:[#allocation2 + $0x58] sm:$0xf] %vm3542, %v3592
  %3750 = vst.msk [vmem:[#allocation2 + $0x5c] sm:$0xf] %vm3542, %v3594
  %3751 = vst.msk [vmem:[#allocation2 + $0x60] sm:$0xf] %vm3542, %v3596
  %3752 = vst.msk [vmem:[#allocation2 + $0x64] sm:$0xf] %vm3542, %v3598
  %3753 = vst.msk [vmem:[#allocation2 + $0x68] sm:$0xf] %vm3542, %v3600
  %3754 = vst.msk [vmem:[#allocation2 + $0x6c] sm:$0xf] %vm3542, %v3602
  %3755 = vst.msk [vmem:[#allocation2 + $0x70] sm:$0xf] %vm3542, %v3604
  %3756 = vst.msk [vmem:[#allocation2 + $0x74] sm:$0xf] %vm3542, %v3606
  %3757 = vst.msk [vmem:[#allocation2 + $0x80] sm:$0xf] %vm3542, %v3608
  %3758 = vst.msk [vmem:[#allocation2 + $0x84] sm:$0xf] %vm3542, %v3610
  %3759 = vst.msk [vmem:[#allocation2 + $0x88] sm:$0xf] %vm3542, %v3612
  %3760 = vst.msk [vmem:[#allocation2 + $0x8c] sm:$0xf] %vm3542, %v3614
  %3761 = vst.msk [vmem:[#allocation2 + $0x90] sm:$0xf] %vm3542, %v3616
  %3762 = vst.msk [vmem:[#allocation2 + $0x94] sm:$0xf] %vm3542, %v3618
  %3763 = vst.msk [vmem:[#allocation2 + $0x98] sm:$0xf] %vm3542, %v3620
  %3764 = vst.msk [vmem:[#allocation2 + $0x9c] sm:$0xf] %vm3542, %v3622
  %3765 = vst.msk [vmem:[#allocation2 + $0xa0] sm:$0xf] %vm3542, %v3624
  %3766 = vst.msk [vmem:[#allocation2 + $0xa4] sm:$0xf] %vm3542, %v3626
  %3767 = vst.msk [vmem:[#allocation2 + $0xa8] sm:$0xf] %vm3542, %v3628
  %3768 = vst.msk [vmem:[#allocation2 + $0xac] sm:$0xf] %vm3542, %v3630
  %3769 = vst.msk [vmem:[#allocation2 + $0xb0] sm:$0xf] %vm3542, %v3632
  %3770 = vst.msk [vmem:[#allocation2 + $0xb4] sm:$0xf] %vm3542, %v3634
  %3771 = vst.msk [vmem:[#allocation2 + $0xb8] sm:$0xf] %vm3542, %v3636
  %3772 = vst.msk [vmem:[#allocation2 + $0xbc] sm:$0xf] %vm3542, %v3638
  %3773 = vst.msk [vmem:[#allocation2 + $0xc0] sm:$0xf] %vm3542, %v3640
  %3774 = vst.msk [vmem:[#allocation2 + $0xc4] sm:$0xf] %vm3542, %v3642
  %3775 = vst.msk [vmem:[#allocation2 + $0xc8] sm:$0xf] %vm3542, %v3644
  %3776 = vst.msk [vmem:[#allocation2 + $0xcc] sm:$0xf] %vm3542, %v3646
  %3777 = vst.msk [vmem:[#allocation2 + $0xd0] sm:$0xf] %vm3542, %v3648
  %3778 = vst.msk [vmem:[#allocation2 + $0xd4] sm:$0xf] %vm3542, %v3650
  %3779 = vst.msk [vmem:[#allocation2 + $0xd8] sm:$0xf] %vm3542, %v3652
  %3780 = vst.msk [vmem:[#allocation2 + $0xdc] sm:$0xf] %vm3542, %v3654
  %3781 = vst.msk [vmem:[#allocation2 + $0xe0] sm:$0xf] %vm3542, %v3656
  %3782 = vst.msk [vmem:[#allocation2 + $0xe4] sm:$0xf] %vm3542, %v3658
  %3783 = vst.msk [vmem:[#allocation2 + $0xe8] sm:$0xf] %vm3542, %v3660
  %3784 = vst.msk [vmem:[#allocation2 + $0xec] sm:$0xf] %vm3542, %v3662
  %3785 = vst.msk [vmem:[#allocation2 + $0xf0] sm:$0xf] %vm3542, %v3664
  %3786 = vst.msk [vmem:[#allocation2 + $0xf4] sm:$0xf] %vm3542, %v3666
  %vm3787 = vcmask 585216
  %3788 = vst.msk [vmem:[%s3136] sm:$0xf] %vm3787, 0
  %3789 = vst.msk [vmem:[%s3136 + $0x4] sm:$0xf] %vm3787, 0
  %3790 = vst.msk [vmem:[%s3136 + $0x80] sm:$0xf] %vm3787, 0
  %3791 = vst.msk [vmem:[%s3136 + $0x84] sm:$0xf] %vm3787, 0
  %vm3792 = vcmask 585219
  %vm3793 = vmand %vm3792, %vm1304
  %v3794 = vld [vmem:[#allocation2 + $0x4] sm:$0x8]
  %v3795 = vsel %vm3793, 0, %v3794
  %3796 = vst [vmem:[#allocation2 + $0x4] sm:$0x8] %v3795
  %v3797 = vld [vmem:[#allocation2 + $0xc] sm:$0x8]
  %v3798 = vsel %vm3793, 0, %v3797
  %3799 = vst [vmem:[#allocation2 + $0xc] sm:$0x8] %v3798
  %v3800 = vld [vmem:[#allocation2 + $0x14] sm:$0x8]
  %v3801 = vsel %vm3793, 0, %v3800
  %3802 = vst [vmem:[#allocation2 + $0x14] sm:$0x8] %v3801
  %v3803 = vld [vmem:[#allocation2 + $0x1c] sm:$0x8]
  %v3804 = vsel %vm3793, 0, %v3803
  %3805 = vst [vmem:[#allocation2 + $0x1c] sm:$0x8] %v3804
  %v3806 = vld [vmem:[#allocation2 + $0x24] sm:$0x8]
  %v3807 = vsel %vm3793, 0, %v3806
  %3808 = vst [vmem:[#allocation2 + $0x24] sm:$0x8] %v3807
  %v3809 = vld [vmem:[#allocation2 + $0x2c] sm:$0x8]
  %v3810 = vsel %vm3793, 0, %v3809
  %3811 = vst [vmem:[#allocation2 + $0x2c] sm:$0x8] %v3810
  %v3812 = vld [vmem:[#allocation2 + $0x34] sm:$0x8]
  %v3813 = vsel %vm3793, 0, %v3812
  %3814 = vst [vmem:[#allocation2 + $0x34] sm:$0x8] %v3813
  %v3815 = vld [vmem:[#allocation2 + $0x3c] sm:$0x8]
  %v3816 = vsel %vm3793, 0, %v3815
  %3817 = vst [vmem:[#allocation2 + $0x3c] sm:$0x8] %v3816
  %v3818 = vld [vmem:[#allocation2 + $0x44] sm:$0x8]
  %v3819 = vsel %vm3793, 0, %v3818
  %3820 = vst [vmem:[#allocation2 + $0x44] sm:$0x8] %v3819
  %v3821 = vld [vmem:[#allocation2 + $0x4c] sm:$0x8]
  %v3822 = vsel %vm3793, 0, %v3821
  %3823 = vst [vmem:[#allocation2 + $0x4c] sm:$0x8] %v3822
  %v3824 = vld [vmem:[#allocation2 + $0x54] sm:$0x8]
  %v3825 = vsel %vm3793, 0, %v3824
  %3826 = vst [vmem:[#allocation2 + $0x54] sm:$0x8] %v3825
  %v3827 = vld [vmem:[#allocation2 + $0x5c] sm:$0x8]
  %v3828 = vsel %vm3793, 0, %v3827
  %3829 = vst [vmem:[#allocation2 + $0x5c] sm:$0x8] %v3828
  %v3830 = vld [vmem:[#allocation2 + $0x64] sm:$0x8]
  %v3831 = vsel %vm3793, 0, %v3830
  %3832 = vst [vmem:[#allocation2 + $0x64] sm:$0x8] %v3831
  %v3833 = vld [vmem:[#allocation2 + $0x6c] sm:$0x8]
  %v3834 = vsel %vm3793, 0, %v3833
  %3835 = vst [vmem:[#allocation2 + $0x6c] sm:$0x8] %v3834
  %v3836 = vld [vmem:[#allocation2 + $0x74] sm:$0x8]
  %v3837 = vsel %vm3793, 0, %v3836
  %3838 = vst [vmem:[#allocation2 + $0x74] sm:$0x8] %v3837
  %v3839 = vld [vmem:[#allocation2 + $0x7c] sm:$0x8]
  %v3840 = vsel %vm3793, 0, %v3839
  %3841 = vst [vmem:[#allocation2 + $0x7c] sm:$0x8] %v3840
  %v3842 = vld [vmem:[#allocation2 + $0x84] sm:$0x8]
  %v3843 = vsel %vm3793, 0, %v3842
  %3844 = vst [vmem:[#allocation2 + $0x84] sm:$0x8] %v3843
  %v3845 = vld [vmem:[#allocation2 + $0x8c] sm:$0x8]
  %v3846 = vsel %vm3793, 0, %v3845
  %3847 = vst [vmem:[#allocation2 + $0x8c] sm:$0x8] %v3846
  %v3848 = vld [vmem:[#allocation2 + $0x94] sm:$0x8]
  %v3849 = vsel %vm3793, 0, %v3848
  %3850 = vst [vmem:[#allocation2 + $0x94] sm:$0x8] %v3849
  %v3851 = vld [vmem:[#allocation2 + $0x9c] sm:$0x8]
  %v3852 = vsel %vm3793, 0, %v3851
  %3853 = vst [vmem:[#allocation2 + $0x9c] sm:$0x8] %v3852
  %v3854 = vld [vmem:[#allocation2 + $0xa4] sm:$0x8]
  %v3855 = vsel %vm3793, 0, %v3854
  %3856 = vst [vmem:[#allocation2 + $0xa4] sm:$0x8] %v3855
  %v3857 = vld [vmem:[#allocation2 + $0xac] sm:$0x8]
  %v3858 = vsel %vm3793, 0, %v3857
  %3859 = vst [vmem:[#allocation2 + $0xac] sm:$0x8] %v3858
  %v3860 = vld [vmem:[#allocation2 + $0xb4] sm:$0x8]
  %v3861 = vsel %vm3793, 0, %v3860
  %3862 = vst [vmem:[#allocation2 + $0xb4] sm:$0x8] %v3861
  %v3863 = vld [vmem:[#allocation2 + $0xbc] sm:$0x8]
  %v3864 = vsel %vm3793, 0, %v3863
  %3865 = vst [vmem:[#allocation2 + $0xbc] sm:$0x8] %v3864
  %v3866 = vld [vmem:[#allocation2 + $0xc4] sm:$0x8]
  %v3867 = vsel %vm3793, 0, %v3866
  %3868 = vst [vmem:[#allocation2 + $0xc4] sm:$0x8] %v3867
  %v3869 = vld [vmem:[#allocation2 + $0xcc] sm:$0x8]
  %v3870 = vsel %vm3793, 0, %v3869
  %3871 = vst [vmem:[#allocation2 + $0xcc] sm:$0x8] %v3870
  %v3872 = vld [vmem:[#allocation2 + $0xd4] sm:$0x8]
  %v3873 = vsel %vm3793, 0, %v3872
  %3874 = vst [vmem:[#allocation2 + $0xd4] sm:$0x8] %v3873
  %v3875 = vld [vmem:[#allocation2 + $0xdc] sm:$0x8]
  %v3876 = vsel %vm3793, 0, %v3875
  %3877 = vst [vmem:[#allocation2 + $0xdc] sm:$0x8] %v3876
  %v3878 = vld [vmem:[#allocation2 + $0xe4] sm:$0x8]
  %v3879 = vsel %vm3793, 0, %v3878
  %3880 = vst [vmem:[#allocation2 + $0xe4] sm:$0x8] %v3879
  %v3881 = vld [vmem:[#allocation2 + $0xec] sm:$0x8]
  %v3882 = vsel %vm3793, 0, %v3881
  %3883 = vst [vmem:[#allocation2 + $0xec] sm:$0x8] %v3882
  %v3884 = vld [vmem:[#allocation2 + $0xf4] sm:$0x8]
  %v3885 = vsel %vm3793, 0, %v3884
  %3886 = vst [vmem:[#allocation2 + $0xf4] sm:$0x8] %v3885
  %v3887 = vld [vmem:[#allocation2 + $0xfc] sm:$0x8]
  %v3888 = vsel %vm3793, 0, %v3887
  %3889 = vst [vmem:[#allocation2 + $0xfc] sm:$0x8] %v3888
  %3890 = vrot.lane.b32.xlu0 %v1419, 64
  %v3891 = vpop.permute.xlu0 %3890
  %3892 = vrot.lane.b32.xlu0 %v1422, 64
  %v3893 = vpop.permute.xlu0 %3892
  %3894 = vrot.lane.b32.xlu0 %v1428, 64
  %v3895 = vpop.permute.xlu0 %3894
  %3896 = vrot.lane.b32.xlu0 %v1431, 64
  %v3897 = vpop.permute.xlu0 %3896
  %3898 = vrot.lane.b32.xlu0 %v1437, 64
  %v3899 = vpop.permute.xlu0 %3898
  %3900 = vrot.lane.b32.xlu0 %v1440, 64
  %v3901 = vpop.permute.xlu0 %3900
  %3902 = vrot.lane.b32.xlu0 %v1446, 64
  %v3903 = vpop.permute.xlu0 %3902
  %3904 = vrot.lane.b32.xlu0 %v1449, 64
  %v3905 = vpop.permute.xlu0 %3904
  %3906 = vrot.lane.b32.xlu0 %v1455, 64
  %v3907 = vpop.permute.xlu0 %3906
  %3908 = vrot.lane.b32.xlu0 %v1458, 64
  %v3909 = vpop.permute.xlu0 %3908
  %3910 = vrot.lane.b32.xlu0 %v1464, 64
  %v3911 = vpop.permute.xlu0 %3910
  %3912 = vrot.lane.b32.xlu0 %v1467, 64
  %v3913 = vpop.permute.xlu0 %3912
  %3914 = vrot.lane.b32.xlu0 %v1473, 64
  %v3915 = vpop.permute.xlu0 %3914
  %3916 = vrot.lane.b32.xlu0 %v1476, 64
  %v3917 = vpop.permute.xlu0 %3916
  %3918 = vrot.lane.b32.xlu0 %v1482, 64
  %v3919 = vpop.permute.xlu0 %3918
  %3920 = vrot.lane.b32.xlu0 %v1485, 64
  %v3921 = vpop.permute.xlu0 %3920
  %3922 = vrot.lane.b32.xlu0 %v1491, 64
  %v3923 = vpop.permute.xlu0 %3922
  %3924 = vrot.lane.b32.xlu0 %v1494, 64
  %v3925 = vpop.permute.xlu0 %3924
  %3926 = vrot.lane.b32.xlu0 %v1500, 64
  %v3927 = vpop.permute.xlu0 %3926
  %3928 = vrot.lane.b32.xlu0 %v1503, 64
  %v3929 = vpop.permute.xlu0 %3928
  %3930 = vrot.lane.b32.xlu0 %v1509, 64
  %v3931 = vpop.permute.xlu0 %3930
  %3932 = vrot.lane.b32.xlu0 %v1512, 64
  %v3933 = vpop.permute.xlu0 %3932
  %3934 = vrot.lane.b32.xlu0 %v1518, 64
  %v3935 = vpop.permute.xlu0 %3934
  %3936 = vrot.lane.b32.xlu0 %v1521, 64
  %v3937 = vpop.permute.xlu0 %3936
  %3938 = vrot.lane.b32.xlu0 %v1527, 64
  %v3939 = vpop.permute.xlu0 %3938
  %3940 = vrot.lane.b32.xlu0 %v1530, 64
  %v3941 = vpop.permute.xlu0 %3940
  %3942 = vrot.lane.b32.xlu0 %v1536, 64
  %v3943 = vpop.permute.xlu0 %3942
  %3944 = vrot.lane.b32.xlu0 %v1539, 64
  %v3945 = vpop.permute.xlu0 %3944
  %3946 = vrot.lane.b32.xlu0 %v2800, 64
  %v3947 = vpop.permute.xlu0 %3946
  %3948 = vrot.lane.b32.xlu0 %v2803, 64
  %v3949 = vpop.permute.xlu0 %3948
  %3950 = vrot.lane.b32.xlu0 %v1554, 64
  %v3951 = vpop.permute.xlu0 %3950
  %3952 = vrot.lane.b32.xlu0 %v1557, 64
  %v3953 = vpop.permute.xlu0 %3952
  %3954 = vrot.lane.b32.xlu0 %v1563, 64
  %v3955 = vpop.permute.xlu0 %3954
  %3956 = vrot.lane.b32.xlu0 %v1566, 64
  %v3957 = vpop.permute.xlu0 %3956
  %3958 = vrot.lane.b32.xlu0 %v1572, 64
  %v3959 = vpop.permute.xlu0 %3958
  %3960 = vrot.lane.b32.xlu0 %v1575, 64
  %v3961 = vpop.permute.xlu0 %3960
  %3962 = vrot.lane.b32.xlu0 %v1581, 64
  %v3963 = vpop.permute.xlu0 %3962
  %3964 = vrot.lane.b32.xlu0 %v1584, 64
  %v3965 = vpop.permute.xlu0 %3964
  %3966 = vrot.lane.b32.xlu0 %v1590, 64
  %v3967 = vpop.permute.xlu0 %3966
  %3968 = vrot.lane.b32.xlu0 %v1593, 64
  %v3969 = vpop.permute.xlu0 %3968
  %3970 = vrot.lane.b32.xlu0 %v1599, 64
  %v3971 = vpop.permute.xlu0 %3970
  %3972 = vrot.lane.b32.xlu0 %v1602, 64
  %v3973 = vpop.permute.xlu0 %3972
  %3974 = vrot.lane.b32.xlu0 %v1608, 64
  %v3975 = vpop.permute.xlu0 %3974
  %3976 = vrot.lane.b32.xlu0 %v1611, 64
  %v3977 = vpop.permute.xlu0 %3976
  %3978 = vrot.lane.b32.xlu0 %v1617, 64
  %v3979 = vpop.permute.xlu0 %3978
  %3980 = vrot.lane.b32.xlu0 %v1620, 64
  %v3981 = vpop.permute.xlu0 %3980
  %3982 = vrot.lane.b32.xlu0 %v1626, 64
  %v3983 = vpop.permute.xlu0 %3982
  %3984 = vrot.lane.b32.xlu0 %v1629, 64
  %v3985 = vpop.permute.xlu0 %3984
  %3986 = vrot.lane.b32.xlu0 %v1635, 64
  %v3987 = vpop.permute.xlu0 %3986
  %3988 = vrot.lane.b32.xlu0 %v1638, 64
  %v3989 = vpop.permute.xlu0 %3988
  %3990 = vrot.lane.b32.xlu0 %v1644, 64
  %v3991 = vpop.permute.xlu0 %3990
  %3992 = vrot.lane.b32.xlu0 %v1647, 64
  %v3993 = vpop.permute.xlu0 %3992
  %3994 = vrot.lane.b32.xlu0 %v1653, 64
  %v3995 = vpop.permute.xlu0 %3994
  %3996 = vrot.lane.b32.xlu0 %v1656, 64
  %v3997 = vpop.permute.xlu0 %3996
  %3998 = vrot.lane.b32.xlu0 %v1662, 64
  %v3999 = vpop.permute.xlu0 %3998
  %4000 = vrot.lane.b32.xlu0 %v1665, 64
  %v4001 = vpop.permute.xlu0 %4000
  %4002 = vrot.lane.b32.xlu0 %v1671, 64
  %v4003 = vpop.permute.xlu0 %4002
  %4004 = vrot.lane.b32.xlu0 %v1674, 64
  %v4005 = vpop.permute.xlu0 %4004
  %4006 = vrot.lane.b32.xlu0 %v2809, 64
  %v4007 = vpop.permute.xlu0 %4006
  %4008 = vrot.lane.b32.xlu0 %v2812, 64
  %v4009 = vpop.permute.xlu0 %4008
  %4070 = vst.msk [vmem:[#allocation2] sm:$0xf] %vm3787, %v3891
  %vm4071 = vcmask 585216
  %vm4072 = vmand %vm4071, %vm1402
  %v4073 = vld [vmem:[#allocation2 + $0x4] sm:$0xf]
  %v4074 = vsel %vm4072, %v3893, %v4073
  %4075 = vst [vmem:[#allocation2 + $0x4] sm:$0xf] %v4074
  %4076 = vst.msk [vmem:[#allocation2 + $0x8] sm:$0xf] %vm3787, %v3895
  %v4077 = vld [vmem:[#allocation2 + $0xc] sm:$0xf]
  %v4078 = vsel %vm4072, %v3897, %v4077
  %4079 = vst [vmem:[#allocation2 + $0xc] sm:$0xf] %v4078
  %4080 = vst.msk [vmem:[#allocation2 + $0x10] sm:$0xf] %vm3787, %v3899
  %v4081 = vld [vmem:[#allocation2 + $0x14] sm:$0xf]
  %v4082 = vsel %vm4072, %v3901, %v4081
  %4083 = vst [vmem:[#allocation2 + $0x14] sm:$0xf] %v4082
  %4084 = vst.msk [vmem:[#allocation2 + $0x18] sm:$0xf] %vm3787, %v3903
  %v4085 = vld [vmem:[#allocation2 + $0x1c] sm:$0xf]
  %v4086 = vsel %vm4072, %v3905, %v4085
  %4087 = vst [vmem:[#allocation2 + $0x1c] sm:$0xf] %v4086
  %4088 = vst.msk [vmem:[#allocation2 + $0x20] sm:$0xf] %vm3787, %v3907
  %v4089 = vld [vmem:[#allocation2 + $0x24] sm:$0xf]
  %v4090 = vsel %vm4072, %v3909, %v4089
  %4091 = vst [vmem:[#allocation2 + $0x24] sm:$0xf] %v4090
  %4092 = vst.msk [vmem:[#allocation2 + $0x28] sm:$0xf] %vm3787, %v3911
  %v4093 = vld [vmem:[#allocation2 + $0x2c] sm:$0xf]
  %v4094 = vsel %vm4072, %v3913, %v4093
  %4095 = vst [vmem:[#allocation2 + $0x2c] sm:$0xf] %v4094
  %4096 = vst.msk [vmem:[#allocation2 + $0x30] sm:$0xf] %vm3787, %v3915
  %v4097 = vld [vmem:[#allocation2 + $0x34] sm:$0xf]
  %v4098 = vsel %vm4072, %v3917, %v4097
  %4099 = vst [vmem:[#allocation2 + $0x34] sm:$0xf] %v4098
  %4100 = vst.msk [vmem:[#allocation2 + $0x38] sm:$0xf] %vm3787, %v3919
  %v4101 = vld [vmem:[#allocation2 + $0x3c] sm:$0xf]
  %v4102 = vsel %vm4072, %v3921, %v4101
  %4103 = vst [vmem:[#allocation2 + $0x3c] sm:$0xf] %v4102
  %4104 = vst.msk [vmem:[#allocation2 + $0x40] sm:$0xf] %vm3787, %v3923
  %v4105 = vld [vmem:[#allocation2 + $0x44] sm:$0xf]
  %v4106 = vsel %vm4072, %v3925, %v4105
  %4107 = vst [vmem:[#allocation2 + $0x44] sm:$0xf] %v4106
  %4108 = vst.msk [vmem:[#allocation2 + $0x48] sm:$0xf] %vm3787, %v3927
  %v4109 = vld [vmem:[#allocation2 + $0x4c] sm:$0xf]
  %v4110 = vsel %vm4072, %v3929, %v4109
  %4111 = vst [vmem:[#allocation2 + $0x4c] sm:$0xf] %v4110
  %4112 = vst.msk [vmem:[#allocation2 + $0x50] sm:$0xf] %vm3787, %v3931
  %v4113 = vld [vmem:[#allocation2 + $0x54] sm:$0xf]
  %v4114 = vsel %vm4072, %v3933, %v4113
  %4115 = vst [vmem:[#allocation2 + $0x54] sm:$0xf] %v4114
  %4116 = vst.msk [vmem:[#allocation2 + $0x58] sm:$0xf] %vm3787, %v3935
  %v4117 = vld [vmem:[#allocation2 + $0x5c] sm:$0xf]
  %v4118 = vsel %vm4072, %v3937, %v4117
  %4119 = vst [vmem:[#allocation2 + $0x5c] sm:$0xf] %v4118
  %4120 = vst.msk [vmem:[#allocation2 + $0x60] sm:$0xf] %vm3787, %v3939
  %v4121 = vld [vmem:[#allocation2 + $0x64] sm:$0xf]
  %v4122 = vsel %vm4072, %v3941, %v4121
  %4123 = vst [vmem:[#allocation2 + $0x64] sm:$0xf] %v4122
  %4124 = vst.msk [vmem:[#allocation2 + $0x68] sm:$0xf] %vm3787, %v3943
  %v4125 = vld [vmem:[#allocation2 + $0x6c] sm:$0xf]
  %v4126 = vsel %vm4072, %v3945, %v4125
  %4127 = vst [vmem:[#allocation2 + $0x6c] sm:$0xf] %v4126
  %4128 = vst.msk [vmem:[#allocation2 + $0x70] sm:$0xf] %vm3787, %v3947
  %v4129 = vld [vmem:[#allocation2 + $0x74] sm:$0xf]
  %v4130 = vsel %vm4072, %v3949, %v4129
  %4131 = vst [vmem:[#allocation2 + $0x74] sm:$0xf] %v4130
  %4132 = vst.msk [vmem:[#allocation2 + $0x80] sm:$0xf] %vm3787, %v3951
  %v4133 = vld [vmem:[#allocation2 + $0x84] sm:$0xf]
  %v4134 = vsel %vm4072, %v3953, %v4133
  %4135 = vst [vmem:[#allocation2 + $0x84] sm:$0xf] %v4134
  %4136 = vst.msk [vmem:[#allocation2 + $0x88] sm:$0xf] %vm3787, %v3955
  %v4137 = vld [vmem:[#allocation2 + $0x8c] sm:$0xf]
  %v4138 = vsel %vm4072, %v3957, %v4137
  %4139 = vst [vmem:[#allocation2 + $0x8c] sm:$0xf] %v4138
  %4140 = vst.msk [vmem:[#allocation2 + $0x90] sm:$0xf] %vm3787, %v3959
  %v4141 = vld [vmem:[#allocation2 + $0x94] sm:$0xf]
  %v4142 = vsel %vm4072, %v3961, %v4141
  %4143 = vst [vmem:[#allocation2 + $0x94] sm:$0xf] %v4142
  %4144 = vst.msk [vmem:[#allocation2 + $0x98] sm:$0xf] %vm3787, %v3963
  %v4145 = vld [vmem:[#allocation2 + $0x9c] sm:$0xf]
  %v4146 = vsel %vm4072, %v3965, %v4145
  %4147 = vst [vmem:[#allocation2 + $0x9c] sm:$0xf] %v4146
  %4148 = vst.msk [vmem:[#allocation2 + $0xa0] sm:$0xf] %vm3787, %v3967
  %v4149 = vld [vmem:[#allocation2 + $0xa4] sm:$0xf]
  %v4150 = vsel %vm4072, %v3969, %v4149
  %4151 = vst [vmem:[#allocation2 + $0xa4] sm:$0xf] %v4150
  %4152 = vst.msk [vmem:[#allocation2 + $0xa8] sm:$0xf] %vm3787, %v3971
  %v4153 = vld [vmem:[#allocation2 + $0xac] sm:$0xf]
  %v4154 = vsel %vm4072, %v3973, %v4153
  %4155 = vst [vmem:[#allocation2 + $0xac] sm:$0xf] %v4154
  %4156 = vst.msk [vmem:[#allocation2 + $0xb0] sm:$0xf] %vm3787, %v3975
  %v4157 = vld [vmem:[#allocation2 + $0xb4] sm:$0xf]
  %v4158 = vsel %vm4072, %v3977, %v4157
  %4159 = vst [vmem:[#allocation2 + $0xb4] sm:$0xf] %v4158
  %4160 = vst.msk [vmem:[#allocation2 + $0xb8] sm:$0xf] %vm3787, %v3979
  %v4161 = vld [vmem:[#allocation2 + $0xbc] sm:$0xf]
  %v4162 = vsel %vm4072, %v3981, %v4161
  %4163 = vst [vmem:[#allocation2 + $0xbc] sm:$0xf] %v4162
  %4164 = vst.msk [vmem:[#allocation2 + $0xc0] sm:$0xf] %vm3787, %v3983
  %v4165 = vld [vmem:[#allocation2 + $0xc4] sm:$0xf]
  %v4166 = vsel %vm4072, %v3985, %v4165
  %4167 = vst [vmem:[#allocation2 + $0xc4] sm:$0xf] %v4166
  %4168 = vst.msk [vmem:[#allocation2 + $0xc8] sm:$0xf] %vm3787, %v3987
  %v4169 = vld [vmem:[#allocation2 + $0xcc] sm:$0xf]
  %v4170 = vsel %vm4072, %v3989, %v4169
  %4171 = vst [vmem:[#allocation2 + $0xcc] sm:$0xf] %v4170
  %4172 = vst.msk [vmem:[#allocation2 + $0xd0] sm:$0xf] %vm3787, %v3991
  %v4173 = vld [vmem:[#allocation2 + $0xd4] sm:$0xf]
  %v4174 = vsel %vm4072, %v3993, %v4173
  %4175 = vst [vmem:[#allocation2 + $0xd4] sm:$0xf] %v4174
  %4176 = vst.msk [vmem:[#allocation2 + $0xd8] sm:$0xf] %vm3787, %v3995
  %v4177 = vld [vmem:[#allocation2 + $0xdc] sm:$0xf]
  %v4178 = vsel %vm4072, %v3997, %v4177
  %4179 = vst [vmem:[#allocation2 + $0xdc] sm:$0xf] %v4178
  %4180 = vst.msk [vmem:[#allocation2 + $0xe0] sm:$0xf] %vm3787, %v3999
  %v4181 = vld [vmem:[#allocation2 + $0xe4] sm:$0xf]
  %v4182 = vsel %vm4072, %v4001, %v4181
  %4183 = vst [vmem:[#allocation2 + $0xe4] sm:$0xf] %v4182
  %4184 = vst.msk [vmem:[#allocation2 + $0xe8] sm:$0xf] %vm3787, %v4003
  %v4185 = vld [vmem:[#allocation2 + $0xec] sm:$0xf]
  %v4186 = vsel %vm4072, %v4005, %v4185
  %4187 = vst [vmem:[#allocation2 + $0xec] sm:$0xf] %v4186
  %4188 = vst.msk [vmem:[#allocation2 + $0xf0] sm:$0xf] %vm3787, %v4007
  %v4189 = vld [vmem:[#allocation2 + $0xf4] sm:$0xf]
  %v4190 = vsel %vm4072, %v4009, %v4189
  %4191 = vst [vmem:[#allocation2 + $0xf4] sm:$0xf] %v4190
  %v4192 = vld [vmem:[#allocation2] sm:$0xf]
  %v4193 = vld [vmem:[#allocation2 + $0x4] sm:$0xf]
  %v4194 = vld [vmem:[#allocation2 + $0x8] sm:$0xf]
  %v4195 = vld [vmem:[#allocation2 + $0xc] sm:$0xf]
  %v4196 = vld [vmem:[#allocation2 + $0x10] sm:$0xf]
  %v4197 = vld [vmem:[#allocation2 + $0x14] sm:$0xf]
  %v4198 = vld [vmem:[#allocation2 + $0x18] sm:$0xf]
  %v4199 = vld [vmem:[#allocation2 + $0x1c] sm:$0xf]
  %v4200 = vld [vmem:[#allocation2 + $0x20] sm:$0xf]
  %v4201 = vld [vmem:[#allocation2 + $0x24] sm:$0xf]
  %v4202 = vld [vmem:[#allocation2 + $0x28] sm:$0xf]
  %v4203 = vld [vmem:[#allocation2 + $0x2c] sm:$0xf]
  %v4204 = vld [vmem:[#allocation2 + $0x30] sm:$0xf]
  %v4205 = vld [vmem:[#allocation2 + $0x34] sm:$0xf]
  %v4206 = vld [vmem:[#allocation2 + $0x38] sm:$0xf]
  %v4207 = vld [vmem:[#allocation2 + $0x3c] sm:$0xf]
  %v4208 = vld [vmem:[#allocation2 + $0x40] sm:$0xf]
  %v4209 = vld [vmem:[#allocation2 + $0x44] sm:$0xf]
  %v4210 = vld [vmem:[#allocation2 + $0x48] sm:$0xf]
  %v4211 = vld [vmem:[#allocation2 + $0x4c] sm:$0xf]
  %v4212 = vld [vmem:[#allocation2 + $0x50] sm:$0xf]
  %v4213 = vld [vmem:[#allocation2 + $0x54] sm:$0xf]
  %v4214 = vld [vmem:[#allocation2 + $0x58] sm:$0xf]
  %v4215 = vld [vmem:[#allocation2 + $0x5c] sm:$0xf]
  %v4216 = vld [vmem:[#allocation2 + $0x60] sm:$0xf]
  %v4217 = vld [vmem:[#allocation2 + $0x64] sm:$0xf]
  %v4218 = vld [vmem:[#allocation2 + $0x68] sm:$0xf]
  %v4219 = vld [vmem:[#allocation2 + $0x6c] sm:$0xf]
  %v4220 = vld [vmem:[#allocation2 + $0x70] sm:$0xf]
  %v4221 = vld [vmem:[#allocation2 + $0x74] sm:$0xf]
  %v4222 = vld [vmem:[#allocation2 + $0x78] sm:$0xf]
  %v4223 = vld [vmem:[#allocation2 + $0x7c] sm:$0xf]
  %v4224 = vld [vmem:[#allocation2 + $0x80] sm:$0xf]
  %v4225 = vld [vmem:[#allocation2 + $0x84] sm:$0xf]
  %v4226 = vld [vmem:[#allocation2 + $0x88] sm:$0xf]
  %v4227 = vld [vmem:[#allocation2 + $0x8c] sm:$0xf]
  %v4228 = vld [vmem:[#allocation2 + $0x90] sm:$0xf]
  %v4229 = vld [vmem:[#allocation2 + $0x94] sm:$0xf]
  %v4230 = vld [vmem:[#allocation2 + $0x98] sm:$0xf]
  %v4231 = vld [vmem:[#allocation2 + $0x9c] sm:$0xf]
  %v4232 = vld [vmem:[#allocation2 + $0xa0] sm:$0xf]
  %v4233 = vld [vmem:[#allocation2 + $0xa4] sm:$0xf]
  %v4234 = vld [vmem:[#allocation2 + $0xa8] sm:$0xf]
  %v4235 = vld [vmem:[#allocation2 + $0xac] sm:$0xf]
  %v4236 = vld [vmem:[#allocation2 + $0xb0] sm:$0xf]
  %v4237 = vld [vmem:[#allocation2 + $0xb4] sm:$0xf]
  %v4238 = vld [vmem:[#allocation2 + $0xb8] sm:$0xf]
  %v4239 = vld [vmem:[#allocation2 + $0xbc] sm:$0xf]
  %v4240 = vld [vmem:[#allocation2 + $0xc0] sm:$0xf]
  %v4241 = vld [vmem:[#allocation2 + $0xc4] sm:$0xf]
  %v4242 = vld [vmem:[#allocation2 + $0xc8] sm:$0xf]
  %v4243 = vld [vmem:[#allocation2 + $0xcc] sm:$0xf]
  %v4244 = vld [vmem:[#allocation2 + $0xd0] sm:$0xf]
  %v4245 = vld [vmem:[#allocation2 + $0xd4] sm:$0xf]
  %v4246 = vld [vmem:[#allocation2 + $0xd8] sm:$0xf]
  %v4247 = vld [vmem:[#allocation2 + $0xdc] sm:$0xf]
  %v4248 = vld [vmem:[#allocation2 + $0xe0] sm:$0xf]
  %v4249 = vld [vmem:[#allocation2 + $0xe4] sm:$0xf]
  %v4250 = vld [vmem:[#allocation2 + $0xe8] sm:$0xf]
  %v4251 = vld [vmem:[#allocation2 + $0xec] sm:$0xf]
  %v4252 = vld [vmem:[#allocation2 + $0xf0] sm:$0xf]
  %v4253 = vld [vmem:[#allocation2 + $0xf4] sm:$0xf]
  %v4254 = vld [vmem:[#allocation2 + $0xf8] sm:$0xf]
  %v4255 = vld [vmem:[#allocation2 + $0xfc] sm:$0xf]
  %v4256 = vld [vmem:[%s1] sm:$0xf]
  %v4257 = vld [vmem:[%s1 + $0x4] sm:$0xf]
  %v4258 = vld [vmem:[%s1 + $0x8] sm:$0xf]
  %v4259 = vld [vmem:[%s1 + $0xc] sm:$0xf]
  %v4260 = vld [vmem:[%s1 + $0x10] sm:$0xf]
  %v4261 = vld [vmem:[%s1 + $0x14] sm:$0xf]
  %v4262 = vld [vmem:[%s1 + $0x18] sm:$0xf]
  %v4263 = vld [vmem:[%s1 + $0x1c] sm:$0xf]
  %v4264 = vld [vmem:[%s1 + $0x20] sm:$0xf]
  %v4265 = vld [vmem:[%s2] sm:$0x1]
  %v4267 = vlaneseq
  %v4268 = vshrl.u32 %v4267, 7
  %v4269 = vsub.s32 0, %v4268
  %v4270 = vrot.slane %v4265, %v4269
  %v4336 = vunpack.c.l.b16 %v4192
  %v4337 = vunpack.c.l.b16 %v4193
  %v4338 = vunpack.c.l.b16 %v4194
  %v4339 = vunpack.c.l.b16 %v4195
  %v4340 = vunpack.c.l.b16 %v4196
  %v4341 = vunpack.c.l.b16 %v4197
  %v4342 = vunpack.c.l.b16 %v4198
  %v4343 = vunpack.c.l.b16 %v4199
  %v4344 = vunpack.c.l.b16 %v4200
  %v4345 = vunpack.c.l.b16 %v4201
  %v4346 = vunpack.c.l.b16 %v4202
  %v4347 = vunpack.c.l.b16 %v4203
  %v4348 = vunpack.c.l.b16 %v4204
  %v4349 = vunpack.c.l.b16 %v4205
  %v4350 = vunpack.c.l.b16 %v4206
  %v4351 = vunpack.c.l.b16 %v4207
  %v4352 = vunpack.c.l.b16 %v4208
  %v4353 = vunpack.c.l.b16 %v4209
  %v4354 = vunpack.c.l.b16 %v4210
  %v4355 = vunpack.c.l.b16 %v4211
  %v4356 = vunpack.c.l.b16 %v4212
  %v4357 = vunpack.c.l.b16 %v4213
  %v4358 = vunpack.c.l.b16 %v4214
  %v4359 = vunpack.c.l.b16 %v4215
  %v4360 = vunpack.c.l.b16 %v4216
  %v4361 = vunpack.c.l.b16 %v4217
  %v4362 = vunpack.c.l.b16 %v4218
  %v4363 = vunpack.c.l.b16 %v4219
  %v4364 = vunpack.c.l.b16 %v4220
  %v4365 = vunpack.c.l.b16 %v4221
  %v4366 = vunpack.c.l.b16 %v4222
  %v4367 = vunpack.c.l.b16 %v4223
  %v4368 = vunpack.c.l.b16 %v4224
  %v4369 = vunpack.c.l.b16 %v4225
  %v4370 = vunpack.c.l.b16 %v4226
  %v4371 = vunpack.c.l.b16 %v4227
  %v4372 = vunpack.c.l.b16 %v4228
  %v4373 = vunpack.c.l.b16 %v4229
  %v4374 = vunpack.c.l.b16 %v4230
  %v4375 = vunpack.c.l.b16 %v4231
  %v4376 = vunpack.c.l.b16 %v4232
  %v4377 = vunpack.c.l.b16 %v4233
  %v4378 = vunpack.c.l.b16 %v4234
  %v4379 = vunpack.c.l.b16 %v4235
  %v4380 = vunpack.c.l.b16 %v4236
  %v4381 = vunpack.c.l.b16 %v4237
  %v4382 = vunpack.c.l.b16 %v4238
  %v4383 = vunpack.c.l.b16 %v4239
  %v4384 = vunpack.c.l.b16 %v4240
  %v4385 = vunpack.c.l.b16 %v4241
  %v4386 = vunpack.c.l.b16 %v4242
  %v4387 = vunpack.c.l.b16 %v4243
  %v4388 = vunpack.c.l.b16 %v4244
  %v4389 = vunpack.c.l.b16 %v4245
  %v4390 = vunpack.c.l.b16 %v4246
  %v4391 = vunpack.c.l.b16 %v4247
  %v4392 = vunpack.c.l.b16 %v4248
  %v4393 = vunpack.c.l.b16 %v4249
  %v4394 = vunpack.c.l.b16 %v4250
  %v4395 = vunpack.c.l.b16 %v4251
  %v4396 = vunpack.c.l.b16 %v4252
  %v4397 = vunpack.c.l.b16 %v4253
  %v4398 = vunpack.c.l.b16 %v4254
  %v4399 = vunpack.c.l.b16 %v4255
  %v4400 = vpack.c.b16 %v4337, %v4336
  %v4401 = vpack.c.b16 %v4339, %v4338
  %v4402 = vpack.c.b16 %v4341, %v4340
  %v4403 = vpack.c.b16 %v4343, %v4342
  %v4404 = vpack.c.b16 %v4345, %v4344
  %v4405 = vpack.c.b16 %v4347, %v4346
  %v4406 = vpack.c.b16 %v4349, %v4348
  %v4407 = vpack.c.b16 %v4351, %v4350
  %v4408 = vpack.c.b16 %v4353, %v4352
  %v4409 = vpack.c.b16 %v4355, %v4354
  %v4410 = vpack.c.b16 %v4357, %v4356
  %v4411 = vpack.c.b16 %v4359, %v4358
  %v4412 = vpack.c.b16 %v4361, %v4360
  %v4413 = vpack.c.b16 %v4363, %v4362
  %v4414 = vpack.c.b16 %v4365, %v4364
  %v4415 = vpack.c.b16 %v4367, %v4366
  %v4416 = vpack.c.b16 %v4369, %v4368
  %v4417 = vpack.c.b16 %v4371, %v4370
  %v4418 = vpack.c.b16 %v4373, %v4372
  %v4419 = vpack.c.b16 %v4375, %v4374
  %v4420 = vpack.c.b16 %v4377, %v4376
  %v4421 = vpack.c.b16 %v4379, %v4378
  %v4422 = vpack.c.b16 %v4381, %v4380
  %v4423 = vpack.c.b16 %v4383, %v4382
  %v4424 = vpack.c.b16 %v4385, %v4384
  %v4425 = vpack.c.b16 %v4387, %v4386
  %v4426 = vpack.c.b16 %v4389, %v4388
  %v4427 = vpack.c.b16 %v4391, %v4390
  %v4428 = vpack.c.b16 %v4393, %v4392
  %v4429 = vpack.c.b16 %v4395, %v4394
  %v4430 = vpack.c.b16 %v4397, %v4396
  %v4431 = vpack.c.b16 %v4399, %v4398
  %v4441 = vunpack.c.l.b16 %v4256
  %v4442 = vunpack.c.l.b16 %v4257
  %v4443 = vunpack.c.l.b16 %v4258
  %v4444 = vunpack.c.l.b16 %v4259
  %v4445 = vunpack.c.l.b16 %v4260
  %v4446 = vunpack.c.l.b16 %v4261
  %v4447 = vunpack.c.l.b16 %v4262
  %v4448 = vunpack.c.l.b16 %v4263
  %v4449 = vunpack.c.l.b16 %v4264
  %v4450 = vpack.c.b16 %v4442, %v4441
  %v4451 = vpack.c.b16 %v4444, %v4443
  %v4452 = vpack.c.b16 %v4446, %v4445
  %v4453 = vpack.c.b16 %v4448, %v4447
  %v4454 = vpack.c.b16 %v4449, %v4449
  %vm4459 = vcmask 588800
  %v4461 = vsel %vm4459, %v4400, 0
  %v4464 = vsel %vm4459, %v4401, 0
  %v4467 = vsel %vm4459, %v4402, 0
  %v4470 = vsel %vm4459, %v4403, 0
  %v4473 = vsel %vm4459, %v4404, 0
  %v4476 = vsel %vm4459, %v4405, 0
  %v4479 = vsel %vm4459, %v4406, 0
  %v4482 = vsel %vm4459, %v4407, 0
  %v4485 = vsel %vm4459, %v4408, 0
  %v4488 = vsel %vm4459, %v4409, 0
  %v4491 = vsel %vm4459, %v4410, 0
  %v4494 = vsel %vm4459, %v4411, 0
  %v4497 = vsel %vm4459, %v4412, 0
  %v4500 = vsel %vm4459, %v4413, 0
  %v4503 = vsel %vm4459, %v4414, 0
  %v4506 = vsel %vm4459, %v4415, 0
  %v4509 = vsel %vm4459, %v4416, 0
  %v4512 = vsel %vm4459, %v4417, 0
  %v4515 = vsel %vm4459, %v4418, 0
  %v4518 = vsel %vm4459, %v4419, 0
  %v4521 = vsel %vm4459, %v4420, 0
  %v4524 = vsel %vm4459, %v4421, 0
  %v4527 = vsel %vm4459, %v4422, 0
  %v4530 = vsel %vm4459, %v4423, 0
  %v4533 = vsel %vm4459, %v4424, 0
  %v4536 = vsel %vm4459, %v4425, 0
  %v4539 = vsel %vm4459, %v4426, 0
  %v4542 = vsel %vm4459, %v4427, 0
  %v4545 = vsel %vm4459, %v4428, 0
  %v4548 = vsel %vm4459, %v4429, 0
  %v4551 = vsel %vm4459, %v4430, 0
  %v4554 = vsel %vm4459, %v4431, 0
  %vm4556 = vcmask 1043456
  %v4558 = vsel %vm4556, %v4454, 0
  %4560 = vmatprep.subr.bf16.mxu0 0
  %4561 = vmatpush1.bf16.msra.mxu0 0
  %4562 = vmatprep.subr.bf16.mxu0 0
  %4563 = vmatpush1.bf16.msra.mxu0 0
  %4564 = vmatprep.subr.bf16.mxu0 0
  %4565 = vmatpush1.bf16.msra.mxu0 0
  %4566 = vmatprep.subr.bf16.mxu0 0
  %4567 = vmatpush1.bf16.msra.mxu0 %v4558
  %4568 = vmatprep.subr.bf16.mxu0 0
  %4569 = vmatpush1.bf16.msra.mxu0 %v4453
  %4570 = vmatprep.subr.bf16.mxu0 0
  %4571 = vmatpush1.bf16.msra.mxu0 %v4452
  %4572 = vmatprep.subr.bf16.mxu0 0
  %4573 = vmatpush1.bf16.msra.mxu0 %v4451
  %4574 = vmatprep.subr.bf16.mxu0 0
  %4575 = vmatpush1.bf16.msra.mxu0 %v4450
  %4576 = vmatprep.subr.bf16.mxu0 0
  %4577 = vmatpush2.bf16.msra.mxu0 0
  %4578 = vmatprep.subr.bf16.mxu0 0
  %4579 = vmatpush2.bf16.msra.mxu0 0
  %4580 = vmatprep.subr.bf16.mxu0 0
  %4581 = vmatpush2.bf16.msra.mxu0 0
  %4582 = vmatprep.subr.bf16.mxu0 0
  %4583 = vmatpush2.bf16.msra.mxu0 0
  %4584 = vmatprep.subr.bf16.mxu0 0
  %4585 = vmatpush2.bf16.msra.mxu0 0
  %4586 = vmatprep.subr.bf16.mxu0 0
  %4587 = vmatpush2.bf16.msra.mxu0 0
  %4588 = vmatprep.subr.bf16.mxu0 0
  %4589 = vmatpush2.bf16.msra.mxu0 0
  %4590 = vmatprep.subr.bf16.mxu0 0
  %4591 = vmatpush2.bf16.msra.mxu0 0
  %4592 = vmatprep.mubr.bf16.mxu0 0
  %4593 = vmatmul.mubr.bf16.gmra.mxu0 %v4461
  %v4594 = vpop.f32.mrf.mxu0
  %v4595 = vadd.f32 %v4270, %v4594
  %v4596 = vpop.f32.mrf.mxu0
  %v4597 = vpop.f32.mrf.mxu0
  %v4598 = vadd.f32 %v4270, %v4597
  %v4599 = vpop.f32.mrf.mxu0
  %4600 = vmatprep.mubr.bf16.mxu0 0
  %4601 = vmatmul.mubr.bf16.gmra.mxu0 %v4464
  %v4602 = vpop.f32.mrf.mxu0
  %v4603 = vadd.f32 %v4270, %v4602
  %v4604 = vpop.f32.mrf.mxu0
  %v4605 = vpop.f32.mrf.mxu0
  %v4606 = vadd.f32 %v4270, %v4605
  %v4607 = vpop.f32.mrf.mxu0
  %4608 = vmatprep.mubr.bf16.mxu0 0
  %4609 = vmatmul.mubr.bf16.gmra.mxu0 %v4467
  %v4610 = vpop.f32.mrf.mxu0
  %v4611 = vadd.f32 %v4270, %v4610
  %v4612 = vpop.f32.mrf.mxu0
  %v4613 = vpop.f32.mrf.mxu0
  %v4614 = vadd.f32 %v4270, %v4613
  %v4615 = vpop.f32.mrf.mxu0
  %4616 = vmatprep.mubr.bf16.mxu0 0
  %4617 = vmatmul.mubr.bf16.gmra.mxu0 %v4470
  %v4618 = vpop.f32.mrf.mxu0
  %v4619 = vadd.f32 %v4270, %v4618
  %v4620 = vpop.f32.mrf.mxu0
  %v4621 = vpop.f32.mrf.mxu0
  %v4622 = vadd.f32 %v4270, %v4621
  %v4623 = vpop.f32.mrf.mxu0
  %4624 = vmatprep.mubr.bf16.mxu0 0
  %4625 = vmatmul.mubr.bf16.gmra.mxu0 %v4473
  %v4626 = vpop.f32.mrf.mxu0
  %v4627 = vadd.f32 %v4270, %v4626
  %v4628 = vpop.f32.mrf.mxu0
  %v4629 = vpop.f32.mrf.mxu0
  %v4630 = vadd.f32 %v4270, %v4629
  %v4631 = vpop.f32.mrf.mxu0
  %4632 = vmatprep.mubr.bf16.mxu0 0
  %4633 = vmatmul.mubr.bf16.gmra.mxu0 %v4476
  %v4634 = vpop.f32.mrf.mxu0
  %v4635 = vadd.f32 %v4270, %v4634
  %v4636 = vpop.f32.mrf.mxu0
  %v4637 = vpop.f32.mrf.mxu0
  %v4638 = vadd.f32 %v4270, %v4637
  %v4639 = vpop.f32.mrf.mxu0
  %4640 = vmatprep.mubr.bf16.mxu0 0
  %4641 = vmatmul.mubr.bf16.gmra.mxu0 %v4479
  %v4642 = vpop.f32.mrf.mxu0
  %v4643 = vadd.f32 %v4270, %v4642
  %v4644 = vpop.f32.mrf.mxu0
  %v4645 = vpop.f32.mrf.mxu0
  %v4646 = vadd.f32 %v4270, %v4645
  %v4647 = vpop.f32.mrf.mxu0
  %4648 = vmatprep.mubr.bf16.mxu0 0
  %4649 = vmatmul.mubr.bf16.gmra.mxu0 %v4482
  %v4650 = vpop.f32.mrf.mxu0
  %v4651 = vadd.f32 %v4270, %v4650
  %v4652 = vpop.f32.mrf.mxu0
  %v4653 = vpop.f32.mrf.mxu0
  %v4654 = vadd.f32 %v4270, %v4653
  %v4655 = vpop.f32.mrf.mxu0
  %4656 = vmatprep.mubr.bf16.mxu0 0
  %4657 = vmatmul.mubr.bf16.gmra.mxu0 %v4485
  %v4658 = vpop.f32.mrf.mxu0
  %v4659 = vadd.f32 %v4270, %v4658
  %v4660 = vpop.f32.mrf.mxu0
  %v4661 = vpop.f32.mrf.mxu0
  %v4662 = vadd.f32 %v4270, %v4661
  %v4663 = vpop.f32.mrf.mxu0
  %4664 = vmatprep.mubr.bf16.mxu0 0
  %4665 = vmatmul.mubr.bf16.gmra.mxu0 %v4488
  %v4666 = vpop.f32.mrf.mxu0
  %v4667 = vadd.f32 %v4270, %v4666
  %v4668 = vpop.f32.mrf.mxu0
  %v4669 = vpop.f32.mrf.mxu0
  %v4670 = vadd.f32 %v4270, %v4669
  %v4671 = vpop.f32.mrf.mxu0
  %4672 = vmatprep.mubr.bf16.mxu0 0
  %4673 = vmatmul.mubr.bf16.gmra.mxu0 %v4491
  %v4674 = vpop.f32.mrf.mxu0
  %v4675 = vadd.f32 %v4270, %v4674
  %v4676 = vpop.f32.mrf.mxu0
  %v4677 = vpop.f32.mrf.mxu0
  %v4678 = vadd.f32 %v4270, %v4677
  %v4679 = vpop.f32.mrf.mxu0
  %4680 = vmatprep.mubr.bf16.mxu0 0
  %4681 = vmatmul.mubr.bf16.gmra.mxu0 %v4494
  %v4682 = vpop.f32.mrf.mxu0
  %v4683 = vadd.f32 %v4270, %v4682
  %v4684 = vpop.f32.mrf.mxu0
  %v4685 = vpop.f32.mrf.mxu0
  %v4686 = vadd.f32 %v4270, %v4685
  %v4687 = vpop.f32.mrf.mxu0
  %4688 = vmatprep.mubr.bf16.mxu0 0
  %4689 = vmatmul.mubr.bf16.gmra.mxu0 %v4497
  %v4690 = vpop.f32.mrf.mxu0
  %v4691 = vadd.f32 %v4270, %v4690
  %v4692 = vpop.f32.mrf.mxu0
  %v4693 = vpop.f32.mrf.mxu0
  %v4694 = vadd.f32 %v4270, %v4693
  %v4695 = vpop.f32.mrf.mxu0
  %4696 = vmatprep.mubr.bf16.mxu0 0
  %4697 = vmatmul.mubr.bf16.gmra.mxu0 %v4500
  %v4698 = vpop.f32.mrf.mxu0
  %v4699 = vadd.f32 %v4270, %v4698
  %v4700 = vpop.f32.mrf.mxu0
  %v4701 = vpop.f32.mrf.mxu0
  %v4702 = vadd.f32 %v4270, %v4701
  %v4703 = vpop.f32.mrf.mxu0
  %4704 = vmatprep.mubr.bf16.mxu0 0
  %4705 = vmatmul.mubr.bf16.gmra.mxu0 %v4503
  %v4706 = vpop.f32.mrf.mxu0
  %v4707 = vadd.f32 %v4270, %v4706
  %v4708 = vpop.f32.mrf.mxu0
  %v4709 = vpop.f32.mrf.mxu0
  %v4710 = vadd.f32 %v4270, %v4709
  %v4711 = vpop.f32.mrf.mxu0
  %4712 = vmatprep.mubr.bf16.mxu0 0
  %4713 = vmatmul.mubr.bf16.gmra.mxu0 %v4506
  %v4714 = vpop.f32.mrf.mxu0
  %v4715 = vadd.f32 %v4270, %v4714
  %v4716 = vpop.f32.mrf.mxu0
  %v4717 = vpop.f32.mrf.mxu0
  %v4718 = vadd.f32 %v4270, %v4717
  %v4719 = vpop.f32.mrf.mxu0
  %4720 = vmatprep.mubr.bf16.mxu0 0
  %4721 = vmatmul.mubr.bf16.gmra.mxu0 %v4509
  %v4722 = vpop.f32.mrf.mxu0
  %v4723 = vadd.f32 %v4270, %v4722
  %v4724 = vpop.f32.mrf.mxu0
  %v4725 = vpop.f32.mrf.mxu0
  %v4726 = vadd.f32 %v4270, %v4725
  %v4727 = vpop.f32.mrf.mxu0
  %4728 = vmatprep.mubr.bf16.mxu0 0
  %4729 = vmatmul.mubr.bf16.gmra.mxu0 %v4512
  %v4730 = vpop.f32.mrf.mxu0
  %v4731 = vadd.f32 %v4270, %v4730
  %v4732 = vpop.f32.mrf.mxu0
  %v4733 = vpop.f32.mrf.mxu0
  %v4734 = vadd.f32 %v4270, %v4733
  %v4735 = vpop.f32.mrf.mxu0
  %4736 = vmatprep.mubr.bf16.mxu0 0
  %4737 = vmatmul.mubr.bf16.gmra.mxu0 %v4515
  %v4738 = vpop.f32.mrf.mxu0
  %v4739 = vadd.f32 %v4270, %v4738
  %v4740 = vpop.f32.mrf.mxu0
  %v4741 = vpop.f32.mrf.mxu0
  %v4742 = vadd.f32 %v4270, %v4741
  %v4743 = vpop.f32.mrf.mxu0
  %4744 = vmatprep.mubr.bf16.mxu0 0
  %4745 = vmatmul.mubr.bf16.gmra.mxu0 %v4518
  %v4746 = vpop.f32.mrf.mxu0
  %v4747 = vadd.f32 %v4270, %v4746
  %v4748 = vpop.f32.mrf.mxu0
  %v4749 = vpop.f32.mrf.mxu0
  %v4750 = vadd.f32 %v4270, %v4749
  %v4751 = vpop.f32.mrf.mxu0
  %4752 = vmatprep.mubr.bf16.mxu0 0
  %4753 = vmatmul.mubr.bf16.gmra.mxu0 %v4521
  %v4754 = vpop.f32.mrf.mxu0
  %v4755 = vadd.f32 %v4270, %v4754
  %v4756 = vpop.f32.mrf.mxu0
  %v4757 = vpop.f32.mrf.mxu0
  %v4758 = vadd.f32 %v4270, %v4757
  %v4759 = vpop.f32.mrf.mxu0
  %4760 = vmatprep.mubr.bf16.mxu0 0
  %4761 = vmatmul.mubr.bf16.gmra.mxu0 %v4524
  %v4762 = vpop.f32.mrf.mxu0
  %v4763 = vadd.f32 %v4270, %v4762
  %v4764 = vpop.f32.mrf.mxu0
  %v4765 = vpop.f32.mrf.mxu0
  %v4766 = vadd.f32 %v4270, %v4765
  %v4767 = vpop.f32.mrf.mxu0
  %4768 = vmatprep.mubr.bf16.mxu0 0
  %4769 = vmatmul.mubr.bf16.gmra.mxu0 %v4527
  %v4770 = vpop.f32.mrf.mxu0
  %v4771 = vadd.f32 %v4270, %v4770
  %v4772 = vpop.f32.mrf.mxu0
  %v4773 = vpop.f32.mrf.mxu0
  %v4774 = vadd.f32 %v4270, %v4773
  %v4775 = vpop.f32.mrf.mxu0
  %4776 = vmatprep.mubr.bf16.mxu0 0
  %4777 = vmatmul.mubr.bf16.gmra.mxu0 %v4530
  %v4778 = vpop.f32.mrf.mxu0
  %v4779 = vadd.f32 %v4270, %v4778
  %v4780 = vpop.f32.mrf.mxu0
  %v4781 = vpop.f32.mrf.mxu0
  %v4782 = vadd.f32 %v4270, %v4781
  %v4783 = vpop.f32.mrf.mxu0
  %4784 = vmatprep.mubr.bf16.mxu0 0
  %4785 = vmatmul.mubr.bf16.gmra.mxu0 %v4533
  %v4786 = vpop.f32.mrf.mxu0
  %v4787 = vadd.f32 %v4270, %v4786
  %v4788 = vpop.f32.mrf.mxu0
  %v4789 = vpop.f32.mrf.mxu0
  %v4790 = vadd.f32 %v4270, %v4789
  %v4791 = vpop.f32.mrf.mxu0
  %4792 = vmatprep.mubr.bf16.mxu0 0
  %4793 = vmatmul.mubr.bf16.gmra.mxu0 %v4536
  %v4794 = vpop.f32.mrf.mxu0
  %v4795 = vadd.f32 %v4270, %v4794
  %v4796 = vpop.f32.mrf.mxu0
  %v4797 = vpop.f32.mrf.mxu0
  %v4798 = vadd.f32 %v4270, %v4797
  %v4799 = vpop.f32.mrf.mxu0
  %4800 = vmatprep.mubr.bf16.mxu0 0
  %4801 = vmatmul.mubr.bf16.gmra.mxu0 %v4539
  %v4802 = vpop.f32.mrf.mxu0
  %v4803 = vadd.f32 %v4270, %v4802
  %v4804 = vpop.f32.mrf.mxu0
  %v4805 = vpop.f32.mrf.mxu0
  %v4806 = vadd.f32 %v4270, %v4805
  %v4807 = vpop.f32.mrf.mxu0
  %4808 = vmatprep.mubr.bf16.mxu0 0
  %4809 = vmatmul.mubr.bf16.gmra.mxu0 %v4542
  %v4810 = vpop.f32.mrf.mxu0
  %v4811 = vadd.f32 %v4270, %v4810
  %v4812 = vpop.f32.mrf.mxu0
  %v4813 = vpop.f32.mrf.mxu0
  %v4814 = vadd.f32 %v4270, %v4813
  %v4815 = vpop.f32.mrf.mxu0
  %4816 = vmatprep.mubr.bf16.mxu0 0
  %4817 = vmatmul.mubr.bf16.gmra.mxu0 %v4545
  %v4818 = vpop.f32.mrf.mxu0
  %v4819 = vadd.f32 %v4270, %v4818
  %v4820 = vpop.f32.mrf.mxu0
  %v4821 = vpop.f32.mrf.mxu0
  %v4822 = vadd.f32 %v4270, %v4821
  %v4823 = vpop.f32.mrf.mxu0
  %4824 = vmatprep.mubr.bf16.mxu0 0
  %4825 = vmatmul.mubr.bf16.gmra.mxu0 %v4548
  %v4826 = vpop.f32.mrf.mxu0
  %v4827 = vadd.f32 %v4270, %v4826
  %v4828 = vpop.f32.mrf.mxu0
  %v4829 = vpop.f32.mrf.mxu0
  %v4830 = vadd.f32 %v4270, %v4829
  %v4831 = vpop.f32.mrf.mxu0
  %4832 = vmatprep.mubr.bf16.mxu0 0
  %4833 = vmatmul.mubr.bf16.gmra.mxu0 %v4551
  %v4834 = vpop.f32.mrf.mxu0
  %v4835 = vadd.f32 %v4270, %v4834
  %v4836 = vpop.f32.mrf.mxu0
  %v4837 = vpop.f32.mrf.mxu0
  %v4838 = vadd.f32 %v4270, %v4837
  %v4839 = vpop.f32.mrf.mxu0
  %4840 = vmatprep.mubr.bf16.mxu0 0
  %4841 = vmatmul.mubr.bf16.gmra.mxu0 %v4554
  %v4842 = vpop.f32.mrf.mxu0
  %v4843 = vadd.f32 %v4270, %v4842
  %v4844 = vpop.f32.mrf.mxu0
  %v4845 = vpop.f32.mrf.mxu0
  %v4846 = vadd.f32 %v4270, %v4845
  %v4847 = vpop.f32.mrf.mxu0
  %4848 = vdwg.mxu0
  %vm4849 = vcmask 64512
  %v4850 = vsel %vm4849, %v4595, 0.0
  %v4851 = vsel %vm4849, %v4598, 0.0
  %v4852 = vadd.f32 %v4850, %v4851
  %v4853 = vsel %vm4849, %v4603, 0.0
  %v4854 = vadd.f32 %v4852, %v4853
  %v4855 = vsel %vm4849, %v4606, 0.0
  %v4856 = vadd.f32 %v4854, %v4855
  %v4857 = vsel %vm4849, %v4611, 0.0
  %v4858 = vadd.f32 %v4856, %v4857
  %v4859 = vsel %vm4849, %v4614, 0.0
  %v4860 = vadd.f32 %v4858, %v4859
  %v4861 = vsel %vm4849, %v4619, 0.0
  %v4862 = vadd.f32 %v4860, %v4861
  %v4863 = vsel %vm4849, %v4622, 0.0
  %v4864 = vadd.f32 %v4862, %v4863
  %v4865 = vsel %vm4849, %v4627, 0.0
  %v4866 = vadd.f32 %v4864, %v4865
  %v4867 = vsel %vm4849, %v4630, 0.0
  %v4868 = vadd.f32 %v4866, %v4867
  %v4869 = vsel %vm4849, %v4635, 0.0
  %v4870 = vadd.f32 %v4868, %v4869
  %v4871 = vsel %vm4849, %v4638, 0.0
  %v4872 = vadd.f32 %v4870, %v4871
  %v4873 = vsel %vm4849, %v4643, 0.0
  %v4874 = vadd.f32 %v4872, %v4873
  %v4875 = vsel %vm4849, %v4646, 0.0
  %v4876 = vadd.f32 %v4874, %v4875
  %v4877 = vsel %vm4849, %v4651, 0.0
  %v4878 = vadd.f32 %v4876, %v4877
  %v4879 = vsel %vm4849, %v4654, 0.0
  %v4880 = vadd.f32 %v4878, %v4879
  %v4881 = vsel %vm4849, %v4659, 0.0
  %v4882 = vadd.f32 %v4880, %v4881
  %v4883 = vsel %vm4849, %v4662, 0.0
  %v4884 = vadd.f32 %v4882, %v4883
  %v4885 = vsel %vm4849, %v4667, 0.0
  %v4886 = vadd.f32 %v4884, %v4885
  %v4887 = vsel %vm4849, %v4670, 0.0
  %v4888 = vadd.f32 %v4886, %v4887
  %v4889 = vsel %vm4849, %v4675, 0.0
  %v4890 = vadd.f32 %v4888, %v4889
  %v4891 = vsel %vm4849, %v4678, 0.0
  %v4892 = vadd.f32 %v4890, %v4891
  %v4893 = vsel %vm4849, %v4683, 0.0
  %v4894 = vadd.f32 %v4892, %v4893
  %v4895 = vsel %vm4849, %v4686, 0.0
  %v4896 = vadd.f32 %v4894, %v4895
  %v4897 = vsel %vm4849, %v4691, 0.0
  %v4898 = vadd.f32 %v4896, %v4897
  %v4899 = vsel %vm4849, %v4694, 0.0
  %v4900 = vadd.f32 %v4898, %v4899
  %v4901 = vsel %vm4849, %v4699, 0.0
  %v4902 = vadd.f32 %v4900, %v4901
  %v4903 = vsel %vm4849, %v4702, 0.0
  %v4904 = vadd.f32 %v4902, %v4903
  %v4905 = vsel %vm4849, %v4707, 0.0
  %v4906 = vadd.f32 %v4904, %v4905
  %v4907 = vsel %vm4849, %v4710, 0.0
  %v4908 = vadd.f32 %v4906, %v4907
  %v4909 = vsel %vm4849, %v4715, 0.0
  %v4910 = vadd.f32 %v4908, %v4909
  %v4911 = vsel %vm4849, %v4718, 0.0
  %v4912 = vadd.f32 %v4910, %v4911
  %v4913 = vsel %vm4849, %v4723, 0.0
  %v4914 = vadd.f32 %v4912, %v4913
  %v4915 = vsel %vm4849, %v4726, 0.0
  %v4916 = vadd.f32 %v4914, %v4915
  %v4917 = vsel %vm4849, %v4731, 0.0
  %v4918 = vadd.f32 %v4916, %v4917
  %v4919 = vsel %vm4849, %v4734, 0.0
  %v4920 = vadd.f32 %v4918, %v4919
  %v4921 = vsel %vm4849, %v4739, 0.0
  %v4922 = vadd.f32 %v4920, %v4921
  %v4923 = vsel %vm4849, %v4742, 0.0
  %v4924 = vadd.f32 %v4922, %v4923
  %v4925 = vsel %vm4849, %v4747, 0.0
  %v4926 = vadd.f32 %v4924, %v4925
  %v4927 = vsel %vm4849, %v4750, 0.0
  %v4928 = vadd.f32 %v4926, %v4927
  %v4929 = vsel %vm4849, %v4755, 0.0
  %v4930 = vadd.f32 %v4928, %v4929
  %v4931 = vsel %vm4849, %v4758, 0.0
  %v4932 = vadd.f32 %v4930, %v4931
  %v4933 = vsel %vm4849, %v4763, 0.0
  %v4934 = vadd.f32 %v4932, %v4933
  %v4935 = vsel %vm4849, %v4766, 0.0
  %v4936 = vadd.f32 %v4934, %v4935
  %v4937 = vsel %vm4849, %v4771, 0.0
  %v4938 = vadd.f32 %v4936, %v4937
  %v4939 = vsel %vm4849, %v4774, 0.0
  %v4940 = vadd.f32 %v4938, %v4939
  %v4941 = vsel %vm4849, %v4779, 0.0
  %v4942 = vadd.f32 %v4940, %v4941
  %v4943 = vsel %vm4849, %v4782, 0.0
  %v4944 = vadd.f32 %v4942, %v4943
  %v4945 = vsel %vm4849, %v4787, 0.0
  %v4946 = vadd.f32 %v4944, %v4945
  %v4947 = vsel %vm4849, %v4790, 0.0
  %v4948 = vadd.f32 %v4946, %v4947
  %v4949 = vsel %vm4849, %v4795, 0.0
  %v4950 = vadd.f32 %v4948, %v4949
  %v4951 = vsel %vm4849, %v4798, 0.0
  %v4952 = vadd.f32 %v4950, %v4951
  %v4953 = vsel %vm4849, %v4803, 0.0
  %v4954 = vadd.f32 %v4952, %v4953
  %v4955 = vsel %vm4849, %v4806, 0.0
  %v4956 = vadd.f32 %v4954, %v4955
  %v4957 = vsel %vm4849, %v4811, 0.0
  %v4958 = vadd.f32 %v4956, %v4957
  %v4959 = vsel %vm4849, %v4814, 0.0
  %v4960 = vadd.f32 %v4958, %v4959
  %v4961 = vsel %vm4849, %v4819, 0.0
  %v4962 = vadd.f32 %v4960, %v4961
  %v4963 = vsel %vm4849, %v4822, 0.0
  %v4964 = vadd.f32 %v4962, %v4963
  %v4965 = vsel %vm4849, %v4827, 0.0
  %v4966 = vadd.f32 %v4964, %v4965
  %v4967 = vsel %vm4849, %v4830, 0.0
  %v4968 = vadd.f32 %v4966, %v4967
  %v4969 = vsel %vm4849, %v4835, 0.0
  %v4970 = vadd.f32 %v4968, %v4969
  %v4971 = vsel %vm4849, %v4838, 0.0
  %v4972 = vadd.f32 %v4970, %v4971
  %v4973 = vsel %vm4849, %v4843, 0.0
  %v4974 = vadd.f32 %v4972, %v4973
  %v4975 = vsel %vm4849, %v4846, 0.0
  %v4976 = vadd.f32 %v4974, %v4975
  %v4977 = vrot.slane %v4976, 4
  %v4978 = vadd.f32 %v4976, %v4977
  %v4979 = vrot.slane %v4978, 2
  %v4980 = vadd.f32 %v4978, %v4979
  %v4981 = vrot.slane %v4980, 1
  %v4982 = vadd.f32 %v4980, %v4981
  %v4983 = vrcp.pop 512.0
  %v4984 = vmul.f32 %v4982, %v4983
  %v4985 = vsub.f32 %v4595, %v4984
  %v4986 = vsub.f32 %v4598, %v4984
  %v4987 = vsub.f32 %v4603, %v4984
  %v4988 = vsub.f32 %v4606, %v4984
  %v4989 = vsub.f32 %v4611, %v4984
  %v4990 = vsub.f32 %v4614, %v4984
  %v4991 = vsub.f32 %v4619, %v4984
  %v4992 = vsub.f32 %v4622, %v4984
  %v4993 = vsub.f32 %v4627, %v4984
  %v4994 = vsub.f32 %v4630, %v4984
  %v4995 = vsub.f32 %v4635, %v4984
  %v4996 = vsub.f32 %v4638, %v4984
  %v4997 = vsub.f32 %v4643, %v4984
  %v4998 = vsub.f32 %v4646, %v4984
  %v4999 = vsub.f32 %v4651, %v4984
  %v5000 = vsub.f32 %v4654, %v4984
  %v5001 = vsub.f32 %v4659, %v4984
  %v5002 = vsub.f32 %v4662, %v4984
  %v5003 = vsub.f32 %v4667, %v4984
  %v5004 = vsub.f32 %v4670, %v4984
  %v5005 = vsub.f32 %v4675, %v4984
  %v5006 = vsub.f32 %v4678, %v4984
  %v5007 = vsub.f32 %v4683, %v4984
  %v5008 = vsub.f32 %v4686, %v4984
  %v5009 = vsub.f32 %v4691, %v4984
  %v5010 = vsub.f32 %v4694, %v4984
  %v5011 = vsub.f32 %v4699, %v4984
  %v5012 = vsub.f32 %v4702, %v4984
  %v5013 = vsub.f32 %v4707, %v4984
  %v5014 = vsub.f32 %v4710, %v4984
  %v5015 = vsub.f32 %v4715, %v4984
  %v5016 = vsub.f32 %v4718, %v4984
  %v5017 = vsub.f32 %v4723, %v4984
  %v5018 = vsub.f32 %v4726, %v4984
  %v5019 = vsub.f32 %v4731, %v4984
  %v5020 = vsub.f32 %v4734, %v4984
  %v5021 = vsub.f32 %v4739, %v4984
  %v5022 = vsub.f32 %v4742, %v4984
  %v5023 = vsub.f32 %v4747, %v4984
  %v5024 = vsub.f32 %v4750, %v4984
  %v5025 = vsub.f32 %v4755, %v4984
  %v5026 = vsub.f32 %v4758, %v4984
  %v5027 = vsub.f32 %v4763, %v4984
  %v5028 = vsub.f32 %v4766, %v4984
  %v5029 = vsub.f32 %v4771, %v4984
  %v5030 = vsub.f32 %v4774, %v4984
  %v5031 = vsub.f32 %v4779, %v4984
  %v5032 = vsub.f32 %v4782, %v4984
  %v5033 = vsub.f32 %v4787, %v4984
  %v5034 = vsub.f32 %v4790, %v4984
  %v5035 = vsub.f32 %v4795, %v4984
  %v5036 = vsub.f32 %v4798, %v4984
  %v5037 = vsub.f32 %v4803, %v4984
  %v5038 = vsub.f32 %v4806, %v4984
  %v5039 = vsub.f32 %v4811, %v4984
  %v5040 = vsub.f32 %v4814, %v4984
  %v5041 = vsub.f32 %v4819, %v4984
  %v5042 = vsub.f32 %v4822, %v4984
  %v5043 = vsub.f32 %v4827, %v4984
  %v5044 = vsub.f32 %v4830, %v4984
  %v5045 = vsub.f32 %v4835, %v4984
  %v5046 = vsub.f32 %v4838, %v4984
  %v5047 = vsub.f32 %v4843, %v4984
  %v5048 = vsub.f32 %v4846, %v4984
  %v5049 = vmul.f32 %v4985, %v4985
  %v5050 = vmul.f32 %v4986, %v4986
  %v5051 = vmul.f32 %v4987, %v4987
  %v5052 = vmul.f32 %v4988, %v4988
  %v5053 = vmul.f32 %v4989, %v4989
  %v5054 = vmul.f32 %v4990, %v4990
  %v5055 = vmul.f32 %v4991, %v4991
  %v5056 = vmul.f32 %v4992, %v4992
  %v5057 = vmul.f32 %v4993, %v4993
  %v5058 = vmul.f32 %v4994, %v4994
  %v5059 = vmul.f32 %v4995, %v4995
  %v5060 = vmul.f32 %v4996, %v4996
  %v5061 = vmul.f32 %v4997, %v4997
  %v5062 = vmul.f32 %v4998, %v4998
  %v5063 = vmul.f32 %v4999, %v4999
  %v5064 = vmul.f32 %v5000, %v5000
  %v5065 = vmul.f32 %v5001, %v5001
  %v5066 = vmul.f32 %v5002, %v5002
  %v5067 = vmul.f32 %v5003, %v5003
  %v5068 = vmul.f32 %v5004, %v5004
  %v5069 = vmul.f32 %v5005, %v5005
  %v5070 = vmul.f32 %v5006, %v5006
  %v5071 = vmul.f32 %v5007, %v5007
  %v5072 = vmul.f32 %v5008, %v5008
  %v5073 = vmul.f32 %v5009, %v5009
  %v5074 = vmul.f32 %v5010, %v5010
  %v5075 = vmul.f32 %v5011, %v5011
  %v5076 = vmul.f32 %v5012, %v5012
  %v5077 = vmul.f32 %v5013, %v5013
  %v5078 = vmul.f32 %v5014, %v5014
  %v5079 = vmul.f32 %v5015, %v5015
  %v5080 = vmul.f32 %v5016, %v5016
  %v5081 = vmul.f32 %v5017, %v5017
  %v5082 = vmul.f32 %v5018, %v5018
  %v5083 = vmul.f32 %v5019, %v5019
  %v5084 = vmul.f32 %v5020, %v5020
  %v5085 = vmul.f32 %v5021, %v5021
  %v5086 = vmul.f32 %v5022, %v5022
  %v5087 = vmul.f32 %v5023, %v5023
  %v5088 = vmul.f32 %v5024, %v5024
  %v5089 = vmul.f32 %v5025, %v5025
  %v5090 = vmul.f32 %v5026, %v5026
  %v5091 = vmul.f32 %v5027, %v5027
  %v5092 = vmul.f32 %v5028, %v5028
  %v5093 = vmul.f32 %v5029, %v5029
  %v5094 = vmul.f32 %v5030, %v5030
  %v5095 = vmul.f32 %v5031, %v5031
  %v5096 = vmul.f32 %v5032, %v5032
  %v5097 = vmul.f32 %v5033, %v5033
  %v5098 = vmul.f32 %v5034, %v5034
  %v5099 = vmul.f32 %v5035, %v5035
  %v5100 = vmul.f32 %v5036, %v5036
  %v5101 = vmul.f32 %v5037, %v5037
  %v5102 = vmul.f32 %v5038, %v5038
  %v5103 = vmul.f32 %v5039, %v5039
  %v5104 = vmul.f32 %v5040, %v5040
  %v5105 = vmul.f32 %v5041, %v5041
  %v5106 = vmul.f32 %v5042, %v5042
  %v5107 = vmul.f32 %v5043, %v5043
  %v5108 = vmul.f32 %v5044, %v5044
  %v5109 = vmul.f32 %v5045, %v5045
  %v5110 = vmul.f32 %v5046, %v5046
  %v5111 = vmul.f32 %v5047, %v5047
  %v5112 = vmul.f32 %v5048, %v5048
  %v5113 = vsel %vm4849, %v5049, 0.0
  %v5114 = vsel %vm4849, %v5050, 0.0
  %v5115 = vadd.f32 %v5113, %v5114
  %v5116 = vsel %vm4849, %v5051, 0.0
  %v5117 = vadd.f32 %v5115, %v5116
  %v5118 = vsel %vm4849, %v5052, 0.0
  %v5119 = vadd.f32 %v5117, %v5118
  %v5120 = vsel %vm4849, %v5053, 0.0
  %v5121 = vadd.f32 %v5119, %v5120
  %v5122 = vsel %vm4849, %v5054, 0.0
  %v5123 = vadd.f32 %v5121, %v5122
  %v5124 = vsel %vm4849, %v5055, 0.0
  %v5125 = vadd.f32 %v5123, %v5124
  %v5126 = vsel %vm4849, %v5056, 0.0
  %v5127 = vadd.f32 %v5125, %v5126
  %v5128 = vsel %vm4849, %v5057, 0.0
  %v5129 = vadd.f32 %v5127, %v5128
  %v5130 = vsel %vm4849, %v5058, 0.0
  %v5131 = vadd.f32 %v5129, %v5130
  %v5132 = vsel %vm4849, %v5059, 0.0
  %v5133 = vadd.f32 %v5131, %v5132
  %v5134 = vsel %vm4849, %v5060, 0.0
  %v5135 = vadd.f32 %v5133, %v5134
  %v5136 = vsel %vm4849, %v5061, 0.0
  %v5137 = vadd.f32 %v5135, %v5136
  %v5138 = vsel %vm4849, %v5062, 0.0
  %v5139 = vadd.f32 %v5137, %v5138
  %v5140 = vsel %vm4849, %v5063, 0.0
  %v5141 = vadd.f32 %v5139, %v5140
  %v5142 = vsel %vm4849, %v5064, 0.0
  %v5143 = vadd.f32 %v5141, %v5142
  %v5144 = vsel %vm4849, %v5065, 0.0
  %v5145 = vadd.f32 %v5143, %v5144
  %v5146 = vsel %vm4849, %v5066, 0.0
  %v5147 = vadd.f32 %v5145, %v5146
  %v5148 = vsel %vm4849, %v5067, 0.0
  %v5149 = vadd.f32 %v5147, %v5148
  %v5150 = vsel %vm4849, %v5068, 0.0
  %v5151 = vadd.f32 %v5149, %v5150
  %v5152 = vsel %vm4849, %v5069, 0.0
  %v5153 = vadd.f32 %v5151, %v5152
  %v5154 = vsel %vm4849, %v5070, 0.0
  %v5155 = vadd.f32 %v5153, %v5154
  %v5156 = vsel %vm4849, %v5071, 0.0
  %v5157 = vadd.f32 %v5155, %v5156
  %v5158 = vsel %vm4849, %v5072, 0.0
  %v5159 = vadd.f32 %v5157, %v5158
  %v5160 = vsel %vm4849, %v5073, 0.0
  %v5161 = vadd.f32 %v5159, %v5160
  %v5162 = vsel %vm4849, %v5074, 0.0
  %v5163 = vadd.f32 %v5161, %v5162
  %v5164 = vsel %vm4849, %v5075, 0.0
  %v5165 = vadd.f32 %v5163, %v5164
  %v5166 = vsel %vm4849, %v5076, 0.0
  %v5167 = vadd.f32 %v5165, %v5166
  %v5168 = vsel %vm4849, %v5077, 0.0
  %v5169 = vadd.f32 %v5167, %v5168
  %v5170 = vsel %vm4849, %v5078, 0.0
  %v5171 = vadd.f32 %v5169, %v5170
  %v5172 = vsel %vm4849, %v5079, 0.0
  %v5173 = vadd.f32 %v5171, %v5172
  %v5174 = vsel %vm4849, %v5080, 0.0
  %v5175 = vadd.f32 %v5173, %v5174
  %v5176 = vsel %vm4849, %v5081, 0.0
  %v5177 = vadd.f32 %v5175, %v5176
  %v5178 = vsel %vm4849, %v5082, 0.0
  %v5179 = vadd.f32 %v5177, %v5178
  %v5180 = vsel %vm4849, %v5083, 0.0
  %v5181 = vadd.f32 %v5179, %v5180
  %v5182 = vsel %vm4849, %v5084, 0.0
  %v5183 = vadd.f32 %v5181, %v5182
  %v5184 = vsel %vm4849, %v5085, 0.0
  %v5185 = vadd.f32 %v5183, %v5184
  %v5186 = vsel %vm4849, %v5086, 0.0
  %v5187 = vadd.f32 %v5185, %v5186
  %v5188 = vsel %vm4849, %v5087, 0.0
  %v5189 = vadd.f32 %v5187, %v5188
  %v5190 = vsel %vm4849, %v5088, 0.0
  %v5191 = vadd.f32 %v5189, %v5190
  %v5192 = vsel %vm4849, %v5089, 0.0
  %v5193 = vadd.f32 %v5191, %v5192
  %v5194 = vsel %vm4849, %v5090, 0.0
  %v5195 = vadd.f32 %v5193, %v5194
  %v5196 = vsel %vm4849, %v5091, 0.0
  %v5197 = vadd.f32 %v5195, %v5196
  %v5198 = vsel %vm4849, %v5092, 0.0
  %v5199 = vadd.f32 %v5197, %v5198
  %v5200 = vsel %vm4849, %v5093, 0.0
  %v5201 = vadd.f32 %v5199, %v5200
  %v5202 = vsel %vm4849, %v5094, 0.0
  %v5203 = vadd.f32 %v5201, %v5202
  %v5204 = vsel %vm4849, %v5095, 0.0
  %v5205 = vadd.f32 %v5203, %v5204
  %v5206 = vsel %vm4849, %v5096, 0.0
  %v5207 = vadd.f32 %v5205, %v5206
  %v5208 = vsel %vm4849, %v5097, 0.0
  %v5209 = vadd.f32 %v5207, %v5208
  %v5210 = vsel %vm4849, %v5098, 0.0
  %v5211 = vadd.f32 %v5209, %v5210
  %v5212 = vsel %vm4849, %v5099, 0.0
  %v5213 = vadd.f32 %v5211, %v5212
  %v5214 = vsel %vm4849, %v5100, 0.0
  %v5215 = vadd.f32 %v5213, %v5214
  %v5216 = vsel %vm4849, %v5101, 0.0
  %v5217 = vadd.f32 %v5215, %v5216
  %v5218 = vsel %vm4849, %v5102, 0.0
  %v5219 = vadd.f32 %v5217, %v5218
  %v5220 = vsel %vm4849, %v5103, 0.0
  %v5221 = vadd.f32 %v5219, %v5220
  %v5222 = vsel %vm4849, %v5104, 0.0
  %v5223 = vadd.f32 %v5221, %v5222
  %v5224 = vsel %vm4849, %v5105, 0.0
  %v5225 = vadd.f32 %v5223, %v5224
  %v5226 = vsel %vm4849, %v5106, 0.0
  %v5227 = vadd.f32 %v5225, %v5226
  %v5228 = vsel %vm4849, %v5107, 0.0
  %v5229 = vadd.f32 %v5227, %v5228
  %v5230 = vsel %vm4849, %v5108, 0.0
  %v5231 = vadd.f32 %v5229, %v5230
  %v5232 = vsel %vm4849, %v5109, 0.0
  %v5233 = vadd.f32 %v5231, %v5232
  %v5234 = vsel %vm4849, %v5110, 0.0
  %v5235 = vadd.f32 %v5233, %v5234
  %v5236 = vsel %vm4849, %v5111, 0.0
  %v5237 = vadd.f32 %v5235, %v5236
  %v5238 = vsel %vm4849, %v5112, 0.0
  %v5239 = vadd.f32 %v5237, %v5238
  %v5240 = vrot.slane %v5239, 4
  %v5241 = vadd.f32 %v5239, %v5240
  %v5242 = vrot.slane %v5241, 2
  %v5243 = vadd.f32 %v5241, %v5242
  %v5244 = vrot.slane %v5243, 1
  %v5245 = vadd.f32 %v5243, %v5244
  %v5246 = vmul.f32 %v5245, %v4983
  %v5247 = vadd.f32 %v5246, 0.8
  %v5248 = vrsqrt.pop %v5247
  %v5249 = vmul.f32 %v4985, %v5248
  %v5250 = vmul.f32 %v4986, %v5248
  %v5251 = vmul.f32 %v4987, %v5248
  %v5252 = vmul.f32 %v4988, %v5248
  %v5253 = vmul.f32 %v4989, %v5248
  %v5254 = vmul.f32 %v4990, %v5248
  %v5255 = vmul.f32 %v4991, %v5248
  %v5256 = vmul.f32 %v4992, %v5248
  %v5257 = vmul.f32 %v4993, %v5248
  %v5258 = vmul.f32 %v4994, %v5248
  %v5259 = vmul.f32 %v4995, %v5248
  %v5260 = vmul.f32 %v4996, %v5248
  %v5261 = vmul.f32 %v4997, %v5248
  %v5262 = vmul.f32 %v4998, %v5248
  %v5263 = vmul.f32 %v4999, %v5248
  %v5264 = vmul.f32 %v5000, %v5248
  %v5265 = vmul.f32 %v5001, %v5248
  %v5266 = vmul.f32 %v5002, %v5248
  %v5267 = vmul.f32 %v5003, %v5248
  %v5268 = vmul.f32 %v5004, %v5248
  %v5269 = vmul.f32 %v5005, %v5248
  %v5270 = vmul.f32 %v5006, %v5248
  %v5271 = vmul.f32 %v5007, %v5248
  %v5272 = vmul.f32 %v5008, %v5248
  %v5273 = vmul.f32 %v5009, %v5248
  %v5274 = vmul.f32 %v5010, %v5248
  %v5275 = vmul.f32 %v5011, %v5248
  %v5276 = vmul.f32 %v5012, %v5248
  %v5277 = vmul.f32 %v5013, %v5248
  %v5278 = vmul.f32 %v5014, %v5248
  %v5279 = vmul.f32 %v5015, %v5248
  %v5280 = vmul.f32 %v5016, %v5248
  %v5281 = vmul.f32 %v5017, %v5248
  %v5282 = vmul.f32 %v5018, %v5248
  %v5283 = vmul.f32 %v5019, %v5248
  %v5284 = vmul.f32 %v5020, %v5248
  %v5285 = vmul.f32 %v5021, %v5248
  %v5286 = vmul.f32 %v5022, %v5248
  %v5287 = vmul.f32 %v5023, %v5248
  %v5288 = vmul.f32 %v5024, %v5248
  %v5289 = vmul.f32 %v5025, %v5248
  %v5290 = vmul.f32 %v5026, %v5248
  %v5291 = vmul.f32 %v5027, %v5248
  %v5292 = vmul.f32 %v5028, %v5248
  %v5293 = vmul.f32 %v5029, %v5248
  %v5294 = vmul.f32 %v5030, %v5248
  %v5295 = vmul.f32 %v5031, %v5248
  %v5296 = vmul.f32 %v5032, %v5248
  %v5297 = vmul.f32 %v5033, %v5248
  %v5298 = vmul.f32 %v5034, %v5248
  %v5299 = vmul.f32 %v5035, %v5248
  %v5300 = vmul.f32 %v5036, %v5248
  %v5301 = vmul.f32 %v5037, %v5248
  %v5302 = vmul.f32 %v5038, %v5248
  %v5303 = vmul.f32 %v5039, %v5248
  %v5304 = vmul.f32 %v5040, %v5248
  %v5305 = vmul.f32 %v5041, %v5248
  %v5306 = vmul.f32 %v5042, %v5248
  %v5307 = vmul.f32 %v5043, %v5248
  %v5308 = vmul.f32 %v5044, %v5248
  %v5309 = vmul.f32 %v5045, %v5248
  %v5310 = vmul.f32 %v5046, %v5248
  %v5311 = vmul.f32 %v5047, %v5248
  %v5312 = vmul.f32 %v5048, %v5248
  %v5313 = vld [vmem:[%s3] sm:$0x1]
  %v5315 = vlaneseq
  %v5316 = vshrl.u32 %v5315, 7
  %v5317 = vsub.s32 0, %v5316
  %v5318 = vrot.slane %v5313, %v5317
  %v5320 = vmul.f32 %v5249, %v5318
  %v5321 = vmul.f32 %v5250, %v5318
  %v5322 = vmul.f32 %v5251, %v5318
  %v5323 = vmul.f32 %v5252, %v5318
  %v5324 = vmul.f32 %v5253, %v5318
  %v5325 = vmul.f32 %v5254, %v5318
  %v5326 = vmul.f32 %v5255, %v5318
  %v5327 = vmul.f32 %v5256, %v5318
  %v5328 = vmul.f32 %v5257, %v5318
  %v5329 = vmul.f32 %v5258, %v5318
  %v5330 = vmul.f32 %v5259, %v5318
  %v5331 = vmul.f32 %v5260, %v5318
  %v5332 = vmul.f32 %v5261, %v5318
  %v5333 = vmul.f32 %v5262, %v5318
  %v5334 = vmul.f32 %v5263, %v5318
  %v5335 = vmul.f32 %v5264, %v5318
  %v5336 = vmul.f32 %v5265, %v5318
  %v5337 = vmul.f32 %v5266, %v5318
  %v5338 = vmul.f32 %v5267, %v5318
  %v5339 = vmul.f32 %v5268, %v5318
  %v5340 = vmul.f32 %v5269, %v5318
  %v5341 = vmul.f32 %v5270, %v5318
  %v5342 = vmul.f32 %v5271, %v5318
  %v5343 = vmul.f32 %v5272, %v5318
  %v5344 = vmul.f32 %v5273, %v5318
  %v5345 = vmul.f32 %v5274, %v5318
  %v5346 = vmul.f32 %v5275, %v5318
  %v5347 = vmul.f32 %v5276, %v5318
  %v5348 = vmul.f32 %v5277, %v5318
  %v5349 = vmul.f32 %v5278, %v5318
  %v5350 = vmul.f32 %v5279, %v5318
  %v5351 = vmul.f32 %v5280, %v5318
  %v5352 = vmul.f32 %v5281, %v5318
  %v5353 = vmul.f32 %v5282, %v5318
  %v5354 = vmul.f32 %v5283, %v5318
  %v5355 = vmul.f32 %v5284, %v5318
  %v5356 = vmul.f32 %v5285, %v5318
  %v5357 = vmul.f32 %v5286, %v5318
  %v5358 = vmul.f32 %v5287, %v5318
  %v5359 = vmul.f32 %v5288, %v5318
  %v5360 = vmul.f32 %v5289, %v5318
  %v5361 = vmul.f32 %v5290, %v5318
  %v5362 = vmul.f32 %v5291, %v5318
  %v5363 = vmul.f32 %v5292, %v5318
  %v5364 = vmul.f32 %v5293, %v5318
  %v5365 = vmul.f32 %v5294, %v5318
  %v5366 = vmul.f32 %v5295, %v5318
  %v5367 = vmul.f32 %v5296, %v5318
  %v5368 = vmul.f32 %v5297, %v5318
  %v5369 = vmul.f32 %v5298, %v5318
  %v5370 = vmul.f32 %v5299, %v5318
  %v5371 = vmul.f32 %v5300, %v5318
  %v5372 = vmul.f32 %v5301, %v5318
  %v5373 = vmul.f32 %v5302, %v5318
  %v5374 = vmul.f32 %v5303, %v5318
  %v5375 = vmul.f32 %v5304, %v5318
  %v5376 = vmul.f32 %v5305, %v5318
  %v5377 = vmul.f32 %v5306, %v5318
  %v5378 = vmul.f32 %v5307, %v5318
  %v5379 = vmul.f32 %v5308, %v5318
  %v5380 = vmul.f32 %v5309, %v5318
  %v5381 = vmul.f32 %v5310, %v5318
  %v5382 = vmul.f32 %v5311, %v5318
  %v5383 = vmul.f32 %v5312, %v5318
  %v5384 = vld [vmem:[%s4] sm:$0x1]
  %v5386 = vlaneseq
  %v5387 = vshrl.u32 %v5386, 7
  %v5388 = vsub.s32 0, %v5387
  %v5389 = vrot.slane %v5384, %v5388
  %v5391 = vadd.f32 %v5320, %v5389
  %v5392 = vadd.f32 %v5321, %v5389
  %v5393 = vadd.f32 %v5322, %v5389
  %v5394 = vadd.f32 %v5323, %v5389
  %v5395 = vadd.f32 %v5324, %v5389
  %v5396 = vadd.f32 %v5325, %v5389
  %v5397 = vadd.f32 %v5326, %v5389
  %v5398 = vadd.f32 %v5327, %v5389
  %v5399 = vadd.f32 %v5328, %v5389
  %v5400 = vadd.f32 %v5329, %v5389
  %v5401 = vadd.f32 %v5330, %v5389
  %v5402 = vadd.f32 %v5331, %v5389
  %v5403 = vadd.f32 %v5332, %v5389
  %v5404 = vadd.f32 %v5333, %v5389
  %v5405 = vadd.f32 %v5334, %v5389
  %v5406 = vadd.f32 %v5335, %v5389
  %v5407 = vadd.f32 %v5336, %v5389
  %v5408 = vadd.f32 %v5337, %v5389
  %v5409 = vadd.f32 %v5338, %v5389
  %v5410 = vadd.f32 %v5339, %v5389
  %v5411 = vadd.f32 %v5340, %v5389
  %v5412 = vadd.f32 %v5341, %v5389
  %v5413 = vadd.f32 %v5342, %v5389
  %v5414 = vadd.f32 %v5343, %v5389
  %v5415 = vadd.f32 %v5344, %v5389
  %v5416 = vadd.f32 %v5345, %v5389
  %v5417 = vadd.f32 %v5346, %v5389
  %v5418 = vadd.f32 %v5347, %v5389
  %v5419 = vadd.f32 %v5348, %v5389
  %v5420 = vadd.f32 %v5349, %v5389
  %v5421 = vadd.f32 %v5350, %v5389
  %v5422 = vadd.f32 %v5351, %v5389
  %v5423 = vadd.f32 %v5352, %v5389
  %v5424 = vadd.f32 %v5353, %v5389
  %v5425 = vadd.f32 %v5354, %v5389
  %v5426 = vadd.f32 %v5355, %v5389
  %v5427 = vadd.f32 %v5356, %v5389
  %v5428 = vadd.f32 %v5357, %v5389
  %v5429 = vadd.f32 %v5358, %v5389
  %v5430 = vadd.f32 %v5359, %v5389
  %v5431 = vadd.f32 %v5360, %v5389
  %v5432 = vadd.f32 %v5361, %v5389
  %v5433 = vadd.f32 %v5362, %v5389
  %v5434 = vadd.f32 %v5363, %v5389
  %v5435 = vadd.f32 %v5364, %v5389
  %v5436 = vadd.f32 %v5365, %v5389
  %v5437 = vadd.f32 %v5366, %v5389
  %v5438 = vadd.f32 %v5367, %v5389
  %v5439 = vadd.f32 %v5368, %v5389
  %v5440 = vadd.f32 %v5369, %v5389
  %v5441 = vadd.f32 %v5370, %v5389
  %v5442 = vadd.f32 %v5371, %v5389
  %v5443 = vadd.f32 %v5372, %v5389
  %v5444 = vadd.f32 %v5373, %v5389
  %v5445 = vadd.f32 %v5374, %v5389
  %v5446 = vadd.f32 %v5375, %v5389
  %v5447 = vadd.f32 %v5376, %v5389
  %v5448 = vadd.f32 %v5377, %v5389
  %v5449 = vadd.f32 %v5378, %v5389
  %v5450 = vadd.f32 %v5379, %v5389
  %v5451 = vadd.f32 %v5380, %v5389
  %v5452 = vadd.f32 %v5381, %v5389
  %v5453 = vadd.f32 %v5382, %v5389
  %v5454 = vadd.f32 %v5383, %v5389
  %s5455 = sld [smem:[#allocation3]]
  %vm5456 = vcmp.gt.f32.partialorder %v5391, 0.0
  %vm5457 = vcmp.gt.f32.partialorder %v5392, 0.0
  %vm5458 = vcmp.gt.f32.partialorder %v5393, 0.0
  %vm5459 = vcmp.gt.f32.partialorder %v5394, 0.0
  %vm5460 = vcmp.gt.f32.partialorder %v5395, 0.0
  %vm5461 = vcmp.gt.f32.partialorder %v5396, 0.0
  %vm5462 = vcmp.gt.f32.partialorder %v5397, 0.0
  %vm5463 = vcmp.gt.f32.partialorder %v5398, 0.0
  %vm5464 = vcmp.gt.f32.partialorder %v5399, 0.0
  %vm5465 = vcmp.gt.f32.partialorder %v5400, 0.0
  %vm5466 = vcmp.gt.f32.partialorder %v5401, 0.0
  %vm5467 = vcmp.gt.f32.partialorder %v5402, 0.0
  %vm5468 = vcmp.gt.f32.partialorder %v5403, 0.0
  %vm5469 = vcmp.gt.f32.partialorder %v5404, 0.0
  %vm5470 = vcmp.gt.f32.partialorder %v5405, 0.0
  %vm5471 = vcmp.gt.f32.partialorder %v5406, 0.0
  %vm5472 = vcmp.gt.f32.partialorder %v5407, 0.0
  %vm5473 = vcmp.gt.f32.partialorder %v5408, 0.0
  %vm5474 = vcmp.gt.f32.partialorder %v5409, 0.0
  %vm5475 = vcmp.gt.f32.partialorder %v5410, 0.0
  %vm5476 = vcmp.gt.f32.partialorder %v5411, 0.0
  %vm5477 = vcmp.gt.f32.partialorder %v5412, 0.0
  %vm5478 = vcmp.gt.f32.partialorder %v5413, 0.0
  %vm5479 = vcmp.gt.f32.partialorder %v5414, 0.0
  %vm5480 = vcmp.gt.f32.partialorder %v5415, 0.0
  %vm5481 = vcmp.gt.f32.partialorder %v5416, 0.0
  %vm5482 = vcmp.gt.f32.partialorder %v5417, 0.0
  %vm5483 = vcmp.gt.f32.partialorder %v5418, 0.0
  %vm5484 = vcmp.gt.f32.partialorder %v5419, 0.0
  %vm5485 = vcmp.gt.f32.partialorder %v5420, 0.0
  %vm5486 = vcmp.gt.f32.partialorder %v5421, 0.0
  %vm5487 = vcmp.gt.f32.partialorder %v5422, 0.0
  %vm5488 = vcmp.gt.f32.partialorder %v5423, 0.0
  %vm5489 = vcmp.gt.f32.partialorder %v5424, 0.0
  %vm5490 = vcmp.gt.f32.partialorder %v5425, 0.0
  %vm5491 = vcmp.gt.f32.partialorder %v5426, 0.0
  %vm5492 = vcmp.gt.f32.partialorder %v5427, 0.0
  %vm5493 = vcmp.gt.f32.partialorder %v5428, 0.0
  %vm5494 = vcmp.gt.f32.partialorder %v5429, 0.0
  %vm5495 = vcmp.gt.f32.partialorder %v5430, 0.0
  %vm5496 = vcmp.gt.f32.partialorder %v5431, 0.0
  %vm5497 = vcmp.gt.f32.partialorder %v5432, 0.0
  %vm5498 = vcmp.gt.f32.partialorder %v5433, 0.0
  %vm5499 = vcmp.gt.f32.partialorder %v5434, 0.0
  %vm5500 = vcmp.gt.f32.partialorder %v5435, 0.0
  %vm5501 = vcmp.gt.f32.partialorder %v5436, 0.0
  %vm5502 = vcmp.gt.f32.partialorder %v5437, 0.0
  %vm5503 = vcmp.gt.f32.partialorder %v5438, 0.0
  %vm5504 = vcmp.gt.f32.partialorder %v5439, 0.0
  %vm5505 = vcmp.gt.f32.partialorder %v5440, 0.0
  %vm5506 = vcmp.gt.f32.partialorder %v5441, 0.0
  %vm5507 = vcmp.gt.f32.partialorder %v5442, 0.0
  %vm5508 = vcmp.gt.f32.partialorder %v5443, 0.0
  %vm5509 = vcmp.gt.f32.partialorder %v5444, 0.0
  %vm5510 = vcmp.gt.f32.partialorder %v5445, 0.0
  %vm5511 = vcmp.gt.f32.partialorder %v5446, 0.0
  %vm5512 = vcmp.gt.f32.partialorder %v5447, 0.0
  %vm5513 = vcmp.gt.f32.partialorder %v5448, 0.0
  %vm5514 = vcmp.gt.f32.partialorder %v5449, 0.0
  %vm5515 = vcmp.gt.f32.partialorder %v5450, 0.0
  %vm5516 = vcmp.gt.f32.partialorder %v5451, 0.0
  %vm5517 = vcmp.gt.f32.partialorder %v5452, 0.0
  %vm5518 = vcmp.gt.f32.partialorder %v5453, 0.0
  %vm5519 = vcmp.gt.f32.partialorder %v5454, 0.0
  %v5520 = vstv %s5455
  %v5521 = vmul.f32 %v5520, %v5391
  %v5522 = vmul.f32 %v5520, %v5392
  %v5523 = vmul.f32 %v5520, %v5393
  %v5524 = vmul.f32 %v5520, %v5394
  %v5525 = vmul.f32 %v5520, %v5395
  %v5526 = vmul.f32 %v5520, %v5396
  %v5527 = vmul.f32 %v5520, %v5397
  %v5528 = vmul.f32 %v5520, %v5398
  %v5529 = vmul.f32 %v5520, %v5399
  %v5530 = vmul.f32 %v5520, %v5400
  %v5531 = vmul.f32 %v5520, %v5401
  %v5532 = vmul.f32 %v5520, %v5402
  %v5533 = vmul.f32 %v5520, %v5403
  %v5534 = vmul.f32 %v5520, %v5404
  %v5535 = vmul.f32 %v5520, %v5405
  %v5536 = vmul.f32 %v5520, %v5406
  %v5537 = vmul.f32 %v5520, %v5407
  %v5538 = vmul.f32 %v5520, %v5408
  %v5539 = vmul.f32 %v5520, %v5409
  %v5540 = vmul.f32 %v5520, %v5410
  %v5541 = vmul.f32 %v5520, %v5411
  %v5542 = vmul.f32 %v5520, %v5412
  %v5543 = vmul.f32 %v5520, %v5413
  %v5544 = vmul.f32 %v5520, %v5414
  %v5545 = vmul.f32 %v5520, %v5415
  %v5546 = vmul.f32 %v5520, %v5416
  %v5547 = vmul.f32 %v5520, %v5417
  %v5548 = vmul.f32 %v5520, %v5418
  %v5549 = vmul.f32 %v5520, %v5419
  %v5550 = vmul.f32 %v5520, %v5420
  %v5551 = vmul.f32 %v5520, %v5421
  %v5552 = vmul.f32 %v5520, %v5422
  %v5553 = vmul.f32 %v5520, %v5423
  %v5554 = vmul.f32 %v5520, %v5424
  %v5555 = vmul.f32 %v5520, %v5425
  %v5556 = vmul.f32 %v5520, %v5426
  %v5557 = vmul.f32 %v5520, %v5427
  %v5558 = vmul.f32 %v5520, %v5428
  %v5559 = vmul.f32 %v5520, %v5429
  %v5560 = vmul.f32 %v5520, %v5430
  %v5561 = vmul.f32 %v5520, %v5431
  %v5562 = vmul.f32 %v5520, %v5432
  %v5563 = vmul.f32 %v5520, %v5433
  %v5564 = vmul.f32 %v5520, %v5434
  %v5565 = vmul.f32 %v5520, %v5435
  %v5566 = vmul.f32 %v5520, %v5436
  %v5567 = vmul.f32 %v5520, %v5437
  %v5568 = vmul.f32 %v5520, %v5438
  %v5569 = vmul.f32 %v5520, %v5439
  %v5570 = vmul.f32 %v5520, %v5440
  %v5571 = vmul.f32 %v5520, %v5441
  %v5572 = vmul.f32 %v5520, %v5442
  %v5573 = vmul.f32 %v5520, %v5443
  %v5574 = vmul.f32 %v5520, %v5444
  %v5575 = vmul.f32 %v5520, %v5445
  %v5576 = vmul.f32 %v5520, %v5446
  %v5577 = vmul.f32 %v5520, %v5447
  %v5578 = vmul.f32 %v5520, %v5448
  %v5579 = vmul.f32 %v5520, %v5449
  %v5580 = vmul.f32 %v5520, %v5450
  %v5581 = vmul.f32 %v5520, %v5451
  %v5582 = vmul.f32 %v5520, %v5452
  %v5583 = vmul.f32 %v5520, %v5453
  %v5584 = vmul.f32 %v5520, %v5454
  %v5585 = vsel %vm5456, %v5391, %v5521
  %v5586 = vsel %vm5457, %v5392, %v5522
  %v5587 = vsel %vm5458, %v5393, %v5523
  %v5588 = vsel %vm5459, %v5394, %v5524
  %v5589 = vsel %vm5460, %v5395, %v5525
  %v5590 = vsel %vm5461, %v5396, %v5526
  %v5591 = vsel %vm5462, %v5397, %v5527
  %v5592 = vsel %vm5463, %v5398, %v5528
  %v5593 = vsel %vm5464, %v5399, %v5529
  %v5594 = vsel %vm5465, %v5400, %v5530
  %v5595 = vsel %vm5466, %v5401, %v5531
  %v5596 = vsel %vm5467, %v5402, %v5532
  %v5597 = vsel %vm5468, %v5403, %v5533
  %v5598 = vsel %vm5469, %v5404, %v5534
  %v5599 = vsel %vm5470, %v5405, %v5535
  %v5600 = vsel %vm5471, %v5406, %v5536
  %v5601 = vsel %vm5472, %v5407, %v5537
  %v5602 = vsel %vm5473, %v5408, %v5538
  %v5603 = vsel %vm5474, %v5409, %v5539
  %v5604 = vsel %vm5475, %v5410, %v5540
  %v5605 = vsel %vm5476, %v5411, %v5541
  %v5606 = vsel %vm5477, %v5412, %v5542
  %v5607 = vsel %vm5478, %v5413, %v5543
  %v5608 = vsel %vm5479, %v5414, %v5544
  %v5609 = vsel %vm5480, %v5415, %v5545
  %v5610 = vsel %vm5481, %v5416, %v5546
  %v5611 = vsel %vm5482, %v5417, %v5547
  %v5612 = vsel %vm5483, %v5418, %v5548
  %v5613 = vsel %vm5484, %v5419, %v5549
  %v5614 = vsel %vm5485, %v5420, %v5550
  %v5615 = vsel %vm5486, %v5421, %v5551
  %v5616 = vsel %vm5487, %v5422, %v5552
  %v5617 = vsel %vm5488, %v5423, %v5553
  %v5618 = vsel %vm5489, %v5424, %v5554
  %v5619 = vsel %vm5490, %v5425, %v5555
  %v5620 = vsel %vm5491, %v5426, %v5556
  %v5621 = vsel %vm5492, %v5427, %v5557
  %v5622 = vsel %vm5493, %v5428, %v5558
  %v5623 = vsel %vm5494, %v5429, %v5559
  %v5624 = vsel %vm5495, %v5430, %v5560
  %v5625 = vsel %vm5496, %v5431, %v5561
  %v5626 = vsel %vm5497, %v5432, %v5562
  %v5627 = vsel %vm5498, %v5433, %v5563
  %v5628 = vsel %vm5499, %v5434, %v5564
  %v5629 = vsel %vm5500, %v5435, %v5565
  %v5630 = vsel %vm5501, %v5436, %v5566
  %v5631 = vsel %vm5502, %v5437, %v5567
  %v5632 = vsel %vm5503, %v5438, %v5568
  %v5633 = vsel %vm5504, %v5439, %v5569
  %v5634 = vsel %vm5505, %v5440, %v5570
  %v5635 = vsel %vm5506, %v5441, %v5571
  %v5636 = vsel %vm5507, %v5442, %v5572
  %v5637 = vsel %vm5508, %v5443, %v5573
  %v5638 = vsel %vm5509, %v5444, %v5574
  %v5639 = vsel %vm5510, %v5445, %v5575
  %v5640 = vsel %vm5511, %v5446, %v5576
  %v5641 = vsel %vm5512, %v5447, %v5577
  %v5642 = vsel %vm5513, %v5448, %v5578
  %v5643 = vsel %vm5514, %v5449, %v5579
  %v5644 = vsel %vm5515, %v5450, %v5580
  %v5645 = vsel %vm5516, %v5451, %v5581
  %v5646 = vsel %vm5517, %v5452, %v5582
  %v5647 = vsel %vm5518, %v5453, %v5583
  %v5648 = vsel %vm5519, %v5454, %v5584
  %v5649 = vpack.c.bf16 %v5586, %v5585
  %v5650 = vpack.c.bf16 %v5588, %v5587
  %v5651 = vpack.c.bf16 %v5590, %v5589
  %v5652 = vpack.c.bf16 %v5592, %v5591
  %v5653 = vpack.c.bf16 %v5594, %v5593
  %v5654 = vpack.c.bf16 %v5596, %v5595
  %v5655 = vpack.c.bf16 %v5598, %v5597
  %v5656 = vpack.c.bf16 %v5600, %v5599
  %v5657 = vpack.c.bf16 %v5602, %v5601
  %v5658 = vpack.c.bf16 %v5604, %v5603
  %v5659 = vpack.c.bf16 %v5606, %v5605
  %v5660 = vpack.c.bf16 %v5608, %v5607
  %v5661 = vpack.c.bf16 %v5610, %v5609
  %v5662 = vpack.c.bf16 %v5612, %v5611
  %v5663 = vpack.c.bf16 %v5614, %v5613
  %v5664 = vpack.c.bf16 %v5616, %v5615
  %v5665 = vpack.c.bf16 %v5618, %v5617
  %v5666 = vpack.c.bf16 %v5620, %v5619
  %v5667 = vpack.c.bf16 %v5622, %v5621
  %v5668 = vpack.c.bf16 %v5624, %v5623
  %v5669 = vpack.c.bf16 %v5626, %v5625
  %v5670 = vpack.c.bf16 %v5628, %v5627
  %v5671 = vpack.c.bf16 %v5630, %v5629
  %v5672 = vpack.c.bf16 %v5632, %v5631
  %v5673 = vpack.c.bf16 %v5634, %v5633
  %v5674 = vpack.c.bf16 %v5636, %v5635
  %v5675 = vpack.c.bf16 %v5638, %v5637
  %v5676 = vpack.c.bf16 %v5640, %v5639
  %v5677 = vpack.c.bf16 %v5642, %v5641
  %v5678 = vpack.c.bf16 %v5644, %v5643
  %v5679 = vpack.c.bf16 %v5646, %v5645
  %v5680 = vpack.c.bf16 %v5648, %v5647
  %5681 = vst.msk [vmem:[#allocation2] sm:$0xf] %vm133, 0
  %5682 = vst.msk [vmem:[#allocation2 + $0x4] sm:$0xf] %vm133, 0
  %5683 = vst.msk [vmem:[#allocation2 + $0x80] sm:$0xf] %vm133, 0
  %5684 = vst.msk [vmem:[#allocation2 + $0x84] sm:$0xf] %vm133, 0
  %v5685 = vld [vmem:[#allocation2] sm:$0x1]
  %v5686 = vsel %vm140, 0, %v5685
  %5687 = vst [vmem:[#allocation2] sm:$0x1] %v5686
  %v5688 = vld [vmem:[#allocation2 + $0x8] sm:$0x1]
  %v5689 = vsel %vm140, 0, %v5688
  %5690 = vst [vmem:[#allocation2 + $0x8] sm:$0x1] %v5689
  %v5691 = vld [vmem:[#allocation2 + $0x10] sm:$0x1]
  %v5692 = vsel %vm140, 0, %v5691
  %5693 = vst [vmem:[#allocation2 + $0x10] sm:$0x1] %v5692
  %v5694 = vld [vmem:[#allocation2 + $0x18] sm:$0x1]
  %v5695 = vsel %vm140, 0, %v5694
  %5696 = vst [vmem:[#allocation2 + $0x18] sm:$0x1] %v5695
  %v5697 = vld [vmem:[#allocation2 + $0x20] sm:$0x1]
  %v5698 = vsel %vm140, 0, %v5697
  %5699 = vst [vmem:[#allocation2 + $0x20] sm:$0x1] %v5698
  %v5700 = vld [vmem:[#allocation2 + $0x28] sm:$0x1]
  %v5701 = vsel %vm140, 0, %v5700
  %5702 = vst [vmem:[#allocation2 + $0x28] sm:$0x1] %v5701
  %v5703 = vld [vmem:[#allocation2 + $0x30] sm:$0x1]
  %v5704 = vsel %vm140, 0, %v5703
  %5705 = vst [vmem:[#allocation2 + $0x30] sm:$0x1] %v5704
  %v5706 = vld [vmem:[#allocation2 + $0x38] sm:$0x1]
  %v5707 = vsel %vm140, 0, %v5706
  %5708 = vst [vmem:[#allocation2 + $0x38] sm:$0x1] %v5707
  %v5709 = vld [vmem:[#allocation2 + $0x40] sm:$0x1]
  %v5710 = vsel %vm140, 0, %v5709
  %5711 = vst [vmem:[#allocation2 + $0x40] sm:$0x1] %v5710
  %v5712 = vld [vmem:[#allocation2 + $0x48] sm:$0x1]
  %v5713 = vsel %vm140, 0, %v5712
  %5714 = vst [vmem:[#allocation2 + $0x48] sm:$0x1] %v5713
  %v5715 = vld [vmem:[#allocation2 + $0x50] sm:$0x1]
  %v5716 = vsel %vm140, 0, %v5715
  %5717 = vst [vmem:[#allocation2 + $0x50] sm:$0x1] %v5716
  %v5718 = vld [vmem:[#allocation2 + $0x58] sm:$0x1]
  %v5719 = vsel %vm140, 0, %v5718
  %5720 = vst [vmem:[#allocation2 + $0x58] sm:$0x1] %v5719
  %v5721 = vld [vmem:[#allocation2 + $0x60] sm:$0x1]
  %v5722 = vsel %vm140, 0, %v5721
  %5723 = vst [vmem:[#allocation2 + $0x60] sm:$0x1] %v5722
  %v5724 = vld [vmem:[#allocation2 + $0x68] sm:$0x1]
  %v5725 = vsel %vm140, 0, %v5724
  %5726 = vst [vmem:[#allocation2 + $0x68] sm:$0x1] %v5725
  %v5727 = vld [vmem:[#allocation2 + $0x70] sm:$0x1]
  %v5728 = vsel %vm140, 0, %v5727
  %5729 = vst [vmem:[#allocation2 + $0x70] sm:$0x1] %v5728
  %v5730 = vld [vmem:[#allocation2 + $0x78] sm:$0x1]
  %v5731 = vsel %vm140, 0, %v5730
  %5732 = vst [vmem:[#allocation2 + $0x78] sm:$0x1] %v5731
  %v5733 = vld [vmem:[#allocation2 + $0x80] sm:$0x1]
  %v5734 = vsel %vm140, 0, %v5733
  %5735 = vst [vmem:[#allocation2 + $0x80] sm:$0x1] %v5734
  %v5736 = vld [vmem:[#allocation2 + $0x88] sm:$0x1]
  %v5737 = vsel %vm140, 0, %v5736
  %5738 = vst [vmem:[#allocation2 + $0x88] sm:$0x1] %v5737
  %v5739 = vld [vmem:[#allocation2 + $0x90] sm:$0x1]
  %v5740 = vsel %vm140, 0, %v5739
  %5741 = vst [vmem:[#allocation2 + $0x90] sm:$0x1] %v5740
  %v5742 = vld [vmem:[#allocation2 + $0x98] sm:$0x1]
  %v5743 = vsel %vm140, 0, %v5742
  %5744 = vst [vmem:[#allocation2 + $0x98] sm:$0x1] %v5743
  %v5745 = vld [vmem:[#allocation2 + $0xa0] sm:$0x1]
  %v5746 = vsel %vm140, 0, %v5745
  %5747 = vst [vmem:[#allocation2 + $0xa0] sm:$0x1] %v5746
  %v5748 = vld [vmem:[#allocation2 + $0xa8] sm:$0x1]
  %v5749 = vsel %vm140, 0, %v5748
  %5750 = vst [vmem:[#allocation2 + $0xa8] sm:$0x1] %v5749
  %v5751 = vld [vmem:[#allocation2 + $0xb0] sm:$0x1]
  %v5752 = vsel %vm140, 0, %v5751
  %5753 = vst [vmem:[#allocation2 + $0xb0] sm:$0x1] %v5752
  %v5754 = vld [vmem:[#allocation2 + $0xb8] sm:$0x1]
  %v5755 = vsel %vm140, 0, %v5754
  %5756 = vst [vmem:[#allocation2 + $0xb8] sm:$0x1] %v5755
  %v5757 = vld [vmem:[#allocation2 + $0xc0] sm:$0x1]
  %v5758 = vsel %vm140, 0, %v5757
  %5759 = vst [vmem:[#allocation2 + $0xc0] sm:$0x1] %v5758
  %v5760 = vld [vmem:[#allocation2 + $0xc8] sm:$0x1]
  %v5761 = vsel %vm140, 0, %v5760
  %5762 = vst [vmem:[#allocation2 + $0xc8] sm:$0x1] %v5761
  %v5763 = vld [vmem:[#allocation2 + $0xd0] sm:$0x1]
  %v5764 = vsel %vm140, 0, %v5763
  %5765 = vst [vmem:[#allocation2 + $0xd0] sm:$0x1] %v5764
  %v5766 = vld [vmem:[#allocation2 + $0xd8] sm:$0x1]
  %v5767 = vsel %vm140, 0, %v5766
  %5768 = vst [vmem:[#allocation2 + $0xd8] sm:$0x1] %v5767
  %v5769 = vld [vmem:[#allocation2 + $0xe0] sm:$0x1]
  %v5770 = vsel %vm140, 0, %v5769
  %5771 = vst [vmem:[#allocation2 + $0xe0] sm:$0x1] %v5770
  %v5772 = vld [vmem:[#allocation2 + $0xe8] sm:$0x1]
  %v5773 = vsel %vm140, 0, %v5772
  %5774 = vst [vmem:[#allocation2 + $0xe8] sm:$0x1] %v5773
  %v5775 = vld [vmem:[#allocation2 + $0xf0] sm:$0x1]
  %v5776 = vsel %vm140, 0, %v5775
  %5777 = vst [vmem:[#allocation2 + $0xf0] sm:$0x1] %v5776
  %v5778 = vld [vmem:[#allocation2 + $0xf8] sm:$0x1]
  %v5779 = vsel %vm140, 0, %v5778
  %5780 = vst [vmem:[#allocation2 + $0xf8] sm:$0x1] %v5779
  %v5811 = vunpack.c.l.b16 %v5649
  %v5812 = vunpack.c.h.b16 %v5649
  %v5813 = vunpack.c.l.b16 %v5650
  %v5814 = vunpack.c.h.b16 %v5650
  %v5815 = vunpack.c.l.b16 %v5651
  %v5816 = vunpack.c.h.b16 %v5651
  %v5817 = vunpack.c.l.b16 %v5652
  %v5818 = vunpack.c.h.b16 %v5652
  %v5819 = vunpack.c.l.b16 %v5653
  %v5820 = vunpack.c.h.b16 %v5653
  %v5821 = vunpack.c.l.b16 %v5654
  %v5822 = vunpack.c.h.b16 %v5654
  %v5823 = vunpack.c.l.b16 %v5655
  %v5824 = vunpack.c.h.b16 %v5655
  %v5825 = vunpack.c.l.b16 %v5656
  %v5826 = vunpack.c.h.b16 %v5656
  %v5827 = vunpack.c.l.b16 %v5657
  %v5828 = vunpack.c.h.b16 %v5657
  %v5829 = vunpack.c.l.b16 %v5658
  %v5830 = vunpack.c.h.b16 %v5658
  %v5831 = vunpack.c.l.b16 %v5659
  %v5832 = vunpack.c.h.b16 %v5659
  %v5833 = vunpack.c.l.b16 %v5660
  %v5834 = vunpack.c.h.b16 %v5660
  %v5835 = vunpack.c.l.b16 %v5661
  %v5836 = vunpack.c.h.b16 %v5661
  %v5837 = vunpack.c.l.b16 %v5662
  %v5838 = vunpack.c.h.b16 %v5662
  %v5839 = vunpack.c.l.b16 %v5663
  %v5840 = vunpack.c.h.b16 %v5663
  %v5841 = vunpack.c.l.b16 %v5665
  %v5842 = vunpack.c.h.b16 %v5665
  %v5843 = vunpack.c.l.b16 %v5666
  %v5844 = vunpack.c.h.b16 %v5666
  %v5845 = vunpack.c.l.b16 %v5667
  %v5846 = vunpack.c.h.b16 %v5667
  %v5847 = vunpack.c.l.b16 %v5668
  %v5848 = vunpack.c.h.b16 %v5668
  %v5849 = vunpack.c.l.b16 %v5669
  %v5850 = vunpack.c.h.b16 %v5669
  %v5851 = vunpack.c.l.b16 %v5670
  %v5852 = vunpack.c.h.b16 %v5670
  %v5853 = vunpack.c.l.b16 %v5671
  %v5854 = vunpack.c.h.b16 %v5671
  %v5855 = vunpack.c.l.b16 %v5672
  %v5856 = vunpack.c.h.b16 %v5672
  %v5857 = vunpack.c.l.b16 %v5673
  %v5858 = vunpack.c.h.b16 %v5673
  %v5859 = vunpack.c.l.b16 %v5674
  %v5860 = vunpack.c.h.b16 %v5674
  %v5861 = vunpack.c.l.b16 %v5675
  %v5862 = vunpack.c.h.b16 %v5675
  %v5863 = vunpack.c.l.b16 %v5676
  %v5864 = vunpack.c.h.b16 %v5676
  %v5865 = vunpack.c.l.b16 %v5677
  %v5866 = vunpack.c.h.b16 %v5677
  %v5867 = vunpack.c.l.b16 %v5678
  %v5868 = vunpack.c.h.b16 %v5678
  %v5869 = vunpack.c.l.b16 %v5679
  %v5870 = vunpack.c.h.b16 %v5679
  %v5871 = vpack.c.b16 %v5811, %v5811
  %v5872 = vpack.c.b16 %v5812, %v5812
  %v5873 = vpack.c.b16 %v5813, %v5813
  %v5874 = vpack.c.b16 %v5814, %v5814
  %v5875 = vpack.c.b16 %v5815, %v5815
  %v5876 = vpack.c.b16 %v5816, %v5816
  %v5877 = vpack.c.b16 %v5817, %v5817
  %v5878 = vpack.c.b16 %v5818, %v5818
  %v5879 = vpack.c.b16 %v5819, %v5819
  %v5880 = vpack.c.b16 %v5820, %v5820
  %v5881 = vpack.c.b16 %v5821, %v5821
  %v5882 = vpack.c.b16 %v5822, %v5822
  %v5883 = vpack.c.b16 %v5823, %v5823
  %v5884 = vpack.c.b16 %v5824, %v5824
  %v5885 = vpack.c.b16 %v5825, %v5825
  %v5886 = vpack.c.b16 %v5826, %v5826
  %v5887 = vpack.c.b16 %v5827, %v5827
  %v5888 = vpack.c.b16 %v5828, %v5828
  %v5889 = vpack.c.b16 %v5829, %v5829
  %v5890 = vpack.c.b16 %v5830, %v5830
  %v5891 = vpack.c.b16 %v5831, %v5831
  %v5892 = vpack.c.b16 %v5832, %v5832
  %v5893 = vpack.c.b16 %v5833, %v5833
  %v5894 = vpack.c.b16 %v5834, %v5834
  %v5895 = vpack.c.b16 %v5835, %v5835
  %v5896 = vpack.c.b16 %v5836, %v5836
  %v5897 = vpack.c.b16 %v5837, %v5837
  %v5898 = vpack.c.b16 %v5838, %v5838
  %v5899 = vpack.c.b16 %v5839, %v5839
  %v5900 = vpack.c.b16 %v5840, %v5840
  %v5901 = vpack.c.b16 %v5841, %v5841
  %v5902 = vpack.c.b16 %v5842, %v5842
  %v5903 = vpack.c.b16 %v5843, %v5843
  %v5904 = vpack.c.b16 %v5844, %v5844
  %v5905 = vpack.c.b16 %v5845, %v5845
  %v5906 = vpack.c.b16 %v5846, %v5846
  %v5907 = vpack.c.b16 %v5847, %v5847
  %v5908 = vpack.c.b16 %v5848, %v5848
  %v5909 = vpack.c.b16 %v5849, %v5849
  %v5910 = vpack.c.b16 %v5850, %v5850
  %v5911 = vpack.c.b16 %v5851, %v5851
  %v5912 = vpack.c.b16 %v5852, %v5852
  %v5913 = vpack.c.b16 %v5853, %v5853
  %v5914 = vpack.c.b16 %v5854, %v5854
  %v5915 = vpack.c.b16 %v5855, %v5855
  %v5916 = vpack.c.b16 %v5856, %v5856
  %v5917 = vpack.c.b16 %v5857, %v5857
  %v5918 = vpack.c.b16 %v5858, %v5858
  %v5919 = vpack.c.b16 %v5859, %v5859
  %v5920 = vpack.c.b16 %v5860, %v5860
  %v5921 = vpack.c.b16 %v5861, %v5861
  %v5922 = vpack.c.b16 %v5862, %v5862
  %v5923 = vpack.c.b16 %v5863, %v5863
  %v5924 = vpack.c.b16 %v5864, %v5864
  %v5925 = vpack.c.b16 %v5865, %v5865
  %v5926 = vpack.c.b16 %v5866, %v5866
  %v5927 = vpack.c.b16 %v5867, %v5867
  %v5928 = vpack.c.b16 %v5868, %v5868
  %v5929 = vpack.c.b16 %v5869, %v5869
  %v5930 = vpack.c.b16 %v5870, %v5870
  %v5932 = vshrl.u32 %v5871, 16
  %v5934 = vrot.slane %v5932, 7
  %v5935 = vshll.u32 %v5871, 16
  %v5937 = vor.u32 %v5934, %v5935
  %v5938 = vrot.slane %v5934, 4
  %v5940 = vshrl.u32 %v5872, 16
  %v5942 = vrot.slane %v5940, 7
  %v5943 = vshll.u32 %v5872, 16
  %v5945 = vor.u32 %v5942, %v5943
  %v5946 = vsel %vm388, %v5938, %v5945
  %v5948 = vshrl.u32 %v5873, 16
  %v5950 = vrot.slane %v5948, 7
  %v5951 = vshll.u32 %v5873, 16
  %v5953 = vor.u32 %v5950, %v5951
  %v5954 = vrot.slane %v5950, 4
  %v5956 = vshrl.u32 %v5874, 16
  %v5958 = vrot.slane %v5956, 7
  %v5959 = vshll.u32 %v5874, 16
  %v5961 = vor.u32 %v5958, %v5959
  %v5962 = vsel %vm388, %v5954, %v5961
  %v5964 = vshrl.u32 %v5875, 16
  %v5966 = vrot.slane %v5964, 7
  %v5967 = vshll.u32 %v5875, 16
  %v5969 = vor.u32 %v5966, %v5967
  %v5970 = vrot.slane %v5966, 4
  %v5972 = vshrl.u32 %v5876, 16
  %v5974 = vrot.slane %v5972, 7
  %v5975 = vshll.u32 %v5876, 16
  %v5977 = vor.u32 %v5974, %v5975
  %v5978 = vsel %vm388, %v5970, %v5977
  %v5980 = vshrl.u32 %v5877, 16
  %v5982 = vrot.slane %v5980, 7
  %v5983 = vshll.u32 %v5877, 16
  %v5985 = vor.u32 %v5982, %v5983
  %v5986 = vrot.slane %v5982, 4
  %v5988 = vshrl.u32 %v5878, 16
  %v5990 = vrot.slane %v5988, 7
  %v5991 = vshll.u32 %v5878, 16
  %v5993 = vor.u32 %v5990, %v5991
  %v5994 = vsel %vm388, %v5986, %v5993
  %v5996 = vshrl.u32 %v5879, 16
  %v5998 = vrot.slane %v5996, 7
  %v5999 = vshll.u32 %v5879, 16
  %v6001 = vor.u32 %v5998, %v5999
  %v6002 = vrot.slane %v5998, 4
  %v6004 = vshrl.u32 %v5880, 16
  %v6006 = vrot.slane %v6004, 7
  %v6007 = vshll.u32 %v5880, 16
  %v6009 = vor.u32 %v6006, %v6007
  %v6010 = vsel %vm388, %v6002, %v6009
  %v6012 = vshrl.u32 %v5881, 16
  %v6014 = vrot.slane %v6012, 7
  %v6015 = vshll.u32 %v5881, 16
  %v6017 = vor.u32 %v6014, %v6015
  %v6018 = vrot.slane %v6014, 4
  %v6020 = vshrl.u32 %v5882, 16
  %v6022 = vrot.slane %v6020, 7
  %v6023 = vshll.u32 %v5882, 16
  %v6025 = vor.u32 %v6022, %v6023
  %v6026 = vsel %vm388, %v6018, %v6025
  %v6028 = vshrl.u32 %v5883, 16
  %v6030 = vrot.slane %v6028, 7
  %v6031 = vshll.u32 %v5883, 16
  %v6033 = vor.u32 %v6030, %v6031
  %v6034 = vrot.slane %v6030, 4
  %v6036 = vshrl.u32 %v5884, 16
  %v6038 = vrot.slane %v6036, 7
  %v6039 = vshll.u32 %v5884, 16
  %v6041 = vor.u32 %v6038, %v6039
  %v6042 = vsel %vm388, %v6034, %v6041
  %v6044 = vshrl.u32 %v5885, 16
  %v6046 = vrot.slane %v6044, 7
  %v6047 = vshll.u32 %v5885, 16
  %v6049 = vor.u32 %v6046, %v6047
  %v6050 = vrot.slane %v6046, 4
  %v6052 = vshrl.u32 %v5886, 16
  %v6054 = vrot.slane %v6052, 7
  %v6055 = vshll.u32 %v5886, 16
  %v6057 = vor.u32 %v6054, %v6055
  %v6058 = vsel %vm388, %v6050, %v6057
  %v6060 = vshrl.u32 %v5887, 16
  %v6062 = vrot.slane %v6060, 7
  %v6063 = vshll.u32 %v5887, 16
  %v6065 = vor.u32 %v6062, %v6063
  %v6066 = vrot.slane %v6062, 4
  %v6068 = vshrl.u32 %v5888, 16
  %v6070 = vrot.slane %v6068, 7
  %v6071 = vshll.u32 %v5888, 16
  %v6073 = vor.u32 %v6070, %v6071
  %v6074 = vsel %vm388, %v6066, %v6073
  %v6076 = vshrl.u32 %v5889, 16
  %v6078 = vrot.slane %v6076, 7
  %v6079 = vshll.u32 %v5889, 16
  %v6081 = vor.u32 %v6078, %v6079
  %v6082 = vrot.slane %v6078, 4
  %v6084 = vshrl.u32 %v5890, 16
  %v6086 = vrot.slane %v6084, 7
  %v6087 = vshll.u32 %v5890, 16
  %v6089 = vor.u32 %v6086, %v6087
  %v6090 = vsel %vm388, %v6082, %v6089
  %v6092 = vshrl.u32 %v5891, 16
  %v6094 = vrot.slane %v6092, 7
  %v6095 = vshll.u32 %v5891, 16
  %v6097 = vor.u32 %v6094, %v6095
  %v6098 = vrot.slane %v6094, 4
  %v6100 = vshrl.u32 %v5892, 16
  %v6102 = vrot.slane %v6100, 7
  %v6103 = vshll.u32 %v5892, 16
  %v6105 = vor.u32 %v6102, %v6103
  %v6106 = vsel %vm388, %v6098, %v6105
  %v6108 = vshrl.u32 %v5893, 16
  %v6110 = vrot.slane %v6108, 7
  %v6111 = vshll.u32 %v5893, 16
  %v6113 = vor.u32 %v6110, %v6111
  %v6114 = vrot.slane %v6110, 4
  %v6116 = vshrl.u32 %v5894, 16
  %v6118 = vrot.slane %v6116, 7
  %v6119 = vshll.u32 %v5894, 16
  %v6121 = vor.u32 %v6118, %v6119
  %v6122 = vsel %vm388, %v6114, %v6121
  %v6124 = vshrl.u32 %v5895, 16
  %v6126 = vrot.slane %v6124, 7
  %v6127 = vshll.u32 %v5895, 16
  %v6129 = vor.u32 %v6126, %v6127
  %v6130 = vrot.slane %v6126, 4
  %v6132 = vshrl.u32 %v5896, 16
  %v6134 = vrot.slane %v6132, 7
  %v6135 = vshll.u32 %v5896, 16
  %v6137 = vor.u32 %v6134, %v6135
  %v6138 = vsel %vm388, %v6130, %v6137
  %v6140 = vshrl.u32 %v5897, 16
  %v6142 = vrot.slane %v6140, 7
  %v6143 = vshll.u32 %v5897, 16
  %v6145 = vor.u32 %v6142, %v6143
  %v6146 = vrot.slane %v6142, 4
  %v6148 = vshrl.u32 %v5898, 16
  %v6150 = vrot.slane %v6148, 7
  %v6151 = vshll.u32 %v5898, 16
  %v6153 = vor.u32 %v6150, %v6151
  %v6154 = vsel %vm388, %v6146, %v6153
  %v6156 = vshrl.u32 %v5899, 16
  %v6158 = vrot.slane %v6156, 7
  %v6159 = vshll.u32 %v5899, 16
  %v6161 = vor.u32 %v6158, %v6159
  %v6162 = vrot.slane %v6158, 4
  %v6164 = vshrl.u32 %v5900, 16
  %v6166 = vrot.slane %v6164, 7
  %v6167 = vshll.u32 %v5900, 16
  %v6169 = vor.u32 %v6166, %v6167
  %v6170 = vsel %vm388, %v6162, %v6169
  %v6172 = vshrl.u32 %v5901, 16
  %v6174 = vrot.slane %v6172, 7
  %v6175 = vshll.u32 %v5901, 16
  %v6177 = vor.u32 %v6174, %v6175
  %v6178 = vrot.slane %v6174, 4
  %v6180 = vshrl.u32 %v5902, 16
  %v6182 = vrot.slane %v6180, 7
  %v6183 = vshll.u32 %v5902, 16
  %v6185 = vor.u32 %v6182, %v6183
  %v6186 = vsel %vm388, %v6178, %v6185
  %v6188 = vshrl.u32 %v5903, 16
  %v6190 = vrot.slane %v6188, 7
  %v6191 = vshll.u32 %v5903, 16
  %v6193 = vor.u32 %v6190, %v6191
  %v6194 = vrot.slane %v6190, 4
  %v6196 = vshrl.u32 %v5904, 16
  %v6198 = vrot.slane %v6196, 7
  %v6199 = vshll.u32 %v5904, 16
  %v6201 = vor.u32 %v6198, %v6199
  %v6202 = vsel %vm388, %v6194, %v6201
  %v6204 = vshrl.u32 %v5905, 16
  %v6206 = vrot.slane %v6204, 7
  %v6207 = vshll.u32 %v5905, 16
  %v6209 = vor.u32 %v6206, %v6207
  %v6210 = vrot.slane %v6206, 4
  %v6212 = vshrl.u32 %v5906, 16
  %v6214 = vrot.slane %v6212, 7
  %v6215 = vshll.u32 %v5906, 16
  %v6217 = vor.u32 %v6214, %v6215
  %v6218 = vsel %vm388, %v6210, %v6217
  %v6220 = vshrl.u32 %v5907, 16
  %v6222 = vrot.slane %v6220, 7
  %v6223 = vshll.u32 %v5907, 16
  %v6225 = vor.u32 %v6222, %v6223
  %v6226 = vrot.slane %v6222, 4
  %v6228 = vshrl.u32 %v5908, 16
  %v6230 = vrot.slane %v6228, 7
  %v6231 = vshll.u32 %v5908, 16
  %v6233 = vor.u32 %v6230, %v6231
  %v6234 = vsel %vm388, %v6226, %v6233
  %v6236 = vshrl.u32 %v5909, 16
  %v6238 = vrot.slane %v6236, 7
  %v6239 = vshll.u32 %v5909, 16
  %v6241 = vor.u32 %v6238, %v6239
  %v6242 = vrot.slane %v6238, 4
  %v6244 = vshrl.u32 %v5910, 16
  %v6246 = vrot.slane %v6244, 7
  %v6247 = vshll.u32 %v5910, 16
  %v6249 = vor.u32 %v6246, %v6247
  %v6250 = vsel %vm388, %v6242, %v6249
  %v6252 = vshrl.u32 %v5911, 16
  %v6254 = vrot.slane %v6252, 7
  %v6255 = vshll.u32 %v5911, 16
  %v6257 = vor.u32 %v6254, %v6255
  %v6258 = vrot.slane %v6254, 4
  %v6260 = vshrl.u32 %v5912, 16
  %v6262 = vrot.slane %v6260, 7
  %v6263 = vshll.u32 %v5912, 16
  %v6265 = vor.u32 %v6262, %v6263
  %v6266 = vsel %vm388, %v6258, %v6265
  %v6268 = vshrl.u32 %v5913, 16
  %v6270 = vrot.slane %v6268, 7
  %v6271 = vshll.u32 %v5913, 16
  %v6273 = vor.u32 %v6270, %v6271
  %v6274 = vrot.slane %v6270, 4
  %v6276 = vshrl.u32 %v5914, 16
  %v6278 = vrot.slane %v6276, 7
  %v6279 = vshll.u32 %v5914, 16
  %v6281 = vor.u32 %v6278, %v6279
  %v6282 = vsel %vm388, %v6274, %v6281
  %v6284 = vshrl.u32 %v5915, 16
  %v6286 = vrot.slane %v6284, 7
  %v6287 = vshll.u32 %v5915, 16
  %v6289 = vor.u32 %v6286, %v6287
  %v6290 = vrot.slane %v6286, 4
  %v6292 = vshrl.u32 %v5916, 16
  %v6294 = vrot.slane %v6292, 7
  %v6295 = vshll.u32 %v5916, 16
  %v6297 = vor.u32 %v6294, %v6295
  %v6298 = vsel %vm388, %v6290, %v6297
  %v6300 = vshrl.u32 %v5917, 16
  %v6302 = vrot.slane %v6300, 7
  %v6303 = vshll.u32 %v5917, 16
  %v6305 = vor.u32 %v6302, %v6303
  %v6306 = vrot.slane %v6302, 4
  %v6308 = vshrl.u32 %v5918, 16
  %v6310 = vrot.slane %v6308, 7
  %v6311 = vshll.u32 %v5918, 16
  %v6313 = vor.u32 %v6310, %v6311
  %v6314 = vsel %vm388, %v6306, %v6313
  %v6316 = vshrl.u32 %v5919, 16
  %v6318 = vrot.slane %v6316, 7
  %v6319 = vshll.u32 %v5919, 16
  %v6321 = vor.u32 %v6318, %v6319
  %v6322 = vrot.slane %v6318, 4
  %v6324 = vshrl.u32 %v5920, 16
  %v6326 = vrot.slane %v6324, 7
  %v6327 = vshll.u32 %v5920, 16
  %v6329 = vor.u32 %v6326, %v6327
  %v6330 = vsel %vm388, %v6322, %v6329
  %v6332 = vshrl.u32 %v5921, 16
  %v6334 = vrot.slane %v6332, 7
  %v6335 = vshll.u32 %v5921, 16
  %v6337 = vor.u32 %v6334, %v6335
  %v6338 = vrot.slane %v6334, 4
  %v6340 = vshrl.u32 %v5922, 16
  %v6342 = vrot.slane %v6340, 7
  %v6343 = vshll.u32 %v5922, 16
  %v6345 = vor.u32 %v6342, %v6343
  %v6346 = vsel %vm388, %v6338, %v6345
  %v6348 = vshrl.u32 %v5923, 16
  %v6350 = vrot.slane %v6348, 7
  %v6351 = vshll.u32 %v5923, 16
  %v6353 = vor.u32 %v6350, %v6351
  %v6354 = vrot.slane %v6350, 4
  %v6356 = vshrl.u32 %v5924, 16
  %v6358 = vrot.slane %v6356, 7
  %v6359 = vshll.u32 %v5924, 16
  %v6361 = vor.u32 %v6358, %v6359
  %v6362 = vsel %vm388, %v6354, %v6361
  %v6364 = vshrl.u32 %v5925, 16
  %v6366 = vrot.slane %v6364, 7
  %v6367 = vshll.u32 %v5925, 16
  %v6369 = vor.u32 %v6366, %v6367
  %v6370 = vrot.slane %v6366, 4
  %v6372 = vshrl.u32 %v5926, 16
  %v6374 = vrot.slane %v6372, 7
  %v6375 = vshll.u32 %v5926, 16
  %v6377 = vor.u32 %v6374, %v6375
  %v6378 = vsel %vm388, %v6370, %v6377
  %v6380 = vshrl.u32 %v5927, 16
  %v6382 = vrot.slane %v6380, 7
  %v6383 = vshll.u32 %v5927, 16
  %v6385 = vor.u32 %v6382, %v6383
  %v6386 = vrot.slane %v6382, 4
  %v6388 = vshrl.u32 %v5928, 16
  %v6390 = vrot.slane %v6388, 7
  %v6391 = vshll.u32 %v5928, 16
  %v6393 = vor.u32 %v6390, %v6391
  %v6394 = vsel %vm388, %v6386, %v6393
  %v6396 = vshrl.u32 %v5929, 16
  %v6398 = vrot.slane %v6396, 7
  %v6399 = vshll.u32 %v5929, 16
  %v6401 = vor.u32 %v6398, %v6399
  %v6402 = vrot.slane %v6398, 4
  %v6404 = vshrl.u32 %v5930, 16
  %v6406 = vrot.slane %v6404, 7
  %v6407 = vshll.u32 %v5930, 16
  %v6409 = vor.u32 %v6406, %v6407
  %v6410 = vsel %vm388, %v6402, %v6409
  %v6471 = vld [vmem:[%s929] sm:$0xf]
  %v6472 = vsel %vm932, %v5937, %v6471
  %6473 = vst [vmem:[%s929] sm:$0xf] %v6472
  %6474 = vst.msk [vmem:[%s929 + $0x4] sm:$0xf] %vm133, %v5946
  %v6475 = vld [vmem:[%s929 + $0x8] sm:$0xf]
  %v6476 = vsel %vm932, %v5953, %v6475
  %6477 = vst [vmem:[%s929 + $0x8] sm:$0xf] %v6476
  %6478 = vst.msk [vmem:[%s929 + $0xc] sm:$0xf] %vm133, %v5962
  %v6479 = vld [vmem:[%s929 + $0x10] sm:$0xf]
  %v6480 = vsel %vm932, %v5969, %v6479
  %6481 = vst [vmem:[%s929 + $0x10] sm:$0xf] %v6480
  %6482 = vst.msk [vmem:[%s929 + $0x14] sm:$0xf] %vm133, %v5978
  %v6483 = vld [vmem:[%s929 + $0x18] sm:$0xf]
  %v6484 = vsel %vm932, %v5985, %v6483
  %6485 = vst [vmem:[%s929 + $0x18] sm:$0xf] %v6484
  %6486 = vst.msk [vmem:[%s929 + $0x1c] sm:$0xf] %vm133, %v5994
  %v6487 = vld [vmem:[%s929 + $0x20] sm:$0xf]
  %v6488 = vsel %vm932, %v6001, %v6487
  %6489 = vst [vmem:[%s929 + $0x20] sm:$0xf] %v6488
  %6490 = vst.msk [vmem:[%s929 + $0x24] sm:$0xf] %vm133, %v6010
  %v6491 = vld [vmem:[%s929 + $0x28] sm:$0xf]
  %v6492 = vsel %vm932, %v6017, %v6491
  %6493 = vst [vmem:[%s929 + $0x28] sm:$0xf] %v6492
  %6494 = vst.msk [vmem:[%s929 + $0x2c] sm:$0xf] %vm133, %v6026
  %v6495 = vld [vmem:[%s929 + $0x30] sm:$0xf]
  %v6496 = vsel %vm932, %v6033, %v6495
  %6497 = vst [vmem:[%s929 + $0x30] sm:$0xf] %v6496
  %6498 = vst.msk [vmem:[%s929 + $0x34] sm:$0xf] %vm133, %v6042
  %v6499 = vld [vmem:[%s929 + $0x38] sm:$0xf]
  %v6500 = vsel %vm932, %v6049, %v6499
  %6501 = vst [vmem:[%s929 + $0x38] sm:$0xf] %v6500
  %6502 = vst.msk [vmem:[%s929 + $0x3c] sm:$0xf] %vm133, %v6058
  %v6503 = vld [vmem:[%s929 + $0x40] sm:$0xf]
  %v6504 = vsel %vm932, %v6065, %v6503
  %6505 = vst [vmem:[%s929 + $0x40] sm:$0xf] %v6504
  %6506 = vst.msk [vmem:[%s929 + $0x44] sm:$0xf] %vm133, %v6074
  %v6507 = vld [vmem:[%s929 + $0x48] sm:$0xf]
  %v6508 = vsel %vm932, %v6081, %v6507
  %6509 = vst [vmem:[%s929 + $0x48] sm:$0xf] %v6508
  %6510 = vst.msk [vmem:[%s929 + $0x4c] sm:$0xf] %vm133, %v6090
  %v6511 = vld [vmem:[%s929 + $0x50] sm:$0xf]
  %v6512 = vsel %vm932, %v6097, %v6511
  %6513 = vst [vmem:[%s929 + $0x50] sm:$0xf] %v6512
  %6514 = vst.msk [vmem:[%s929 + $0x54] sm:$0xf] %vm133, %v6106
  %v6515 = vld [vmem:[%s929 + $0x58] sm:$0xf]
  %v6516 = vsel %vm932, %v6113, %v6515
  %6517 = vst [vmem:[%s929 + $0x58] sm:$0xf] %v6516
  %6518 = vst.msk [vmem:[%s929 + $0x5c] sm:$0xf] %vm133, %v6122
  %v6519 = vld [vmem:[%s929 + $0x60] sm:$0xf]
  %v6520 = vsel %vm932, %v6129, %v6519
  %6521 = vst [vmem:[%s929 + $0x60] sm:$0xf] %v6520
  %6522 = vst.msk [vmem:[%s929 + $0x64] sm:$0xf] %vm133, %v6138
  %v6523 = vld [vmem:[%s929 + $0x68] sm:$0xf]
  %v6524 = vsel %vm932, %v6145, %v6523
  %6525 = vst [vmem:[%s929 + $0x68] sm:$0xf] %v6524
  %6526 = vst.msk [vmem:[%s929 + $0x6c] sm:$0xf] %vm133, %v6154
  %v6527 = vld [vmem:[%s929 + $0x70] sm:$0xf]
  %v6528 = vsel %vm932, %v6161, %v6527
  %6529 = vst [vmem:[%s929 + $0x70] sm:$0xf] %v6528
  %6530 = vst.msk [vmem:[%s929 + $0x74] sm:$0xf] %vm133, %v6170
  %v6531 = vld [vmem:[%s929 + $0x80] sm:$0xf]
  %v6532 = vsel %vm932, %v6177, %v6531
  %6533 = vst [vmem:[%s929 + $0x80] sm:$0xf] %v6532
  %6534 = vst.msk [vmem:[%s929 + $0x84] sm:$0xf] %vm133, %v6186
  %v6535 = vld [vmem:[%s929 + $0x88] sm:$0xf]
  %v6536 = vsel %vm932, %v6193, %v6535
  %6537 = vst [vmem:[%s929 + $0x88] sm:$0xf] %v6536
  %6538 = vst.msk [vmem:[%s929 + $0x8c] sm:$0xf] %vm133, %v6202
  %v6539 = vld [vmem:[%s929 + $0x90] sm:$0xf]
  %v6540 = vsel %vm932, %v6209, %v6539
  %6541 = vst [vmem:[%s929 + $0x90] sm:$0xf] %v6540
  %6542 = vst.msk [vmem:[%s929 + $0x94] sm:$0xf] %vm133, %v6218
  %v6543 = vld [vmem:[%s929 + $0x98] sm:$0xf]
  %v6544 = vsel %vm932, %v6225, %v6543
  %6545 = vst [vmem:[%s929 + $0x98] sm:$0xf] %v6544
  %6546 = vst.msk [vmem:[%s929 + $0x9c] sm:$0xf] %vm133, %v6234
  %v6547 = vld [vmem:[%s929 + $0xa0] sm:$0xf]
  %v6548 = vsel %vm932, %v6241, %v6547
  %6549 = vst [vmem:[%s929 + $0xa0] sm:$0xf] %v6548
  %6550 = vst.msk [vmem:[%s929 + $0xa4] sm:$0xf] %vm133, %v6250
  %v6551 = vld [vmem:[%s929 + $0xa8] sm:$0xf]
  %v6552 = vsel %vm932, %v6257, %v6551
  %6553 = vst [vmem:[%s929 + $0xa8] sm:$0xf] %v6552
  %6554 = vst.msk [vmem:[%s929 + $0xac] sm:$0xf] %vm133, %v6266
  %v6555 = vld [vmem:[%s929 + $0xb0] sm:$0xf]
  %v6556 = vsel %vm932, %v6273, %v6555
  %6557 = vst [vmem:[%s929 + $0xb0] sm:$0xf] %v6556
  %6558 = vst.msk [vmem:[%s929 + $0xb4] sm:$0xf] %vm133, %v6282
  %v6559 = vld [vmem:[%s929 + $0xb8] sm:$0xf]
  %v6560 = vsel %vm932, %v6289, %v6559
  %6561 = vst [vmem:[%s929 + $0xb8] sm:$0xf] %v6560
  %6562 = vst.msk [vmem:[%s929 + $0xbc] sm:$0xf] %vm133, %v6298
  %v6563 = vld [vmem:[%s929 + $0xc0] sm:$0xf]
  %v6564 = vsel %vm932, %v6305, %v6563
  %6565 = vst [vmem:[%s929 + $0xc0] sm:$0xf] %v6564
  %6566 = vst.msk [vmem:[%s929 + $0xc4] sm:$0xf] %vm133, %v6314
  %v6567 = vld [vmem:[%s929 + $0xc8] sm:$0xf]
  %v6568 = vsel %vm932, %v6321, %v6567
  %6569 = vst [vmem:[%s929 + $0xc8] sm:$0xf] %v6568
  %6570 = vst.msk [vmem:[%s929 + $0xcc] sm:$0xf] %vm133, %v6330
  %v6571 = vld [vmem:[%s929 + $0xd0] sm:$0xf]
  %v6572 = vsel %vm932, %v6337, %v6571
  %6573 = vst [vmem:[%s929 + $0xd0] sm:$0xf] %v6572
  %6574 = vst.msk [vmem:[%s929 + $0xd4] sm:$0xf] %vm133, %v6346
  %v6575 = vld [vmem:[%s929 + $0xd8] sm:$0xf]
  %v6576 = vsel %vm932, %v6353, %v6575
  %6577 = vst [vmem:[%s929 + $0xd8] sm:$0xf] %v6576
  %6578 = vst.msk [vmem:[%s929 + $0xdc] sm:$0xf] %vm133, %v6362
  %v6579 = vld [vmem:[%s929 + $0xe0] sm:$0xf]
  %v6580 = vsel %vm932, %v6369, %v6579
  %6581 = vst [vmem:[%s929 + $0xe0] sm:$0xf] %v6580
  %6582 = vst.msk [vmem:[%s929 + $0xe4] sm:$0xf] %vm133, %v6378
  %v6583 = vld [vmem:[%s929 + $0xe8] sm:$0xf]
  %v6584 = vsel %vm932, %v6385, %v6583
  %6585 = vst [vmem:[%s929 + $0xe8] sm:$0xf] %v6584
  %6586 = vst.msk [vmem:[%s929 + $0xec] sm:$0xf] %vm133, %v6394
  %v6587 = vld [vmem:[%s929 + $0xf0] sm:$0xf]
  %v6588 = vsel %vm932, %v6401, %v6587
  %6589 = vst [vmem:[%s929 + $0xf0] sm:$0xf] %v6588
  %6590 = vst.msk [vmem:[%s929 + $0xf4] sm:$0xf] %vm133, %v6410
  %6591 = vst.msk [vmem:[#allocation2] sm:$0xf] %vm1053, 0
  %6592 = vst.msk [vmem:[#allocation2 + $0x4] sm:$0xf] %vm1053, 0
  %6593 = vst.msk [vmem:[#allocation2 + $0x80] sm:$0xf] %vm1053, 0
  %6594 = vst.msk [vmem:[#allocation2 + $0x84] sm:$0xf] %vm1053, 0
  %6595 = vrot.lane.b32.xlu0 %v5871, 8
  %v6596 = vpop.permute.xlu0 %6595
  %6597 = vrot.lane.b32.xlu0 %v5872, 8
  %v6598 = vpop.permute.xlu0 %6597
  %6599 = vrot.lane.b32.xlu0 %v5873, 8
  %v6600 = vpop.permute.xlu0 %6599
  %6601 = vrot.lane.b32.xlu0 %v5874, 8
  %v6602 = vpop.permute.xlu0 %6601
  %6603 = vrot.lane.b32.xlu0 %v5875, 8
  %v6604 = vpop.permute.xlu0 %6603
  %6605 = vrot.lane.b32.xlu0 %v5876, 8
  %v6606 = vpop.permute.xlu0 %6605
  %6607 = vrot.lane.b32.xlu0 %v5877, 8
  %v6608 = vpop.permute.xlu0 %6607
  %6609 = vrot.lane.b32.xlu0 %v5878, 8
  %v6610 = vpop.permute.xlu0 %6609
  %6611 = vrot.lane.b32.xlu0 %v5879, 8
  %v6612 = vpop.permute.xlu0 %6611
  %6613 = vrot.lane.b32.xlu0 %v5880, 8
  %v6614 = vpop.permute.xlu0 %6613
  %6615 = vrot.lane.b32.xlu0 %v5881, 8
  %v6616 = vpop.permute.xlu0 %6615
  %6617 = vrot.lane.b32.xlu0 %v5882, 8
  %v6618 = vpop.permute.xlu0 %6617
  %6619 = vrot.lane.b32.xlu0 %v5883, 8
  %v6620 = vpop.permute.xlu0 %6619
  %6621 = vrot.lane.b32.xlu0 %v5884, 8
  %v6622 = vpop.permute.xlu0 %6621
  %6623 = vrot.lane.b32.xlu0 %v5885, 8
  %v6624 = vpop.permute.xlu0 %6623
  %6625 = vrot.lane.b32.xlu0 %v5886, 8
  %v6626 = vpop.permute.xlu0 %6625
  %6627 = vrot.lane.b32.xlu0 %v5887, 8
  %v6628 = vpop.permute.xlu0 %6627
  %6629 = vrot.lane.b32.xlu0 %v5888, 8
  %v6630 = vpop.permute.xlu0 %6629
  %6631 = vrot.lane.b32.xlu0 %v5889, 8
  %v6632 = vpop.permute.xlu0 %6631
  %6633 = vrot.lane.b32.xlu0 %v5890, 8
  %v6634 = vpop.permute.xlu0 %6633
  %6635 = vrot.lane.b32.xlu0 %v5891, 8
  %v6636 = vpop.permute.xlu0 %6635
  %6637 = vrot.lane.b32.xlu0 %v5892, 8
  %v6638 = vpop.permute.xlu0 %6637
  %6639 = vrot.lane.b32.xlu0 %v5893, 8
  %v6640 = vpop.permute.xlu0 %6639
  %6641 = vrot.lane.b32.xlu0 %v5894, 8
  %v6642 = vpop.permute.xlu0 %6641
  %6643 = vrot.lane.b32.xlu0 %v5895, 8
  %v6644 = vpop.permute.xlu0 %6643
  %6645 = vrot.lane.b32.xlu0 %v5896, 8
  %v6646 = vpop.permute.xlu0 %6645
  %6647 = vrot.lane.b32.xlu0 %v5897, 8
  %v6648 = vpop.permute.xlu0 %6647
  %6649 = vrot.lane.b32.xlu0 %v5898, 8
  %v6650 = vpop.permute.xlu0 %6649
  %6651 = vrot.lane.b32.xlu0 %v5899, 8
  %v6652 = vpop.permute.xlu0 %6651
  %6653 = vrot.lane.b32.xlu0 %v5900, 8
  %v6654 = vpop.permute.xlu0 %6653
  %6655 = vrot.lane.b32.xlu0 %v5901, 8
  %v6656 = vpop.permute.xlu0 %6655
  %6657 = vrot.lane.b32.xlu0 %v5902, 8
  %v6658 = vpop.permute.xlu0 %6657
  %6659 = vrot.lane.b32.xlu0 %v5903, 8
  %v6660 = vpop.permute.xlu0 %6659
  %6661 = vrot.lane.b32.xlu0 %v5904, 8
  %v6662 = vpop.permute.xlu0 %6661
  %6663 = vrot.lane.b32.xlu0 %v5905, 8
  %v6664 = vpop.permute.xlu0 %6663
  %6665 = vrot.lane.b32.xlu0 %v5906, 8
  %v6666 = vpop.permute.xlu0 %6665
  %6667 = vrot.lane.b32.xlu0 %v5907, 8
  %v6668 = vpop.permute.xlu0 %6667
  %6669 = vrot.lane.b32.xlu0 %v5908, 8
  %v6670 = vpop.permute.xlu0 %6669
  %6671 = vrot.lane.b32.xlu0 %v5909, 8
  %v6672 = vpop.permute.xlu0 %6671
  %6673 = vrot.lane.b32.xlu0 %v5910, 8
  %v6674 = vpop.permute.xlu0 %6673
  %6675 = vrot.lane.b32.xlu0 %v5911, 8
  %v6676 = vpop.permute.xlu0 %6675
  %6677 = vrot.lane.b32.xlu0 %v5912, 8
  %v6678 = vpop.permute.xlu0 %6677
  %6679 = vrot.lane.b32.xlu0 %v5913, 8
  %v6680 = vpop.permute.xlu0 %6679
  %6681 = vrot.lane.b32.xlu0 %v5914, 8
  %v6682 = vpop.permute.xlu0 %6681
  %6683 = vrot.lane.b32.xlu0 %v5915, 8
  %v6684 = vpop.permute.xlu0 %6683
  %6685 = vrot.lane.b32.xlu0 %v5916, 8
  %v6686 = vpop.permute.xlu0 %6685
  %6687 = vrot.lane.b32.xlu0 %v5917, 8
  %v6688 = vpop.permute.xlu0 %6687
  %6689 = vrot.lane.b32.xlu0 %v5918, 8
  %v6690 = vpop.permute.xlu0 %6689
  %6691 = vrot.lane.b32.xlu0 %v5919, 8
  %v6692 = vpop.permute.xlu0 %6691
  %6693 = vrot.lane.b32.xlu0 %v5920, 8
  %v6694 = vpop.permute.xlu0 %6693
  %6695 = vrot.lane.b32.xlu0 %v5921, 8
  %v6696 = vpop.permute.xlu0 %6695
  %6697 = vrot.lane.b32.xlu0 %v5922, 8
  %v6698 = vpop.permute.xlu0 %6697
  %6699 = vrot.lane.b32.xlu0 %v5923, 8
  %v6700 = vpop.permute.xlu0 %6699
  %6701 = vrot.lane.b32.xlu0 %v5924, 8
  %v6702 = vpop.permute.xlu0 %6701
  %6703 = vrot.lane.b32.xlu0 %v5925, 8
  %v6704 = vpop.permute.xlu0 %6703
  %6705 = vrot.lane.b32.xlu0 %v5926, 8
  %v6706 = vpop.permute.xlu0 %6705
  %6707 = vrot.lane.b32.xlu0 %v5927, 8
  %v6708 = vpop.permute.xlu0 %6707
  %6709 = vrot.lane.b32.xlu0 %v5928, 8
  %v6710 = vpop.permute.xlu0 %6709
  %6711 = vrot.lane.b32.xlu0 %v5929, 8
  %v6712 = vpop.permute.xlu0 %6711
  %6713 = vrot.lane.b32.xlu0 %v5930, 8
  %v6714 = vpop.permute.xlu0 %6713
  %6775 = vst.msk [vmem:[%s929] sm:$0xf] %vm1053, %v6596
  %6776 = vst.msk [vmem:[%s929 + $0x4] sm:$0xf] %vm1053, %v6598
  %6777 = vst.msk [vmem:[%s929 + $0x8] sm:$0xf] %vm1053, %v6600
  %6778 = vst.msk [vmem:[%s929 + $0xc] sm:$0xf] %vm1053, %v6602
  %6779 = vst.msk [vmem:[%s929 + $0x10] sm:$0xf] %vm1053, %v6604
  %6780 = vst.msk [vmem:[%s929 + $0x14] sm:$0xf] %vm1053, %v6606
  %6781 = vst.msk [vmem:[%s929 + $0x18] sm:$0xf] %vm1053, %v6608
  %6782 = vst.msk [vmem:[%s929 + $0x1c] sm:$0xf] %vm1053, %v6610
  %6783 = vst.msk [vmem:[%s929 + $0x20] sm:$0xf] %vm1053, %v6612
  %6784 = vst.msk [vmem:[%s929 + $0x24] sm:$0xf] %vm1053, %v6614
  %6785 = vst.msk [vmem:[%s929 + $0x28] sm:$0xf] %vm1053, %v6616
  %6786 = vst.msk [vmem:[%s929 + $0x2c] sm:$0xf] %vm1053, %v6618
  %6787 = vst.msk [vmem:[%s929 + $0x30] sm:$0xf] %vm1053, %v6620
  %6788 = vst.msk [vmem:[%s929 + $0x34] sm:$0xf] %vm1053, %v6622
  %6789 = vst.msk [vmem:[%s929 + $0x38] sm:$0xf] %vm1053, %v6624
  %6790 = vst.msk [vmem:[%s929 + $0x3c] sm:$0xf] %vm1053, %v6626
  %6791 = vst.msk [vmem:[%s929 + $0x40] sm:$0xf] %vm1053, %v6628
  %6792 = vst.msk [vmem:[%s929 + $0x44] sm:$0xf] %vm1053, %v6630
  %6793 = vst.msk [vmem:[%s929 + $0x48] sm:$0xf] %vm1053, %v6632
  %6794 = vst.msk [vmem:[%s929 + $0x4c] sm:$0xf] %vm1053, %v6634
  %6795 = vst.msk [vmem:[%s929 + $0x50] sm:$0xf] %vm1053, %v6636
  %6796 = vst.msk [vmem:[%s929 + $0x54] sm:$0xf] %vm1053, %v6638
  %6797 = vst.msk [vmem:[%s929 + $0x58] sm:$0xf] %vm1053, %v6640
  %6798 = vst.msk [vmem:[%s929 + $0x5c] sm:$0xf] %vm1053, %v6642
  %6799 = vst.msk [vmem:[%s929 + $0x60] sm:$0xf] %vm1053, %v6644
  %6800 = vst.msk [vmem:[%s929 + $0x64] sm:$0xf] %vm1053, %v6646
  %6801 = vst.msk [vmem:[%s929 + $0x68] sm:$0xf] %vm1053, %v6648
  %6802 = vst.msk [vmem:[%s929 + $0x6c] sm:$0xf] %vm1053, %v6650
  %6803 = vst.msk [vmem:[%s929 + $0x70] sm:$0xf] %vm1053, %v6652
  %6804 = vst.msk [vmem:[%s929 + $0x74] sm:$0xf] %vm1053, %v6654
  %6805 = vst.msk [vmem:[%s929 + $0x80] sm:$0xf] %vm1053, %v6656
  %6806 = vst.msk [vmem:[%s929 + $0x84] sm:$0xf] %vm1053, %v6658
  %6807 = vst.msk [vmem:[%s929 + $0x88] sm:$0xf] %vm1053, %v6660
  %6808 = vst.msk [vmem:[%s929 + $0x8c] sm:$0xf] %vm1053, %v6662
  %6809 = vst.msk [vmem:[%s929 + $0x90] sm:$0xf] %vm1053, %v6664
  %6810 = vst.msk [vmem:[%s929 + $0x94] sm:$0xf] %vm1053, %v6666
  %6811 = vst.msk [vmem:[%s929 + $0x98] sm:$0xf] %vm1053, %v6668
  %6812 = vst.msk [vmem:[%s929 + $0x9c] sm:$0xf] %vm1053, %v6670
  %6813 = vst.msk [vmem:[%s929 + $0xa0] sm:$0xf] %vm1053, %v6672
  %6814 = vst.msk [vmem:[%s929 + $0xa4] sm:$0xf] %vm1053, %v6674
  %6815 = vst.msk [vmem:[%s929 + $0xa8] sm:$0xf] %vm1053, %v6676
  %6816 = vst.msk [vmem:[%s929 + $0xac] sm:$0xf] %vm1053, %v6678
  %6817 = vst.msk [vmem:[%s929 + $0xb0] sm:$0xf] %vm1053, %v6680
  %6818 = vst.msk [vmem:[%s929 + $0xb4] sm:$0xf] %vm1053, %v6682
  %6819 = vst.msk [vmem:[%s929 + $0xb8] sm:$0xf] %vm1053, %v6684
  %6820 = vst.msk [vmem:[%s929 + $0xbc] sm:$0xf] %vm1053, %v6686
  %6821 = vst.msk [vmem:[%s929 + $0xc0] sm:$0xf] %vm1053, %v6688
  %6822 = vst.msk [vmem:[%s929 + $0xc4] sm:$0xf] %vm1053, %v6690
  %6823 = vst.msk [vmem:[%s929 + $0xc8] sm:$0xf] %vm1053, %v6692
  %6824 = vst.msk [vmem:[%s929 + $0xcc] sm:$0xf] %vm1053, %v6694
  %6825 = vst.msk [vmem:[%s929 + $0xd0] sm:$0xf] %vm1053, %v6696
  %6826 = vst.msk [vmem:[%s929 + $0xd4] sm:$0xf] %vm1053, %v6698
  %6827 = vst.msk [vmem:[%s929 + $0xd8] sm:$0xf] %vm1053, %v6700
  %6828 = vst.msk [vmem:[%s929 + $0xdc] sm:$0xf] %vm1053, %v6702
  %6829 = vst.msk [vmem:[%s929 + $0xe0] sm:$0xf] %vm1053, %v6704
  %6830 = vst.msk [vmem:[%s929 + $0xe4] sm:$0xf] %vm1053, %v6706
  %6831 = vst.msk [vmem:[%s929 + $0xe8] sm:$0xf] %vm1053, %v6708
  %6832 = vst.msk [vmem:[%s929 + $0xec] sm:$0xf] %vm1053, %v6710
  %6833 = vst.msk [vmem:[%s929 + $0xf0] sm:$0xf] %vm1053, %v6712
  %6834 = vst.msk [vmem:[%s929 + $0xf4] sm:$0xf] %vm1053, %v6714
  %6835 = vst.msk [vmem:[#allocation2] sm:$0xf] %vm1298, 0
  %6836 = vst.msk [vmem:[#allocation2 + $0x4] sm:$0xf] %vm1298, 0
  %6837 = vst.msk [vmem:[#allocation2 + $0x80] sm:$0xf] %vm1298, 0
  %6838 = vst.msk [vmem:[#allocation2 + $0x84] sm:$0xf] %vm1298, 0
  %v6839 = vld [vmem:[#allocation2 + $0x4] sm:$0x8]
  %v6840 = vsel %vm1305, 0, %v6839
  %6841 = vst [vmem:[#allocation2 + $0x4] sm:$0x8] %v6840
  %v6842 = vld [vmem:[#allocation2 + $0xc] sm:$0x8]
  %v6843 = vsel %vm1305, 0, %v6842
  %6844 = vst [vmem:[#allocation2 + $0xc] sm:$0x8] %v6843
  %v6845 = vld [vmem:[#allocation2 + $0x14] sm:$0x8]
  %v6846 = vsel %vm1305, 0, %v6845
  %6847 = vst [vmem:[#allocation2 + $0x14] sm:$0x8] %v6846
  %v6848 = vld [vmem:[#allocation2 + $0x1c] sm:$0x8]
  %v6849 = vsel %vm1305, 0, %v6848
  %6850 = vst [vmem:[#allocation2 + $0x1c] sm:$0x8] %v6849
  %v6851 = vld [vmem:[#allocation2 + $0x24] sm:$0x8]
  %v6852 = vsel %vm1305, 0, %v6851
  %6853 = vst [vmem:[#allocation2 + $0x24] sm:$0x8] %v6852
  %v6854 = vld [vmem:[#allocation2 + $0x2c] sm:$0x8]
  %v6855 = vsel %vm1305, 0, %v6854
  %6856 = vst [vmem:[#allocation2 + $0x2c] sm:$0x8] %v6855
  %v6857 = vld [vmem:[#allocation2 + $0x34] sm:$0x8]
  %v6858 = vsel %vm1305, 0, %v6857
  %6859 = vst [vmem:[#allocation2 + $0x34] sm:$0x8] %v6858
  %v6860 = vld [vmem:[#allocation2 + $0x3c] sm:$0x8]
  %v6861 = vsel %vm1305, 0, %v6860
  %6862 = vst [vmem:[#allocation2 + $0x3c] sm:$0x8] %v6861
  %v6863 = vld [vmem:[#allocation2 + $0x44] sm:$0x8]
  %v6864 = vsel %vm1305, 0, %v6863
  %6865 = vst [vmem:[#allocation2 + $0x44] sm:$0x8] %v6864
  %v6866 = vld [vmem:[#allocation2 + $0x4c] sm:$0x8]
  %v6867 = vsel %vm1305, 0, %v6866
  %6868 = vst [vmem:[#allocation2 + $0x4c] sm:$0x8] %v6867
  %v6869 = vld [vmem:[#allocation2 + $0x54] sm:$0x8]
  %v6870 = vsel %vm1305, 0, %v6869
  %6871 = vst [vmem:[#allocation2 + $0x54] sm:$0x8] %v6870
  %v6872 = vld [vmem:[#allocation2 + $0x5c] sm:$0x8]
  %v6873 = vsel %vm1305, 0, %v6872
  %6874 = vst [vmem:[#allocation2 + $0x5c] sm:$0x8] %v6873
  %v6875 = vld [vmem:[#allocation2 + $0x64] sm:$0x8]
  %v6876 = vsel %vm1305, 0, %v6875
  %6877 = vst [vmem:[#allocation2 + $0x64] sm:$0x8] %v6876
  %v6878 = vld [vmem:[#allocation2 + $0x6c] sm:$0x8]
  %v6879 = vsel %vm1305, 0, %v6878
  %6880 = vst [vmem:[#allocation2 + $0x6c] sm:$0x8] %v6879
  %v6881 = vld [vmem:[#allocation2 + $0x74] sm:$0x8]
  %v6882 = vsel %vm1305, 0, %v6881
  %6883 = vst [vmem:[#allocation2 + $0x74] sm:$0x8] %v6882
  %v6884 = vld [vmem:[#allocation2 + $0x7c] sm:$0x8]
  %v6885 = vsel %vm1305, 0, %v6884
  %6886 = vst [vmem:[#allocation2 + $0x7c] sm:$0x8] %v6885
  %v6887 = vld [vmem:[#allocation2 + $0x84] sm:$0x8]
  %v6888 = vsel %vm1305, 0, %v6887
  %6889 = vst [vmem:[#allocation2 + $0x84] sm:$0x8] %v6888
  %v6890 = vld [vmem:[#allocation2 + $0x8c] sm:$0x8]
  %v6891 = vsel %vm1305, 0, %v6890
  %6892 = vst [vmem:[#allocation2 + $0x8c] sm:$0x8] %v6891
  %v6893 = vld [vmem:[#allocation2 + $0x94] sm:$0x8]
  %v6894 = vsel %vm1305, 0, %v6893
  %6895 = vst [vmem:[#allocation2 + $0x94] sm:$0x8] %v6894
  %v6896 = vld [vmem:[#allocation2 + $0x9c] sm:$0x8]
  %v6897 = vsel %vm1305, 0, %v6896
  %6898 = vst [vmem:[#allocation2 + $0x9c] sm:$0x8] %v6897
  %v6899 = vld [vmem:[#allocation2 + $0xa4] sm:$0x8]
  %v6900 = vsel %vm1305, 0, %v6899
  %6901 = vst [vmem:[#allocation2 + $0xa4] sm:$0x8] %v6900
  %v6902 = vld [vmem:[#allocation2 + $0xac] sm:$0x8]
  %v6903 = vsel %vm1305, 0, %v6902
  %6904 = vst [vmem:[#allocation2 + $0xac] sm:$0x8] %v6903
  %v6905 = vld [vmem:[#allocation2 + $0xb4] sm:$0x8]
  %v6906 = vsel %vm1305, 0, %v6905
  %6907 = vst [vmem:[#allocation2 + $0xb4] sm:$0x8] %v6906
  %v6908 = vld [vmem:[#allocation2 + $0xbc] sm:$0x8]
  %v6909 = vsel %vm1305, 0, %v6908
  %6910 = vst [vmem:[#allocation2 + $0xbc] sm:$0x8] %v6909
  %v6911 = vld [vmem:[#allocation2 + $0xc4] sm:$0x8]
  %v6912 = vsel %vm1305, 0, %v6911
  %6913 = vst [vmem:[#allocation2 + $0xc4] sm:$0x8] %v6912
  %v6914 = vld [vmem:[#allocation2 + $0xcc] sm:$0x8]
  %v6915 = vsel %vm1305, 0, %v6914
  %6916 = vst [vmem:[#allocation2 + $0xcc] sm:$0x8] %v6915
  %v6917 = vld [vmem:[#allocation2 + $0xd4] sm:$0x8]
  %v6918 = vsel %vm1305, 0, %v6917
  %6919 = vst [vmem:[#allocation2 + $0xd4] sm:$0x8] %v6918
  %v6920 = vld [vmem:[#allocation2 + $0xdc] sm:$0x8]
  %v6921 = vsel %vm1305, 0, %v6920
  %6922 = vst [vmem:[#allocation2 + $0xdc] sm:$0x8] %v6921
  %v6923 = vld [vmem:[#allocation2 + $0xe4] sm:$0x8]
  %v6924 = vsel %vm1305, 0, %v6923
  %6925 = vst [vmem:[#allocation2 + $0xe4] sm:$0x8] %v6924
  %v6926 = vld [vmem:[#allocation2 + $0xec] sm:$0x8]
  %v6927 = vsel %vm1305, 0, %v6926
  %6928 = vst [vmem:[#allocation2 + $0xec] sm:$0x8] %v6927
  %v6929 = vld [vmem:[#allocation2 + $0xf4] sm:$0x8]
  %v6930 = vsel %vm1305, 0, %v6929
  %6931 = vst [vmem:[#allocation2 + $0xf4] sm:$0x8] %v6930
  %v6932 = vld [vmem:[#allocation2 + $0xfc] sm:$0x8]
  %v6933 = vsel %vm1305, 0, %v6932
  %6934 = vst [vmem:[#allocation2 + $0xfc] sm:$0x8] %v6933
  %v6935 = vrot.slane %v5932, 4
  %v6936 = vrot.slane %v5935, 5
  %v6937 = vor.u32 %v6935, %v6936
  %v6938 = vrot.slane %v6937, 4
  %v6939 = vrot.slane %v5943, 5
  %v6940 = vsel %vm1404, %v6938, %v6939
  %v6941 = vrot.slane %v5940, 4
  %v6942 = vor.u32 %v6941, %v6939
  %v6943 = vrot.slane %v6942, 4
  %v6944 = vrot.slane %v5948, 4
  %v6945 = vrot.slane %v5951, 5
  %v6946 = vor.u32 %v6944, %v6945
  %v6947 = vrot.slane %v6946, 4
  %v6948 = vrot.slane %v5959, 5
  %v6949 = vsel %vm1404, %v6947, %v6948
  %v6950 = vrot.slane %v5956, 4
  %v6951 = vor.u32 %v6950, %v6948
  %v6952 = vrot.slane %v6951, 4
  %v6953 = vrot.slane %v5964, 4
  %v6954 = vrot.slane %v5967, 5
  %v6955 = vor.u32 %v6953, %v6954
  %v6956 = vrot.slane %v6955, 4
  %v6957 = vrot.slane %v5975, 5
  %v6958 = vsel %vm1404, %v6956, %v6957
  %v6959 = vrot.slane %v5972, 4
  %v6960 = vor.u32 %v6959, %v6957
  %v6961 = vrot.slane %v6960, 4
  %v6962 = vrot.slane %v5980, 4
  %v6963 = vrot.slane %v5983, 5
  %v6964 = vor.u32 %v6962, %v6963
  %v6965 = vrot.slane %v6964, 4
  %v6966 = vrot.slane %v5991, 5
  %v6967 = vsel %vm1404, %v6965, %v6966
  %v6968 = vrot.slane %v5988, 4
  %v6969 = vor.u32 %v6968, %v6966
  %v6970 = vrot.slane %v6969, 4
  %v6971 = vrot.slane %v5996, 4
  %v6972 = vrot.slane %v5999, 5
  %v6973 = vor.u32 %v6971, %v6972
  %v6974 = vrot.slane %v6973, 4
  %v6975 = vrot.slane %v6007, 5
  %v6976 = vsel %vm1404, %v6974, %v6975
  %v6977 = vrot.slane %v6004, 4
  %v6978 = vor.u32 %v6977, %v6975
  %v6979 = vrot.slane %v6978, 4
  %v6980 = vrot.slane %v6012, 4
  %v6981 = vrot.slane %v6015, 5
  %v6982 = vor.u32 %v6980, %v6981
  %v6983 = vrot.slane %v6982, 4
  %v6984 = vrot.slane %v6023, 5
  %v6985 = vsel %vm1404, %v6983, %v6984
  %v6986 = vrot.slane %v6020, 4
  %v6987 = vor.u32 %v6986, %v6984
  %v6988 = vrot.slane %v6987, 4
  %v6989 = vrot.slane %v6028, 4
  %v6990 = vrot.slane %v6031, 5
  %v6991 = vor.u32 %v6989, %v6990
  %v6992 = vrot.slane %v6991, 4
  %v6993 = vrot.slane %v6039, 5
  %v6994 = vsel %vm1404, %v6992, %v6993
  %v6995 = vrot.slane %v6036, 4
  %v6996 = vor.u32 %v6995, %v6993
  %v6997 = vrot.slane %v6996, 4
  %v6998 = vrot.slane %v6044, 4
  %v6999 = vrot.slane %v6047, 5
  %v7000 = vor.u32 %v6998, %v6999
  %v7001 = vrot.slane %v7000, 4
  %v7002 = vrot.slane %v6055, 5
  %v7003 = vsel %vm1404, %v7001, %v7002
  %v7004 = vrot.slane %v6052, 4
  %v7005 = vor.u32 %v7004, %v7002
  %v7006 = vrot.slane %v7005, 4
  %v7007 = vrot.slane %v6060, 4
  %v7008 = vrot.slane %v6063, 5
  %v7009 = vor.u32 %v7007, %v7008
  %v7010 = vrot.slane %v7009, 4
  %v7011 = vrot.slane %v6071, 5
  %v7012 = vsel %vm1404, %v7010, %v7011
  %v7013 = vrot.slane %v6068, 4
  %v7014 = vor.u32 %v7013, %v7011
  %v7015 = vrot.slane %v7014, 4
  %v7016 = vrot.slane %v6076, 4
  %v7017 = vrot.slane %v6079, 5
  %v7018 = vor.u32 %v7016, %v7017
  %v7019 = vrot.slane %v7018, 4
  %v7020 = vrot.slane %v6087, 5
  %v7021 = vsel %vm1404, %v7019, %v7020
  %v7022 = vrot.slane %v6084, 4
  %v7023 = vor.u32 %v7022, %v7020
  %v7024 = vrot.slane %v7023, 4
  %v7025 = vrot.slane %v6092, 4
  %v7026 = vrot.slane %v6095, 5
  %v7027 = vor.u32 %v7025, %v7026
  %v7028 = vrot.slane %v7027, 4
  %v7029 = vrot.slane %v6103, 5
  %v7030 = vsel %vm1404, %v7028, %v7029
  %v7031 = vrot.slane %v6100, 4
  %v7032 = vor.u32 %v7031, %v7029
  %v7033 = vrot.slane %v7032, 4
  %v7034 = vrot.slane %v6108, 4
  %v7035 = vrot.slane %v6111, 5
  %v7036 = vor.u32 %v7034, %v7035
  %v7037 = vrot.slane %v7036, 4
  %v7038 = vrot.slane %v6119, 5
  %v7039 = vsel %vm1404, %v7037, %v7038
  %v7040 = vrot.slane %v6116, 4
  %v7041 = vor.u32 %v7040, %v7038
  %v7042 = vrot.slane %v7041, 4
  %v7043 = vrot.slane %v6124, 4
  %v7044 = vrot.slane %v6127, 5
  %v7045 = vor.u32 %v7043, %v7044
  %v7046 = vrot.slane %v7045, 4
  %v7047 = vrot.slane %v6135, 5
  %v7048 = vsel %vm1404, %v7046, %v7047
  %v7049 = vrot.slane %v6132, 4
  %v7050 = vor.u32 %v7049, %v7047
  %v7051 = vrot.slane %v7050, 4
  %v7052 = vrot.slane %v6140, 4
  %v7053 = vrot.slane %v6143, 5
  %v7054 = vor.u32 %v7052, %v7053
  %v7055 = vrot.slane %v7054, 4
  %v7056 = vrot.slane %v6151, 5
  %v7057 = vsel %vm1404, %v7055, %v7056
  %v7058 = vrot.slane %v6148, 4
  %v7059 = vor.u32 %v7058, %v7056
  %v7060 = vrot.slane %v7059, 4
  %v7061 = vrot.slane %v6156, 4
  %v7062 = vrot.slane %v6159, 5
  %v7063 = vor.u32 %v7061, %v7062
  %v7064 = vrot.slane %v7063, 4
  %v7065 = vrot.slane %v6167, 5
  %v7066 = vsel %vm1404, %v7064, %v7065
  %v7067 = vrot.slane %v6164, 4
  %v7068 = vor.u32 %v7067, %v7065
  %v7069 = vrot.slane %v7068, 4
  %v7070 = vrot.slane %v6172, 4
  %v7071 = vrot.slane %v6175, 5
  %v7072 = vor.u32 %v7070, %v7071
  %v7073 = vrot.slane %v7072, 4
  %v7074 = vrot.slane %v6183, 5
  %v7075 = vsel %vm1404, %v7073, %v7074
  %v7076 = vrot.slane %v6180, 4
  %v7077 = vor.u32 %v7076, %v7074
  %v7078 = vrot.slane %v7077, 4
  %v7079 = vrot.slane %v6188, 4
  %v7080 = vrot.slane %v6191, 5
  %v7081 = vor.u32 %v7079, %v7080
  %v7082 = vrot.slane %v7081, 4
  %v7083 = vrot.slane %v6199, 5
  %v7084 = vsel %vm1404, %v7082, %v7083
  %v7085 = vrot.slane %v6196, 4
  %v7086 = vor.u32 %v7085, %v7083
  %v7087 = vrot.slane %v7086, 4
  %v7088 = vrot.slane %v6204, 4
  %v7089 = vrot.slane %v6207, 5
  %v7090 = vor.u32 %v7088, %v7089
  %v7091 = vrot.slane %v7090, 4
  %v7092 = vrot.slane %v6215, 5
  %v7093 = vsel %vm1404, %v7091, %v7092
  %v7094 = vrot.slane %v6212, 4
  %v7095 = vor.u32 %v7094, %v7092
  %v7096 = vrot.slane %v7095, 4
  %v7097 = vrot.slane %v6220, 4
  %v7098 = vrot.slane %v6223, 5
  %v7099 = vor.u32 %v7097, %v7098
  %v7100 = vrot.slane %v7099, 4
  %v7101 = vrot.slane %v6231, 5
  %v7102 = vsel %vm1404, %v7100, %v7101
  %v7103 = vrot.slane %v6228, 4
  %v7104 = vor.u32 %v7103, %v7101
  %v7105 = vrot.slane %v7104, 4
  %v7106 = vrot.slane %v6236, 4
  %v7107 = vrot.slane %v6239, 5
  %v7108 = vor.u32 %v7106, %v7107
  %v7109 = vrot.slane %v7108, 4
  %v7110 = vrot.slane %v6247, 5
  %v7111 = vsel %vm1404, %v7109, %v7110
  %v7112 = vrot.slane %v6244, 4
  %v7113 = vor.u32 %v7112, %v7110
  %v7114 = vrot.slane %v7113, 4
  %v7115 = vrot.slane %v6252, 4
  %v7116 = vrot.slane %v6255, 5
  %v7117 = vor.u32 %v7115, %v7116
  %v7118 = vrot.slane %v7117, 4
  %v7119 = vrot.slane %v6263, 5
  %v7120 = vsel %vm1404, %v7118, %v7119
  %v7121 = vrot.slane %v6260, 4
  %v7122 = vor.u32 %v7121, %v7119
  %v7123 = vrot.slane %v7122, 4
  %v7124 = vrot.slane %v6268, 4
  %v7125 = vrot.slane %v6271, 5
  %v7126 = vor.u32 %v7124, %v7125
  %v7127 = vrot.slane %v7126, 4
  %v7128 = vrot.slane %v6279, 5
  %v7129 = vsel %vm1404, %v7127, %v7128
  %v7130 = vrot.slane %v6276, 4
  %v7131 = vor.u32 %v7130, %v7128
  %v7132 = vrot.slane %v7131, 4
  %v7133 = vrot.slane %v6284, 4
  %v7134 = vrot.slane %v6287, 5
  %v7135 = vor.u32 %v7133, %v7134
  %v7136 = vrot.slane %v7135, 4
  %v7137 = vrot.slane %v6295, 5
  %v7138 = vsel %vm1404, %v7136, %v7137
  %v7139 = vrot.slane %v6292, 4
  %v7140 = vor.u32 %v7139, %v7137
  %v7141 = vrot.slane %v7140, 4
  %v7142 = vrot.slane %v6300, 4
  %v7143 = vrot.slane %v6303, 5
  %v7144 = vor.u32 %v7142, %v7143
  %v7145 = vrot.slane %v7144, 4
  %v7146 = vrot.slane %v6311, 5
  %v7147 = vsel %vm1404, %v7145, %v7146
  %v7148 = vrot.slane %v6308, 4
  %v7149 = vor.u32 %v7148, %v7146
  %v7150 = vrot.slane %v7149, 4
  %v7151 = vrot.slane %v6316, 4
  %v7152 = vrot.slane %v6319, 5
  %v7153 = vor.u32 %v7151, %v7152
  %v7154 = vrot.slane %v7153, 4
  %v7155 = vrot.slane %v6327, 5
  %v7156 = vsel %vm1404, %v7154, %v7155
  %v7157 = vrot.slane %v6324, 4
  %v7158 = vor.u32 %v7157, %v7155
  %v7159 = vrot.slane %v7158, 4
  %v7160 = vrot.slane %v6332, 4
  %v7161 = vrot.slane %v6335, 5
  %v7162 = vor.u32 %v7160, %v7161
  %v7163 = vrot.slane %v7162, 4
  %v7164 = vrot.slane %v6343, 5
  %v7165 = vsel %vm1404, %v7163, %v7164
  %v7166 = vrot.slane %v6340, 4
  %v7167 = vor.u32 %v7166, %v7164
  %v7168 = vrot.slane %v7167, 4
  %v7169 = vrot.slane %v6348, 4
  %v7170 = vrot.slane %v6351, 5
  %v7171 = vor.u32 %v7169, %v7170
  %v7172 = vrot.slane %v7171, 4
  %v7173 = vrot.slane %v6359, 5
  %v7174 = vsel %vm1404, %v7172, %v7173
  %v7175 = vrot.slane %v6356, 4
  %v7176 = vor.u32 %v7175, %v7173
  %v7177 = vrot.slane %v7176, 4
  %v7178 = vrot.slane %v6364, 4
  %v7179 = vrot.slane %v6367, 5
  %v7180 = vor.u32 %v7178, %v7179
  %v7181 = vrot.slane %v7180, 4
  %v7182 = vrot.slane %v6375, 5
  %v7183 = vsel %vm1404, %v7181, %v7182
  %v7184 = vrot.slane %v6372, 4
  %v7185 = vor.u32 %v7184, %v7182
  %v7186 = vrot.slane %v7185, 4
  %v7187 = vrot.slane %v6380, 4
  %v7188 = vrot.slane %v6383, 5
  %v7189 = vor.u32 %v7187, %v7188
  %v7190 = vrot.slane %v7189, 4
  %v7191 = vrot.slane %v6391, 5
  %v7192 = vsel %vm1404, %v7190, %v7191
  %v7193 = vrot.slane %v6388, 4
  %v7194 = vor.u32 %v7193, %v7191
  %v7195 = vrot.slane %v7194, 4
  %v7196 = vrot.slane %v6396, 4
  %v7197 = vrot.slane %v6399, 5
  %v7198 = vor.u32 %v7196, %v7197
  %v7199 = vrot.slane %v7198, 4
  %v7200 = vrot.slane %v6407, 5
  %v7201 = vsel %vm1404, %v7199, %v7200
  %v7202 = vrot.slane %v6404, 4
  %v7203 = vor.u32 %v7202, %v7200
  %v7204 = vrot.slane %v7203, 4
  %7205 = vrot.lane.b32.xlu0 %v6940, 16
  %v7206 = vpop.permute.xlu0 %7205
  %7207 = vrot.lane.b32.xlu0 %v6943, 16
  %v7208 = vpop.permute.xlu0 %7207
  %7209 = vrot.lane.b32.xlu0 %v6949, 16
  %v7210 = vpop.permute.xlu0 %7209
  %7211 = vrot.lane.b32.xlu0 %v6952, 16
  %v7212 = vpop.permute.xlu0 %7211
  %7213 = vrot.lane.b32.xlu0 %v6958, 16
  %v7214 = vpop.permute.xlu0 %7213
  %7215 = vrot.lane.b32.xlu0 %v6961, 16
  %v7216 = vpop.permute.xlu0 %7215
  %7217 = vrot.lane.b32.xlu0 %v6967, 16
  %v7218 = vpop.permute.xlu0 %7217
  %7219 = vrot.lane.b32.xlu0 %v6970, 16
  %v7220 = vpop.permute.xlu0 %7219
  %7221 = vrot.lane.b32.xlu0 %v6976, 16
  %v7222 = vpop.permute.xlu0 %7221
  %7223 = vrot.lane.b32.xlu0 %v6979, 16
  %v7224 = vpop.permute.xlu0 %7223
  %7225 = vrot.lane.b32.xlu0 %v6985, 16
  %v7226 = vpop.permute.xlu0 %7225
  %7227 = vrot.lane.b32.xlu0 %v6988, 16
  %v7228 = vpop.permute.xlu0 %7227
  %7229 = vrot.lane.b32.xlu0 %v6994, 16
  %v7230 = vpop.permute.xlu0 %7229
  %7231 = vrot.lane.b32.xlu0 %v6997, 16
  %v7232 = vpop.permute.xlu0 %7231
  %7233 = vrot.lane.b32.xlu0 %v7003, 16
  %v7234 = vpop.permute.xlu0 %7233
  %7235 = vrot.lane.b32.xlu0 %v7006, 16
  %v7236 = vpop.permute.xlu0 %7235
  %7237 = vrot.lane.b32.xlu0 %v7012, 16
  %v7238 = vpop.permute.xlu0 %7237
  %7239 = vrot.lane.b32.xlu0 %v7015, 16
  %v7240 = vpop.permute.xlu0 %7239
  %7241 = vrot.lane.b32.xlu0 %v7021, 16
  %v7242 = vpop.permute.xlu0 %7241
  %7243 = vrot.lane.b32.xlu0 %v7024, 16
  %v7244 = vpop.permute.xlu0 %7243
  %7245 = vrot.lane.b32.xlu0 %v7030, 16
  %v7246 = vpop.permute.xlu0 %7245
  %7247 = vrot.lane.b32.xlu0 %v7033, 16
  %v7248 = vpop.permute.xlu0 %7247
  %7249 = vrot.lane.b32.xlu0 %v7039, 16
  %v7250 = vpop.permute.xlu0 %7249
  %7251 = vrot.lane.b32.xlu0 %v7042, 16
  %v7252 = vpop.permute.xlu0 %7251
  %7253 = vrot.lane.b32.xlu0 %v7048, 16
  %v7254 = vpop.permute.xlu0 %7253
  %7255 = vrot.lane.b32.xlu0 %v7051, 16
  %v7256 = vpop.permute.xlu0 %7255
  %7257 = vrot.lane.b32.xlu0 %v7057, 16
  %v7258 = vpop.permute.xlu0 %7257
  %7259 = vrot.lane.b32.xlu0 %v7060, 16
  %v7260 = vpop.permute.xlu0 %7259
  %7261 = vrot.lane.b32.xlu0 %v7066, 16
  %v7262 = vpop.permute.xlu0 %7261
  %7263 = vrot.lane.b32.xlu0 %v7069, 16
  %v7264 = vpop.permute.xlu0 %7263
  %7265 = vrot.lane.b32.xlu0 %v7075, 16
  %v7266 = vpop.permute.xlu0 %7265
  %7267 = vrot.lane.b32.xlu0 %v7078, 16
  %v7268 = vpop.permute.xlu0 %7267
  %7269 = vrot.lane.b32.xlu0 %v7084, 16
  %v7270 = vpop.permute.xlu0 %7269
  %7271 = vrot.lane.b32.xlu0 %v7087, 16
  %v7272 = vpop.permute.xlu0 %7271
  %7273 = vrot.lane.b32.xlu0 %v7093, 16
  %v7274 = vpop.permute.xlu0 %7273
  %7275 = vrot.lane.b32.xlu0 %v7096, 16
  %v7276 = vpop.permute.xlu0 %7275
  %7277 = vrot.lane.b32.xlu0 %v7102, 16
  %v7278 = vpop.permute.xlu0 %7277
  %7279 = vrot.lane.b32.xlu0 %v7105, 16
  %v7280 = vpop.permute.xlu0 %7279
  %7281 = vrot.lane.b32.xlu0 %v7111, 16
  %v7282 = vpop.permute.xlu0 %7281
  %7283 = vrot.lane.b32.xlu0 %v7114, 16
  %v7284 = vpop.permute.xlu0 %7283
  %7285 = vrot.lane.b32.xlu0 %v7120, 16
  %v7286 = vpop.permute.xlu0 %7285
  %7287 = vrot.lane.b32.xlu0 %v7123, 16
  %v7288 = vpop.permute.xlu0 %7287
  %7289 = vrot.lane.b32.xlu0 %v7129, 16
  %v7290 = vpop.permute.xlu0 %7289
  %7291 = vrot.lane.b32.xlu0 %v7132, 16
  %v7292 = vpop.permute.xlu0 %7291
  %7293 = vrot.lane.b32.xlu0 %v7138, 16
  %v7294 = vpop.permute.xlu0 %7293
  %7295 = vrot.lane.b32.xlu0 %v7141, 16
  %v7296 = vpop.permute.xlu0 %7295
  %7297 = vrot.lane.b32.xlu0 %v7147, 16
  %v7298 = vpop.permute.xlu0 %7297
  %7299 = vrot.lane.b32.xlu0 %v7150, 16
  %v7300 = vpop.permute.xlu0 %7299
  %7301 = vrot.lane.b32.xlu0 %v7156, 16
  %v7302 = vpop.permute.xlu0 %7301
  %7303 = vrot.lane.b32.xlu0 %v7159, 16
  %v7304 = vpop.permute.xlu0 %7303
  %7305 = vrot.lane.b32.xlu0 %v7165, 16
  %v7306 = vpop.permute.xlu0 %7305
  %7307 = vrot.lane.b32.xlu0 %v7168, 16
  %v7308 = vpop.permute.xlu0 %7307
  %7309 = vrot.lane.b32.xlu0 %v7174, 16
  %v7310 = vpop.permute.xlu0 %7309
  %7311 = vrot.lane.b32.xlu0 %v7177, 16
  %v7312 = vpop.permute.xlu0 %7311
  %7313 = vrot.lane.b32.xlu0 %v7183, 16
  %v7314 = vpop.permute.xlu0 %7313
  %7315 = vrot.lane.b32.xlu0 %v7186, 16
  %v7316 = vpop.permute.xlu0 %7315
  %7317 = vrot.lane.b32.xlu0 %v7192, 16
  %v7318 = vpop.permute.xlu0 %7317
  %7319 = vrot.lane.b32.xlu0 %v7195, 16
  %v7320 = vpop.permute.xlu0 %7319
  %7321 = vrot.lane.b32.xlu0 %v7201, 16
  %v7322 = vpop.permute.xlu0 %7321
  %7323 = vrot.lane.b32.xlu0 %v7204, 16
  %v7324 = vpop.permute.xlu0 %7323
  %7385 = vst.msk [vmem:[%s929] sm:$0xf] %vm1298, %v7206
  %v7386 = vld [vmem:[%s929 + $0x4] sm:$0xf]
  %v7387 = vsel %vm1857, %v7208, %v7386
  %7388 = vst [vmem:[%s929 + $0x4] sm:$0xf] %v7387
  %7389 = vst.msk [vmem:[%s929 + $0x8] sm:$0xf] %vm1298, %v7210
  %v7390 = vld [vmem:[%s929 + $0xc] sm:$0xf]
  %v7391 = vsel %vm1857, %v7212, %v7390
  %7392 = vst [vmem:[%s929 + $0xc] sm:$0xf] %v7391
  %7393 = vst.msk [vmem:[%s929 + $0x10] sm:$0xf] %vm1298, %v7214
  %v7394 = vld [vmem:[%s929 + $0x14] sm:$0xf]
  %v7395 = vsel %vm1857, %v7216, %v7394
  %7396 = vst [vmem:[%s929 + $0x14] sm:$0xf] %v7395
  %7397 = vst.msk [vmem:[%s929 + $0x18] sm:$0xf] %vm1298, %v7218
  %v7398 = vld [vmem:[%s929 + $0x1c] sm:$0xf]
  %v7399 = vsel %vm1857, %v7220, %v7398
  %7400 = vst [vmem:[%s929 + $0x1c] sm:$0xf] %v7399
  %7401 = vst.msk [vmem:[%s929 + $0x20] sm:$0xf] %vm1298, %v7222
  %v7402 = vld [vmem:[%s929 + $0x24] sm:$0xf]
  %v7403 = vsel %vm1857, %v7224, %v7402
  %7404 = vst [vmem:[%s929 + $0x24] sm:$0xf] %v7403
  %7405 = vst.msk [vmem:[%s929 + $0x28] sm:$0xf] %vm1298, %v7226
  %v7406 = vld [vmem:[%s929 + $0x2c] sm:$0xf]
  %v7407 = vsel %vm1857, %v7228, %v7406
  %7408 = vst [vmem:[%s929 + $0x2c] sm:$0xf] %v7407
  %7409 = vst.msk [vmem:[%s929 + $0x30] sm:$0xf] %vm1298, %v7230
  %v7410 = vld [vmem:[%s929 + $0x34] sm:$0xf]
  %v7411 = vsel %vm1857, %v7232, %v7410
  %7412 = vst [vmem:[%s929 + $0x34] sm:$0xf] %v7411
  %7413 = vst.msk [vmem:[%s929 + $0x38] sm:$0xf] %vm1298, %v7234
  %v7414 = vld [vmem:[%s929 + $0x3c] sm:$0xf]
  %v7415 = vsel %vm1857, %v7236, %v7414
  %7416 = vst [vmem:[%s929 + $0x3c] sm:$0xf] %v7415
  %7417 = vst.msk [vmem:[%s929 + $0x40] sm:$0xf] %vm1298, %v7238
  %v7418 = vld [vmem:[%s929 + $0x44] sm:$0xf]
  %v7419 = vsel %vm1857, %v7240, %v7418
  %7420 = vst [vmem:[%s929 + $0x44] sm:$0xf] %v7419
  %7421 = vst.msk [vmem:[%s929 + $0x48] sm:$0xf] %vm1298, %v7242
  %v7422 = vld [vmem:[%s929 + $0x4c] sm:$0xf]
  %v7423 = vsel %vm1857, %v7244, %v7422
  %7424 = vst [vmem:[%s929 + $0x4c] sm:$0xf] %v7423
  %7425 = vst.msk [vmem:[%s929 + $0x50] sm:$0xf] %vm1298, %v7246
  %v7426 = vld [vmem:[%s929 + $0x54] sm:$0xf]
  %v7427 = vsel %vm1857, %v7248, %v7426
  %7428 = vst [vmem:[%s929 + $0x54] sm:$0xf] %v7427
  %7429 = vst.msk [vmem:[%s929 + $0x58] sm:$0xf] %vm1298, %v7250
  %v7430 = vld [vmem:[%s929 + $0x5c] sm:$0xf]
  %v7431 = vsel %vm1857, %v7252, %v7430
  %7432 = vst [vmem:[%s929 + $0x5c] sm:$0xf] %v7431
  %7433 = vst.msk [vmem:[%s929 + $0x60] sm:$0xf] %vm1298, %v7254
  %v7434 = vld [vmem:[%s929 + $0x64] sm:$0xf]
  %v7435 = vsel %vm1857, %v7256, %v7434
  %7436 = vst [vmem:[%s929 + $0x64] sm:$0xf] %v7435
  %7437 = vst.msk [vmem:[%s929 + $0x68] sm:$0xf] %vm1298, %v7258
  %v7438 = vld [vmem:[%s929 + $0x6c] sm:$0xf]
  %v7439 = vsel %vm1857, %v7260, %v7438
  %7440 = vst [vmem:[%s929 + $0x6c] sm:$0xf] %v7439
  %7441 = vst.msk [vmem:[%s929 + $0x70] sm:$0xf] %vm1298, %v7262
  %v7442 = vld [vmem:[%s929 + $0x74] sm:$0xf]
  %v7443 = vsel %vm1857, %v7264, %v7442
  %7444 = vst [vmem:[%s929 + $0x74] sm:$0xf] %v7443
  %7445 = vst.msk [vmem:[%s929 + $0x80] sm:$0xf] %vm1298, %v7266
  %v7446 = vld [vmem:[%s929 + $0x84] sm:$0xf]
  %v7447 = vsel %vm1857, %v7268, %v7446
  %7448 = vst [vmem:[%s929 + $0x84] sm:$0xf] %v7447
  %7449 = vst.msk [vmem:[%s929 + $0x88] sm:$0xf] %vm1298, %v7270
  %v7450 = vld [vmem:[%s929 + $0x8c] sm:$0xf]
  %v7451 = vsel %vm1857, %v7272, %v7450
  %7452 = vst [vmem:[%s929 + $0x8c] sm:$0xf] %v7451
  %7453 = vst.msk [vmem:[%s929 + $0x90] sm:$0xf] %vm1298, %v7274
  %v7454 = vld [vmem:[%s929 + $0x94] sm:$0xf]
  %v7455 = vsel %vm1857, %v7276, %v7454
  %7456 = vst [vmem:[%s929 + $0x94] sm:$0xf] %v7455
  %7457 = vst.msk [vmem:[%s929 + $0x98] sm:$0xf] %vm1298, %v7278
  %v7458 = vld [vmem:[%s929 + $0x9c] sm:$0xf]
  %v7459 = vsel %vm1857, %v7280, %v7458
  %7460 = vst [vmem:[%s929 + $0x9c] sm:$0xf] %v7459
  %7461 = vst.msk [vmem:[%s929 + $0xa0] sm:$0xf] %vm1298, %v7282
  %v7462 = vld [vmem:[%s929 + $0xa4] sm:$0xf]
  %v7463 = vsel %vm1857, %v7284, %v7462
  %7464 = vst [vmem:[%s929 + $0xa4] sm:$0xf] %v7463
  %7465 = vst.msk [vmem:[%s929 + $0xa8] sm:$0xf] %vm1298, %v7286
  %v7466 = vld [vmem:[%s929 + $0xac] sm:$0xf]
  %v7467 = vsel %vm1857, %v7288, %v7466
  %7468 = vst [vmem:[%s929 + $0xac] sm:$0xf] %v7467
  %7469 = vst.msk [vmem:[%s929 + $0xb0] sm:$0xf] %vm1298, %v7290
  %v7470 = vld [vmem:[%s929 + $0xb4] sm:$0xf]
  %v7471 = vsel %vm1857, %v7292, %v7470
  %7472 = vst [vmem:[%s929 + $0xb4] sm:$0xf] %v7471
  %7473 = vst.msk [vmem:[%s929 + $0xb8] sm:$0xf] %vm1298, %v7294
  %v7474 = vld [vmem:[%s929 + $0xbc] sm:$0xf]
  %v7475 = vsel %vm1857, %v7296, %v7474
  %7476 = vst [vmem:[%s929 + $0xbc] sm:$0xf] %v7475
  %7477 = vst.msk [vmem:[%s929 + $0xc0] sm:$0xf] %vm1298, %v7298
  %v7478 = vld [vmem:[%s929 + $0xc4] sm:$0xf]
  %v7479 = vsel %vm1857, %v7300, %v7478
  %7480 = vst [vmem:[%s929 + $0xc4] sm:$0xf] %v7479
  %7481 = vst.msk [vmem:[%s929 + $0xc8] sm:$0xf] %vm1298, %v7302
  %v7482 = vld [vmem:[%s929 + $0xcc] sm:$0xf]
  %v7483 = vsel %vm1857, %v7304, %v7482
  %7484 = vst [vmem:[%s929 + $0xcc] sm:$0xf] %v7483
  %7485 = vst.msk [vmem:[%s929 + $0xd0] sm:$0xf] %vm1298, %v7306
  %v7486 = vld [vmem:[%s929 + $0xd4] sm:$0xf]
  %v7487 = vsel %vm1857, %v7308, %v7486
  %7488 = vst [vmem:[%s929 + $0xd4] sm:$0xf] %v7487
  %7489 = vst.msk [vmem:[%s929 + $0xd8] sm:$0xf] %vm1298, %v7310
  %v7490 = vld [vmem:[%s929 + $0xdc] sm:$0xf]
  %v7491 = vsel %vm1857, %v7312, %v7490
  %7492 = vst [vmem:[%s929 + $0xdc] sm:$0xf] %v7491
  %7493 = vst.msk [vmem:[%s929 + $0xe0] sm:$0xf] %vm1298, %v7314
  %v7494 = vld [vmem:[%s929 + $0xe4] sm:$0xf]
  %v7495 = vsel %vm1857, %v7316, %v7494
  %7496 = vst [vmem:[%s929 + $0xe4] sm:$0xf] %v7495
  %7497 = vst.msk [vmem:[%s929 + $0xe8] sm:$0xf] %vm1298, %v7318
  %v7498 = vld [vmem:[%s929 + $0xec] sm:$0xf]
  %v7499 = vsel %vm1857, %v7320, %v7498
  %7500 = vst [vmem:[%s929 + $0xec] sm:$0xf] %v7499
  %7501 = vst.msk [vmem:[%s929 + $0xf0] sm:$0xf] %vm1298, %v7322
  %v7502 = vld [vmem:[%s929 + $0xf4] sm:$0xf]
  %v7503 = vsel %vm1857, %v7324, %v7502
  %7504 = vst [vmem:[%s929 + $0xf4] sm:$0xf] %v7503
  %v7505 = vld [vmem:[#allocation2] sm:$0x1]
  %v7506 = vsel %vm1978, 0, %v7505
  %7507 = vst [vmem:[#allocation2] sm:$0x1] %v7506
  %v7508 = vld [vmem:[#allocation2 + $0x8] sm:$0x1]
  %v7509 = vsel %vm1978, 0, %v7508
  %7510 = vst [vmem:[#allocation2 + $0x8] sm:$0x1] %v7509
  %v7511 = vld [vmem:[#allocation2 + $0x10] sm:$0x1]
  %v7512 = vsel %vm1978, 0, %v7511
  %7513 = vst [vmem:[#allocation2 + $0x10] sm:$0x1] %v7512
  %v7514 = vld [vmem:[#allocation2 + $0x18] sm:$0x1]
  %v7515 = vsel %vm1978, 0, %v7514
  %7516 = vst [vmem:[#allocation2 + $0x18] sm:$0x1] %v7515
  %v7517 = vld [vmem:[#allocation2 + $0x20] sm:$0x1]
  %v7518 = vsel %vm1978, 0, %v7517
  %7519 = vst [vmem:[#allocation2 + $0x20] sm:$0x1] %v7518
  %v7520 = vld [vmem:[#allocation2 + $0x28] sm:$0x1]
  %v7521 = vsel %vm1978, 0, %v7520
  %7522 = vst [vmem:[#allocation2 + $0x28] sm:$0x1] %v7521
  %v7523 = vld [vmem:[#allocation2 + $0x30] sm:$0x1]
  %v7524 = vsel %vm1978, 0, %v7523
  %7525 = vst [vmem:[#allocation2 + $0x30] sm:$0x1] %v7524
  %v7526 = vld [vmem:[#allocation2 + $0x38] sm:$0x1]
  %v7527 = vsel %vm1978, 0, %v7526
  %7528 = vst [vmem:[#allocation2 + $0x38] sm:$0x1] %v7527
  %v7529 = vld [vmem:[#allocation2 + $0x40] sm:$0x1]
  %v7530 = vsel %vm1978, 0, %v7529
  %7531 = vst [vmem:[#allocation2 + $0x40] sm:$0x1] %v7530
  %v7532 = vld [vmem:[#allocation2 + $0x48] sm:$0x1]
  %v7533 = vsel %vm1978, 0, %v7532
  %7534 = vst [vmem:[#allocation2 + $0x48] sm:$0x1] %v7533
  %v7535 = vld [vmem:[#allocation2 + $0x50] sm:$0x1]
  %v7536 = vsel %vm1978, 0, %v7535
  %7537 = vst [vmem:[#allocation2 + $0x50] sm:$0x1] %v7536
  %v7538 = vld [vmem:[#allocation2 + $0x58] sm:$0x1]
  %v7539 = vsel %vm1978, 0, %v7538
  %7540 = vst [vmem:[#allocation2 + $0x58] sm:$0x1] %v7539
  %v7541 = vld [vmem:[#allocation2 + $0x60] sm:$0x1]
  %v7542 = vsel %vm1978, 0, %v7541
  %7543 = vst [vmem:[#allocation2 + $0x60] sm:$0x1] %v7542
  %v7544 = vld [vmem:[#allocation2 + $0x68] sm:$0x1]
  %v7545 = vsel %vm1978, 0, %v7544
  %7546 = vst [vmem:[#allocation2 + $0x68] sm:$0x1] %v7545
  %v7547 = vld [vmem:[#allocation2 + $0x70] sm:$0x1]
  %v7548 = vsel %vm1978, 0, %v7547
  %7549 = vst [vmem:[#allocation2 + $0x70] sm:$0x1] %v7548
  %v7550 = vld [vmem:[#allocation2 + $0x78] sm:$0x1]
  %v7551 = vsel %vm1978, 0, %v7550
  %7552 = vst [vmem:[#allocation2 + $0x78] sm:$0x1] %v7551
  %v7553 = vld [vmem:[#allocation2 + $0x80] sm:$0x1]
  %v7554 = vsel %vm1978, 0, %v7553
  %7555 = vst [vmem:[#allocation2 + $0x80] sm:$0x1] %v7554
  %v7556 = vld [vmem:[#allocation2 + $0x88] sm:$0x1]
  %v7557 = vsel %vm1978, 0, %v7556
  %7558 = vst [vmem:[#allocation2 + $0x88] sm:$0x1] %v7557
  %v7559 = vld [vmem:[#allocation2 + $0x90] sm:$0x1]
  %v7560 = vsel %vm1978, 0, %v7559
  %7561 = vst [vmem:[#allocation2 + $0x90] sm:$0x1] %v7560
  %v7562 = vld [vmem:[#allocation2 + $0x98] sm:$0x1]
  %v7563 = vsel %vm1978, 0, %v7562
  %7564 = vst [vmem:[#allocation2 + $0x98] sm:$0x1] %v7563
  %v7565 = vld [vmem:[#allocation2 + $0xa0] sm:$0x1]
  %v7566 = vsel %vm1978, 0, %v7565
  %7567 = vst [vmem:[#allocation2 + $0xa0] sm:$0x1] %v7566
  %v7568 = vld [vmem:[#allocation2 + $0xa8] sm:$0x1]
  %v7569 = vsel %vm1978, 0, %v7568
  %7570 = vst [vmem:[#allocation2 + $0xa8] sm:$0x1] %v7569
  %v7571 = vld [vmem:[#allocation2 + $0xb0] sm:$0x1]
  %v7572 = vsel %vm1978, 0, %v7571
  %7573 = vst [vmem:[#allocation2 + $0xb0] sm:$0x1] %v7572
  %v7574 = vld [vmem:[#allocation2 + $0xb8] sm:$0x1]
  %v7575 = vsel %vm1978, 0, %v7574
  %7576 = vst [vmem:[#allocation2 + $0xb8] sm:$0x1] %v7575
  %v7577 = vld [vmem:[#allocation2 + $0xc0] sm:$0x1]
  %v7578 = vsel %vm1978, 0, %v7577
  %7579 = vst [vmem:[#allocation2 + $0xc0] sm:$0x1] %v7578
  %v7580 = vld [vmem:[#allocation2 + $0xc8] sm:$0x1]
  %v7581 = vsel %vm1978, 0, %v7580
  %7582 = vst [vmem:[#allocation2 + $0xc8] sm:$0x1] %v7581
  %v7583 = vld [vmem:[#allocation2 + $0xd0] sm:$0x1]
  %v7584 = vsel %vm1978, 0, %v7583
  %7585 = vst [vmem:[#allocation2 + $0xd0] sm:$0x1] %v7584
  %v7586 = vld [vmem:[#allocation2 + $0xd8] sm:$0x1]
  %v7587 = vsel %vm1978, 0, %v7586
  %7588 = vst [vmem:[#allocation2 + $0xd8] sm:$0x1] %v7587
  %v7589 = vld [vmem:[#allocation2 + $0xe0] sm:$0x1]
  %v7590 = vsel %vm1978, 0, %v7589
  %7591 = vst [vmem:[#allocation2 + $0xe0] sm:$0x1] %v7590
  %v7592 = vld [vmem:[#allocation2 + $0xe8] sm:$0x1]
  %v7593 = vsel %vm1978, 0, %v7592
  %7594 = vst [vmem:[#allocation2 + $0xe8] sm:$0x1] %v7593
  %v7595 = vld [vmem:[#allocation2 + $0xf0] sm:$0x1]
  %v7596 = vsel %vm1978, 0, %v7595
  %7597 = vst [vmem:[#allocation2 + $0xf0] sm:$0x1] %v7596
  %v7598 = vld [vmem:[#allocation2 + $0xf8] sm:$0x1]
  %v7599 = vsel %vm1978, 0, %v7598
  %7600 = vst [vmem:[#allocation2 + $0xf8] sm:$0x1] %v7599
  %v7603 = vunpack.c.l.b16 %v5664
  %v7604 = vunpack.c.h.b16 %v5664
  %v7605 = vunpack.c.l.b16 %v5680
  %v7606 = vunpack.c.h.b16 %v5680
  %v7607 = vpack.c.b16 %v7603, %v7603
  %v7608 = vpack.c.b16 %v7604, %v7604
  %v7609 = vpack.c.b16 %v7605, %v7605
  %v7610 = vpack.c.b16 %v7606, %v7606
  %v7612 = vshrl.u32 %v7607, 16
  %v7614 = vrot.slane %v7612, 7
  %v7615 = vshll.u32 %v7607, 16
  %v7617 = vor.u32 %v7614, %v7615
  %v7618 = vrot.slane %v7614, 4
  %v7620 = vshrl.u32 %v7608, 16
  %v7622 = vrot.slane %v7620, 7
  %v7623 = vshll.u32 %v7608, 16
  %v7625 = vor.u32 %v7622, %v7623
  %v7626 = vsel %vm388, %v7618, %v7625
  %v7628 = vshrl.u32 %v7609, 16
  %v7630 = vrot.slane %v7628, 7
  %v7631 = vshll.u32 %v7609, 16
  %v7633 = vor.u32 %v7630, %v7631
  %v7634 = vrot.slane %v7630, 4
  %v7636 = vshrl.u32 %v7610, 16
  %v7638 = vrot.slane %v7636, 7
  %v7639 = vshll.u32 %v7610, 16
  %v7641 = vor.u32 %v7638, %v7639
  %v7642 = vsel %vm388, %v7634, %v7641
  %7643 = vrot.lane.b32.xlu0 %v5937, 24
  %v7644 = vpop.permute.xlu0 %7643
  %7645 = vrot.lane.b32.xlu0 %v5946, 24
  %v7646 = vpop.permute.xlu0 %7645
  %7647 = vrot.lane.b32.xlu0 %v5953, 24
  %v7648 = vpop.permute.xlu0 %7647
  %7649 = vrot.lane.b32.xlu0 %v5962, 24
  %v7650 = vpop.permute.xlu0 %7649
  %7651 = vrot.lane.b32.xlu0 %v5969, 24
  %v7652 = vpop.permute.xlu0 %7651
  %7653 = vrot.lane.b32.xlu0 %v5978, 24
  %v7654 = vpop.permute.xlu0 %7653
  %7655 = vrot.lane.b32.xlu0 %v5985, 24
  %v7656 = vpop.permute.xlu0 %7655
  %7657 = vrot.lane.b32.xlu0 %v5994, 24
  %v7658 = vpop.permute.xlu0 %7657
  %7659 = vrot.lane.b32.xlu0 %v6001, 24
  %v7660 = vpop.permute.xlu0 %7659
  %7661 = vrot.lane.b32.xlu0 %v6010, 24
  %v7662 = vpop.permute.xlu0 %7661
  %7663 = vrot.lane.b32.xlu0 %v6017, 24
  %v7664 = vpop.permute.xlu0 %7663
  %7665 = vrot.lane.b32.xlu0 %v6026, 24
  %v7666 = vpop.permute.xlu0 %7665
  %7667 = vrot.lane.b32.xlu0 %v6033, 24
  %v7668 = vpop.permute.xlu0 %7667
  %7669 = vrot.lane.b32.xlu0 %v6042, 24
  %v7670 = vpop.permute.xlu0 %7669
  %7671 = vrot.lane.b32.xlu0 %v6049, 24
  %v7672 = vpop.permute.xlu0 %7671
  %7673 = vrot.lane.b32.xlu0 %v6058, 24
  %v7674 = vpop.permute.xlu0 %7673
  %7675 = vrot.lane.b32.xlu0 %v6065, 24
  %v7676 = vpop.permute.xlu0 %7675
  %7677 = vrot.lane.b32.xlu0 %v6074, 24
  %v7678 = vpop.permute.xlu0 %7677
  %7679 = vrot.lane.b32.xlu0 %v6081, 24
  %v7680 = vpop.permute.xlu0 %7679
  %7681 = vrot.lane.b32.xlu0 %v6090, 24
  %v7682 = vpop.permute.xlu0 %7681
  %7683 = vrot.lane.b32.xlu0 %v6097, 24
  %v7684 = vpop.permute.xlu0 %7683
  %7685 = vrot.lane.b32.xlu0 %v6106, 24
  %v7686 = vpop.permute.xlu0 %7685
  %7687 = vrot.lane.b32.xlu0 %v6113, 24
  %v7688 = vpop.permute.xlu0 %7687
  %7689 = vrot.lane.b32.xlu0 %v6122, 24
  %v7690 = vpop.permute.xlu0 %7689
  %7691 = vrot.lane.b32.xlu0 %v6129, 24
  %v7692 = vpop.permute.xlu0 %7691
  %7693 = vrot.lane.b32.xlu0 %v6138, 24
  %v7694 = vpop.permute.xlu0 %7693
  %7695 = vrot.lane.b32.xlu0 %v6145, 24
  %v7696 = vpop.permute.xlu0 %7695
  %7697 = vrot.lane.b32.xlu0 %v6154, 24
  %v7698 = vpop.permute.xlu0 %7697
  %7699 = vrot.lane.b32.xlu0 %v6161, 24
  %v7700 = vpop.permute.xlu0 %7699
  %7701 = vrot.lane.b32.xlu0 %v6170, 24
  %v7702 = vpop.permute.xlu0 %7701
  %7703 = vrot.lane.b32.xlu0 %v7617, 24
  %v7704 = vpop.permute.xlu0 %7703
  %7705 = vrot.lane.b32.xlu0 %v7626, 24
  %v7706 = vpop.permute.xlu0 %7705
  %7707 = vrot.lane.b32.xlu0 %v6177, 24
  %v7708 = vpop.permute.xlu0 %7707
  %7709 = vrot.lane.b32.xlu0 %v6186, 24
  %v7710 = vpop.permute.xlu0 %7709
  %7711 = vrot.lane.b32.xlu0 %v6193, 24
  %v7712 = vpop.permute.xlu0 %7711
  %7713 = vrot.lane.b32.xlu0 %v6202, 24
  %v7714 = vpop.permute.xlu0 %7713
  %7715 = vrot.lane.b32.xlu0 %v6209, 24
  %v7716 = vpop.permute.xlu0 %7715
  %7717 = vrot.lane.b32.xlu0 %v6218, 24
  %v7718 = vpop.permute.xlu0 %7717
  %7719 = vrot.lane.b32.xlu0 %v6225, 24
  %v7720 = vpop.permute.xlu0 %7719
  %7721 = vrot.lane.b32.xlu0 %v6234, 24
  %v7722 = vpop.permute.xlu0 %7721
  %7723 = vrot.lane.b32.xlu0 %v6241, 24
  %v7724 = vpop.permute.xlu0 %7723
  %7725 = vrot.lane.b32.xlu0 %v6250, 24
  %v7726 = vpop.permute.xlu0 %7725
  %7727 = vrot.lane.b32.xlu0 %v6257, 24
  %v7728 = vpop.permute.xlu0 %7727
  %7729 = vrot.lane.b32.xlu0 %v6266, 24
  %v7730 = vpop.permute.xlu0 %7729
  %7731 = vrot.lane.b32.xlu0 %v6273, 24
  %v7732 = vpop.permute.xlu0 %7731
  %7733 = vrot.lane.b32.xlu0 %v6282, 24
  %v7734 = vpop.permute.xlu0 %7733
  %7735 = vrot.lane.b32.xlu0 %v6289, 24
  %v7736 = vpop.permute.xlu0 %7735
  %7737 = vrot.lane.b32.xlu0 %v6298, 24
  %v7738 = vpop.permute.xlu0 %7737
  %7739 = vrot.lane.b32.xlu0 %v6305, 24
  %v7740 = vpop.permute.xlu0 %7739
  %7741 = vrot.lane.b32.xlu0 %v6314, 24
  %v7742 = vpop.permute.xlu0 %7741
  %7743 = vrot.lane.b32.xlu0 %v6321, 24
  %v7744 = vpop.permute.xlu0 %7743
  %7745 = vrot.lane.b32.xlu0 %v6330, 24
  %v7746 = vpop.permute.xlu0 %7745
  %7747 = vrot.lane.b32.xlu0 %v6337, 24
  %v7748 = vpop.permute.xlu0 %7747
  %7749 = vrot.lane.b32.xlu0 %v6346, 24
  %v7750 = vpop.permute.xlu0 %7749
  %7751 = vrot.lane.b32.xlu0 %v6353, 24
  %v7752 = vpop.permute.xlu0 %7751
  %7753 = vrot.lane.b32.xlu0 %v6362, 24
  %v7754 = vpop.permute.xlu0 %7753
  %7755 = vrot.lane.b32.xlu0 %v6369, 24
  %v7756 = vpop.permute.xlu0 %7755
  %7757 = vrot.lane.b32.xlu0 %v6378, 24
  %v7758 = vpop.permute.xlu0 %7757
  %7759 = vrot.lane.b32.xlu0 %v6385, 24
  %v7760 = vpop.permute.xlu0 %7759
  %7761 = vrot.lane.b32.xlu0 %v6394, 24
  %v7762 = vpop.permute.xlu0 %7761
  %7763 = vrot.lane.b32.xlu0 %v6401, 24
  %v7764 = vpop.permute.xlu0 %7763
  %7765 = vrot.lane.b32.xlu0 %v6410, 24
  %v7766 = vpop.permute.xlu0 %7765
  %7767 = vrot.lane.b32.xlu0 %v7633, 24
  %v7768 = vpop.permute.xlu0 %7767
  %7769 = vrot.lane.b32.xlu0 %v7642, 24
  %v7770 = vpop.permute.xlu0 %7769
  %v7835 = vld [vmem:[#allocation2] sm:$0xf]
  %v7836 = vsel %vm2310, %v7644, %v7835
  %7837 = vst [vmem:[#allocation2] sm:$0xf] %v7836
  %7838 = vst.msk [vmem:[#allocation2 + $0x4] sm:$0xf] %vm2314, %v7646
  %v7839 = vld [vmem:[#allocation2 + $0x8] sm:$0xf]
  %v7840 = vsel %vm2310, %v7648, %v7839
  %7841 = vst [vmem:[#allocation2 + $0x8] sm:$0xf] %v7840
  %7842 = vst.msk [vmem:[#allocation2 + $0xc] sm:$0xf] %vm2314, %v7650
  %v7843 = vld [vmem:[#allocation2 + $0x10] sm:$0xf]
  %v7844 = vsel %vm2310, %v7652, %v7843
  %7845 = vst [vmem:[#allocation2 + $0x10] sm:$0xf] %v7844
  %7846 = vst.msk [vmem:[#allocation2 + $0x14] sm:$0xf] %vm2314, %v7654
  %v7847 = vld [vmem:[#allocation2 + $0x18] sm:$0xf]
  %v7848 = vsel %vm2310, %v7656, %v7847
  %7849 = vst [vmem:[#allocation2 + $0x18] sm:$0xf] %v7848
  %7850 = vst.msk [vmem:[#allocation2 + $0x1c] sm:$0xf] %vm2314, %v7658
  %v7851 = vld [vmem:[#allocation2 + $0x20] sm:$0xf]
  %v7852 = vsel %vm2310, %v7660, %v7851
  %7853 = vst [vmem:[#allocation2 + $0x20] sm:$0xf] %v7852
  %7854 = vst.msk [vmem:[#allocation2 + $0x24] sm:$0xf] %vm2314, %v7662
  %v7855 = vld [vmem:[#allocation2 + $0x28] sm:$0xf]
  %v7856 = vsel %vm2310, %v7664, %v7855
  %7857 = vst [vmem:[#allocation2 + $0x28] sm:$0xf] %v7856
  %7858 = vst.msk [vmem:[#allocation2 + $0x2c] sm:$0xf] %vm2314, %v7666
  %v7859 = vld [vmem:[#allocation2 + $0x30] sm:$0xf]
  %v7860 = vsel %vm2310, %v7668, %v7859
  %7861 = vst [vmem:[#allocation2 + $0x30] sm:$0xf] %v7860
  %7862 = vst.msk [vmem:[#allocation2 + $0x34] sm:$0xf] %vm2314, %v7670
  %v7863 = vld [vmem:[#allocation2 + $0x38] sm:$0xf]
  %v7864 = vsel %vm2310, %v7672, %v7863
  %7865 = vst [vmem:[#allocation2 + $0x38] sm:$0xf] %v7864
  %7866 = vst.msk [vmem:[#allocation2 + $0x3c] sm:$0xf] %vm2314, %v7674
  %v7867 = vld [vmem:[#allocation2 + $0x40] sm:$0xf]
  %v7868 = vsel %vm2310, %v7676, %v7867
  %7869 = vst [vmem:[#allocation2 + $0x40] sm:$0xf] %v7868
  %7870 = vst.msk [vmem:[#allocation2 + $0x44] sm:$0xf] %vm2314, %v7678
  %v7871 = vld [vmem:[#allocation2 + $0x48] sm:$0xf]
  %v7872 = vsel %vm2310, %v7680, %v7871
  %7873 = vst [vmem:[#allocation2 + $0x48] sm:$0xf] %v7872
  %7874 = vst.msk [vmem:[#allocation2 + $0x4c] sm:$0xf] %vm2314, %v7682
  %v7875 = vld [vmem:[#allocation2 + $0x50] sm:$0xf]
  %v7876 = vsel %vm2310, %v7684, %v7875
  %7877 = vst [vmem:[#allocation2 + $0x50] sm:$0xf] %v7876
  %7878 = vst.msk [vmem:[#allocation2 + $0x54] sm:$0xf] %vm2314, %v7686
  %v7879 = vld [vmem:[#allocation2 + $0x58] sm:$0xf]
  %v7880 = vsel %vm2310, %v7688, %v7879
  %7881 = vst [vmem:[#allocation2 + $0x58] sm:$0xf] %v7880
  %7882 = vst.msk [vmem:[#allocation2 + $0x5c] sm:$0xf] %vm2314, %v7690
  %v7883 = vld [vmem:[#allocation2 + $0x60] sm:$0xf]
  %v7884 = vsel %vm2310, %v7692, %v7883
  %7885 = vst [vmem:[#allocation2 + $0x60] sm:$0xf] %v7884
  %7886 = vst.msk [vmem:[#allocation2 + $0x64] sm:$0xf] %vm2314, %v7694
  %v7887 = vld [vmem:[#allocation2 + $0x68] sm:$0xf]
  %v7888 = vsel %vm2310, %v7696, %v7887
  %7889 = vst [vmem:[#allocation2 + $0x68] sm:$0xf] %v7888
  %7890 = vst.msk [vmem:[#allocation2 + $0x6c] sm:$0xf] %vm2314, %v7698
  %v7891 = vld [vmem:[#allocation2 + $0x70] sm:$0xf]
  %v7892 = vsel %vm2310, %v7700, %v7891
  %7893 = vst [vmem:[#allocation2 + $0x70] sm:$0xf] %v7892
  %7894 = vst.msk [vmem:[#allocation2 + $0x74] sm:$0xf] %vm2314, %v7702
  %v7895 = vld [vmem:[#allocation2 + $0x78] sm:$0xf]
  %v7896 = vsel %vm2310, %v7704, %v7895
  %7897 = vst [vmem:[#allocation2 + $0x78] sm:$0xf] %v7896
  %7898 = vst.msk [vmem:[#allocation2 + $0x7c] sm:$0xf] %vm2314, %v7706
  %v7899 = vld [vmem:[#allocation2 + $0x80] sm:$0xf]
  %v7900 = vsel %vm2310, %v7708, %v7899
  %7901 = vst [vmem:[#allocation2 + $0x80] sm:$0xf] %v7900
  %7902 = vst.msk [vmem:[#allocation2 + $0x84] sm:$0xf] %vm2314, %v7710
  %v7903 = vld [vmem:[#allocation2 + $0x88] sm:$0xf]
  %v7904 = vsel %vm2310, %v7712, %v7903
  %7905 = vst [vmem:[#allocation2 + $0x88] sm:$0xf] %v7904
  %7906 = vst.msk [vmem:[#allocation2 + $0x8c] sm:$0xf] %vm2314, %v7714
  %v7907 = vld [vmem:[#allocation2 + $0x90] sm:$0xf]
  %v7908 = vsel %vm2310, %v7716, %v7907
  %7909 = vst [vmem:[#allocation2 + $0x90] sm:$0xf] %v7908
  %7910 = vst.msk [vmem:[#allocation2 + $0x94] sm:$0xf] %vm2314, %v7718
  %v7911 = vld [vmem:[#allocation2 + $0x98] sm:$0xf]
  %v7912 = vsel %vm2310, %v7720, %v7911
  %7913 = vst [vmem:[#allocation2 + $0x98] sm:$0xf] %v7912
  %7914 = vst.msk [vmem:[#allocation2 + $0x9c] sm:$0xf] %vm2314, %v7722
  %v7915 = vld [vmem:[#allocation2 + $0xa0] sm:$0xf]
  %v7916 = vsel %vm2310, %v7724, %v7915
  %7917 = vst [vmem:[#allocation2 + $0xa0] sm:$0xf] %v7916
  %7918 = vst.msk [vmem:[#allocation2 + $0xa4] sm:$0xf] %vm2314, %v7726
  %v7919 = vld [vmem:[#allocation2 + $0xa8] sm:$0xf]
  %v7920 = vsel %vm2310, %v7728, %v7919
  %7921 = vst [vmem:[#allocation2 + $0xa8] sm:$0xf] %v7920
  %7922 = vst.msk [vmem:[#allocation2 + $0xac] sm:$0xf] %vm2314, %v7730
  %v7923 = vld [vmem:[#allocation2 + $0xb0] sm:$0xf]
  %v7924 = vsel %vm2310, %v7732, %v7923
  %7925 = vst [vmem:[#allocation2 + $0xb0] sm:$0xf] %v7924
  %7926 = vst.msk [vmem:[#allocation2 + $0xb4] sm:$0xf] %vm2314, %v7734
  %v7927 = vld [vmem:[#allocation2 + $0xb8] sm:$0xf]
  %v7928 = vsel %vm2310, %v7736, %v7927
  %7929 = vst [vmem:[#allocation2 + $0xb8] sm:$0xf] %v7928
  %7930 = vst.msk [vmem:[#allocation2 + $0xbc] sm:$0xf] %vm2314, %v7738
  %v7931 = vld [vmem:[#allocation2 + $0xc0] sm:$0xf]
  %v7932 = vsel %vm2310, %v7740, %v7931
  %7933 = vst [vmem:[#allocation2 + $0xc0] sm:$0xf] %v7932
  %7934 = vst.msk [vmem:[#allocation2 + $0xc4] sm:$0xf] %vm2314, %v7742
  %v7935 = vld [vmem:[#allocation2 + $0xc8] sm:$0xf]
  %v7936 = vsel %vm2310, %v7744, %v7935
  %7937 = vst [vmem:[#allocation2 + $0xc8] sm:$0xf] %v7936
  %7938 = vst.msk [vmem:[#allocation2 + $0xcc] sm:$0xf] %vm2314, %v7746
  %v7939 = vld [vmem:[#allocation2 + $0xd0] sm:$0xf]
  %v7940 = vsel %vm2310, %v7748, %v7939
  %7941 = vst [vmem:[#allocation2 + $0xd0] sm:$0xf] %v7940
  %7942 = vst.msk [vmem:[#allocation2 + $0xd4] sm:$0xf] %vm2314, %v7750
  %v7943 = vld [vmem:[#allocation2 + $0xd8] sm:$0xf]
  %v7944 = vsel %vm2310, %v7752, %v7943
  %7945 = vst [vmem:[#allocation2 + $0xd8] sm:$0xf] %v7944
  %7946 = vst.msk [vmem:[#allocation2 + $0xdc] sm:$0xf] %vm2314, %v7754
  %v7947 = vld [vmem:[#allocation2 + $0xe0] sm:$0xf]
  %v7948 = vsel %vm2310, %v7756, %v7947
  %7949 = vst [vmem:[#allocation2 + $0xe0] sm:$0xf] %v7948
  %7950 = vst.msk [vmem:[#allocation2 + $0xe4] sm:$0xf] %vm2314, %v7758
  %v7951 = vld [vmem:[#allocation2 + $0xe8] sm:$0xf]
  %v7952 = vsel %vm2310, %v7760, %v7951
  %7953 = vst [vmem:[#allocation2 + $0xe8] sm:$0xf] %v7952
  %7954 = vst.msk [vmem:[#allocation2 + $0xec] sm:$0xf] %vm2314, %v7762
  %v7955 = vld [vmem:[#allocation2 + $0xf0] sm:$0xf]
  %v7956 = vsel %vm2310, %v7764, %v7955
  %7957 = vst [vmem:[#allocation2 + $0xf0] sm:$0xf] %v7956
  %7958 = vst.msk [vmem:[#allocation2 + $0xf4] sm:$0xf] %vm2314, %v7766
  %v7959 = vld [vmem:[#allocation2 + $0xf8] sm:$0xf]
  %v7960 = vsel %vm2310, %v7768, %v7959
  %7961 = vst [vmem:[#allocation2 + $0xf8] sm:$0xf] %v7960
  %7962 = vst.msk [vmem:[#allocation2 + $0xfc] sm:$0xf] %vm2314, %v7770
  %7963 = vrot.lane.b32.xlu0 %v5871, 32
  %v7964 = vpop.permute.xlu0 %7963
  %7965 = vrot.lane.b32.xlu0 %v5872, 32
  %v7966 = vpop.permute.xlu0 %7965
  %7967 = vrot.lane.b32.xlu0 %v5873, 32
  %v7968 = vpop.permute.xlu0 %7967
  %7969 = vrot.lane.b32.xlu0 %v5874, 32
  %v7970 = vpop.permute.xlu0 %7969
  %7971 = vrot.lane.b32.xlu0 %v5875, 32
  %v7972 = vpop.permute.xlu0 %7971
  %7973 = vrot.lane.b32.xlu0 %v5876, 32
  %v7974 = vpop.permute.xlu0 %7973
  %7975 = vrot.lane.b32.xlu0 %v5877, 32
  %v7976 = vpop.permute.xlu0 %7975
  %7977 = vrot.lane.b32.xlu0 %v5878, 32
  %v7978 = vpop.permute.xlu0 %7977
  %7979 = vrot.lane.b32.xlu0 %v5879, 32
  %v7980 = vpop.permute.xlu0 %7979
  %7981 = vrot.lane.b32.xlu0 %v5880, 32
  %v7982 = vpop.permute.xlu0 %7981
  %7983 = vrot.lane.b32.xlu0 %v5881, 32
  %v7984 = vpop.permute.xlu0 %7983
  %7985 = vrot.lane.b32.xlu0 %v5882, 32
  %v7986 = vpop.permute.xlu0 %7985
  %7987 = vrot.lane.b32.xlu0 %v5883, 32
  %v7988 = vpop.permute.xlu0 %7987
  %7989 = vrot.lane.b32.xlu0 %v5884, 32
  %v7990 = vpop.permute.xlu0 %7989
  %7991 = vrot.lane.b32.xlu0 %v5885, 32
  %v7992 = vpop.permute.xlu0 %7991
  %7993 = vrot.lane.b32.xlu0 %v5886, 32
  %v7994 = vpop.permute.xlu0 %7993
  %7995 = vrot.lane.b32.xlu0 %v5887, 32
  %v7996 = vpop.permute.xlu0 %7995
  %7997 = vrot.lane.b32.xlu0 %v5888, 32
  %v7998 = vpop.permute.xlu0 %7997
  %7999 = vrot.lane.b32.xlu0 %v5889, 32
  %v8000 = vpop.permute.xlu0 %7999
  %8001 = vrot.lane.b32.xlu0 %v5890, 32
  %v8002 = vpop.permute.xlu0 %8001
  %8003 = vrot.lane.b32.xlu0 %v5891, 32
  %v8004 = vpop.permute.xlu0 %8003
  %8005 = vrot.lane.b32.xlu0 %v5892, 32
  %v8006 = vpop.permute.xlu0 %8005
  %8007 = vrot.lane.b32.xlu0 %v5893, 32
  %v8008 = vpop.permute.xlu0 %8007
  %8009 = vrot.lane.b32.xlu0 %v5894, 32
  %v8010 = vpop.permute.xlu0 %8009
  %8011 = vrot.lane.b32.xlu0 %v5895, 32
  %v8012 = vpop.permute.xlu0 %8011
  %8013 = vrot.lane.b32.xlu0 %v5896, 32
  %v8014 = vpop.permute.xlu0 %8013
  %8015 = vrot.lane.b32.xlu0 %v5897, 32
  %v8016 = vpop.permute.xlu0 %8015
  %8017 = vrot.lane.b32.xlu0 %v5898, 32
  %v8018 = vpop.permute.xlu0 %8017
  %8019 = vrot.lane.b32.xlu0 %v5899, 32
  %v8020 = vpop.permute.xlu0 %8019
  %8021 = vrot.lane.b32.xlu0 %v5900, 32
  %v8022 = vpop.permute.xlu0 %8021
  %8023 = vrot.lane.b32.xlu0 %v7607, 32
  %v8024 = vpop.permute.xlu0 %8023
  %8025 = vrot.lane.b32.xlu0 %v7608, 32
  %v8026 = vpop.permute.xlu0 %8025
  %8027 = vrot.lane.b32.xlu0 %v5901, 32
  %v8028 = vpop.permute.xlu0 %8027
  %8029 = vrot.lane.b32.xlu0 %v5902, 32
  %v8030 = vpop.permute.xlu0 %8029
  %8031 = vrot.lane.b32.xlu0 %v5903, 32
  %v8032 = vpop.permute.xlu0 %8031
  %8033 = vrot.lane.b32.xlu0 %v5904, 32
  %v8034 = vpop.permute.xlu0 %8033
  %8035 = vrot.lane.b32.xlu0 %v5905, 32
  %v8036 = vpop.permute.xlu0 %8035
  %8037 = vrot.lane.b32.xlu0 %v5906, 32
  %v8038 = vpop.permute.xlu0 %8037
  %8039 = vrot.lane.b32.xlu0 %v5907, 32
  %v8040 = vpop.permute.xlu0 %8039
  %8041 = vrot.lane.b32.xlu0 %v5908, 32
  %v8042 = vpop.permute.xlu0 %8041
  %8043 = vrot.lane.b32.xlu0 %v5909, 32
  %v8044 = vpop.permute.xlu0 %8043
  %8045 = vrot.lane.b32.xlu0 %v5910, 32
  %v8046 = vpop.permute.xlu0 %8045
  %8047 = vrot.lane.b32.xlu0 %v5911, 32
  %v8048 = vpop.permute.xlu0 %8047
  %8049 = vrot.lane.b32.xlu0 %v5912, 32
  %v8050 = vpop.permute.xlu0 %8049
  %8051 = vrot.lane.b32.xlu0 %v5913, 32
  %v8052 = vpop.permute.xlu0 %8051
  %8053 = vrot.lane.b32.xlu0 %v5914, 32
  %v8054 = vpop.permute.xlu0 %8053
  %8055 = vrot.lane.b32.xlu0 %v5915, 32
  %v8056 = vpop.permute.xlu0 %8055
  %8057 = vrot.lane.b32.xlu0 %v5916, 32
  %v8058 = vpop.permute.xlu0 %8057
  %8059 = vrot.lane.b32.xlu0 %v5917, 32
  %v8060 = vpop.permute.xlu0 %8059
  %8061 = vrot.lane.b32.xlu0 %v5918, 32
  %v8062 = vpop.permute.xlu0 %8061
  %8063 = vrot.lane.b32.xlu0 %v5919, 32
  %v8064 = vpop.permute.xlu0 %8063
  %8065 = vrot.lane.b32.xlu0 %v5920, 32
  %v8066 = vpop.permute.xlu0 %8065
  %8067 = vrot.lane.b32.xlu0 %v5921, 32
  %v8068 = vpop.permute.xlu0 %8067
  %8069 = vrot.lane.b32.xlu0 %v5922, 32
  %v8070 = vpop.permute.xlu0 %8069
  %8071 = vrot.lane.b32.xlu0 %v5923, 32
  %v8072 = vpop.permute.xlu0 %8071
  %8073 = vrot.lane.b32.xlu0 %v5924, 32
  %v8074 = vpop.permute.xlu0 %8073
  %8075 = vrot.lane.b32.xlu0 %v5925, 32
  %v8076 = vpop.permute.xlu0 %8075
  %8077 = vrot.lane.b32.xlu0 %v5926, 32
  %v8078 = vpop.permute.xlu0 %8077
  %8079 = vrot.lane.b32.xlu0 %v5927, 32
  %v8080 = vpop.permute.xlu0 %8079
  %8081 = vrot.lane.b32.xlu0 %v5928, 32
  %v8082 = vpop.permute.xlu0 %8081
  %8083 = vrot.lane.b32.xlu0 %v5929, 32
  %v8084 = vpop.permute.xlu0 %8083
  %8085 = vrot.lane.b32.xlu0 %v5930, 32
  %v8086 = vpop.permute.xlu0 %8085
  %8087 = vrot.lane.b32.xlu0 %v7609, 32
  %v8088 = vpop.permute.xlu0 %8087
  %8089 = vrot.lane.b32.xlu0 %v7610, 32
  %v8090 = vpop.permute.xlu0 %8089
  %8155 = vst.msk [vmem:[#allocation2] sm:$0xf] %vm2632, %v7964
  %8156 = vst.msk [vmem:[#allocation2 + $0x4] sm:$0xf] %vm2632, %v7966
  %8157 = vst.msk [vmem:[#allocation2 + $0x8] sm:$0xf] %vm2632, %v7968
  %8158 = vst.msk [vmem:[#allocation2 + $0xc] sm:$0xf] %vm2632, %v7970
  %8159 = vst.msk [vmem:[#allocation2 + $0x10] sm:$0xf] %vm2632, %v7972
  %8160 = vst.msk [vmem:[#allocation2 + $0x14] sm:$0xf] %vm2632, %v7974
  %8161 = vst.msk [vmem:[#allocation2 + $0x18] sm:$0xf] %vm2632, %v7976
  %8162 = vst.msk [vmem:[#allocation2 + $0x1c] sm:$0xf] %vm2632, %v7978
  %8163 = vst.msk [vmem:[#allocation2 + $0x20] sm:$0xf] %vm2632, %v7980
  %8164 = vst.msk [vmem:[#allocation2 + $0x24] sm:$0xf] %vm2632, %v7982
  %8165 = vst.msk [vmem:[#allocation2 + $0x28] sm:$0xf] %vm2632, %v7984
  %8166 = vst.msk [vmem:[#allocation2 + $0x2c] sm:$0xf] %vm2632, %v7986
  %8167 = vst.msk [vmem:[#allocation2 + $0x30] sm:$0xf] %vm2632, %v7988
  %8168 = vst.msk [vmem:[#allocation2 + $0x34] sm:$0xf] %vm2632, %v7990
  %8169 = vst.msk [vmem:[#allocation2 + $0x38] sm:$0xf] %vm2632, %v7992
  %8170 = vst.msk [vmem:[#allocation2 + $0x3c] sm:$0xf] %vm2632, %v7994
  %8171 = vst.msk [vmem:[#allocation2 + $0x40] sm:$0xf] %vm2632, %v7996
  %8172 = vst.msk [vmem:[#allocation2 + $0x44] sm:$0xf] %vm2632, %v7998
  %8173 = vst.msk [vmem:[#allocation2 + $0x48] sm:$0xf] %vm2632, %v8000
  %8174 = vst.msk [vmem:[#allocation2 + $0x4c] sm:$0xf] %vm2632, %v8002
  %8175 = vst.msk [vmem:[#allocation2 + $0x50] sm:$0xf] %vm2632, %v8004
  %8176 = vst.msk [vmem:[#allocation2 + $0x54] sm:$0xf] %vm2632, %v8006
  %8177 = vst.msk [vmem:[#allocation2 + $0x58] sm:$0xf] %vm2632, %v8008
  %8178 = vst.msk [vmem:[#allocation2 + $0x5c] sm:$0xf] %vm2632, %v8010
  %8179 = vst.msk [vmem:[#allocation2 + $0x60] sm:$0xf] %vm2632, %v8012
  %8180 = vst.msk [vmem:[#allocation2 + $0x64] sm:$0xf] %vm2632, %v8014
  %8181 = vst.msk [vmem:[#allocation2 + $0x68] sm:$0xf] %vm2632, %v8016
  %8182 = vst.msk [vmem:[#allocation2 + $0x6c] sm:$0xf] %vm2632, %v8018
  %8183 = vst.msk [vmem:[#allocation2 + $0x70] sm:$0xf] %vm2632, %v8020
  %8184 = vst.msk [vmem:[#allocation2 + $0x74] sm:$0xf] %vm2632, %v8022
  %8185 = vst.msk [vmem:[#allocation2 + $0x78] sm:$0xf] %vm2632, %v8024
  %8186 = vst.msk [vmem:[#allocation2 + $0x7c] sm:$0xf] %vm2632, %v8026
  %8187 = vst.msk [vmem:[#allocation2 + $0x80] sm:$0xf] %vm2632, %v8028
  %8188 = vst.msk [vmem:[#allocation2 + $0x84] sm:$0xf] %vm2632, %v8030
  %8189 = vst.msk [vmem:[#allocation2 + $0x88] sm:$0xf] %vm2632, %v8032
  %8190 = vst.msk [vmem:[#allocation2 + $0x8c] sm:$0xf] %vm2632, %v8034
  %8191 = vst.msk [vmem:[#allocation2 + $0x90] sm:$0xf] %vm2632, %v8036
  %8192 = vst.msk [vmem:[#allocation2 + $0x94] sm:$0xf] %vm2632, %v8038
  %8193 = vst.msk [vmem:[#allocation2 + $0x98] sm:$0xf] %vm2632, %v8040
  %8194 = vst.msk [vmem:[#allocation2 + $0x9c] sm:$0xf] %vm2632, %v8042
  %8195 = vst.msk [vmem:[#allocation2 + $0xa0] sm:$0xf] %vm2632, %v8044
  %8196 = vst.msk [vmem:[#allocation2 + $0xa4] sm:$0xf] %vm2632, %v8046
  %8197 = vst.msk [vmem:[#allocation2 + $0xa8] sm:$0xf] %vm2632, %v8048
  %8198 = vst.msk [vmem:[#allocation2 + $0xac] sm:$0xf] %vm2632, %v8050
  %8199 = vst.msk [vmem:[#allocation2 + $0xb0] sm:$0xf] %vm2632, %v8052
  %8200 = vst.msk [vmem:[#allocation2 + $0xb4] sm:$0xf] %vm2632, %v8054
  %8201 = vst.msk [vmem:[#allocation2 + $0xb8] sm:$0xf] %vm2632, %v8056
  %8202 = vst.msk [vmem:[#allocation2 + $0xbc] sm:$0xf] %vm2632, %v8058
  %8203 = vst.msk [vmem:[#allocation2 + $0xc0] sm:$0xf] %vm2632, %v8060
  %8204 = vst.msk [vmem:[#allocation2 + $0xc4] sm:$0xf] %vm2632, %v8062
  %8205 = vst.msk [vmem:[#allocation2 + $0xc8] sm:$0xf] %vm2632, %v8064
  %8206 = vst.msk [vmem:[#allocation2 + $0xcc] sm:$0xf] %vm2632, %v8066
  %8207 = vst.msk [vmem:[#allocation2 + $0xd0] sm:$0xf] %vm2632, %v8068
  %8208 = vst.msk [vmem:[#allocation2 + $0xd4] sm:$0xf] %vm2632, %v8070
  %8209 = vst.msk [vmem:[#allocation2 + $0xd8] sm:$0xf] %vm2632, %v8072
  %8210 = vst.msk [vmem:[#allocation2 + $0xdc] sm:$0xf] %vm2632, %v8074
  %8211 = vst.msk [vmem:[#allocation2 + $0xe0] sm:$0xf] %vm2632, %v8076
  %8212 = vst.msk [vmem:[#allocation2 + $0xe4] sm:$0xf] %vm2632, %v8078
  %8213 = vst.msk [vmem:[#allocation2 + $0xe8] sm:$0xf] %vm2632, %v8080
  %8214 = vst.msk [vmem:[#allocation2 + $0xec] sm:$0xf] %vm2632, %v8082
  %8215 = vst.msk [vmem:[#allocation2 + $0xf0] sm:$0xf] %vm2632, %v8084
  %8216 = vst.msk [vmem:[#allocation2 + $0xf4] sm:$0xf] %vm2632, %v8086
  %8217 = vst.msk [vmem:[#allocation2 + $0xf8] sm:$0xf] %vm2632, %v8088
  %8218 = vst.msk [vmem:[#allocation2 + $0xfc] sm:$0xf] %vm2632, %v8090
  %v8219 = vld [vmem:[#allocation2 + $0x4] sm:$0x8]
  %v8220 = vsel %vm2698, 0, %v8219
  %8221 = vst [vmem:[#allocation2 + $0x4] sm:$0x8] %v8220
  %v8222 = vld [vmem:[#allocation2 + $0xc] sm:$0x8]
  %v8223 = vsel %vm2698, 0, %v8222
  %8224 = vst [vmem:[#allocation2 + $0xc] sm:$0x8] %v8223
  %v8225 = vld [vmem:[#allocation2 + $0x14] sm:$0x8]
  %v8226 = vsel %vm2698, 0, %v8225
  %8227 = vst [vmem:[#allocation2 + $0x14] sm:$0x8] %v8226
  %v8228 = vld [vmem:[#allocation2 + $0x1c] sm:$0x8]
  %v8229 = vsel %vm2698, 0, %v8228
  %8230 = vst [vmem:[#allocation2 + $0x1c] sm:$0x8] %v8229
  %v8231 = vld [vmem:[#allocation2 + $0x24] sm:$0x8]
  %v8232 = vsel %vm2698, 0, %v8231
  %8233 = vst [vmem:[#allocation2 + $0x24] sm:$0x8] %v8232
  %v8234 = vld [vmem:[#allocation2 + $0x2c] sm:$0x8]
  %v8235 = vsel %vm2698, 0, %v8234
  %8236 = vst [vmem:[#allocation2 + $0x2c] sm:$0x8] %v8235
  %v8237 = vld [vmem:[#allocation2 + $0x34] sm:$0x8]
  %v8238 = vsel %vm2698, 0, %v8237
  %8239 = vst [vmem:[#allocation2 + $0x34] sm:$0x8] %v8238
  %v8240 = vld [vmem:[#allocation2 + $0x3c] sm:$0x8]
  %v8241 = vsel %vm2698, 0, %v8240
  %8242 = vst [vmem:[#allocation2 + $0x3c] sm:$0x8] %v8241
  %v8243 = vld [vmem:[#allocation2 + $0x44] sm:$0x8]
  %v8244 = vsel %vm2698, 0, %v8243
  %8245 = vst [vmem:[#allocation2 + $0x44] sm:$0x8] %v8244
  %v8246 = vld [vmem:[#allocation2 + $0x4c] sm:$0x8]
  %v8247 = vsel %vm2698, 0, %v8246
  %8248 = vst [vmem:[#allocation2 + $0x4c] sm:$0x8] %v8247
  %v8249 = vld [vmem:[#allocation2 + $0x54] sm:$0x8]
  %v8250 = vsel %vm2698, 0, %v8249
  %8251 = vst [vmem:[#allocation2 + $0x54] sm:$0x8] %v8250
  %v8252 = vld [vmem:[#allocation2 + $0x5c] sm:$0x8]
  %v8253 = vsel %vm2698, 0, %v8252
  %8254 = vst [vmem:[#allocation2 + $0x5c] sm:$0x8] %v8253
  %v8255 = vld [vmem:[#allocation2 + $0x64] sm:$0x8]
  %v8256 = vsel %vm2698, 0, %v8255
  %8257 = vst [vmem:[#allocation2 + $0x64] sm:$0x8] %v8256
  %v8258 = vld [vmem:[#allocation2 + $0x6c] sm:$0x8]
  %v8259 = vsel %vm2698, 0, %v8258
  %8260 = vst [vmem:[#allocation2 + $0x6c] sm:$0x8] %v8259
  %v8261 = vld [vmem:[#allocation2 + $0x74] sm:$0x8]
  %v8262 = vsel %vm2698, 0, %v8261
  %8263 = vst [vmem:[#allocation2 + $0x74] sm:$0x8] %v8262
  %v8264 = vld [vmem:[#allocation2 + $0x7c] sm:$0x8]
  %v8265 = vsel %vm2698, 0, %v8264
  %8266 = vst [vmem:[#allocation2 + $0x7c] sm:$0x8] %v8265
  %v8267 = vld [vmem:[#allocation2 + $0x84] sm:$0x8]
  %v8268 = vsel %vm2698, 0, %v8267
  %8269 = vst [vmem:[#allocation2 + $0x84] sm:$0x8] %v8268
  %v8270 = vld [vmem:[#allocation2 + $0x8c] sm:$0x8]
  %v8271 = vsel %vm2698, 0, %v8270
  %8272 = vst [vmem:[#allocation2 + $0x8c] sm:$0x8] %v8271
  %v8273 = vld [vmem:[#allocation2 + $0x94] sm:$0x8]
  %v8274 = vsel %vm2698, 0, %v8273
  %8275 = vst [vmem:[#allocation2 + $0x94] sm:$0x8] %v8274
  %v8276 = vld [vmem:[#allocation2 + $0x9c] sm:$0x8]
  %v8277 = vsel %vm2698, 0, %v8276
  %8278 = vst [vmem:[#allocation2 + $0x9c] sm:$0x8] %v8277
  %v8279 = vld [vmem:[#allocation2 + $0xa4] sm:$0x8]
  %v8280 = vsel %vm2698, 0, %v8279
  %8281 = vst [vmem:[#allocation2 + $0xa4] sm:$0x8] %v8280
  %v8282 = vld [vmem:[#allocation2 + $0xac] sm:$0x8]
  %v8283 = vsel %vm2698, 0, %v8282
  %8284 = vst [vmem:[#allocation2 + $0xac] sm:$0x8] %v8283
  %v8285 = vld [vmem:[#allocation2 + $0xb4] sm:$0x8]
  %v8286 = vsel %vm2698, 0, %v8285
  %8287 = vst [vmem:[#allocation2 + $0xb4] sm:$0x8] %v8286
  %v8288 = vld [vmem:[#allocation2 + $0xbc] sm:$0x8]
  %v8289 = vsel %vm2698, 0, %v8288
  %8290 = vst [vmem:[#allocation2 + $0xbc] sm:$0x8] %v8289
  %v8291 = vld [vmem:[#allocation2 + $0xc4] sm:$0x8]
  %v8292 = vsel %vm2698, 0, %v8291
  %8293 = vst [vmem:[#allocation2 + $0xc4] sm:$0x8] %v8292
  %v8294 = vld [vmem:[#allocation2 + $0xcc] sm:$0x8]
  %v8295 = vsel %vm2698, 0, %v8294
  %8296 = vst [vmem:[#allocation2 + $0xcc] sm:$0x8] %v8295
  %v8297 = vld [vmem:[#allocation2 + $0xd4] sm:$0x8]
  %v8298 = vsel %vm2698, 0, %v8297
  %8299 = vst [vmem:[#allocation2 + $0xd4] sm:$0x8] %v8298
  %v8300 = vld [vmem:[#allocation2 + $0xdc] sm:$0x8]
  %v8301 = vsel %vm2698, 0, %v8300
  %8302 = vst [vmem:[#allocation2 + $0xdc] sm:$0x8] %v8301
  %v8303 = vld [vmem:[#allocation2 + $0xe4] sm:$0x8]
  %v8304 = vsel %vm2698, 0, %v8303
  %8305 = vst [vmem:[#allocation2 + $0xe4] sm:$0x8] %v8304
  %v8306 = vld [vmem:[#allocation2 + $0xec] sm:$0x8]
  %v8307 = vsel %vm2698, 0, %v8306
  %8308 = vst [vmem:[#allocation2 + $0xec] sm:$0x8] %v8307
  %v8309 = vld [vmem:[#allocation2 + $0xf4] sm:$0x8]
  %v8310 = vsel %vm2698, 0, %v8309
  %8311 = vst [vmem:[#allocation2 + $0xf4] sm:$0x8] %v8310
  %v8312 = vld [vmem:[#allocation2 + $0xfc] sm:$0x8]
  %v8313 = vsel %vm2698, 0, %v8312
  %8314 = vst [vmem:[#allocation2 + $0xfc] sm:$0x8] %v8313
  %v8315 = vrot.slane %v7612, 4
  %v8316 = vrot.slane %v7615, 5
  %v8317 = vor.u32 %v8315, %v8316
  %v8318 = vrot.slane %v8317, 4
  %v8319 = vrot.slane %v7623, 5
  %v8320 = vsel %vm1404, %v8318, %v8319
  %v8321 = vrot.slane %v7620, 4
  %v8322 = vor.u32 %v8321, %v8319
  %v8323 = vrot.slane %v8322, 4
  %v8324 = vrot.slane %v7628, 4
  %v8325 = vrot.slane %v7631, 5
  %v8326 = vor.u32 %v8324, %v8325
  %v8327 = vrot.slane %v8326, 4
  %v8328 = vrot.slane %v7639, 5
  %v8329 = vsel %vm1404, %v8327, %v8328
  %v8330 = vrot.slane %v7636, 4
  %v8331 = vor.u32 %v8330, %v8328
  %v8332 = vrot.slane %v8331, 4
  %8333 = vrot.lane.b32.xlu0 %v6940, 40
  %v8334 = vpop.permute.xlu0 %8333
  %8335 = vrot.lane.b32.xlu0 %v6943, 40
  %v8336 = vpop.permute.xlu0 %8335
  %8337 = vrot.lane.b32.xlu0 %v6949, 40
  %v8338 = vpop.permute.xlu0 %8337
  %8339 = vrot.lane.b32.xlu0 %v6952, 40
  %v8340 = vpop.permute.xlu0 %8339
  %8341 = vrot.lane.b32.xlu0 %v6958, 40
  %v8342 = vpop.permute.xlu0 %8341
  %8343 = vrot.lane.b32.xlu0 %v6961, 40
  %v8344 = vpop.permute.xlu0 %8343
  %8345 = vrot.lane.b32.xlu0 %v6967, 40
  %v8346 = vpop.permute.xlu0 %8345
  %8347 = vrot.lane.b32.xlu0 %v6970, 40
  %v8348 = vpop.permute.xlu0 %8347
  %8349 = vrot.lane.b32.xlu0 %v6976, 40
  %v8350 = vpop.permute.xlu0 %8349
  %8351 = vrot.lane.b32.xlu0 %v6979, 40
  %v8352 = vpop.permute.xlu0 %8351
  %8353 = vrot.lane.b32.xlu0 %v6985, 40
  %v8354 = vpop.permute.xlu0 %8353
  %8355 = vrot.lane.b32.xlu0 %v6988, 40
  %v8356 = vpop.permute.xlu0 %8355
  %8357 = vrot.lane.b32.xlu0 %v6994, 40
  %v8358 = vpop.permute.xlu0 %8357
  %8359 = vrot.lane.b32.xlu0 %v6997, 40
  %v8360 = vpop.permute.xlu0 %8359
  %8361 = vrot.lane.b32.xlu0 %v7003, 40
  %v8362 = vpop.permute.xlu0 %8361
  %8363 = vrot.lane.b32.xlu0 %v7006, 40
  %v8364 = vpop.permute.xlu0 %8363
  %8365 = vrot.lane.b32.xlu0 %v7012, 40
  %v8366 = vpop.permute.xlu0 %8365
  %8367 = vrot.lane.b32.xlu0 %v7015, 40
  %v8368 = vpop.permute.xlu0 %8367
  %8369 = vrot.lane.b32.xlu0 %v7021, 40
  %v8370 = vpop.permute.xlu0 %8369
  %8371 = vrot.lane.b32.xlu0 %v7024, 40
  %v8372 = vpop.permute.xlu0 %8371
  %8373 = vrot.lane.b32.xlu0 %v7030, 40
  %v8374 = vpop.permute.xlu0 %8373
  %8375 = vrot.lane.b32.xlu0 %v7033, 40
  %v8376 = vpop.permute.xlu0 %8375
  %8377 = vrot.lane.b32.xlu0 %v7039, 40
  %v8378 = vpop.permute.xlu0 %8377
  %8379 = vrot.lane.b32.xlu0 %v7042, 40
  %v8380 = vpop.permute.xlu0 %8379
  %8381 = vrot.lane.b32.xlu0 %v7048, 40
  %v8382 = vpop.permute.xlu0 %8381
  %8383 = vrot.lane.b32.xlu0 %v7051, 40
  %v8384 = vpop.permute.xlu0 %8383
  %8385 = vrot.lane.b32.xlu0 %v7057, 40
  %v8386 = vpop.permute.xlu0 %8385
  %8387 = vrot.lane.b32.xlu0 %v7060, 40
  %v8388 = vpop.permute.xlu0 %8387
  %8389 = vrot.lane.b32.xlu0 %v7066, 40
  %v8390 = vpop.permute.xlu0 %8389
  %8391 = vrot.lane.b32.xlu0 %v7069, 40
  %v8392 = vpop.permute.xlu0 %8391
  %8393 = vrot.lane.b32.xlu0 %v8320, 40
  %v8394 = vpop.permute.xlu0 %8393
  %8395 = vrot.lane.b32.xlu0 %v8323, 40
  %v8396 = vpop.permute.xlu0 %8395
  %8397 = vrot.lane.b32.xlu0 %v7075, 40
  %v8398 = vpop.permute.xlu0 %8397
  %8399 = vrot.lane.b32.xlu0 %v7078, 40
  %v8400 = vpop.permute.xlu0 %8399
  %8401 = vrot.lane.b32.xlu0 %v7084, 40
  %v8402 = vpop.permute.xlu0 %8401
  %8403 = vrot.lane.b32.xlu0 %v7087, 40
  %v8404 = vpop.permute.xlu0 %8403
  %8405 = vrot.lane.b32.xlu0 %v7093, 40
  %v8406 = vpop.permute.xlu0 %8405
  %8407 = vrot.lane.b32.xlu0 %v7096, 40
  %v8408 = vpop.permute.xlu0 %8407
  %8409 = vrot.lane.b32.xlu0 %v7102, 40
  %v8410 = vpop.permute.xlu0 %8409
  %8411 = vrot.lane.b32.xlu0 %v7105, 40
  %v8412 = vpop.permute.xlu0 %8411
  %8413 = vrot.lane.b32.xlu0 %v7111, 40
  %v8414 = vpop.permute.xlu0 %8413
  %8415 = vrot.lane.b32.xlu0 %v7114, 40
  %v8416 = vpop.permute.xlu0 %8415
  %8417 = vrot.lane.b32.xlu0 %v7120, 40
  %v8418 = vpop.permute.xlu0 %8417
  %8419 = vrot.lane.b32.xlu0 %v7123, 40
  %v8420 = vpop.permute.xlu0 %8419
  %8421 = vrot.lane.b32.xlu0 %v7129, 40
  %v8422 = vpop.permute.xlu0 %8421
  %8423 = vrot.lane.b32.xlu0 %v7132, 40
  %v8424 = vpop.permute.xlu0 %8423
  %8425 = vrot.lane.b32.xlu0 %v7138, 40
  %v8426 = vpop.permute.xlu0 %8425
  %8427 = vrot.lane.b32.xlu0 %v7141, 40
  %v8428 = vpop.permute.xlu0 %8427
  %8429 = vrot.lane.b32.xlu0 %v7147, 40
  %v8430 = vpop.permute.xlu0 %8429
  %8431 = vrot.lane.b32.xlu0 %v7150, 40
  %v8432 = vpop.permute.xlu0 %8431
  %8433 = vrot.lane.b32.xlu0 %v7156, 40
  %v8434 = vpop.permute.xlu0 %8433
  %8435 = vrot.lane.b32.xlu0 %v7159, 40
  %v8436 = vpop.permute.xlu0 %8435
  %8437 = vrot.lane.b32.xlu0 %v7165, 40
  %v8438 = vpop.permute.xlu0 %8437
  %8439 = vrot.lane.b32.xlu0 %v7168, 40
  %v8440 = vpop.permute.xlu0 %8439
  %8441 = vrot.lane.b32.xlu0 %v7174, 40
  %v8442 = vpop.permute.xlu0 %8441
  %8443 = vrot.lane.b32.xlu0 %v7177, 40
  %v8444 = vpop.permute.xlu0 %8443
  %8445 = vrot.lane.b32.xlu0 %v7183, 40
  %v8446 = vpop.permute.xlu0 %8445
  %8447 = vrot.lane.b32.xlu0 %v7186, 40
  %v8448 = vpop.permute.xlu0 %8447
  %8449 = vrot.lane.b32.xlu0 %v7192, 40
  %v8450 = vpop.permute.xlu0 %8449
  %8451 = vrot.lane.b32.xlu0 %v7195, 40
  %v8452 = vpop.permute.xlu0 %8451
  %8453 = vrot.lane.b32.xlu0 %v7201, 40
  %v8454 = vpop.permute.xlu0 %8453
  %8455 = vrot.lane.b32.xlu0 %v7204, 40
  %v8456 = vpop.permute.xlu0 %8455
  %8457 = vrot.lane.b32.xlu0 %v8329, 40
  %v8458 = vpop.permute.xlu0 %8457
  %8459 = vrot.lane.b32.xlu0 %v8332, 40
  %v8460 = vpop.permute.xlu0 %8459
  %8525 = vst.msk [vmem:[#allocation2] sm:$0xf] %vm3005, %v8334
  %v8526 = vld [vmem:[#allocation2 + $0x4] sm:$0xf]
  %v8527 = vsel %vm3008, %v8336, %v8526
  %8528 = vst [vmem:[#allocation2 + $0x4] sm:$0xf] %v8527
  %8529 = vst.msk [vmem:[#allocation2 + $0x8] sm:$0xf] %vm3005, %v8338
  %v8530 = vld [vmem:[#allocation2 + $0xc] sm:$0xf]
  %v8531 = vsel %vm3008, %v8340, %v8530
  %8532 = vst [vmem:[#allocation2 + $0xc] sm:$0xf] %v8531
  %8533 = vst.msk [vmem:[#allocation2 + $0x10] sm:$0xf] %vm3005, %v8342
  %v8534 = vld [vmem:[#allocation2 + $0x14] sm:$0xf]
  %v8535 = vsel %vm3008, %v8344, %v8534
  %8536 = vst [vmem:[#allocation2 + $0x14] sm:$0xf] %v8535
  %8537 = vst.msk [vmem:[#allocation2 + $0x18] sm:$0xf] %vm3005, %v8346
  %v8538 = vld [vmem:[#allocation2 + $0x1c] sm:$0xf]
  %v8539 = vsel %vm3008, %v8348, %v8538
  %8540 = vst [vmem:[#allocation2 + $0x1c] sm:$0xf] %v8539
  %8541 = vst.msk [vmem:[#allocation2 + $0x20] sm:$0xf] %vm3005, %v8350
  %v8542 = vld [vmem:[#allocation2 + $0x24] sm:$0xf]
  %v8543 = vsel %vm3008, %v8352, %v8542
  %8544 = vst [vmem:[#allocation2 + $0x24] sm:$0xf] %v8543
  %8545 = vst.msk [vmem:[#allocation2 + $0x28] sm:$0xf] %vm3005, %v8354
  %v8546 = vld [vmem:[#allocation2 + $0x2c] sm:$0xf]
  %v8547 = vsel %vm3008, %v8356, %v8546
  %8548 = vst [vmem:[#allocation2 + $0x2c] sm:$0xf] %v8547
  %8549 = vst.msk [vmem:[#allocation2 + $0x30] sm:$0xf] %vm3005, %v8358
  %v8550 = vld [vmem:[#allocation2 + $0x34] sm:$0xf]
  %v8551 = vsel %vm3008, %v8360, %v8550
  %8552 = vst [vmem:[#allocation2 + $0x34] sm:$0xf] %v8551
  %8553 = vst.msk [vmem:[#allocation2 + $0x38] sm:$0xf] %vm3005, %v8362
  %v8554 = vld [vmem:[#allocation2 + $0x3c] sm:$0xf]
  %v8555 = vsel %vm3008, %v8364, %v8554
  %8556 = vst [vmem:[#allocation2 + $0x3c] sm:$0xf] %v8555
  %8557 = vst.msk [vmem:[#allocation2 + $0x40] sm:$0xf] %vm3005, %v8366
  %v8558 = vld [vmem:[#allocation2 + $0x44] sm:$0xf]
  %v8559 = vsel %vm3008, %v8368, %v8558
  %8560 = vst [vmem:[#allocation2 + $0x44] sm:$0xf] %v8559
  %8561 = vst.msk [vmem:[#allocation2 + $0x48] sm:$0xf] %vm3005, %v8370
  %v8562 = vld [vmem:[#allocation2 + $0x4c] sm:$0xf]
  %v8563 = vsel %vm3008, %v8372, %v8562
  %8564 = vst [vmem:[#allocation2 + $0x4c] sm:$0xf] %v8563
  %8565 = vst.msk [vmem:[#allocation2 + $0x50] sm:$0xf] %vm3005, %v8374
  %v8566 = vld [vmem:[#allocation2 + $0x54] sm:$0xf]
  %v8567 = vsel %vm3008, %v8376, %v8566
  %8568 = vst [vmem:[#allocation2 + $0x54] sm:$0xf] %v8567
  %8569 = vst.msk [vmem:[#allocation2 + $0x58] sm:$0xf] %vm3005, %v8378
  %v8570 = vld [vmem:[#allocation2 + $0x5c] sm:$0xf]
  %v8571 = vsel %vm3008, %v8380, %v8570
  %8572 = vst [vmem:[#allocation2 + $0x5c] sm:$0xf] %v8571
  %8573 = vst.msk [vmem:[#allocation2 + $0x60] sm:$0xf] %vm3005, %v8382
  %v8574 = vld [vmem:[#allocation2 + $0x64] sm:$0xf]
  %v8575 = vsel %vm3008, %v8384, %v8574
  %8576 = vst [vmem:[#allocation2 + $0x64] sm:$0xf] %v8575
  %8577 = vst.msk [vmem:[#allocation2 + $0x68] sm:$0xf] %vm3005, %v8386
  %v8578 = vld [vmem:[#allocation2 + $0x6c] sm:$0xf]
  %v8579 = vsel %vm3008, %v8388, %v8578
  %8580 = vst [vmem:[#allocation2 + $0x6c] sm:$0xf] %v8579
  %8581 = vst.msk [vmem:[#allocation2 + $0x70] sm:$0xf] %vm3005, %v8390
  %v8582 = vld [vmem:[#allocation2 + $0x74] sm:$0xf]
  %v8583 = vsel %vm3008, %v8392, %v8582
  %8584 = vst [vmem:[#allocation2 + $0x74] sm:$0xf] %v8583
  %8585 = vst.msk [vmem:[#allocation2 + $0x78] sm:$0xf] %vm3005, %v8394
  %v8586 = vld [vmem:[#allocation2 + $0x7c] sm:$0xf]
  %v8587 = vsel %vm3008, %v8396, %v8586
  %8588 = vst [vmem:[#allocation2 + $0x7c] sm:$0xf] %v8587
  %8589 = vst.msk [vmem:[#allocation2 + $0x80] sm:$0xf] %vm3005, %v8398
  %v8590 = vld [vmem:[#allocation2 + $0x84] sm:$0xf]
  %v8591 = vsel %vm3008, %v8400, %v8590
  %8592 = vst [vmem:[#allocation2 + $0x84] sm:$0xf] %v8591
  %8593 = vst.msk [vmem:[#allocation2 + $0x88] sm:$0xf] %vm3005, %v8402
  %v8594 = vld [vmem:[#allocation2 + $0x8c] sm:$0xf]
  %v8595 = vsel %vm3008, %v8404, %v8594
  %8596 = vst [vmem:[#allocation2 + $0x8c] sm:$0xf] %v8595
  %8597 = vst.msk [vmem:[#allocation2 + $0x90] sm:$0xf] %vm3005, %v8406
  %v8598 = vld [vmem:[#allocation2 + $0x94] sm:$0xf]
  %v8599 = vsel %vm3008, %v8408, %v8598
  %8600 = vst [vmem:[#allocation2 + $0x94] sm:$0xf] %v8599
  %8601 = vst.msk [vmem:[#allocation2 + $0x98] sm:$0xf] %vm3005, %v8410
  %v8602 = vld [vmem:[#allocation2 + $0x9c] sm:$0xf]
  %v8603 = vsel %vm3008, %v8412, %v8602
  %8604 = vst [vmem:[#allocation2 + $0x9c] sm:$0xf] %v8603
  %8605 = vst.msk [vmem:[#allocation2 + $0xa0] sm:$0xf] %vm3005, %v8414
  %v8606 = vld [vmem:[#allocation2 + $0xa4] sm:$0xf]
  %v8607 = vsel %vm3008, %v8416, %v8606
  %8608 = vst [vmem:[#allocation2 + $0xa4] sm:$0xf] %v8607
  %8609 = vst.msk [vmem:[#allocation2 + $0xa8] sm:$0xf] %vm3005, %v8418
  %v8610 = vld [vmem:[#allocation2 + $0xac] sm:$0xf]
  %v8611 = vsel %vm3008, %v8420, %v8610
  %8612 = vst [vmem:[#allocation2 + $0xac] sm:$0xf] %v8611
  %8613 = vst.msk [vmem:[#allocation2 + $0xb0] sm:$0xf] %vm3005, %v8422
  %v8614 = vld [vmem:[#allocation2 + $0xb4] sm:$0xf]
  %v8615 = vsel %vm3008, %v8424, %v8614
  %8616 = vst [vmem:[#allocation2 + $0xb4] sm:$0xf] %v8615
  %8617 = vst.msk [vmem:[#allocation2 + $0xb8] sm:$0xf] %vm3005, %v8426
  %v8618 = vld [vmem:[#allocation2 + $0xbc] sm:$0xf]
  %v8619 = vsel %vm3008, %v8428, %v8618
  %8620 = vst [vmem:[#allocation2 + $0xbc] sm:$0xf] %v8619
  %8621 = vst.msk [vmem:[#allocation2 + $0xc0] sm:$0xf] %vm3005, %v8430
  %v8622 = vld [vmem:[#allocation2 + $0xc4] sm:$0xf]
  %v8623 = vsel %vm3008, %v8432, %v8622
  %8624 = vst [vmem:[#allocation2 + $0xc4] sm:$0xf] %v8623
  %8625 = vst.msk [vmem:[#allocation2 + $0xc8] sm:$0xf] %vm3005, %v8434
  %v8626 = vld [vmem:[#allocation2 + $0xcc] sm:$0xf]
  %v8627 = vsel %vm3008, %v8436, %v8626
  %8628 = vst [vmem:[#allocation2 + $0xcc] sm:$0xf] %v8627
  %8629 = vst.msk [vmem:[#allocation2 + $0xd0] sm:$0xf] %vm3005, %v8438
  %v8630 = vld [vmem:[#allocation2 + $0xd4] sm:$0xf]
  %v8631 = vsel %vm3008, %v8440, %v8630
  %8632 = vst [vmem:[#allocation2 + $0xd4] sm:$0xf] %v8631
  %8633 = vst.msk [vmem:[#allocation2 + $0xd8] sm:$0xf] %vm3005, %v8442
  %v8634 = vld [vmem:[#allocation2 + $0xdc] sm:$0xf]
  %v8635 = vsel %vm3008, %v8444, %v8634
  %8636 = vst [vmem:[#allocation2 + $0xdc] sm:$0xf] %v8635
  %8637 = vst.msk [vmem:[#allocation2 + $0xe0] sm:$0xf] %vm3005, %v8446
  %v8638 = vld [vmem:[#allocation2 + $0xe4] sm:$0xf]
  %v8639 = vsel %vm3008, %v8448, %v8638
  %8640 = vst [vmem:[#allocation2 + $0xe4] sm:$0xf] %v8639
  %8641 = vst.msk [vmem:[#allocation2 + $0xe8] sm:$0xf] %vm3005, %v8450
  %v8642 = vld [vmem:[#allocation2 + $0xec] sm:$0xf]
  %v8643 = vsel %vm3008, %v8452, %v8642
  %8644 = vst [vmem:[#allocation2 + $0xec] sm:$0xf] %v8643
  %8645 = vst.msk [vmem:[#allocation2 + $0xf0] sm:$0xf] %vm3005, %v8454
  %v8646 = vld [vmem:[#allocation2 + $0xf4] sm:$0xf]
  %v8647 = vsel %vm3008, %v8456, %v8646
  %8648 = vst [vmem:[#allocation2 + $0xf4] sm:$0xf] %v8647
  %8649 = vst.msk [vmem:[#allocation2 + $0xf8] sm:$0xf] %vm3005, %v8458
  %v8650 = vld [vmem:[#allocation2 + $0xfc] sm:$0xf]
  %v8651 = vsel %vm3008, %v8460, %v8650
  %8652 = vst [vmem:[#allocation2 + $0xfc] sm:$0xf] %v8651
  %8653 = vst.msk [vmem:[%s3136] sm:$0xf] %vm3137, 0
  %8654 = vst.msk [vmem:[%s3136 + $0x4] sm:$0xf] %vm3137, 0
  %8655 = vst.msk [vmem:[%s3136 + $0x80] sm:$0xf] %vm3137, 0
  %8656 = vst.msk [vmem:[%s3136 + $0x84] sm:$0xf] %vm3137, 0
  %v8657 = vld [vmem:[#allocation2] sm:$0x1]
  %v8658 = vsel %vm3143, 0, %v8657
  %8659 = vst [vmem:[#allocation2] sm:$0x1] %v8658
  %v8660 = vld [vmem:[#allocation2 + $0x8] sm:$0x1]
  %v8661 = vsel %vm3143, 0, %v8660
  %8662 = vst [vmem:[#allocation2 + $0x8] sm:$0x1] %v8661
  %v8663 = vld [vmem:[#allocation2 + $0x10] sm:$0x1]
  %v8664 = vsel %vm3143, 0, %v8663
  %8665 = vst [vmem:[#allocation2 + $0x10] sm:$0x1] %v8664
  %v8666 = vld [vmem:[#allocation2 + $0x18] sm:$0x1]
  %v8667 = vsel %vm3143, 0, %v8666
  %8668 = vst [vmem:[#allocation2 + $0x18] sm:$0x1] %v8667
  %v8669 = vld [vmem:[#allocation2 + $0x20] sm:$0x1]
  %v8670 = vsel %vm3143, 0, %v8669
  %8671 = vst [vmem:[#allocation2 + $0x20] sm:$0x1] %v8670
  %v8672 = vld [vmem:[#allocation2 + $0x28] sm:$0x1]
  %v8673 = vsel %vm3143, 0, %v8672
  %8674 = vst [vmem:[#allocation2 + $0x28] sm:$0x1] %v8673
  %v8675 = vld [vmem:[#allocation2 + $0x30] sm:$0x1]
  %v8676 = vsel %vm3143, 0, %v8675
  %8677 = vst [vmem:[#allocation2 + $0x30] sm:$0x1] %v8676
  %v8678 = vld [vmem:[#allocation2 + $0x38] sm:$0x1]
  %v8679 = vsel %vm3143, 0, %v8678
  %8680 = vst [vmem:[#allocation2 + $0x38] sm:$0x1] %v8679
  %v8681 = vld [vmem:[#allocation2 + $0x40] sm:$0x1]
  %v8682 = vsel %vm3143, 0, %v8681
  %8683 = vst [vmem:[#allocation2 + $0x40] sm:$0x1] %v8682
  %v8684 = vld [vmem:[#allocation2 + $0x48] sm:$0x1]
  %v8685 = vsel %vm3143, 0, %v8684
  %8686 = vst [vmem:[#allocation2 + $0x48] sm:$0x1] %v8685
  %v8687 = vld [vmem:[#allocation2 + $0x50] sm:$0x1]
  %v8688 = vsel %vm3143, 0, %v8687
  %8689 = vst [vmem:[#allocation2 + $0x50] sm:$0x1] %v8688
  %v8690 = vld [vmem:[#allocation2 + $0x58] sm:$0x1]
  %v8691 = vsel %vm3143, 0, %v8690
  %8692 = vst [vmem:[#allocation2 + $0x58] sm:$0x1] %v8691
  %v8693 = vld [vmem:[#allocation2 + $0x60] sm:$0x1]
  %v8694 = vsel %vm3143, 0, %v8693
  %8695 = vst [vmem:[#allocation2 + $0x60] sm:$0x1] %v8694
  %v8696 = vld [vmem:[#allocation2 + $0x68] sm:$0x1]
  %v8697 = vsel %vm3143, 0, %v8696
  %8698 = vst [vmem:[#allocation2 + $0x68] sm:$0x1] %v8697
  %v8699 = vld [vmem:[#allocation2 + $0x70] sm:$0x1]
  %v8700 = vsel %vm3143, 0, %v8699
  %8701 = vst [vmem:[#allocation2 + $0x70] sm:$0x1] %v8700
  %v8702 = vld [vmem:[#allocation2 + $0x78] sm:$0x1]
  %v8703 = vsel %vm3143, 0, %v8702
  %8704 = vst [vmem:[#allocation2 + $0x78] sm:$0x1] %v8703
  %v8705 = vld [vmem:[#allocation2 + $0x80] sm:$0x1]
  %v8706 = vsel %vm3143, 0, %v8705
  %8707 = vst [vmem:[#allocation2 + $0x80] sm:$0x1] %v8706
  %v8708 = vld [vmem:[#allocation2 + $0x88] sm:$0x1]
  %v8709 = vsel %vm3143, 0, %v8708
  %8710 = vst [vmem:[#allocation2 + $0x88] sm:$0x1] %v8709
  %v8711 = vld [vmem:[#allocation2 + $0x90] sm:$0x1]
  %v8712 = vsel %vm3143, 0, %v8711
  %8713 = vst [vmem:[#allocation2 + $0x90] sm:$0x1] %v8712
  %v8714 = vld [vmem:[#allocation2 + $0x98] sm:$0x1]
  %v8715 = vsel %vm3143, 0, %v8714
  %8716 = vst [vmem:[#allocation2 + $0x98] sm:$0x1] %v8715
  %v8717 = vld [vmem:[#allocation2 + $0xa0] sm:$0x1]
  %v8718 = vsel %vm3143, 0, %v8717
  %8719 = vst [vmem:[#allocation2 + $0xa0] sm:$0x1] %v8718
  %v8720 = vld [vmem:[#allocation2 + $0xa8] sm:$0x1]
  %v8721 = vsel %vm3143, 0, %v8720
  %8722 = vst [vmem:[#allocation2 + $0xa8] sm:$0x1] %v8721
  %v8723 = vld [vmem:[#allocation2 + $0xb0] sm:$0x1]
  %v8724 = vsel %vm3143, 0, %v8723
  %8725 = vst [vmem:[#allocation2 + $0xb0] sm:$0x1] %v8724
  %v8726 = vld [vmem:[#allocation2 + $0xb8] sm:$0x1]
  %v8727 = vsel %vm3143, 0, %v8726
  %8728 = vst [vmem:[#allocation2 + $0xb8] sm:$0x1] %v8727
  %v8729 = vld [vmem:[#allocation2 + $0xc0] sm:$0x1]
  %v8730 = vsel %vm3143, 0, %v8729
  %8731 = vst [vmem:[#allocation2 + $0xc0] sm:$0x1] %v8730
  %v8732 = vld [vmem:[#allocation2 + $0xc8] sm:$0x1]
  %v8733 = vsel %vm3143, 0, %v8732
  %8734 = vst [vmem:[#allocation2 + $0xc8] sm:$0x1] %v8733
  %v8735 = vld [vmem:[#allocation2 + $0xd0] sm:$0x1]
  %v8736 = vsel %vm3143, 0, %v8735
  %8737 = vst [vmem:[#allocation2 + $0xd0] sm:$0x1] %v8736
  %v8738 = vld [vmem:[#allocation2 + $0xd8] sm:$0x1]
  %v8739 = vsel %vm3143, 0, %v8738
  %8740 = vst [vmem:[#allocation2 + $0xd8] sm:$0x1] %v8739
  %v8741 = vld [vmem:[#allocation2 + $0xe0] sm:$0x1]
  %v8742 = vsel %vm3143, 0, %v8741
  %8743 = vst [vmem:[#allocation2 + $0xe0] sm:$0x1] %v8742
  %v8744 = vld [vmem:[#allocation2 + $0xe8] sm:$0x1]
  %v8745 = vsel %vm3143, 0, %v8744
  %8746 = vst [vmem:[#allocation2 + $0xe8] sm:$0x1] %v8745
  %v8747 = vld [vmem:[#allocation2 + $0xf0] sm:$0x1]
  %v8748 = vsel %vm3143, 0, %v8747
  %8749 = vst [vmem:[#allocation2 + $0xf0] sm:$0x1] %v8748
  %v8750 = vld [vmem:[#allocation2 + $0xf8] sm:$0x1]
  %v8751 = vsel %vm3143, 0, %v8750
  %8752 = vst [vmem:[#allocation2 + $0xf8] sm:$0x1] %v8751
  %8753 = vrot.lane.b32.xlu0 %v5953, 48
  %v8754 = vpop.permute.xlu0 %8753
  %8755 = vrot.lane.b32.xlu0 %v5962, 48
  %v8756 = vpop.permute.xlu0 %8755
  %8757 = vrot.lane.b32.xlu0 %v5969, 48
  %v8758 = vpop.permute.xlu0 %8757
  %8759 = vrot.lane.b32.xlu0 %v5978, 48
  %v8760 = vpop.permute.xlu0 %8759
  %8761 = vrot.lane.b32.xlu0 %v5985, 48
  %v8762 = vpop.permute.xlu0 %8761
  %8763 = vrot.lane.b32.xlu0 %v5994, 48
  %v8764 = vpop.permute.xlu0 %8763
  %8765 = vrot.lane.b32.xlu0 %v6001, 48
  %v8766 = vpop.permute.xlu0 %8765
  %8767 = vrot.lane.b32.xlu0 %v6010, 48
  %v8768 = vpop.permute.xlu0 %8767
  %8769 = vrot.lane.b32.xlu0 %v6017, 48
  %v8770 = vpop.permute.xlu0 %8769
  %8771 = vrot.lane.b32.xlu0 %v6026, 48
  %v8772 = vpop.permute.xlu0 %8771
  %8773 = vrot.lane.b32.xlu0 %v6033, 48
  %v8774 = vpop.permute.xlu0 %8773
  %8775 = vrot.lane.b32.xlu0 %v6042, 48
  %v8776 = vpop.permute.xlu0 %8775
  %8777 = vrot.lane.b32.xlu0 %v6049, 48
  %v8778 = vpop.permute.xlu0 %8777
  %8779 = vrot.lane.b32.xlu0 %v6058, 48
  %v8780 = vpop.permute.xlu0 %8779
  %8781 = vrot.lane.b32.xlu0 %v6065, 48
  %v8782 = vpop.permute.xlu0 %8781
  %8783 = vrot.lane.b32.xlu0 %v6074, 48
  %v8784 = vpop.permute.xlu0 %8783
  %8785 = vrot.lane.b32.xlu0 %v6081, 48
  %v8786 = vpop.permute.xlu0 %8785
  %8787 = vrot.lane.b32.xlu0 %v6090, 48
  %v8788 = vpop.permute.xlu0 %8787
  %8789 = vrot.lane.b32.xlu0 %v6097, 48
  %v8790 = vpop.permute.xlu0 %8789
  %8791 = vrot.lane.b32.xlu0 %v6106, 48
  %v8792 = vpop.permute.xlu0 %8791
  %8793 = vrot.lane.b32.xlu0 %v6113, 48
  %v8794 = vpop.permute.xlu0 %8793
  %8795 = vrot.lane.b32.xlu0 %v6122, 48
  %v8796 = vpop.permute.xlu0 %8795
  %8797 = vrot.lane.b32.xlu0 %v6129, 48
  %v8798 = vpop.permute.xlu0 %8797
  %8799 = vrot.lane.b32.xlu0 %v6138, 48
  %v8800 = vpop.permute.xlu0 %8799
  %8801 = vrot.lane.b32.xlu0 %v6145, 48
  %v8802 = vpop.permute.xlu0 %8801
  %8803 = vrot.lane.b32.xlu0 %v6154, 48
  %v8804 = vpop.permute.xlu0 %8803
  %8805 = vrot.lane.b32.xlu0 %v6161, 48
  %v8806 = vpop.permute.xlu0 %8805
  %8807 = vrot.lane.b32.xlu0 %v6170, 48
  %v8808 = vpop.permute.xlu0 %8807
  %8809 = vrot.lane.b32.xlu0 %v7617, 48
  %v8810 = vpop.permute.xlu0 %8809
  %8811 = vrot.lane.b32.xlu0 %v7626, 48
  %v8812 = vpop.permute.xlu0 %8811
  %8813 = vrot.lane.b32.xlu0 %v6193, 48
  %v8814 = vpop.permute.xlu0 %8813
  %8815 = vrot.lane.b32.xlu0 %v6202, 48
  %v8816 = vpop.permute.xlu0 %8815
  %8817 = vrot.lane.b32.xlu0 %v6209, 48
  %v8818 = vpop.permute.xlu0 %8817
  %8819 = vrot.lane.b32.xlu0 %v6218, 48
  %v8820 = vpop.permute.xlu0 %8819
  %8821 = vrot.lane.b32.xlu0 %v6225, 48
  %v8822 = vpop.permute.xlu0 %8821
  %8823 = vrot.lane.b32.xlu0 %v6234, 48
  %v8824 = vpop.permute.xlu0 %8823
  %8825 = vrot.lane.b32.xlu0 %v6241, 48
  %v8826 = vpop.permute.xlu0 %8825
  %8827 = vrot.lane.b32.xlu0 %v6250, 48
  %v8828 = vpop.permute.xlu0 %8827
  %8829 = vrot.lane.b32.xlu0 %v6257, 48
  %v8830 = vpop.permute.xlu0 %8829
  %8831 = vrot.lane.b32.xlu0 %v6266, 48
  %v8832 = vpop.permute.xlu0 %8831
  %8833 = vrot.lane.b32.xlu0 %v6273, 48
  %v8834 = vpop.permute.xlu0 %8833
  %8835 = vrot.lane.b32.xlu0 %v6282, 48
  %v8836 = vpop.permute.xlu0 %8835
  %8837 = vrot.lane.b32.xlu0 %v6289, 48
  %v8838 = vpop.permute.xlu0 %8837
  %8839 = vrot.lane.b32.xlu0 %v6298, 48
  %v8840 = vpop.permute.xlu0 %8839
  %8841 = vrot.lane.b32.xlu0 %v6305, 48
  %v8842 = vpop.permute.xlu0 %8841
  %8843 = vrot.lane.b32.xlu0 %v6314, 48
  %v8844 = vpop.permute.xlu0 %8843
  %8845 = vrot.lane.b32.xlu0 %v6321, 48
  %v8846 = vpop.permute.xlu0 %8845
  %8847 = vrot.lane.b32.xlu0 %v6330, 48
  %v8848 = vpop.permute.xlu0 %8847
  %8849 = vrot.lane.b32.xlu0 %v6337, 48
  %v8850 = vpop.permute.xlu0 %8849
  %8851 = vrot.lane.b32.xlu0 %v6346, 48
  %v8852 = vpop.permute.xlu0 %8851
  %8853 = vrot.lane.b32.xlu0 %v6353, 48
  %v8854 = vpop.permute.xlu0 %8853
  %8855 = vrot.lane.b32.xlu0 %v6362, 48
  %v8856 = vpop.permute.xlu0 %8855
  %8857 = vrot.lane.b32.xlu0 %v6369, 48
  %v8858 = vpop.permute.xlu0 %8857
  %8859 = vrot.lane.b32.xlu0 %v6378, 48
  %v8860 = vpop.permute.xlu0 %8859
  %8861 = vrot.lane.b32.xlu0 %v6385, 48
  %v8862 = vpop.permute.xlu0 %8861
  %8863 = vrot.lane.b32.xlu0 %v6394, 48
  %v8864 = vpop.permute.xlu0 %8863
  %8865 = vrot.lane.b32.xlu0 %v6401, 48
  %v8866 = vpop.permute.xlu0 %8865
  %8867 = vrot.lane.b32.xlu0 %v6410, 48
  %v8868 = vpop.permute.xlu0 %8867
  %8869 = vrot.lane.b32.xlu0 %v7633, 48
  %v8870 = vpop.permute.xlu0 %8869
  %8871 = vrot.lane.b32.xlu0 %v7642, 48
  %v8872 = vpop.permute.xlu0 %8871
  %v8933 = vld [vmem:[#allocation2] sm:$0xf]
  %v8934 = vsel %vm3421, %v8754, %v8933
  %8935 = vst [vmem:[#allocation2] sm:$0xf] %v8934
  %8936 = vst.msk [vmem:[#allocation2 + $0x4] sm:$0xf] %vm3137, %v8756
  %v8937 = vld [vmem:[#allocation2 + $0x8] sm:$0xf]
  %v8938 = vsel %vm3421, %v8758, %v8937
  %8939 = vst [vmem:[#allocation2 + $0x8] sm:$0xf] %v8938
  %8940 = vst.msk [vmem:[#allocation2 + $0xc] sm:$0xf] %vm3137, %v8760
  %v8941 = vld [vmem:[#allocation2 + $0x10] sm:$0xf]
  %v8942 = vsel %vm3421, %v8762, %v8941
  %8943 = vst [vmem:[#allocation2 + $0x10] sm:$0xf] %v8942
  %8944 = vst.msk [vmem:[#allocation2 + $0x14] sm:$0xf] %vm3137, %v8764
  %v8945 = vld [vmem:[#allocation2 + $0x18] sm:$0xf]
  %v8946 = vsel %vm3421, %v8766, %v8945
  %8947 = vst [vmem:[#allocation2 + $0x18] sm:$0xf] %v8946
  %8948 = vst.msk [vmem:[#allocation2 + $0x1c] sm:$0xf] %vm3137, %v8768
  %v8949 = vld [vmem:[#allocation2 + $0x20] sm:$0xf]
  %v8950 = vsel %vm3421, %v8770, %v8949
  %8951 = vst [vmem:[#allocation2 + $0x20] sm:$0xf] %v8950
  %8952 = vst.msk [vmem:[#allocation2 + $0x24] sm:$0xf] %vm3137, %v8772
  %v8953 = vld [vmem:[#allocation2 + $0x28] sm:$0xf]
  %v8954 = vsel %vm3421, %v8774, %v8953
  %8955 = vst [vmem:[#allocation2 + $0x28] sm:$0xf] %v8954
  %8956 = vst.msk [vmem:[#allocation2 + $0x2c] sm:$0xf] %vm3137, %v8776
  %v8957 = vld [vmem:[#allocation2 + $0x30] sm:$0xf]
  %v8958 = vsel %vm3421, %v8778, %v8957
  %8959 = vst [vmem:[#allocation2 + $0x30] sm:$0xf] %v8958
  %8960 = vst.msk [vmem:[#allocation2 + $0x34] sm:$0xf] %vm3137, %v8780
  %v8961 = vld [vmem:[#allocation2 + $0x38] sm:$0xf]
  %v8962 = vsel %vm3421, %v8782, %v8961
  %8963 = vst [vmem:[#allocation2 + $0x38] sm:$0xf] %v8962
  %8964 = vst.msk [vmem:[#allocation2 + $0x3c] sm:$0xf] %vm3137, %v8784
  %v8965 = vld [vmem:[#allocation2 + $0x40] sm:$0xf]
  %v8966 = vsel %vm3421, %v8786, %v8965
  %8967 = vst [vmem:[#allocation2 + $0x40] sm:$0xf] %v8966
  %8968 = vst.msk [vmem:[#allocation2 + $0x44] sm:$0xf] %vm3137, %v8788
  %v8969 = vld [vmem:[#allocation2 + $0x48] sm:$0xf]
  %v8970 = vsel %vm3421, %v8790, %v8969
  %8971 = vst [vmem:[#allocation2 + $0x48] sm:$0xf] %v8970
  %8972 = vst.msk [vmem:[#allocation2 + $0x4c] sm:$0xf] %vm3137, %v8792
  %v8973 = vld [vmem:[#allocation2 + $0x50] sm:$0xf]
  %v8974 = vsel %vm3421, %v8794, %v8973
  %8975 = vst [vmem:[#allocation2 + $0x50] sm:$0xf] %v8974
  %8976 = vst.msk [vmem:[#allocation2 + $0x54] sm:$0xf] %vm3137, %v8796
  %v8977 = vld [vmem:[#allocation2 + $0x58] sm:$0xf]
  %v8978 = vsel %vm3421, %v8798, %v8977
  %8979 = vst [vmem:[#allocation2 + $0x58] sm:$0xf] %v8978
  %8980 = vst.msk [vmem:[#allocation2 + $0x5c] sm:$0xf] %vm3137, %v8800
  %v8981 = vld [vmem:[#allocation2 + $0x60] sm:$0xf]
  %v8982 = vsel %vm3421, %v8802, %v8981
  %8983 = vst [vmem:[#allocation2 + $0x60] sm:$0xf] %v8982
  %8984 = vst.msk [vmem:[#allocation2 + $0x64] sm:$0xf] %vm3137, %v8804
  %v8985 = vld [vmem:[#allocation2 + $0x68] sm:$0xf]
  %v8986 = vsel %vm3421, %v8806, %v8985
  %8987 = vst [vmem:[#allocation2 + $0x68] sm:$0xf] %v8986
  %8988 = vst.msk [vmem:[#allocation2 + $0x6c] sm:$0xf] %vm3137, %v8808
  %v8989 = vld [vmem:[#allocation2 + $0x70] sm:$0xf]
  %v8990 = vsel %vm3421, %v8810, %v8989
  %8991 = vst [vmem:[#allocation2 + $0x70] sm:$0xf] %v8990
  %8992 = vst.msk [vmem:[#allocation2 + $0x74] sm:$0xf] %vm3137, %v8812
  %v8993 = vld [vmem:[#allocation2 + $0x80] sm:$0xf]
  %v8994 = vsel %vm3421, %v8814, %v8993
  %8995 = vst [vmem:[#allocation2 + $0x80] sm:$0xf] %v8994
  %8996 = vst.msk [vmem:[#allocation2 + $0x84] sm:$0xf] %vm3137, %v8816
  %v8997 = vld [vmem:[#allocation2 + $0x88] sm:$0xf]
  %v8998 = vsel %vm3421, %v8818, %v8997
  %8999 = vst [vmem:[#allocation2 + $0x88] sm:$0xf] %v8998
  %9000 = vst.msk [vmem:[#allocation2 + $0x8c] sm:$0xf] %vm3137, %v8820
  %v9001 = vld [vmem:[#allocation2 + $0x90] sm:$0xf]
  %v9002 = vsel %vm3421, %v8822, %v9001
  %9003 = vst [vmem:[#allocation2 + $0x90] sm:$0xf] %v9002
  %9004 = vst.msk [vmem:[#allocation2 + $0x94] sm:$0xf] %vm3137, %v8824
  %v9005 = vld [vmem:[#allocation2 + $0x98] sm:$0xf]
  %v9006 = vsel %vm3421, %v8826, %v9005
  %9007 = vst [vmem:[#allocation2 + $0x98] sm:$0xf] %v9006
  %9008 = vst.msk [vmem:[#allocation2 + $0x9c] sm:$0xf] %vm3137, %v8828
  %v9009 = vld [vmem:[#allocation2 + $0xa0] sm:$0xf]
  %v9010 = vsel %vm3421, %v8830, %v9009
  %9011 = vst [vmem:[#allocation2 + $0xa0] sm:$0xf] %v9010
  %9012 = vst.msk [vmem:[#allocation2 + $0xa4] sm:$0xf] %vm3137, %v8832
  %v9013 = vld [vmem:[#allocation2 + $0xa8] sm:$0xf]
  %v9014 = vsel %vm3421, %v8834, %v9013
  %9015 = vst [vmem:[#allocation2 + $0xa8] sm:$0xf] %v9014
  %9016 = vst.msk [vmem:[#allocation2 + $0xac] sm:$0xf] %vm3137, %v8836
  %v9017 = vld [vmem:[#allocation2 + $0xb0] sm:$0xf]
  %v9018 = vsel %vm3421, %v8838, %v9017
  %9019 = vst [vmem:[#allocation2 + $0xb0] sm:$0xf] %v9018
  %9020 = vst.msk [vmem:[#allocation2 + $0xb4] sm:$0xf] %vm3137, %v8840
  %v9021 = vld [vmem:[#allocation2 + $0xb8] sm:$0xf]
  %v9022 = vsel %vm3421, %v8842, %v9021
  %9023 = vst [vmem:[#allocation2 + $0xb8] sm:$0xf] %v9022
  %9024 = vst.msk [vmem:[#allocation2 + $0xbc] sm:$0xf] %vm3137, %v8844
  %v9025 = vld [vmem:[#allocation2 + $0xc0] sm:$0xf]
  %v9026 = vsel %vm3421, %v8846, %v9025
  %9027 = vst [vmem:[#allocation2 + $0xc0] sm:$0xf] %v9026
  %9028 = vst.msk [vmem:[#allocation2 + $0xc4] sm:$0xf] %vm3137, %v8848
  %v9029 = vld [vmem:[#allocation2 + $0xc8] sm:$0xf]
  %v9030 = vsel %vm3421, %v8850, %v9029
  %9031 = vst [vmem:[#allocation2 + $0xc8] sm:$0xf] %v9030
  %9032 = vst.msk [vmem:[#allocation2 + $0xcc] sm:$0xf] %vm3137, %v8852
  %v9033 = vld [vmem:[#allocation2 + $0xd0] sm:$0xf]
  %v9034 = vsel %vm3421, %v8854, %v9033
  %9035 = vst [vmem:[#allocation2 + $0xd0] sm:$0xf] %v9034
  %9036 = vst.msk [vmem:[#allocation2 + $0xd4] sm:$0xf] %vm3137, %v8856
  %v9037 = vld [vmem:[#allocation2 + $0xd8] sm:$0xf]
  %v9038 = vsel %vm3421, %v8858, %v9037
  %9039 = vst [vmem:[#allocation2 + $0xd8] sm:$0xf] %v9038
  %9040 = vst.msk [vmem:[#allocation2 + $0xdc] sm:$0xf] %vm3137, %v8860
  %v9041 = vld [vmem:[#allocation2 + $0xe0] sm:$0xf]
  %v9042 = vsel %vm3421, %v8862, %v9041
  %9043 = vst [vmem:[#allocation2 + $0xe0] sm:$0xf] %v9042
  %9044 = vst.msk [vmem:[#allocation2 + $0xe4] sm:$0xf] %vm3137, %v8864
  %v9045 = vld [vmem:[#allocation2 + $0xe8] sm:$0xf]
  %v9046 = vsel %vm3421, %v8866, %v9045
  %9047 = vst [vmem:[#allocation2 + $0xe8] sm:$0xf] %v9046
  %9048 = vst.msk [vmem:[#allocation2 + $0xec] sm:$0xf] %vm3137, %v8868
  %v9049 = vld [vmem:[#allocation2 + $0xf0] sm:$0xf]
  %v9050 = vsel %vm3421, %v8870, %v9049
  %9051 = vst [vmem:[#allocation2 + $0xf0] sm:$0xf] %v9050
  %9052 = vst.msk [vmem:[#allocation2 + $0xf4] sm:$0xf] %vm3137, %v8872
  %9053 = vst.msk [vmem:[%s3136] sm:$0xf] %vm3542, 0
  %9054 = vst.msk [vmem:[%s3136 + $0x4] sm:$0xf] %vm3542, 0
  %9055 = vst.msk [vmem:[%s3136 + $0x80] sm:$0xf] %vm3542, 0
  %9056 = vst.msk [vmem:[%s3136 + $0x84] sm:$0xf] %vm3542, 0
  %9057 = vrot.lane.b32.xlu0 %v5873, 56
  %v9058 = vpop.permute.xlu0 %9057
  %9059 = vrot.lane.b32.xlu0 %v5874, 56
  %v9060 = vpop.permute.xlu0 %9059
  %9061 = vrot.lane.b32.xlu0 %v5875, 56
  %v9062 = vpop.permute.xlu0 %9061
  %9063 = vrot.lane.b32.xlu0 %v5876, 56
  %v9064 = vpop.permute.xlu0 %9063
  %9065 = vrot.lane.b32.xlu0 %v5877, 56
  %v9066 = vpop.permute.xlu0 %9065
  %9067 = vrot.lane.b32.xlu0 %v5878, 56
  %v9068 = vpop.permute.xlu0 %9067
  %9069 = vrot.lane.b32.xlu0 %v5879, 56
  %v9070 = vpop.permute.xlu0 %9069
  %9071 = vrot.lane.b32.xlu0 %v5880, 56
  %v9072 = vpop.permute.xlu0 %9071
  %9073 = vrot.lane.b32.xlu0 %v5881, 56
  %v9074 = vpop.permute.xlu0 %9073
  %9075 = vrot.lane.b32.xlu0 %v5882, 56
  %v9076 = vpop.permute.xlu0 %9075
  %9077 = vrot.lane.b32.xlu0 %v5883, 56
  %v9078 = vpop.permute.xlu0 %9077
  %9079 = vrot.lane.b32.xlu0 %v5884, 56
  %v9080 = vpop.permute.xlu0 %9079
  %9081 = vrot.lane.b32.xlu0 %v5885, 56
  %v9082 = vpop.permute.xlu0 %9081
  %9083 = vrot.lane.b32.xlu0 %v5886, 56
  %v9084 = vpop.permute.xlu0 %9083
  %9085 = vrot.lane.b32.xlu0 %v5887, 56
  %v9086 = vpop.permute.xlu0 %9085
  %9087 = vrot.lane.b32.xlu0 %v5888, 56
  %v9088 = vpop.permute.xlu0 %9087
  %9089 = vrot.lane.b32.xlu0 %v5889, 56
  %v9090 = vpop.permute.xlu0 %9089
  %9091 = vrot.lane.b32.xlu0 %v5890, 56
  %v9092 = vpop.permute.xlu0 %9091
  %9093 = vrot.lane.b32.xlu0 %v5891, 56
  %v9094 = vpop.permute.xlu0 %9093
  %9095 = vrot.lane.b32.xlu0 %v5892, 56
  %v9096 = vpop.permute.xlu0 %9095
  %9097 = vrot.lane.b32.xlu0 %v5893, 56
  %v9098 = vpop.permute.xlu0 %9097
  %9099 = vrot.lane.b32.xlu0 %v5894, 56
  %v9100 = vpop.permute.xlu0 %9099
  %9101 = vrot.lane.b32.xlu0 %v5895, 56
  %v9102 = vpop.permute.xlu0 %9101
  %9103 = vrot.lane.b32.xlu0 %v5896, 56
  %v9104 = vpop.permute.xlu0 %9103
  %9105 = vrot.lane.b32.xlu0 %v5897, 56
  %v9106 = vpop.permute.xlu0 %9105
  %9107 = vrot.lane.b32.xlu0 %v5898, 56
  %v9108 = vpop.permute.xlu0 %9107
  %9109 = vrot.lane.b32.xlu0 %v5899, 56
  %v9110 = vpop.permute.xlu0 %9109
  %9111 = vrot.lane.b32.xlu0 %v5900, 56
  %v9112 = vpop.permute.xlu0 %9111
  %9113 = vrot.lane.b32.xlu0 %v7607, 56
  %v9114 = vpop.permute.xlu0 %9113
  %9115 = vrot.lane.b32.xlu0 %v7608, 56
  %v9116 = vpop.permute.xlu0 %9115
  %9117 = vrot.lane.b32.xlu0 %v5903, 56
  %v9118 = vpop.permute.xlu0 %9117
  %9119 = vrot.lane.b32.xlu0 %v5904, 56
  %v9120 = vpop.permute.xlu0 %9119
  %9121 = vrot.lane.b32.xlu0 %v5905, 56
  %v9122 = vpop.permute.xlu0 %9121
  %9123 = vrot.lane.b32.xlu0 %v5906, 56
  %v9124 = vpop.permute.xlu0 %9123
  %9125 = vrot.lane.b32.xlu0 %v5907, 56
  %v9126 = vpop.permute.xlu0 %9125
  %9127 = vrot.lane.b32.xlu0 %v5908, 56
  %v9128 = vpop.permute.xlu0 %9127
  %9129 = vrot.lane.b32.xlu0 %v5909, 56
  %v9130 = vpop.permute.xlu0 %9129
  %9131 = vrot.lane.b32.xlu0 %v5910, 56
  %v9132 = vpop.permute.xlu0 %9131
  %9133 = vrot.lane.b32.xlu0 %v5911, 56
  %v9134 = vpop.permute.xlu0 %9133
  %9135 = vrot.lane.b32.xlu0 %v5912, 56
  %v9136 = vpop.permute.xlu0 %9135
  %9137 = vrot.lane.b32.xlu0 %v5913, 56
  %v9138 = vpop.permute.xlu0 %9137
  %9139 = vrot.lane.b32.xlu0 %v5914, 56
  %v9140 = vpop.permute.xlu0 %9139
  %9141 = vrot.lane.b32.xlu0 %v5915, 56
  %v9142 = vpop.permute.xlu0 %9141
  %9143 = vrot.lane.b32.xlu0 %v5916, 56
  %v9144 = vpop.permute.xlu0 %9143
  %9145 = vrot.lane.b32.xlu0 %v5917, 56
  %v9146 = vpop.permute.xlu0 %9145
  %9147 = vrot.lane.b32.xlu0 %v5918, 56
  %v9148 = vpop.permute.xlu0 %9147
  %9149 = vrot.lane.b32.xlu0 %v5919, 56
  %v9150 = vpop.permute.xlu0 %9149
  %9151 = vrot.lane.b32.xlu0 %v5920, 56
  %v9152 = vpop.permute.xlu0 %9151
  %9153 = vrot.lane.b32.xlu0 %v5921, 56
  %v9154 = vpop.permute.xlu0 %9153
  %9155 = vrot.lane.b32.xlu0 %v5922, 56
  %v9156 = vpop.permute.xlu0 %9155
  %9157 = vrot.lane.b32.xlu0 %v5923, 56
  %v9158 = vpop.permute.xlu0 %9157
  %9159 = vrot.lane.b32.xlu0 %v5924, 56
  %v9160 = vpop.permute.xlu0 %9159
  %9161 = vrot.lane.b32.xlu0 %v5925, 56
  %v9162 = vpop.permute.xlu0 %9161
  %9163 = vrot.lane.b32.xlu0 %v5926, 56
  %v9164 = vpop.permute.xlu0 %9163
  %9165 = vrot.lane.b32.xlu0 %v5927, 56
  %v9166 = vpop.permute.xlu0 %9165
  %9167 = vrot.lane.b32.xlu0 %v5928, 56
  %v9168 = vpop.permute.xlu0 %9167
  %9169 = vrot.lane.b32.xlu0 %v5929, 56
  %v9170 = vpop.permute.xlu0 %9169
  %9171 = vrot.lane.b32.xlu0 %v5930, 56
  %v9172 = vpop.permute.xlu0 %9171
  %9173 = vrot.lane.b32.xlu0 %v7609, 56
  %v9174 = vpop.permute.xlu0 %9173
  %9175 = vrot.lane.b32.xlu0 %v7610, 56
  %v9176 = vpop.permute.xlu0 %9175
  %9237 = vst.msk [vmem:[#allocation2] sm:$0xf] %vm3542, %v9058
  %9238 = vst.msk [vmem:[#allocation2 + $0x4] sm:$0xf] %vm3542, %v9060
  %9239 = vst.msk [vmem:[#allocation2 + $0x8] sm:$0xf] %vm3542, %v9062
  %9240 = vst.msk [vmem:[#allocation2 + $0xc] sm:$0xf] %vm3542, %v9064
  %9241 = vst.msk [vmem:[#allocation2 + $0x10] sm:$0xf] %vm3542, %v9066
  %9242 = vst.msk [vmem:[#allocation2 + $0x14] sm:$0xf] %vm3542, %v9068
  %9243 = vst.msk [vmem:[#allocation2 + $0x18] sm:$0xf] %vm3542, %v9070
  %9244 = vst.msk [vmem:[#allocation2 + $0x1c] sm:$0xf] %vm3542, %v9072
  %9245 = vst.msk [vmem:[#allocation2 + $0x20] sm:$0xf] %vm3542, %v9074
  %9246 = vst.msk [vmem:[#allocation2 + $0x24] sm:$0xf] %vm3542, %v9076
  %9247 = vst.msk [vmem:[#allocation2 + $0x28] sm:$0xf] %vm3542, %v9078
  %9248 = vst.msk [vmem:[#allocation2 + $0x2c] sm:$0xf] %vm3542, %v9080
  %9249 = vst.msk [vmem:[#allocation2 + $0x30] sm:$0xf] %vm3542, %v9082
  %9250 = vst.msk [vmem:[#allocation2 + $0x34] sm:$0xf] %vm3542, %v9084
  %9251 = vst.msk [vmem:[#allocation2 + $0x38] sm:$0xf] %vm3542, %v9086
  %9252 = vst.msk [vmem:[#allocation2 + $0x3c] sm:$0xf] %vm3542, %v9088
  %9253 = vst.msk [vmem:[#allocation2 + $0x40] sm:$0xf] %vm3542, %v9090
  %9254 = vst.msk [vmem:[#allocation2 + $0x44] sm:$0xf] %vm3542, %v9092
  %9255 = vst.msk [vmem:[#allocation2 + $0x48] sm:$0xf] %vm3542, %v9094
  %9256 = vst.msk [vmem:[#allocation2 + $0x4c] sm:$0xf] %vm3542, %v9096
  %9257 = vst.msk [vmem:[#allocation2 + $0x50] sm:$0xf] %vm3542, %v9098
  %9258 = vst.msk [vmem:[#allocation2 + $0x54] sm:$0xf] %vm3542, %v9100
  %9259 = vst.msk [vmem:[#allocation2 + $0x58] sm:$0xf] %vm3542, %v9102
  %9260 = vst.msk [vmem:[#allocation2 + $0x5c] sm:$0xf] %vm3542, %v9104
  %9261 = vst.msk [vmem:[#allocation2 + $0x60] sm:$0xf] %vm3542, %v9106
  %9262 = vst.msk [vmem:[#allocation2 + $0x64] sm:$0xf] %vm3542, %v9108
  %9263 = vst.msk [vmem:[#allocation2 + $0x68] sm:$0xf] %vm3542, %v9110
  %9264 = vst.msk [vmem:[#allocation2 + $0x6c] sm:$0xf] %vm3542, %v9112
  %9265 = vst.msk [vmem:[#allocation2 + $0x70] sm:$0xf] %vm3542, %v9114
  %9266 = vst.msk [vmem:[#allocation2 + $0x74] sm:$0xf] %vm3542, %v9116
  %9267 = vst.msk [vmem:[#allocation2 + $0x80] sm:$0xf] %vm3542, %v9118
  %9268 = vst.msk [vmem:[#allocation2 + $0x84] sm:$0xf] %vm3542, %v9120
  %9269 = vst.msk [vmem:[#allocation2 + $0x88] sm:$0xf] %vm3542, %v9122
  %9270 = vst.msk [vmem:[#allocation2 + $0x8c] sm:$0xf] %vm3542, %v9124
  %9271 = vst.msk [vmem:[#allocation2 + $0x90] sm:$0xf] %vm3542, %v9126
  %9272 = vst.msk [vmem:[#allocation2 + $0x94] sm:$0xf] %vm3542, %v9128
  %9273 = vst.msk [vmem:[#allocation2 + $0x98] sm:$0xf] %vm3542, %v9130
  %9274 = vst.msk [vmem:[#allocation2 + $0x9c] sm:$0xf] %vm3542, %v9132
  %9275 = vst.msk [vmem:[#allocation2 + $0xa0] sm:$0xf] %vm3542, %v9134
  %9276 = vst.msk [vmem:[#allocation2 + $0xa4] sm:$0xf] %vm3542, %v9136
  %9277 = vst.msk [vmem:[#allocation2 + $0xa8] sm:$0xf] %vm3542, %v9138
  %9278 = vst.msk [vmem:[#allocation2 + $0xac] sm:$0xf] %vm3542, %v9140
  %9279 = vst.msk [vmem:[#allocation2 + $0xb0] sm:$0xf] %vm3542, %v9142
  %9280 = vst.msk [vmem:[#allocation2 + $0xb4] sm:$0xf] %vm3542, %v9144
  %9281 = vst.msk [vmem:[#allocation2 + $0xb8] sm:$0xf] %vm3542, %v9146
  %9282 = vst.msk [vmem:[#allocation2 + $0xbc] sm:$0xf] %vm3542, %v9148
  %9283 = vst.msk [vmem:[#allocation2 + $0xc0] sm:$0xf] %vm3542, %v9150
  %9284 = vst.msk [vmem:[#allocation2 + $0xc4] sm:$0xf] %vm3542, %v9152
  %9285 = vst.msk [vmem:[#allocation2 + $0xc8] sm:$0xf] %vm3542, %v9154
  %9286 = vst.msk [vmem:[#allocation2 + $0xcc] sm:$0xf] %vm3542, %v9156
  %9287 = vst.msk [vmem:[#allocation2 + $0xd0] sm:$0xf] %vm3542, %v9158
  %9288 = vst.msk [vmem:[#allocation2 + $0xd4] sm:$0xf] %vm3542, %v9160
  %9289 = vst.msk [vmem:[#allocation2 + $0xd8] sm:$0xf] %vm3542, %v9162
  %9290 = vst.msk [vmem:[#allocation2 + $0xdc] sm:$0xf] %vm3542, %v9164
  %9291 = vst.msk [vmem:[#allocation2 + $0xe0] sm:$0xf] %vm3542, %v9166
  %9292 = vst.msk [vmem:[#allocation2 + $0xe4] sm:$0xf] %vm3542, %v9168
  %9293 = vst.msk [vmem:[#allocation2 + $0xe8] sm:$0xf] %vm3542, %v9170
  %9294 = vst.msk [vmem:[#allocation2 + $0xec] sm:$0xf] %vm3542, %v9172
  %9295 = vst.msk [vmem:[#allocation2 + $0xf0] sm:$0xf] %vm3542, %v9174
  %9296 = vst.msk [vmem:[#allocation2 + $0xf4] sm:$0xf] %vm3542, %v9176
  %9297 = vst.msk [vmem:[%s3136] sm:$0xf] %vm3787, 0
  %9298 = vst.msk [vmem:[%s3136 + $0x4] sm:$0xf] %vm3787, 0
  %9299 = vst.msk [vmem:[%s3136 + $0x80] sm:$0xf] %vm3787, 0
  %9300 = vst.msk [vmem:[%s3136 + $0x84] sm:$0xf] %vm3787, 0
  %v9301 = vld [vmem:[#allocation2 + $0x4] sm:$0x8]
  %v9302 = vsel %vm3793, 0, %v9301
  %9303 = vst [vmem:[#allocation2 + $0x4] sm:$0x8] %v9302
  %v9304 = vld [vmem:[#allocation2 + $0xc] sm:$0x8]
  %v9305 = vsel %vm3793, 0, %v9304
  %9306 = vst [vmem:[#allocation2 + $0xc] sm:$0x8] %v9305
  %v9307 = vld [vmem:[#allocation2 + $0x14] sm:$0x8]
  %v9308 = vsel %vm3793, 0, %v9307
  %9309 = vst [vmem:[#allocation2 + $0x14] sm:$0x8] %v9308
  %v9310 = vld [vmem:[#allocation2 + $0x1c] sm:$0x8]
  %v9311 = vsel %vm3793, 0, %v9310
  %9312 = vst [vmem:[#allocation2 + $0x1c] sm:$0x8] %v9311
  %v9313 = vld [vmem:[#allocation2 + $0x24] sm:$0x8]
  %v9314 = vsel %vm3793, 0, %v9313
  %9315 = vst [vmem:[#allocation2 + $0x24] sm:$0x8] %v9314
  %v9316 = vld [vmem:[#allocation2 + $0x2c] sm:$0x8]
  %v9317 = vsel %vm3793, 0, %v9316
  %9318 = vst [vmem:[#allocation2 + $0x2c] sm:$0x8] %v9317
  %v9319 = vld [vmem:[#allocation2 + $0x34] sm:$0x8]
  %v9320 = vsel %vm3793, 0, %v9319
  %9321 = vst [vmem:[#allocation2 + $0x34] sm:$0x8] %v9320
  %v9322 = vld [vmem:[#allocation2 + $0x3c] sm:$0x8]
  %v9323 = vsel %vm3793, 0, %v9322
  %9324 = vst [vmem:[#allocation2 + $0x3c] sm:$0x8] %v9323
  %v9325 = vld [vmem:[#allocation2 + $0x44] sm:$0x8]
  %v9326 = vsel %vm3793, 0, %v9325
  %9327 = vst [vmem:[#allocation2 + $0x44] sm:$0x8] %v9326
  %v9328 = vld [vmem:[#allocation2 + $0x4c] sm:$0x8]
  %v9329 = vsel %vm3793, 0, %v9328
  %9330 = vst [vmem:[#allocation2 + $0x4c] sm:$0x8] %v9329
  %v9331 = vld [vmem:[#allocation2 + $0x54] sm:$0x8]
  %v9332 = vsel %vm3793, 0, %v9331
  %9333 = vst [vmem:[#allocation2 + $0x54] sm:$0x8] %v9332
  %v9334 = vld [vmem:[#allocation2 + $0x5c] sm:$0x8]
  %v9335 = vsel %vm3793, 0, %v9334
  %9336 = vst [vmem:[#allocation2 + $0x5c] sm:$0x8] %v9335
  %v9337 = vld [vmem:[#allocation2 + $0x64] sm:$0x8]
  %v9338 = vsel %vm3793, 0, %v9337
  %9339 = vst [vmem:[#allocation2 + $0x64] sm:$0x8] %v9338
  %v9340 = vld [vmem:[#allocation2 + $0x6c] sm:$0x8]
  %v9341 = vsel %vm3793, 0, %v9340
  %9342 = vst [vmem:[#allocation2 + $0x6c] sm:$0x8] %v9341
  %v9343 = vld [vmem:[#allocation2 + $0x74] sm:$0x8]
  %v9344 = vsel %vm3793, 0, %v9343
  %9345 = vst [vmem:[#allocation2 + $0x74] sm:$0x8] %v9344
  %v9346 = vld [vmem:[#allocation2 + $0x7c] sm:$0x8]
  %v9347 = vsel %vm3793, 0, %v9346
  %9348 = vst [vmem:[#allocation2 + $0x7c] sm:$0x8] %v9347
  %v9349 = vld [vmem:[#allocation2 + $0x84] sm:$0x8]
  %v9350 = vsel %vm3793, 0, %v9349
  %9351 = vst [vmem:[#allocation2 + $0x84] sm:$0x8] %v9350
  %v9352 = vld [vmem:[#allocation2 + $0x8c] sm:$0x8]
  %v9353 = vsel %vm3793, 0, %v9352
  %9354 = vst [vmem:[#allocation2 + $0x8c] sm:$0x8] %v9353
  %v9355 = vld [vmem:[#allocation2 + $0x94] sm:$0x8]
  %v9356 = vsel %vm3793, 0, %v9355
  %9357 = vst [vmem:[#allocation2 + $0x94] sm:$0x8] %v9356
  %v9358 = vld [vmem:[#allocation2 + $0x9c] sm:$0x8]
  %v9359 = vsel %vm3793, 0, %v9358
  %9360 = vst [vmem:[#allocation2 + $0x9c] sm:$0x8] %v9359
  %v9361 = vld [vmem:[#allocation2 + $0xa4] sm:$0x8]
  %v9362 = vsel %vm3793, 0, %v9361
  %9363 = vst [vmem:[#allocation2 + $0xa4] sm:$0x8] %v9362
  %v9364 = vld [vmem:[#allocation2 + $0xac] sm:$0x8]
  %v9365 = vsel %vm3793, 0, %v9364
  %9366 = vst [vmem:[#allocation2 + $0xac] sm:$0x8] %v9365
  %v9367 = vld [vmem:[#allocation2 + $0xb4] sm:$0x8]
  %v9368 = vsel %vm3793, 0, %v9367
  %9369 = vst [vmem:[#allocation2 + $0xb4] sm:$0x8] %v9368
  %v9370 = vld [vmem:[#allocation2 + $0xbc] sm:$0x8]
  %v9371 = vsel %vm3793, 0, %v9370
  %9372 = vst [vmem:[#allocation2 + $0xbc] sm:$0x8] %v9371
  %v9373 = vld [vmem:[#allocation2 + $0xc4] sm:$0x8]
  %v9374 = vsel %vm3793, 0, %v9373
  %9375 = vst [vmem:[#allocation2 + $0xc4] sm:$0x8] %v9374
  %v9376 = vld [vmem:[#allocation2 + $0xcc] sm:$0x8]
  %v9377 = vsel %vm3793, 0, %v9376
  %9378 = vst [vmem:[#allocation2 + $0xcc] sm:$0x8] %v9377
  %v9379 = vld [vmem:[#allocation2 + $0xd4] sm:$0x8]
  %v9380 = vsel %vm3793, 0, %v9379
  %9381 = vst [vmem:[#allocation2 + $0xd4] sm:$0x8] %v9380
  %v9382 = vld [vmem:[#allocation2 + $0xdc] sm:$0x8]
  %v9383 = vsel %vm3793, 0, %v9382
  %9384 = vst [vmem:[#allocation2 + $0xdc] sm:$0x8] %v9383
  %v9385 = vld [vmem:[#allocation2 + $0xe4] sm:$0x8]
  %v9386 = vsel %vm3793, 0, %v9385
  %9387 = vst [vmem:[#allocation2 + $0xe4] sm:$0x8] %v9386
  %v9388 = vld [vmem:[#allocation2 + $0xec] sm:$0x8]
  %v9389 = vsel %vm3793, 0, %v9388
  %9390 = vst [vmem:[#allocation2 + $0xec] sm:$0x8] %v9389
  %v9391 = vld [vmem:[#allocation2 + $0xf4] sm:$0x8]
  %v9392 = vsel %vm3793, 0, %v9391
  %9393 = vst [vmem:[#allocation2 + $0xf4] sm:$0x8] %v9392
  %v9394 = vld [vmem:[#allocation2 + $0xfc] sm:$0x8]
  %v9395 = vsel %vm3793, 0, %v9394
  %9396 = vst [vmem:[#allocation2 + $0xfc] sm:$0x8] %v9395
  %9397 = vrot.lane.b32.xlu0 %v6949, 64
  %v9398 = vpop.permute.xlu0 %9397
  %9399 = vrot.lane.b32.xlu0 %v6952, 64
  %v9400 = vpop.permute.xlu0 %9399
  %9401 = vrot.lane.b32.xlu0 %v6958, 64
  %v9402 = vpop.permute.xlu0 %9401
  %9403 = vrot.lane.b32.xlu0 %v6961, 64
  %v9404 = vpop.permute.xlu0 %9403
  %9405 = vrot.lane.b32.xlu0 %v6967, 64
  %v9406 = vpop.permute.xlu0 %9405
  %9407 = vrot.lane.b32.xlu0 %v6970, 64
  %v9408 = vpop.permute.xlu0 %9407
  %9409 = vrot.lane.b32.xlu0 %v6976, 64
  %v9410 = vpop.permute.xlu0 %9409
  %9411 = vrot.lane.b32.xlu0 %v6979, 64
  %v9412 = vpop.permute.xlu0 %9411
  %9413 = vrot.lane.b32.xlu0 %v6985, 64
  %v9414 = vpop.permute.xlu0 %9413
  %9415 = vrot.lane.b32.xlu0 %v6988, 64
  %v9416 = vpop.permute.xlu0 %9415
  %9417 = vrot.lane.b32.xlu0 %v6994, 64
  %v9418 = vpop.permute.xlu0 %9417
  %9419 = vrot.lane.b32.xlu0 %v6997, 64
  %v9420 = vpop.permute.xlu0 %9419
  %9421 = vrot.lane.b32.xlu0 %v7003, 64
  %v9422 = vpop.permute.xlu0 %9421
  %9423 = vrot.lane.b32.xlu0 %v7006, 64
  %v9424 = vpop.permute.xlu0 %9423
  %9425 = vrot.lane.b32.xlu0 %v7012, 64
  %v9426 = vpop.permute.xlu0 %9425
  %9427 = vrot.lane.b32.xlu0 %v7015, 64
  %v9428 = vpop.permute.xlu0 %9427
  %9429 = vrot.lane.b32.xlu0 %v7021, 64
  %v9430 = vpop.permute.xlu0 %9429
  %9431 = vrot.lane.b32.xlu0 %v7024, 64
  %v9432 = vpop.permute.xlu0 %9431
  %9433 = vrot.lane.b32.xlu0 %v7030, 64
  %v9434 = vpop.permute.xlu0 %9433
  %9435 = vrot.lane.b32.xlu0 %v7033, 64
  %v9436 = vpop.permute.xlu0 %9435
  %9437 = vrot.lane.b32.xlu0 %v7039, 64
  %v9438 = vpop.permute.xlu0 %9437
  %9439 = vrot.lane.b32.xlu0 %v7042, 64
  %v9440 = vpop.permute.xlu0 %9439
  %9441 = vrot.lane.b32.xlu0 %v7048, 64
  %v9442 = vpop.permute.xlu0 %9441
  %9443 = vrot.lane.b32.xlu0 %v7051, 64
  %v9444 = vpop.permute.xlu0 %9443
  %9445 = vrot.lane.b32.xlu0 %v7057, 64
  %v9446 = vpop.permute.xlu0 %9445
  %9447 = vrot.lane.b32.xlu0 %v7060, 64
  %v9448 = vpop.permute.xlu0 %9447
  %9449 = vrot.lane.b32.xlu0 %v7066, 64
  %v9450 = vpop.permute.xlu0 %9449
  %9451 = vrot.lane.b32.xlu0 %v7069, 64
  %v9452 = vpop.permute.xlu0 %9451
  %9453 = vrot.lane.b32.xlu0 %v8320, 64
  %v9454 = vpop.permute.xlu0 %9453
  %9455 = vrot.lane.b32.xlu0 %v8323, 64
  %v9456 = vpop.permute.xlu0 %9455
  %9457 = vrot.lane.b32.xlu0 %v7084, 64
  %v9458 = vpop.permute.xlu0 %9457
  %9459 = vrot.lane.b32.xlu0 %v7087, 64
  %v9460 = vpop.permute.xlu0 %9459
  %9461 = vrot.lane.b32.xlu0 %v7093, 64
  %v9462 = vpop.permute.xlu0 %9461
  %9463 = vrot.lane.b32.xlu0 %v7096, 64
  %v9464 = vpop.permute.xlu0 %9463
  %9465 = vrot.lane.b32.xlu0 %v7102, 64
  %v9466 = vpop.permute.xlu0 %9465
  %9467 = vrot.lane.b32.xlu0 %v7105, 64
  %v9468 = vpop.permute.xlu0 %9467
  %9469 = vrot.lane.b32.xlu0 %v7111, 64
  %v9470 = vpop.permute.xlu0 %9469
  %9471 = vrot.lane.b32.xlu0 %v7114, 64
  %v9472 = vpop.permute.xlu0 %9471
  %9473 = vrot.lane.b32.xlu0 %v7120, 64
  %v9474 = vpop.permute.xlu0 %9473
  %9475 = vrot.lane.b32.xlu0 %v7123, 64
  %v9476 = vpop.permute.xlu0 %9475
  %9477 = vrot.lane.b32.xlu0 %v7129, 64
  %v9478 = vpop.permute.xlu0 %9477
  %9479 = vrot.lane.b32.xlu0 %v7132, 64
  %v9480 = vpop.permute.xlu0 %9479
  %9481 = vrot.lane.b32.xlu0 %v7138, 64
  %v9482 = vpop.permute.xlu0 %9481
  %9483 = vrot.lane.b32.xlu0 %v7141, 64
  %v9484 = vpop.permute.xlu0 %9483
  %9485 = vrot.lane.b32.xlu0 %v7147, 64
  %v9486 = vpop.permute.xlu0 %9485
  %9487 = vrot.lane.b32.xlu0 %v7150, 64
  %v9488 = vpop.permute.xlu0 %9487
  %9489 = vrot.lane.b32.xlu0 %v7156, 64
  %v9490 = vpop.permute.xlu0 %9489
  %9491 = vrot.lane.b32.xlu0 %v7159, 64
  %v9492 = vpop.permute.xlu0 %9491
  %9493 = vrot.lane.b32.xlu0 %v7165, 64
  %v9494 = vpop.permute.xlu0 %9493
  %9495 = vrot.lane.b32.xlu0 %v7168, 64
  %v9496 = vpop.permute.xlu0 %9495
  %9497 = vrot.lane.b32.xlu0 %v7174, 64
  %v9498 = vpop.permute.xlu0 %9497
  %9499 = vrot.lane.b32.xlu0 %v7177, 64
  %v9500 = vpop.permute.xlu0 %9499
  %9501 = vrot.lane.b32.xlu0 %v7183, 64
  %v9502 = vpop.permute.xlu0 %9501
  %9503 = vrot.lane.b32.xlu0 %v7186, 64
  %v9504 = vpop.permute.xlu0 %9503
  %9505 = vrot.lane.b32.xlu0 %v7192, 64
  %v9506 = vpop.permute.xlu0 %9505
  %9507 = vrot.lane.b32.xlu0 %v7195, 64
  %v9508 = vpop.permute.xlu0 %9507
  %9509 = vrot.lane.b32.xlu0 %v7201, 64
  %v9510 = vpop.permute.xlu0 %9509
  %9511 = vrot.lane.b32.xlu0 %v7204, 64
  %v9512 = vpop.permute.xlu0 %9511
  %9513 = vrot.lane.b32.xlu0 %v8329, 64
  %v9514 = vpop.permute.xlu0 %9513
  %9515 = vrot.lane.b32.xlu0 %v8332, 64
  %v9516 = vpop.permute.xlu0 %9515
  %9577 = vst.msk [vmem:[#allocation2] sm:$0xf] %vm3787, %v9398
  %v9578 = vld [vmem:[#allocation2 + $0x4] sm:$0xf]
  %v9579 = vsel %vm4072, %v9400, %v9578
  %9580 = vst [vmem:[#allocation2 + $0x4] sm:$0xf] %v9579
  %9581 = vst.msk [vmem:[#allocation2 + $0x8] sm:$0xf] %vm3787, %v9402
  %v9582 = vld [vmem:[#allocation2 + $0xc] sm:$0xf]
  %v9583 = vsel %vm4072, %v9404, %v9582
  %9584 = vst [vmem:[#allocation2 + $0xc] sm:$0xf] %v9583
  %9585 = vst.msk [vmem:[#allocation2 + $0x10] sm:$0xf] %vm3787, %v9406
  %v9586 = vld [vmem:[#allocation2 + $0x14] sm:$0xf]
  %v9587 = vsel %vm4072, %v9408, %v9586
  %9588 = vst [vmem:[#allocation2 + $0x14] sm:$0xf] %v9587
  %9589 = vst.msk [vmem:[#allocation2 + $0x18] sm:$0xf] %vm3787, %v9410
  %v9590 = vld [vmem:[#allocation2 + $0x1c] sm:$0xf]
  %v9591 = vsel %vm4072, %v9412, %v9590
  %9592 = vst [vmem:[#allocation2 + $0x1c] sm:$0xf] %v9591
  %9593 = vst.msk [vmem:[#allocation2 + $0x20] sm:$0xf] %vm3787, %v9414
  %v9594 = vld [vmem:[#allocation2 + $0x24] sm:$0xf]
  %v9595 = vsel %vm4072, %v9416, %v9594
  %9596 = vst [vmem:[#allocation2 + $0x24] sm:$0xf] %v9595
  %9597 = vst.msk [vmem:[#allocation2 + $0x28] sm:$0xf] %vm3787, %v9418
  %v9598 = vld [vmem:[#allocation2 + $0x2c] sm:$0xf]
  %v9599 = vsel %vm4072, %v9420, %v9598
  %9600 = vst [vmem:[#allocation2 + $0x2c] sm:$0xf] %v9599
  %9601 = vst.msk [vmem:[#allocation2 + $0x30] sm:$0xf] %vm3787, %v9422
  %v9602 = vld [vmem:[#allocation2 + $0x34] sm:$0xf]
  %v9603 = vsel %vm4072, %v9424, %v9602
  %9604 = vst [vmem:[#allocation2 + $0x34] sm:$0xf] %v9603
  %9605 = vst.msk [vmem:[#allocation2 + $0x38] sm:$0xf] %vm3787, %v9426
  %v9606 = vld [vmem:[#allocation2 + $0x3c] sm:$0xf]
  %v9607 = vsel %vm4072, %v9428, %v9606
  %9608 = vst [vmem:[#allocation2 + $0x3c] sm:$0xf] %v9607
  %9609 = vst.msk [vmem:[#allocation2 + $0x40] sm:$0xf] %vm3787, %v9430
  %v9610 = vld [vmem:[#allocation2 + $0x44] sm:$0xf]
  %v9611 = vsel %vm4072, %v9432, %v9610
  %9612 = vst [vmem:[#allocation2 + $0x44] sm:$0xf] %v9611
  %9613 = vst.msk [vmem:[#allocation2 + $0x48] sm:$0xf] %vm3787, %v9434
  %v9614 = vld [vmem:[#allocation2 + $0x4c] sm:$0xf]
  %v9615 = vsel %vm4072, %v9436, %v9614
  %9616 = vst [vmem:[#allocation2 + $0x4c] sm:$0xf] %v9615
  %9617 = vst.msk [vmem:[#allocation2 + $0x50] sm:$0xf] %vm3787, %v9438
  %v9618 = vld [vmem:[#allocation2 + $0x54] sm:$0xf]
  %v9619 = vsel %vm4072, %v9440, %v9618
  %9620 = vst [vmem:[#allocation2 + $0x54] sm:$0xf] %v9619
  %9621 = vst.msk [vmem:[#allocation2 + $0x58] sm:$0xf] %vm3787, %v9442
  %v9622 = vld [vmem:[#allocation2 + $0x5c] sm:$0xf]
  %v9623 = vsel %vm4072, %v9444, %v9622
  %9624 = vst [vmem:[#allocation2 + $0x5c] sm:$0xf] %v9623
  %9625 = vst.msk [vmem:[#allocation2 + $0x60] sm:$0xf] %vm3787, %v9446
  %v9626 = vld [vmem:[#allocation2 + $0x64] sm:$0xf]
  %v9627 = vsel %vm4072, %v9448, %v9626
  %9628 = vst [vmem:[#allocation2 + $0x64] sm:$0xf] %v9627
  %9629 = vst.msk [vmem:[#allocation2 + $0x68] sm:$0xf] %vm3787, %v9450
  %v9630 = vld [vmem:[#allocation2 + $0x6c] sm:$0xf]
  %v9631 = vsel %vm4072, %v9452, %v9630
  %9632 = vst [vmem:[#allocation2 + $0x6c] sm:$0xf] %v9631
  %9633 = vst.msk [vmem:[#allocation2 + $0x70] sm:$0xf] %vm3787, %v9454
  %v9634 = vld [vmem:[#allocation2 + $0x74] sm:$0xf]
  %v9635 = vsel %vm4072, %v9456, %v9634
  %9636 = vst [vmem:[#allocation2 + $0x74] sm:$0xf] %v9635
  %9637 = vst.msk [vmem:[#allocation2 + $0x80] sm:$0xf] %vm3787, %v9458
  %v9638 = vld [vmem:[#allocation2 + $0x84] sm:$0xf]
  %v9639 = vsel %vm4072, %v9460, %v9638
  %9640 = vst [vmem:[#allocation2 + $0x84] sm:$0xf] %v9639
  %9641 = vst.msk [vmem:[#allocation2 + $0x88] sm:$0xf] %vm3787, %v9462
  %v9642 = vld [vmem:[#allocation2 + $0x8c] sm:$0xf]
  %v9643 = vsel %vm4072, %v9464, %v9642
  %9644 = vst [vmem:[#allocation2 + $0x8c] sm:$0xf] %v9643
  %9645 = vst.msk [vmem:[#allocation2 + $0x90] sm:$0xf] %vm3787, %v9466
  %v9646 = vld [vmem:[#allocation2 + $0x94] sm:$0xf]
  %v9647 = vsel %vm4072, %v9468, %v9646
  %9648 = vst [vmem:[#allocation2 + $0x94] sm:$0xf] %v9647
  %9649 = vst.msk [vmem:[#allocation2 + $0x98] sm:$0xf] %vm3787, %v9470
  %v9650 = vld [vmem:[#allocation2 + $0x9c] sm:$0xf]
  %v9651 = vsel %vm4072, %v9472, %v9650
  %9652 = vst [vmem:[#allocation2 + $0x9c] sm:$0xf] %v9651
  %9653 = vst.msk [vmem:[#allocation2 + $0xa0] sm:$0xf] %vm3787, %v9474
  %v9654 = vld [vmem:[#allocation2 + $0xa4] sm:$0xf]
  %v9655 = vsel %vm4072, %v9476, %v9654
  %9656 = vst [vmem:[#allocation2 + $0xa4] sm:$0xf] %v9655
  %9657 = vst.msk [vmem:[#allocation2 + $0xa8] sm:$0xf] %vm3787, %v9478
  %v9658 = vld [vmem:[#allocation2 + $0xac] sm:$0xf]
  %v9659 = vsel %vm4072, %v9480, %v9658
  %9660 = vst [vmem:[#allocation2 + $0xac] sm:$0xf] %v9659
  %9661 = vst.msk [vmem:[#allocation2 + $0xb0] sm:$0xf] %vm3787, %v9482
  %v9662 = vld [vmem:[#allocation2 + $0xb4] sm:$0xf]
  %v9663 = vsel %vm4072, %v9484, %v9662
  %9664 = vst [vmem:[#allocation2 + $0xb4] sm:$0xf] %v9663
  %9665 = vst.msk [vmem:[#allocation2 + $0xb8] sm:$0xf] %vm3787, %v9486
  %v9666 = vld [vmem:[#allocation2 + $0xbc] sm:$0xf]
  %v9667 = vsel %vm4072, %v9488, %v9666
  %9668 = vst [vmem:[#allocation2 + $0xbc] sm:$0xf] %v9667
  %9669 = vst.msk [vmem:[#allocation2 + $0xc0] sm:$0xf] %vm3787, %v9490
  %v9670 = vld [vmem:[#allocation2 + $0xc4] sm:$0xf]
  %v9671 = vsel %vm4072, %v9492, %v9670
  %9672 = vst [vmem:[#allocation2 + $0xc4] sm:$0xf] %v9671
  %9673 = vst.msk [vmem:[#allocation2 + $0xc8] sm:$0xf] %vm3787, %v9494
  %v9674 = vld [vmem:[#allocation2 + $0xcc] sm:$0xf]
  %v9675 = vsel %vm4072, %v9496, %v9674
  %9676 = vst [vmem:[#allocation2 + $0xcc] sm:$0xf] %v9675
  %9677 = vst.msk [vmem:[#allocation2 + $0xd0] sm:$0xf] %vm3787, %v9498
  %v9678 = vld [vmem:[#allocation2 + $0xd4] sm:$0xf]
  %v9679 = vsel %vm4072, %v9500, %v9678
  %9680 = vst [vmem:[#allocation2 + $0xd4] sm:$0xf] %v9679
  %9681 = vst.msk [vmem:[#allocation2 + $0xd8] sm:$0xf] %vm3787, %v9502
  %v9682 = vld [vmem:[#allocation2 + $0xdc] sm:$0xf]
  %v9683 = vsel %vm4072, %v9504, %v9682
  %9684 = vst [vmem:[#allocation2 + $0xdc] sm:$0xf] %v9683
  %9685 = vst.msk [vmem:[#allocation2 + $0xe0] sm:$0xf] %vm3787, %v9506
  %v9686 = vld [vmem:[#allocation2 + $0xe4] sm:$0xf]
  %v9687 = vsel %vm4072, %v9508, %v9686
  %9688 = vst [vmem:[#allocation2 + $0xe4] sm:$0xf] %v9687
  %9689 = vst.msk [vmem:[#allocation2 + $0xe8] sm:$0xf] %vm3787, %v9510
  %v9690 = vld [vmem:[#allocation2 + $0xec] sm:$0xf]
  %v9691 = vsel %vm4072, %v9512, %v9690
  %9692 = vst [vmem:[#allocation2 + $0xec] sm:$0xf] %v9691
  %9693 = vst.msk [vmem:[#allocation2 + $0xf0] sm:$0xf] %vm3787, %v9514
  %v9694 = vld [vmem:[#allocation2 + $0xf4] sm:$0xf]
  %v9695 = vsel %vm4072, %v9516, %v9694
  %9696 = vst [vmem:[#allocation2 + $0xf4] sm:$0xf] %v9695
  %v9697 = vld [vmem:[#allocation2] sm:$0xf]
  %v9698 = vld [vmem:[#allocation2 + $0x4] sm:$0xf]
  %v9699 = vld [vmem:[#allocation2 + $0x8] sm:$0xf]
  %v9700 = vld [vmem:[#allocation2 + $0xc] sm:$0xf]
  %v9701 = vld [vmem:[#allocation2 + $0x10] sm:$0xf]
  %v9702 = vld [vmem:[#allocation2 + $0x14] sm:$0xf]
  %v9703 = vld [vmem:[#allocation2 + $0x18] sm:$0xf]
  %v9704 = vld [vmem:[#allocation2 + $0x1c] sm:$0xf]
  %v9705 = vld [vmem:[#allocation2 + $0x20] sm:$0xf]
  %v9706 = vld [vmem:[#allocation2 + $0x24] sm:$0xf]
  %v9707 = vld [vmem:[#allocation2 + $0x28] sm:$0xf]
  %v9708 = vld [vmem:[#allocation2 + $0x2c] sm:$0xf]
  %v9709 = vld [vmem:[#allocation2 + $0x30] sm:$0xf]
  %v9710 = vld [vmem:[#allocation2 + $0x34] sm:$0xf]
  %v9711 = vld [vmem:[#allocation2 + $0x38] sm:$0xf]
  %v9712 = vld [vmem:[#allocation2 + $0x3c] sm:$0xf]
  %v9713 = vld [vmem:[#allocation2 + $0x40] sm:$0xf]
  %v9714 = vld [vmem:[#allocation2 + $0x44] sm:$0xf]
  %v9715 = vld [vmem:[#allocation2 + $0x48] sm:$0xf]
  %v9716 = vld [vmem:[#allocation2 + $0x4c] sm:$0xf]
  %v9717 = vld [vmem:[#allocation2 + $0x50] sm:$0xf]
  %v9718 = vld [vmem:[#allocation2 + $0x54] sm:$0xf]
  %v9719 = vld [vmem:[#allocation2 + $0x58] sm:$0xf]
  %v9720 = vld [vmem:[#allocation2 + $0x5c] sm:$0xf]
  %v9721 = vld [vmem:[#allocation2 + $0x60] sm:$0xf]
  %v9722 = vld [vmem:[#allocation2 + $0x64] sm:$0xf]
  %v9723 = vld [vmem:[#allocation2 + $0x68] sm:$0xf]
  %v9724 = vld [vmem:[#allocation2 + $0x6c] sm:$0xf]
  %v9725 = vld [vmem:[#allocation2 + $0x70] sm:$0xf]
  %v9726 = vld [vmem:[#allocation2 + $0x74] sm:$0xf]
  %v9727 = vld [vmem:[#allocation2 + $0x78] sm:$0xf]
  %v9728 = vld [vmem:[#allocation2 + $0x7c] sm:$0xf]
  %v9729 = vld [vmem:[#allocation2 + $0x80] sm:$0xf]
  %v9730 = vld [vmem:[#allocation2 + $0x84] sm:$0xf]
  %v9731 = vld [vmem:[#allocation2 + $0x88] sm:$0xf]
  %v9732 = vld [vmem:[#allocation2 + $0x8c] sm:$0xf]
  %v9733 = vld [vmem:[#allocation2 + $0x90] sm:$0xf]
  %v9734 = vld [vmem:[#allocation2 + $0x94] sm:$0xf]
  %v9735 = vld [vmem:[#allocation2 + $0x98] sm:$0xf]
  %v9736 = vld [vmem:[#allocation2 + $0x9c] sm:$0xf]
  %v9737 = vld [vmem:[#allocation2 + $0xa0] sm:$0xf]
  %v9738 = vld [vmem:[#allocation2 + $0xa4] sm:$0xf]
  %v9739 = vld [vmem:[#allocation2 + $0xa8] sm:$0xf]
  %v9740 = vld [vmem:[#allocation2 + $0xac] sm:$0xf]
  %v9741 = vld [vmem:[#allocation2 + $0xb0] sm:$0xf]
  %v9742 = vld [vmem:[#allocation2 + $0xb4] sm:$0xf]
  %v9743 = vld [vmem:[#allocation2 + $0xb8] sm:$0xf]
  %v9744 = vld [vmem:[#allocation2 + $0xbc] sm:$0xf]
  %v9745 = vld [vmem:[#allocation2 + $0xc0] sm:$0xf]
  %v9746 = vld [vmem:[#allocation2 + $0xc4] sm:$0xf]
  %v9747 = vld [vmem:[#allocation2 + $0xc8] sm:$0xf]
  %v9748 = vld [vmem:[#allocation2 + $0xcc] sm:$0xf]
  %v9749 = vld [vmem:[#allocation2 + $0xd0] sm:$0xf]
  %v9750 = vld [vmem:[#allocation2 + $0xd4] sm:$0xf]
  %v9751 = vld [vmem:[#allocation2 + $0xd8] sm:$0xf]
  %v9752 = vld [vmem:[#allocation2 + $0xdc] sm:$0xf]
  %v9753 = vld [vmem:[#allocation2 + $0xe0] sm:$0xf]
  %v9754 = vld [vmem:[#allocation2 + $0xe4] sm:$0xf]
  %v9755 = vld [vmem:[#allocation2 + $0xe8] sm:$0xf]
  %v9756 = vld [vmem:[#allocation2 + $0xec] sm:$0xf]
  %v9757 = vld [vmem:[#allocation2 + $0xf0] sm:$0xf]
  %v9758 = vld [vmem:[#allocation2 + $0xf4] sm:$0xf]
  %v9759 = vld [vmem:[#allocation2 + $0xf8] sm:$0xf]
  %v9760 = vld [vmem:[#allocation2 + $0xfc] sm:$0xf]
  %v9761 = vld [vmem:[%s5] sm:$0xf]
  %v9762 = vld [vmem:[%s5 + $0x4] sm:$0xf]
  %v9763 = vld [vmem:[%s5 + $0x8] sm:$0xf]
  %v9764 = vld [vmem:[%s5 + $0xc] sm:$0xf]
  %v9765 = vld [vmem:[%s5 + $0x10] sm:$0xf]
  %v9766 = vld [vmem:[%s5 + $0x14] sm:$0xf]
  %v9767 = vld [vmem:[%s5 + $0x18] sm:$0xf]
  %v9768 = vld [vmem:[%s5 + $0x1c] sm:$0xf]
  %v9769 = vld [vmem:[%s5 + $0x20] sm:$0xf]
  %v9770 = vld [vmem:[%s6] sm:$0x1]
  %v9772 = vlaneseq
  %v9773 = vshrl.u32 %v9772, 7
  %v9774 = vsub.s32 0, %v9773
  %v9775 = vrot.slane %v9770, %v9774
  %v9841 = vunpack.c.l.b16 %v9697
  %v9842 = vunpack.c.l.b16 %v9698
  %v9843 = vunpack.c.l.b16 %v9699
  %v9844 = vunpack.c.l.b16 %v9700
  %v9845 = vunpack.c.l.b16 %v9701
  %v9846 = vunpack.c.l.b16 %v9702
  %v9847 = vunpack.c.l.b16 %v9703
  %v9848 = vunpack.c.l.b16 %v9704
  %v9849 = vunpack.c.l.b16 %v9705
  %v9850 = vunpack.c.l.b16 %v9706
  %v9851 = vunpack.c.l.b16 %v9707
  %v9852 = vunpack.c.l.b16 %v9708
  %v9853 = vunpack.c.l.b16 %v9709
  %v9854 = vunpack.c.l.b16 %v9710
  %v9855 = vunpack.c.l.b16 %v9711
  %v9856 = vunpack.c.l.b16 %v9712
  %v9857 = vunpack.c.l.b16 %v9713
  %v9858 = vunpack.c.l.b16 %v9714
  %v9859 = vunpack.c.l.b16 %v9715
  %v9860 = vunpack.c.l.b16 %v9716
  %v9861 = vunpack.c.l.b16 %v9717
  %v9862 = vunpack.c.l.b16 %v9718
  %v9863 = vunpack.c.l.b16 %v9719
  %v9864 = vunpack.c.l.b16 %v9720
  %v9865 = vunpack.c.l.b16 %v9721
  %v9866 = vunpack.c.l.b16 %v9722
  %v9867 = vunpack.c.l.b16 %v9723
  %v9868 = vunpack.c.l.b16 %v9724
  %v9869 = vunpack.c.l.b16 %v9725
  %v9870 = vunpack.c.l.b16 %v9726
  %v9871 = vunpack.c.l.b16 %v9727
  %v9872 = vunpack.c.l.b16 %v9728
  %v9873 = vunpack.c.l.b16 %v9729
  %v9874 = vunpack.c.l.b16 %v9730
  %v9875 = vunpack.c.l.b16 %v9731
  %v9876 = vunpack.c.l.b16 %v9732
  %v9877 = vunpack.c.l.b16 %v9733
  %v9878 = vunpack.c.l.b16 %v9734
  %v9879 = vunpack.c.l.b16 %v9735
  %v9880 = vunpack.c.l.b16 %v9736
  %v9881 = vunpack.c.l.b16 %v9737
  %v9882 = vunpack.c.l.b16 %v9738
  %v9883 = vunpack.c.l.b16 %v9739
  %v9884 = vunpack.c.l.b16 %v9740
  %v9885 = vunpack.c.l.b16 %v9741
  %v9886 = vunpack.c.l.b16 %v9742
  %v9887 = vunpack.c.l.b16 %v9743
  %v9888 = vunpack.c.l.b16 %v9744
  %v9889 = vunpack.c.l.b16 %v9745
  %v9890 = vunpack.c.l.b16 %v9746
  %v9891 = vunpack.c.l.b16 %v9747
  %v9892 = vunpack.c.l.b16 %v9748
  %v9893 = vunpack.c.l.b16 %v9749
  %v9894 = vunpack.c.l.b16 %v9750
  %v9895 = vunpack.c.l.b16 %v9751
  %v9896 = vunpack.c.l.b16 %v9752
  %v9897 = vunpack.c.l.b16 %v9753
  %v9898 = vunpack.c.l.b16 %v9754
  %v9899 = vunpack.c.l.b16 %v9755
  %v9900 = vunpack.c.l.b16 %v9756
  %v9901 = vunpack.c.l.b16 %v9757
  %v9902 = vunpack.c.l.b16 %v9758
  %v9903 = vunpack.c.l.b16 %v9759
  %v9904 = vunpack.c.l.b16 %v9760
  %v9905 = vpack.c.b16 %v9842, %v9841
  %v9906 = vpack.c.b16 %v9844, %v9843
  %v9907 = vpack.c.b16 %v9846, %v9845
  %v9908 = vpack.c.b16 %v9848, %v9847
  %v9909 = vpack.c.b16 %v9850, %v9849
  %v9910 = vpack.c.b16 %v9852, %v9851
  %v9911 = vpack.c.b16 %v9854, %v9853
  %v9912 = vpack.c.b16 %v9856, %v9855
  %v9913 = vpack.c.b16 %v9858, %v9857
  %v9914 = vpack.c.b16 %v9860, %v9859
  %v9915 = vpack.c.b16 %v9862, %v9861
  %v9916 = vpack.c.b16 %v9864, %v9863
  %v9917 = vpack.c.b16 %v9866, %v9865
  %v9918 = vpack.c.b16 %v9868, %v9867
  %v9919 = vpack.c.b16 %v9870, %v9869
  %v9920 = vpack.c.b16 %v9872, %v9871
  %v9921 = vpack.c.b16 %v9874, %v9873
  %v9922 = vpack.c.b16 %v9876, %v9875
  %v9923 = vpack.c.b16 %v9878, %v9877
  %v9924 = vpack.c.b16 %v9880, %v9879
  %v9925 = vpack.c.b16 %v9882, %v9881
  %v9926 = vpack.c.b16 %v9884, %v9883
  %v9927 = vpack.c.b16 %v9886, %v9885
  %v9928 = vpack.c.b16 %v9888, %v9887
  %v9929 = vpack.c.b16 %v9890, %v9889
  %v9930 = vpack.c.b16 %v9892, %v9891
  %v9931 = vpack.c.b16 %v9894, %v9893
  %v9932 = vpack.c.b16 %v9896, %v9895
  %v9933 = vpack.c.b16 %v9898, %v9897
  %v9934 = vpack.c.b16 %v9900, %v9899
  %v9935 = vpack.c.b16 %v9902, %v9901
  %v9936 = vpack.c.b16 %v9904, %v9903
  %v9946 = vunpack.c.l.b16 %v9761
  %v9947 = vunpack.c.l.b16 %v9762
  %v9948 = vunpack.c.l.b16 %v9763
  %v9949 = vunpack.c.l.b16 %v9764
  %v9950 = vunpack.c.l.b16 %v9765
  %v9951 = vunpack.c.l.b16 %v9766
  %v9952 = vunpack.c.l.b16 %v9767
  %v9953 = vunpack.c.l.b16 %v9768
  %v9954 = vunpack.c.l.b16 %v9769
  %v9955 = vpack.c.b16 %v9947, %v9946
  %v9956 = vpack.c.b16 %v9949, %v9948
  %v9957 = vpack.c.b16 %v9951, %v9950
  %v9958 = vpack.c.b16 %v9953, %v9952
  %v9959 = vpack.c.b16 %v9954, %v9954
  %v9965 = vsel %vm4459, %v9905, 0
  %v9968 = vsel %vm4459, %v9906, 0
  %v9971 = vsel %vm4459, %v9907, 0
  %v9974 = vsel %vm4459, %v9908, 0
  %v9977 = vsel %vm4459, %v9909, 0
  %v9980 = vsel %vm4459, %v9910, 0
  %v9983 = vsel %vm4459, %v9911, 0
  %v9986 = vsel %vm4459, %v9912, 0
  %v9989 = vsel %vm4459, %v9913, 0
  %v9992 = vsel %vm4459, %v9914, 0
  %v9995 = vsel %vm4459, %v9915, 0
  %v9998 = vsel %vm4459, %v9916, 0
  %v10001 = vsel %vm4459, %v9917, 0
  %v10004 = vsel %vm4459, %v9918, 0
  %v10007 = vsel %vm4459, %v9919, 0
  %v10010 = vsel %vm4459, %v9920, 0
  %v10013 = vsel %vm4459, %v9921, 0
  %v10016 = vsel %vm4459, %v9922, 0
  %v10019 = vsel %vm4459, %v9923, 0
  %v10022 = vsel %vm4459, %v9924, 0
  %v10025 = vsel %vm4459, %v9925, 0
  %v10028 = vsel %vm4459, %v9926, 0
  %v10031 = vsel %vm4459, %v9927, 0
  %v10034 = vsel %vm4459, %v9928, 0
  %v10037 = vsel %vm4459, %v9929, 0
  %v10040 = vsel %vm4459, %v9930, 0
  %v10043 = vsel %vm4459, %v9931, 0
  %v10046 = vsel %vm4459, %v9932, 0
  %v10049 = vsel %vm4459, %v9933, 0
  %v10052 = vsel %vm4459, %v9934, 0
  %v10055 = vsel %vm4459, %v9935, 0
  %v10058 = vsel %vm4459, %v9936, 0
  %v10061 = vsel %vm4556, %v9959, 0
  %10063 = vmatprep.subr.bf16.mxu0 0
  %10064 = vmatpush1.bf16.msra.mxu0 0
  %10065 = vmatprep.subr.bf16.mxu0 0
  %10066 = vmatpush1.bf16.msra.mxu0 0
  %10067 = vmatprep.subr.bf16.mxu0 0
  %10068 = vmatpush1.bf16.msra.mxu0 0
  %10069 = vmatprep.subr.bf16.mxu0 0
  %10070 = vmatpush1.bf16.msra.mxu0 %v10061
  %10071 = vmatprep.subr.bf16.mxu0 0
  %10072 = vmatpush1.bf16.msra.mxu0 %v9958
  %10073 = vmatprep.subr.bf16.mxu0 0
  %10074 = vmatpush1.bf16.msra.mxu0 %v9957
  %10075 = vmatprep.subr.bf16.mxu0 0
  %10076 = vmatpush1.bf16.msra.mxu0 %v9956
  %10077 = vmatprep.subr.bf16.mxu0 0
  %10078 = vmatpush1.bf16.msra.mxu0 %v9955
  %10079 = vmatprep.subr.bf16.mxu0 0
  %10080 = vmatpush2.bf16.msra.mxu0 0
  %10081 = vmatprep.subr.bf16.mxu0 0
  %10082 = vmatpush2.bf16.msra.mxu0 0
  %10083 = vmatprep.subr.bf16.mxu0 0
  %10084 = vmatpush2.bf16.msra.mxu0 0
  %10085 = vmatprep.subr.bf16.mxu0 0
  %10086 = vmatpush2.bf16.msra.mxu0 0
  %10087 = vmatprep.subr.bf16.mxu0 0
  %10088 = vmatpush2.bf16.msra.mxu0 0
  %10089 = vmatprep.subr.bf16.mxu0 0
  %10090 = vmatpush2.bf16.msra.mxu0 0
  %10091 = vmatprep.subr.bf16.mxu0 0
  %10092 = vmatpush2.bf16.msra.mxu0 0
  %10093 = vmatprep.subr.bf16.mxu0 0
  %10094 = vmatpush2.bf16.msra.mxu0 0
  %10095 = vmatprep.mubr.bf16.mxu0 0
  %10096 = vmatmul.mubr.bf16.gmra.mxu0 %v9965
  %v10097 = vpop.f32.mrf.mxu0
  %v10098 = vadd.f32 %v9775, %v10097
  %v10099 = vpop.f32.mrf.mxu0
  %v10100 = vpop.f32.mrf.mxu0
  %v10101 = vadd.f32 %v9775, %v10100
  %v10102 = vpop.f32.mrf.mxu0
  %10103 = vmatprep.mubr.bf16.mxu0 0
  %10104 = vmatmul.mubr.bf16.gmra.mxu0 %v9968
  %v10105 = vpop.f32.mrf.mxu0
  %v10106 = vadd.f32 %v9775, %v10105
  %v10107 = vpop.f32.mrf.mxu0
  %v10108 = vpop.f32.mrf.mxu0
  %v10109 = vadd.f32 %v9775, %v10108
  %v10110 = vpop.f32.mrf.mxu0
  %10111 = vmatprep.mubr.bf16.mxu0 0
  %10112 = vmatmul.mubr.bf16.gmra.mxu0 %v9971
  %v10113 = vpop.f32.mrf.mxu0
  %v10114 = vadd.f32 %v9775, %v10113
  %v10115 = vpop.f32.mrf.mxu0
  %v10116 = vpop.f32.mrf.mxu0
  %v10117 = vadd.f32 %v9775, %v10116
  %v10118 = vpop.f32.mrf.mxu0
  %10119 = vmatprep.mubr.bf16.mxu0 0
  %10120 = vmatmul.mubr.bf16.gmra.mxu0 %v9974
  %v10121 = vpop.f32.mrf.mxu0
  %v10122 = vadd.f32 %v9775, %v10121
  %v10123 = vpop.f32.mrf.mxu0
  %v10124 = vpop.f32.mrf.mxu0
  %v10125 = vadd.f32 %v9775, %v10124
  %v10126 = vpop.f32.mrf.mxu0
  %10127 = vmatprep.mubr.bf16.mxu0 0
  %10128 = vmatmul.mubr.bf16.gmra.mxu0 %v9977
  %v10129 = vpop.f32.mrf.mxu0
  %v10130 = vadd.f32 %v9775, %v10129
  %v10131 = vpop.f32.mrf.mxu0
  %v10132 = vpop.f32.mrf.mxu0
  %v10133 = vadd.f32 %v9775, %v10132
  %v10134 = vpop.f32.mrf.mxu0
  %10135 = vmatprep.mubr.bf16.mxu0 0
  %10136 = vmatmul.mubr.bf16.gmra.mxu0 %v9980
  %v10137 = vpop.f32.mrf.mxu0
  %v10138 = vadd.f32 %v9775, %v10137
  %v10139 = vpop.f32.mrf.mxu0
  %v10140 = vpop.f32.mrf.mxu0
  %v10141 = vadd.f32 %v9775, %v10140
  %v10142 = vpop.f32.mrf.mxu0
  %10143 = vmatprep.mubr.bf16.mxu0 0
  %10144 = vmatmul.mubr.bf16.gmra.mxu0 %v9983
  %v10145 = vpop.f32.mrf.mxu0
  %v10146 = vadd.f32 %v9775, %v10145
  %v10147 = vpop.f32.mrf.mxu0
  %v10148 = vpop.f32.mrf.mxu0
  %v10149 = vadd.f32 %v9775, %v10148
  %v10150 = vpop.f32.mrf.mxu0
  %10151 = vmatprep.mubr.bf16.mxu0 0
  %10152 = vmatmul.mubr.bf16.gmra.mxu0 %v9986
  %v10153 = vpop.f32.mrf.mxu0
  %v10154 = vadd.f32 %v9775, %v10153
  %v10155 = vpop.f32.mrf.mxu0
  %v10156 = vpop.f32.mrf.mxu0
  %v10157 = vadd.f32 %v9775, %v10156
  %v10158 = vpop.f32.mrf.mxu0
  %10159 = vmatprep.mubr.bf16.mxu0 0
  %10160 = vmatmul.mubr.bf16.gmra.mxu0 %v9989
  %v10161 = vpop.f32.mrf.mxu0
  %v10162 = vadd.f32 %v9775, %v10161
  %v10163 = vpop.f32.mrf.mxu0
  %v10164 = vpop.f32.mrf.mxu0
  %v10165 = vadd.f32 %v9775, %v10164
  %v10166 = vpop.f32.mrf.mxu0
  %10167 = vmatprep.mubr.bf16.mxu0 0
  %10168 = vmatmul.mubr.bf16.gmra.mxu0 %v9992
  %v10169 = vpop.f32.mrf.mxu0
  %v10170 = vadd.f32 %v9775, %v10169
  %v10171 = vpop.f32.mrf.mxu0
  %v10172 = vpop.f32.mrf.mxu0
  %v10173 = vadd.f32 %v9775, %v10172
  %v10174 = vpop.f32.mrf.mxu0
  %10175 = vmatprep.mubr.bf16.mxu0 0
  %10176 = vmatmul.mubr.bf16.gmra.mxu0 %v9995
  %v10177 = vpop.f32.mrf.mxu0
  %v10178 = vadd.f32 %v9775, %v10177
  %v10179 = vpop.f32.mrf.mxu0
  %v10180 = vpop.f32.mrf.mxu0
  %v10181 = vadd.f32 %v9775, %v10180
  %v10182 = vpop.f32.mrf.mxu0
  %10183 = vmatprep.mubr.bf16.mxu0 0
  %10184 = vmatmul.mubr.bf16.gmra.mxu0 %v9998
  %v10185 = vpop.f32.mrf.mxu0
  %v10186 = vadd.f32 %v9775, %v10185
  %v10187 = vpop.f32.mrf.mxu0
  %v10188 = vpop.f32.mrf.mxu0
  %v10189 = vadd.f32 %v9775, %v10188
  %v10190 = vpop.f32.mrf.mxu0
  %10191 = vmatprep.mubr.bf16.mxu0 0
  %10192 = vmatmul.mubr.bf16.gmra.mxu0 %v10001
  %v10193 = vpop.f32.mrf.mxu0
  %v10194 = vadd.f32 %v9775, %v10193
  %v10195 = vpop.f32.mrf.mxu0
  %v10196 = vpop.f32.mrf.mxu0
  %v10197 = vadd.f32 %v9775, %v10196
  %v10198 = vpop.f32.mrf.mxu0
  %10199 = vmatprep.mubr.bf16.mxu0 0
  %10200 = vmatmul.mubr.bf16.gmra.mxu0 %v10004
  %v10201 = vpop.f32.mrf.mxu0
  %v10202 = vadd.f32 %v9775, %v10201
  %v10203 = vpop.f32.mrf.mxu0
  %v10204 = vpop.f32.mrf.mxu0
  %v10205 = vadd.f32 %v9775, %v10204
  %v10206 = vpop.f32.mrf.mxu0
  %10207 = vmatprep.mubr.bf16.mxu0 0
  %10208 = vmatmul.mubr.bf16.gmra.mxu0 %v10007
  %v10209 = vpop.f32.mrf.mxu0
  %v10210 = vadd.f32 %v9775, %v10209
  %v10211 = vpop.f32.mrf.mxu0
  %v10212 = vpop.f32.mrf.mxu0
  %v10213 = vadd.f32 %v9775, %v10212
  %v10214 = vpop.f32.mrf.mxu0
  %10215 = vmatprep.mubr.bf16.mxu0 0
  %10216 = vmatmul.mubr.bf16.gmra.mxu0 %v10010
  %v10217 = vpop.f32.mrf.mxu0
  %v10218 = vadd.f32 %v9775, %v10217
  %v10219 = vpop.f32.mrf.mxu0
  %v10220 = vpop.f32.mrf.mxu0
  %v10221 = vadd.f32 %v9775, %v10220
  %v10222 = vpop.f32.mrf.mxu0
  %10223 = vmatprep.mubr.bf16.mxu0 0
  %10224 = vmatmul.mubr.bf16.gmra.mxu0 %v10013
  %v10225 = vpop.f32.mrf.mxu0
  %v10226 = vadd.f32 %v9775, %v10225
  %v10227 = vpop.f32.mrf.mxu0
  %v10228 = vpop.f32.mrf.mxu0
  %v10229 = vadd.f32 %v9775, %v10228
  %v10230 = vpop.f32.mrf.mxu0
  %10231 = vmatprep.mubr.bf16.mxu0 0
  %10232 = vmatmul.mubr.bf16.gmra.mxu0 %v10016
  %v10233 = vpop.f32.mrf.mxu0
  %v10234 = vadd.f32 %v9775, %v10233
  %v10235 = vpop.f32.mrf.mxu0
  %v10236 = vpop.f32.mrf.mxu0
  %v10237 = vadd.f32 %v9775, %v10236
  %v10238 = vpop.f32.mrf.mxu0
  %10239 = vmatprep.mubr.bf16.mxu0 0
  %10240 = vmatmul.mubr.bf16.gmra.mxu0 %v10019
  %v10241 = vpop.f32.mrf.mxu0
  %v10242 = vadd.f32 %v9775, %v10241
  %v10243 = vpop.f32.mrf.mxu0
  %v10244 = vpop.f32.mrf.mxu0
  %v10245 = vadd.f32 %v9775, %v10244
  %v10246 = vpop.f32.mrf.mxu0
  %10247 = vmatprep.mubr.bf16.mxu0 0
  %10248 = vmatmul.mubr.bf16.gmra.mxu0 %v10022
  %v10249 = vpop.f32.mrf.mxu0
  %v10250 = vadd.f32 %v9775, %v10249
  %v10251 = vpop.f32.mrf.mxu0
  %v10252 = vpop.f32.mrf.mxu0
  %v10253 = vadd.f32 %v9775, %v10252
  %v10254 = vpop.f32.mrf.mxu0
  %10255 = vmatprep.mubr.bf16.mxu0 0
  %10256 = vmatmul.mubr.bf16.gmra.mxu0 %v10025
  %v10257 = vpop.f32.mrf.mxu0
  %v10258 = vadd.f32 %v9775, %v10257
  %v10259 = vpop.f32.mrf.mxu0
  %v10260 = vpop.f32.mrf.mxu0
  %v10261 = vadd.f32 %v9775, %v10260
  %v10262 = vpop.f32.mrf.mxu0
  %10263 = vmatprep.mubr.bf16.mxu0 0
  %10264 = vmatmul.mubr.bf16.gmra.mxu0 %v10028
  %v10265 = vpop.f32.mrf.mxu0
  %v10266 = vadd.f32 %v9775, %v10265
  %v10267 = vpop.f32.mrf.mxu0
  %v10268 = vpop.f32.mrf.mxu0
  %v10269 = vadd.f32 %v9775, %v10268
  %v10270 = vpop.f32.mrf.mxu0
  %10271 = vmatprep.mubr.bf16.mxu0 0
  %10272 = vmatmul.mubr.bf16.gmra.mxu0 %v10031
  %v10273 = vpop.f32.mrf.mxu0
  %v10274 = vadd.f32 %v9775, %v10273
  %v10275 = vpop.f32.mrf.mxu0
  %v10276 = vpop.f32.mrf.mxu0
  %v10277 = vadd.f32 %v9775, %v10276
  %v10278 = vpop.f32.mrf.mxu0
  %10279 = vmatprep.mubr.bf16.mxu0 0
  %10280 = vmatmul.mubr.bf16.gmra.mxu0 %v10034
  %v10281 = vpop.f32.mrf.mxu0
  %v10282 = vadd.f32 %v9775, %v10281
  %v10283 = vpop.f32.mrf.mxu0
  %v10284 = vpop.f32.mrf.mxu0
  %v10285 = vadd.f32 %v9775, %v10284
  %v10286 = vpop.f32.mrf.mxu0
  %10287 = vmatprep.mubr.bf16.mxu0 0
  %10288 = vmatmul.mubr.bf16.gmra.mxu0 %v10037
  %v10289 = vpop.f32.mrf.mxu0
  %v10290 = vadd.f32 %v9775, %v10289
  %v10291 = vpop.f32.mrf.mxu0
  %v10292 = vpop.f32.mrf.mxu0
  %v10293 = vadd.f32 %v9775, %v10292
  %v10294 = vpop.f32.mrf.mxu0
  %10295 = vmatprep.mubr.bf16.mxu0 0
  %10296 = vmatmul.mubr.bf16.gmra.mxu0 %v10040
  %v10297 = vpop.f32.mrf.mxu0
  %v10298 = vadd.f32 %v9775, %v10297
  %v10299 = vpop.f32.mrf.mxu0
  %v10300 = vpop.f32.mrf.mxu0
  %v10301 = vadd.f32 %v9775, %v10300
  %v10302 = vpop.f32.mrf.mxu0
  %10303 = vmatprep.mubr.bf16.mxu0 0
  %10304 = vmatmul.mubr.bf16.gmra.mxu0 %v10043
  %v10305 = vpop.f32.mrf.mxu0
  %v10306 = vadd.f32 %v9775, %v10305
  %v10307 = vpop.f32.mrf.mxu0
  %v10308 = vpop.f32.mrf.mxu0
  %v10309 = vadd.f32 %v9775, %v10308
  %v10310 = vpop.f32.mrf.mxu0
  %10311 = vmatprep.mubr.bf16.mxu0 0
  %10312 = vmatmul.mubr.bf16.gmra.mxu0 %v10046
  %v10313 = vpop.f32.mrf.mxu0
  %v10314 = vadd.f32 %v9775, %v10313
  %v10315 = vpop.f32.mrf.mxu0
  %v10316 = vpop.f32.mrf.mxu0
  %v10317 = vadd.f32 %v9775, %v10316
  %v10318 = vpop.f32.mrf.mxu0
  %10319 = vmatprep.mubr.bf16.mxu0 0
  %10320 = vmatmul.mubr.bf16.gmra.mxu0 %v10049
  %v10321 = vpop.f32.mrf.mxu0
  %v10322 = vadd.f32 %v9775, %v10321
  %v10323 = vpop.f32.mrf.mxu0
  %v10324 = vpop.f32.mrf.mxu0
  %v10325 = vadd.f32 %v9775, %v10324
  %v10326 = vpop.f32.mrf.mxu0
  %10327 = vmatprep.mubr.bf16.mxu0 0
  %10328 = vmatmul.mubr.bf16.gmra.mxu0 %v10052
  %v10329 = vpop.f32.mrf.mxu0
  %v10330 = vadd.f32 %v9775, %v10329
  %v10331 = vpop.f32.mrf.mxu0
  %v10332 = vpop.f32.mrf.mxu0
  %v10333 = vadd.f32 %v9775, %v10332
  %v10334 = vpop.f32.mrf.mxu0
  %10335 = vmatprep.mubr.bf16.mxu0 0
  %10336 = vmatmul.mubr.bf16.gmra.mxu0 %v10055
  %v10337 = vpop.f32.mrf.mxu0
  %v10338 = vadd.f32 %v9775, %v10337
  %v10339 = vpop.f32.mrf.mxu0
  %v10340 = vpop.f32.mrf.mxu0
  %v10341 = vadd.f32 %v9775, %v10340
  %v10342 = vpop.f32.mrf.mxu0
  %10343 = vmatprep.mubr.bf16.mxu0 0
  %10344 = vmatmul.mubr.bf16.gmra.mxu0 %v10058
  %v10345 = vpop.f32.mrf.mxu0
  %v10346 = vadd.f32 %v9775, %v10345
  %v10347 = vpop.f32.mrf.mxu0
  %v10348 = vpop.f32.mrf.mxu0
  %v10349 = vadd.f32 %v9775, %v10348
  %v10350 = vpop.f32.mrf.mxu0
  %10351 = vdwg.mxu0
  %v10352 = vsel %vm4849, %v10098, 0.0
  %v10353 = vsel %vm4849, %v10101, 0.0
  %v10354 = vadd.f32 %v10352, %v10353
  %v10355 = vsel %vm4849, %v10106, 0.0
  %v10356 = vadd.f32 %v10354, %v10355
  %v10357 = vsel %vm4849, %v10109, 0.0
  %v10358 = vadd.f32 %v10356, %v10357
  %v10359 = vsel %vm4849, %v10114, 0.0
  %v10360 = vadd.f32 %v10358, %v10359
  %v10361 = vsel %vm4849, %v10117, 0.0
  %v10362 = vadd.f32 %v10360, %v10361
  %v10363 = vsel %vm4849, %v10122, 0.0
  %v10364 = vadd.f32 %v10362, %v10363
  %v10365 = vsel %vm4849, %v10125, 0.0
  %v10366 = vadd.f32 %v10364, %v10365
  %v10367 = vsel %vm4849, %v10130, 0.0
  %v10368 = vadd.f32 %v10366, %v10367
  %v10369 = vsel %vm4849, %v10133, 0.0
  %v10370 = vadd.f32 %v10368, %v10369
  %v10371 = vsel %vm4849, %v10138, 0.0
  %v10372 = vadd.f32 %v10370, %v10371
  %v10373 = vsel %vm4849, %v10141, 0.0
  %v10374 = vadd.f32 %v10372, %v10373
  %v10375 = vsel %vm4849, %v10146, 0.0
  %v10376 = vadd.f32 %v10374, %v10375
  %v10377 = vsel %vm4849, %v10149, 0.0
  %v10378 = vadd.f32 %v10376, %v10377
  %v10379 = vsel %vm4849, %v10154, 0.0
  %v10380 = vadd.f32 %v10378, %v10379
  %v10381 = vsel %vm4849, %v10157, 0.0
  %v10382 = vadd.f32 %v10380, %v10381
  %v10383 = vsel %vm4849, %v10162, 0.0
  %v10384 = vadd.f32 %v10382, %v10383
  %v10385 = vsel %vm4849, %v10165, 0.0
  %v10386 = vadd.f32 %v10384, %v10385
  %v10387 = vsel %vm4849, %v10170, 0.0
  %v10388 = vadd.f32 %v10386, %v10387
  %v10389 = vsel %vm4849, %v10173, 0.0
  %v10390 = vadd.f32 %v10388, %v10389
  %v10391 = vsel %vm4849, %v10178, 0.0
  %v10392 = vadd.f32 %v10390, %v10391
  %v10393 = vsel %vm4849, %v10181, 0.0
  %v10394 = vadd.f32 %v10392, %v10393
  %v10395 = vsel %vm4849, %v10186, 0.0
  %v10396 = vadd.f32 %v10394, %v10395
  %v10397 = vsel %vm4849, %v10189, 0.0
  %v10398 = vadd.f32 %v10396, %v10397
  %v10399 = vsel %vm4849, %v10194, 0.0
  %v10400 = vadd.f32 %v10398, %v10399
  %v10401 = vsel %vm4849, %v10197, 0.0
  %v10402 = vadd.f32 %v10400, %v10401
  %v10403 = vsel %vm4849, %v10202, 0.0
  %v10404 = vadd.f32 %v10402, %v10403
  %v10405 = vsel %vm4849, %v10205, 0.0
  %v10406 = vadd.f32 %v10404, %v10405
  %v10407 = vsel %vm4849, %v10210, 0.0
  %v10408 = vadd.f32 %v10406, %v10407
  %v10409 = vsel %vm4849, %v10213, 0.0
  %v10410 = vadd.f32 %v10408, %v10409
  %v10411 = vsel %vm4849, %v10218, 0.0
  %v10412 = vadd.f32 %v10410, %v10411
  %v10413 = vsel %vm4849, %v10221, 0.0
  %v10414 = vadd.f32 %v10412, %v10413
  %v10415 = vsel %vm4849, %v10226, 0.0
  %v10416 = vadd.f32 %v10414, %v10415
  %v10417 = vsel %vm4849, %v10229, 0.0
  %v10418 = vadd.f32 %v10416, %v10417
  %v10419 = vsel %vm4849, %v10234, 0.0
  %v10420 = vadd.f32 %v10418, %v10419
  %v10421 = vsel %vm4849, %v10237, 0.0
  %v10422 = vadd.f32 %v10420, %v10421
  %v10423 = vsel %vm4849, %v10242, 0.0
  %v10424 = vadd.f32 %v10422, %v10423
  %v10425 = vsel %vm4849, %v10245, 0.0
  %v10426 = vadd.f32 %v10424, %v10425
  %v10427 = vsel %vm4849, %v10250, 0.0
  %v10428 = vadd.f32 %v10426, %v10427
  %v10429 = vsel %vm4849, %v10253, 0.0
  %v10430 = vadd.f32 %v10428, %v10429
  %v10431 = vsel %vm4849, %v10258, 0.0
  %v10432 = vadd.f32 %v10430, %v10431
  %v10433 = vsel %vm4849, %v10261, 0.0
  %v10434 = vadd.f32 %v10432, %v10433
  %v10435 = vsel %vm4849, %v10266, 0.0
  %v10436 = vadd.f32 %v10434, %v10435
  %v10437 = vsel %vm4849, %v10269, 0.0
  %v10438 = vadd.f32 %v10436, %v10437
  %v10439 = vsel %vm4849, %v10274, 0.0
  %v10440 = vadd.f32 %v10438, %v10439
  %v10441 = vsel %vm4849, %v10277, 0.0
  %v10442 = vadd.f32 %v10440, %v10441
  %v10443 = vsel %vm4849, %v10282, 0.0
  %v10444 = vadd.f32 %v10442, %v10443
  %v10445 = vsel %vm4849, %v10285, 0.0
  %v10446 = vadd.f32 %v10444, %v10445
  %v10447 = vsel %vm4849, %v10290, 0.0
  %v10448 = vadd.f32 %v10446, %v10447
  %v10449 = vsel %vm4849, %v10293, 0.0
  %v10450 = vadd.f32 %v10448, %v10449
  %v10451 = vsel %vm4849, %v10298, 0.0
  %v10452 = vadd.f32 %v10450, %v10451
  %v10453 = vsel %vm4849, %v10301, 0.0
  %v10454 = vadd.f32 %v10452, %v10453
  %v10455 = vsel %vm4849, %v10306, 0.0
  %v10456 = vadd.f32 %v10454, %v10455
  %v10457 = vsel %vm4849, %v10309, 0.0
  %v10458 = vadd.f32 %v10456, %v10457
  %v10459 = vsel %vm4849, %v10314, 0.0
  %v10460 = vadd.f32 %v10458, %v10459
  %v10461 = vsel %vm4849, %v10317, 0.0
  %v10462 = vadd.f32 %v10460, %v10461
  %v10463 = vsel %vm4849, %v10322, 0.0
  %v10464 = vadd.f32 %v10462, %v10463
  %v10465 = vsel %vm4849, %v10325, 0.0
  %v10466 = vadd.f32 %v10464, %v10465
  %v10467 = vsel %vm4849, %v10330, 0.0
  %v10468 = vadd.f32 %v10466, %v10467
  %v10469 = vsel %vm4849, %v10333, 0.0
  %v10470 = vadd.f32 %v10468, %v10469
  %v10471 = vsel %vm4849, %v10338, 0.0
  %v10472 = vadd.f32 %v10470, %v10471
  %v10473 = vsel %vm4849, %v10341, 0.0
  %v10474 = vadd.f32 %v10472, %v10473
  %v10475 = vsel %vm4849, %v10346, 0.0
  %v10476 = vadd.f32 %v10474, %v10475
  %v10477 = vsel %vm4849, %v10349, 0.0
  %v10478 = vadd.f32 %v10476, %v10477
  %v10479 = vrot.slane %v10478, 4
  %v10480 = vadd.f32 %v10478, %v10479
  %v10481 = vrot.slane %v10480, 2
  %v10482 = vadd.f32 %v10480, %v10481
  %v10483 = vrot.slane %v10482, 1
  %v10484 = vadd.f32 %v10482, %v10483
  %v10485 = vmul.f32 %v10484, %v4983
  %v10486 = vsub.f32 %v10098, %v10485
  %v10487 = vsub.f32 %v10101, %v10485
  %v10488 = vsub.f32 %v10106, %v10485
  %v10489 = vsub.f32 %v10109, %v10485
  %v10490 = vsub.f32 %v10114, %v10485
  %v10491 = vsub.f32 %v10117, %v10485
  %v10492 = vsub.f32 %v10122, %v10485
  %v10493 = vsub.f32 %v10125, %v10485
  %v10494 = vsub.f32 %v10130, %v10485
  %v10495 = vsub.f32 %v10133, %v10485
  %v10496 = vsub.f32 %v10138, %v10485
  %v10497 = vsub.f32 %v10141, %v10485
  %v10498 = vsub.f32 %v10146, %v10485
  %v10499 = vsub.f32 %v10149, %v10485
  %v10500 = vsub.f32 %v10154, %v10485
  %v10501 = vsub.f32 %v10157, %v10485
  %v10502 = vsub.f32 %v10162, %v10485
  %v10503 = vsub.f32 %v10165, %v10485
  %v10504 = vsub.f32 %v10170, %v10485
  %v10505 = vsub.f32 %v10173, %v10485
  %v10506 = vsub.f32 %v10178, %v10485
  %v10507 = vsub.f32 %v10181, %v10485
  %v10508 = vsub.f32 %v10186, %v10485
  %v10509 = vsub.f32 %v10189, %v10485
  %v10510 = vsub.f32 %v10194, %v10485
  %v10511 = vsub.f32 %v10197, %v10485
  %v10512 = vsub.f32 %v10202, %v10485
  %v10513 = vsub.f32 %v10205, %v10485
  %v10514 = vsub.f32 %v10210, %v10485
  %v10515 = vsub.f32 %v10213, %v10485
  %v10516 = vsub.f32 %v10218, %v10485
  %v10517 = vsub.f32 %v10221, %v10485
  %v10518 = vsub.f32 %v10226, %v10485
  %v10519 = vsub.f32 %v10229, %v10485
  %v10520 = vsub.f32 %v10234, %v10485
  %v10521 = vsub.f32 %v10237, %v10485
  %v10522 = vsub.f32 %v10242, %v10485
  %v10523 = vsub.f32 %v10245, %v10485
  %v10524 = vsub.f32 %v10250, %v10485
  %v10525 = vsub.f32 %v10253, %v10485
  %v10526 = vsub.f32 %v10258, %v10485
  %v10527 = vsub.f32 %v10261, %v10485
  %v10528 = vsub.f32 %v10266, %v10485
  %v10529 = vsub.f32 %v10269, %v10485
  %v10530 = vsub.f32 %v10274, %v10485
  %v10531 = vsub.f32 %v10277, %v10485
  %v10532 = vsub.f32 %v10282, %v10485
  %v10533 = vsub.f32 %v10285, %v10485
  %v10534 = vsub.f32 %v10290, %v10485
  %v10535 = vsub.f32 %v10293, %v10485
  %v10536 = vsub.f32 %v10298, %v10485
  %v10537 = vsub.f32 %v10301, %v10485
  %v10538 = vsub.f32 %v10306, %v10485
  %v10539 = vsub.f32 %v10309, %v10485
  %v10540 = vsub.f32 %v10314, %v10485
  %v10541 = vsub.f32 %v10317, %v10485
  %v10542 = vsub.f32 %v10322, %v10485
  %v10543 = vsub.f32 %v10325, %v10485
  %v10544 = vsub.f32 %v10330, %v10485
  %v10545 = vsub.f32 %v10333, %v10485
  %v10546 = vsub.f32 %v10338, %v10485
  %v10547 = vsub.f32 %v10341, %v10485
  %v10548 = vsub.f32 %v10346, %v10485
  %v10549 = vsub.f32 %v10349, %v10485
  %v10550 = vmul.f32 %v10486, %v10486
  %v10551 = vmul.f32 %v10487, %v10487
  %v10552 = vmul.f32 %v10488, %v10488
  %v10553 = vmul.f32 %v10489, %v10489
  %v10554 = vmul.f32 %v10490, %v10490
  %v10555 = vmul.f32 %v10491, %v10491
  %v10556 = vmul.f32 %v10492, %v10492
  %v10557 = vmul.f32 %v10493, %v10493
  %v10558 = vmul.f32 %v10494, %v10494
  %v10559 = vmul.f32 %v10495, %v10495
  %v10560 = vmul.f32 %v10496, %v10496
  %v10561 = vmul.f32 %v10497, %v10497
  %v10562 = vmul.f32 %v10498, %v10498
  %v10563 = vmul.f32 %v10499, %v10499
  %v10564 = vmul.f32 %v10500, %v10500
  %v10565 = vmul.f32 %v10501, %v10501
  %v10566 = vmul.f32 %v10502, %v10502
  %v10567 = vmul.f32 %v10503, %v10503
  %v10568 = vmul.f32 %v10504, %v10504
  %v10569 = vmul.f32 %v10505, %v10505
  %v10570 = vmul.f32 %v10506, %v10506
  %v10571 = vmul.f32 %v10507, %v10507
  %v10572 = vmul.f32 %v10508, %v10508
  %v10573 = vmul.f32 %v10509, %v10509
  %v10574 = vmul.f32 %v10510, %v10510
  %v10575 = vmul.f32 %v10511, %v10511
  %v10576 = vmul.f32 %v10512, %v10512
  %v10577 = vmul.f32 %v10513, %v10513
  %v10578 = vmul.f32 %v10514, %v10514
  %v10579 = vmul.f32 %v10515, %v10515
  %v10580 = vmul.f32 %v10516, %v10516
  %v10581 = vmul.f32 %v10517, %v10517
  %v10582 = vmul.f32 %v10518, %v10518
  %v10583 = vmul.f32 %v10519, %v10519
  %v10584 = vmul.f32 %v10520, %v10520
  %v10585 = vmul.f32 %v10521, %v10521
  %v10586 = vmul.f32 %v10522, %v10522
  %v10587 = vmul.f32 %v10523, %v10523
  %v10588 = vmul.f32 %v10524, %v10524
  %v10589 = vmul.f32 %v10525, %v10525
  %v10590 = vmul.f32 %v10526, %v10526
  %v10591 = vmul.f32 %v10527, %v10527
  %v10592 = vmul.f32 %v10528, %v10528
  %v10593 = vmul.f32 %v10529, %v10529
  %v10594 = vmul.f32 %v10530, %v10530
  %v10595 = vmul.f32 %v10531, %v10531
  %v10596 = vmul.f32 %v10532, %v10532
  %v10597 = vmul.f32 %v10533, %v10533
  %v10598 = vmul.f32 %v10534, %v10534
  %v10599 = vmul.f32 %v10535, %v10535
  %v10600 = vmul.f32 %v10536, %v10536
  %v10601 = vmul.f32 %v10537, %v10537
  %v10602 = vmul.f32 %v10538, %v10538
  %v10603 = vmul.f32 %v10539, %v10539
  %v10604 = vmul.f32 %v10540, %v10540
  %v10605 = vmul.f32 %v10541, %v10541
  %v10606 = vmul.f32 %v10542, %v10542
  %v10607 = vmul.f32 %v10543, %v10543
  %v10608 = vmul.f32 %v10544, %v10544
  %v10609 = vmul.f32 %v10545, %v10545
  %v10610 = vmul.f32 %v10546, %v10546
  %v10611 = vmul.f32 %v10547, %v10547
  %v10612 = vmul.f32 %v10548, %v10548
  %v10613 = vmul.f32 %v10549, %v10549
  %v10614 = vsel %vm4849, %v10550, 0.0
  %v10615 = vsel %vm4849, %v10551, 0.0
  %v10616 = vadd.f32 %v10614, %v10615
  %v10617 = vsel %vm4849, %v10552, 0.0
  %v10618 = vadd.f32 %v10616, %v10617
  %v10619 = vsel %vm4849, %v10553, 0.0
  %v10620 = vadd.f32 %v10618, %v10619
  %v10621 = vsel %vm4849, %v10554, 0.0
  %v10622 = vadd.f32 %v10620, %v10621
  %v10623 = vsel %vm4849, %v10555, 0.0
  %v10624 = vadd.f32 %v10622, %v10623
  %v10625 = vsel %vm4849, %v10556, 0.0
  %v10626 = vadd.f32 %v10624, %v10625
  %v10627 = vsel %vm4849, %v10557, 0.0
  %v10628 = vadd.f32 %v10626, %v10627
  %v10629 = vsel %vm4849, %v10558, 0.0
  %v10630 = vadd.f32 %v10628, %v10629
  %v10631 = vsel %vm4849, %v10559, 0.0
  %v10632 = vadd.f32 %v10630, %v10631
  %v10633 = vsel %vm4849, %v10560, 0.0
  %v10634 = vadd.f32 %v10632, %v10633
  %v10635 = vsel %vm4849, %v10561, 0.0
  %v10636 = vadd.f32 %v10634, %v10635
  %v10637 = vsel %vm4849, %v10562, 0.0
  %v10638 = vadd.f32 %v10636, %v10637
  %v10639 = vsel %vm4849, %v10563, 0.0
  %v10640 = vadd.f32 %v10638, %v10639
  %v10641 = vsel %vm4849, %v10564, 0.0
  %v10642 = vadd.f32 %v10640, %v10641
  %v10643 = vsel %vm4849, %v10565, 0.0
  %v10644 = vadd.f32 %v10642, %v10643
  %v10645 = vsel %vm4849, %v10566, 0.0
  %v10646 = vadd.f32 %v10644, %v10645
  %v10647 = vsel %vm4849, %v10567, 0.0
  %v10648 = vadd.f32 %v10646, %v10647
  %v10649 = vsel %vm4849, %v10568, 0.0
  %v10650 = vadd.f32 %v10648, %v10649
  %v10651 = vsel %vm4849, %v10569, 0.0
  %v10652 = vadd.f32 %v10650, %v10651
  %v10653 = vsel %vm4849, %v10570, 0.0
  %v10654 = vadd.f32 %v10652, %v10653
  %v10655 = vsel %vm4849, %v10571, 0.0
  %v10656 = vadd.f32 %v10654, %v10655
  %v10657 = vsel %vm4849, %v10572, 0.0
  %v10658 = vadd.f32 %v10656, %v10657
  %v10659 = vsel %vm4849, %v10573, 0.0
  %v10660 = vadd.f32 %v10658, %v10659
  %v10661 = vsel %vm4849, %v10574, 0.0
  %v10662 = vadd.f32 %v10660, %v10661
  %v10663 = vsel %vm4849, %v10575, 0.0
  %v10664 = vadd.f32 %v10662, %v10663
  %v10665 = vsel %vm4849, %v10576, 0.0
  %v10666 = vadd.f32 %v10664, %v10665
  %v10667 = vsel %vm4849, %v10577, 0.0
  %v10668 = vadd.f32 %v10666, %v10667
  %v10669 = vsel %vm4849, %v10578, 0.0
  %v10670 = vadd.f32 %v10668, %v10669
  %v10671 = vsel %vm4849, %v10579, 0.0
  %v10672 = vadd.f32 %v10670, %v10671
  %v10673 = vsel %vm4849, %v10580, 0.0
  %v10674 = vadd.f32 %v10672, %v10673
  %v10675 = vsel %vm4849, %v10581, 0.0
  %v10676 = vadd.f32 %v10674, %v10675
  %v10677 = vsel %vm4849, %v10582, 0.0
  %v10678 = vadd.f32 %v10676, %v10677
  %v10679 = vsel %vm4849, %v10583, 0.0
  %v10680 = vadd.f32 %v10678, %v10679
  %v10681 = vsel %vm4849, %v10584, 0.0
  %v10682 = vadd.f32 %v10680, %v10681
  %v10683 = vsel %vm4849, %v10585, 0.0
  %v10684 = vadd.f32 %v10682, %v10683
  %v10685 = vsel %vm4849, %v10586, 0.0
  %v10686 = vadd.f32 %v10684, %v10685
  %v10687 = vsel %vm4849, %v10587, 0.0
  %v10688 = vadd.f32 %v10686, %v10687
  %v10689 = vsel %vm4849, %v10588, 0.0
  %v10690 = vadd.f32 %v10688, %v10689
  %v10691 = vsel %vm4849, %v10589, 0.0
  %v10692 = vadd.f32 %v10690, %v10691
  %v10693 = vsel %vm4849, %v10590, 0.0
  %v10694 = vadd.f32 %v10692, %v10693
  %v10695 = vsel %vm4849, %v10591, 0.0
  %v10696 = vadd.f32 %v10694, %v10695
  %v10697 = vsel %vm4849, %v10592, 0.0
  %v10698 = vadd.f32 %v10696, %v10697
  %v10699 = vsel %vm4849, %v10593, 0.0
  %v10700 = vadd.f32 %v10698, %v10699
  %v10701 = vsel %vm4849, %v10594, 0.0
  %v10702 = vadd.f32 %v10700, %v10701
  %v10703 = vsel %vm4849, %v10595, 0.0
  %v10704 = vadd.f32 %v10702, %v10703
  %v10705 = vsel %vm4849, %v10596, 0.0
  %v10706 = vadd.f32 %v10704, %v10705
  %v10707 = vsel %vm4849, %v10597, 0.0
  %v10708 = vadd.f32 %v10706, %v10707
  %v10709 = vsel %vm4849, %v10598, 0.0
  %v10710 = vadd.f32 %v10708, %v10709
  %v10711 = vsel %vm4849, %v10599, 0.0
  %v10712 = vadd.f32 %v10710, %v10711
  %v10713 = vsel %vm4849, %v10600, 0.0
  %v10714 = vadd.f32 %v10712, %v10713
  %v10715 = vsel %vm4849, %v10601, 0.0
  %v10716 = vadd.f32 %v10714, %v10715
  %v10717 = vsel %vm4849, %v10602, 0.0
  %v10718 = vadd.f32 %v10716, %v10717
  %v10719 = vsel %vm4849, %v10603, 0.0
  %v10720 = vadd.f32 %v10718, %v10719
  %v10721 = vsel %vm4849, %v10604, 0.0
  %v10722 = vadd.f32 %v10720, %v10721
  %v10723 = vsel %vm4849, %v10605, 0.0
  %v10724 = vadd.f32 %v10722, %v10723
  %v10725 = vsel %vm4849, %v10606, 0.0
  %v10726 = vadd.f32 %v10724, %v10725
  %v10727 = vsel %vm4849, %v10607, 0.0
  %v10728 = vadd.f32 %v10726, %v10727
  %v10729 = vsel %vm4849, %v10608, 0.0
  %v10730 = vadd.f32 %v10728, %v10729
  %v10731 = vsel %vm4849, %v10609, 0.0
  %v10732 = vadd.f32 %v10730, %v10731
  %v10733 = vsel %vm4849, %v10610, 0.0
  %v10734 = vadd.f32 %v10732, %v10733
  %v10735 = vsel %vm4849, %v10611, 0.0
  %v10736 = vadd.f32 %v10734, %v10735
  %v10737 = vsel %vm4849, %v10612, 0.0
  %v10738 = vadd.f32 %v10736, %v10737
  %v10739 = vsel %vm4849, %v10613, 0.0
  %v10740 = vadd.f32 %v10738, %v10739
  %v10741 = vrot.slane %v10740, 4
  %v10742 = vadd.f32 %v10740, %v10741
  %v10743 = vrot.slane %v10742, 2
  %v10744 = vadd.f32 %v10742, %v10743
  %v10745 = vrot.slane %v10744, 1
  %v10746 = vadd.f32 %v10744, %v10745
  %v10747 = vmul.f32 %v10746, %v4983
  %v10748 = vadd.f32 %v10747, 0.8
  %v10749 = vrsqrt.pop %v10748
  %v10750 = vmul.f32 %v10486, %v10749
  %v10751 = vmul.f32 %v10487, %v10749
  %v10752 = vmul.f32 %v10488, %v10749
  %v10753 = vmul.f32 %v10489, %v10749
  %v10754 = vmul.f32 %v10490, %v10749
  %v10755 = vmul.f32 %v10491, %v10749
  %v10756 = vmul.f32 %v10492, %v10749
  %v10757 = vmul.f32 %v10493, %v10749
  %v10758 = vmul.f32 %v10494, %v10749
  %v10759 = vmul.f32 %v10495, %v10749
  %v10760 = vmul.f32 %v10496, %v10749
  %v10761 = vmul.f32 %v10497, %v10749
  %v10762 = vmul.f32 %v10498, %v10749
  %v10763 = vmul.f32 %v10499, %v10749
  %v10764 = vmul.f32 %v10500, %v10749
  %v10765 = vmul.f32 %v10501, %v10749
  %v10766 = vmul.f32 %v10502, %v10749
  %v10767 = vmul.f32 %v10503, %v10749
  %v10768 = vmul.f32 %v10504, %v10749
  %v10769 = vmul.f32 %v10505, %v10749
  %v10770 = vmul.f32 %v10506, %v10749
  %v10771 = vmul.f32 %v10507, %v10749
  %v10772 = vmul.f32 %v10508, %v10749
  %v10773 = vmul.f32 %v10509, %v10749
  %v10774 = vmul.f32 %v10510, %v10749
  %v10775 = vmul.f32 %v10511, %v10749
  %v10776 = vmul.f32 %v10512, %v10749
  %v10777 = vmul.f32 %v10513, %v10749
  %v10778 = vmul.f32 %v10514, %v10749
  %v10779 = vmul.f32 %v10515, %v10749
  %v10780 = vmul.f32 %v10516, %v10749
  %v10781 = vmul.f32 %v10517, %v10749
  %v10782 = vmul.f32 %v10518, %v10749
  %v10783 = vmul.f32 %v10519, %v10749
  %v10784 = vmul.f32 %v10520, %v10749
  %v10785 = vmul.f32 %v10521, %v10749
  %v10786 = vmul.f32 %v10522, %v10749
  %v10787 = vmul.f32 %v10523, %v10749
  %v10788 = vmul.f32 %v10524, %v10749
  %v10789 = vmul.f32 %v10525, %v10749
  %v10790 = vmul.f32 %v10526, %v10749
  %v10791 = vmul.f32 %v10527, %v10749
  %v10792 = vmul.f32 %v10528, %v10749
  %v10793 = vmul.f32 %v10529, %v10749
  %v10794 = vmul.f32 %v10530, %v10749
  %v10795 = vmul.f32 %v10531, %v10749
  %v10796 = vmul.f32 %v10532, %v10749
  %v10797 = vmul.f32 %v10533, %v10749
  %v10798 = vmul.f32 %v10534, %v10749
  %v10799 = vmul.f32 %v10535, %v10749
  %v10800 = vmul.f32 %v10536, %v10749
  %v10801 = vmul.f32 %v10537, %v10749
  %v10802 = vmul.f32 %v10538, %v10749
  %v10803 = vmul.f32 %v10539, %v10749
  %v10804 = vmul.f32 %v10540, %v10749
  %v10805 = vmul.f32 %v10541, %v10749
  %v10806 = vmul.f32 %v10542, %v10749
  %v10807 = vmul.f32 %v10543, %v10749
  %v10808 = vmul.f32 %v10544, %v10749
  %v10809 = vmul.f32 %v10545, %v10749
  %v10810 = vmul.f32 %v10546, %v10749
  %v10811 = vmul.f32 %v10547, %v10749
  %v10812 = vmul.f32 %v10548, %v10749
  %v10813 = vmul.f32 %v10549, %v10749
  %v10814 = vld [vmem:[%s7] sm:$0x1]
  %v10816 = vlaneseq
  %v10817 = vshrl.u32 %v10816, 7
  %v10818 = vsub.s32 0, %v10817
  %v10819 = vrot.slane %v10814, %v10818
  %v10821 = vmul.f32 %v10750, %v10819
  %v10822 = vmul.f32 %v10751, %v10819
  %v10823 = vmul.f32 %v10752, %v10819
  %v10824 = vmul.f32 %v10753, %v10819
  %v10825 = vmul.f32 %v10754, %v10819
  %v10826 = vmul.f32 %v10755, %v10819
  %v10827 = vmul.f32 %v10756, %v10819
  %v10828 = vmul.f32 %v10757, %v10819
  %v10829 = vmul.f32 %v10758, %v10819
  %v10830 = vmul.f32 %v10759, %v10819
  %v10831 = vmul.f32 %v10760, %v10819
  %v10832 = vmul.f32 %v10761, %v10819
  %v10833 = vmul.f32 %v10762, %v10819
  %v10834 = vmul.f32 %v10763, %v10819
  %v10835 = vmul.f32 %v10764, %v10819
  %v10836 = vmul.f32 %v10765, %v10819
  %v10837 = vmul.f32 %v10766, %v10819
  %v10838 = vmul.f32 %v10767, %v10819
  %v10839 = vmul.f32 %v10768, %v10819
  %v10840 = vmul.f32 %v10769, %v10819
  %v10841 = vmul.f32 %v10770, %v10819
  %v10842 = vmul.f32 %v10771, %v10819
  %v10843 = vmul.f32 %v10772, %v10819
  %v10844 = vmul.f32 %v10773, %v10819
  %v10845 = vmul.f32 %v10774, %v10819
  %v10846 = vmul.f32 %v10775, %v10819
  %v10847 = vmul.f32 %v10776, %v10819
  %v10848 = vmul.f32 %v10777, %v10819
  %v10849 = vmul.f32 %v10778, %v10819
  %v10850 = vmul.f32 %v10779, %v10819
  %v10851 = vmul.f32 %v10780, %v10819
  %v10852 = vmul.f32 %v10781, %v10819
  %v10853 = vmul.f32 %v10782, %v10819
  %v10854 = vmul.f32 %v10783, %v10819
  %v10855 = vmul.f32 %v10784, %v10819
  %v10856 = vmul.f32 %v10785, %v10819
  %v10857 = vmul.f32 %v10786, %v10819
  %v10858 = vmul.f32 %v10787, %v10819
  %v10859 = vmul.f32 %v10788, %v10819
  %v10860 = vmul.f32 %v10789, %v10819
  %v10861 = vmul.f32 %v10790, %v10819
  %v10862 = vmul.f32 %v10791, %v10819
  %v10863 = vmul.f32 %v10792, %v10819
  %v10864 = vmul.f32 %v10793, %v10819
  %v10865 = vmul.f32 %v10794, %v10819
  %v10866 = vmul.f32 %v10795, %v10819
  %v10867 = vmul.f32 %v10796, %v10819
  %v10868 = vmul.f32 %v10797, %v10819
  %v10869 = vmul.f32 %v10798, %v10819
  %v10870 = vmul.f32 %v10799, %v10819
  %v10871 = vmul.f32 %v10800, %v10819
  %v10872 = vmul.f32 %v10801, %v10819
  %v10873 = vmul.f32 %v10802, %v10819
  %v10874 = vmul.f32 %v10803, %v10819
  %v10875 = vmul.f32 %v10804, %v10819
  %v10876 = vmul.f32 %v10805, %v10819
  %v10877 = vmul.f32 %v10806, %v10819
  %v10878 = vmul.f32 %v10807, %v10819
  %v10879 = vmul.f32 %v10808, %v10819
  %v10880 = vmul.f32 %v10809, %v10819
  %v10881 = vmul.f32 %v10810, %v10819
  %v10882 = vmul.f32 %v10811, %v10819
  %v10883 = vmul.f32 %v10812, %v10819
  %v10884 = vmul.f32 %v10813, %v10819
  %v10885 = vld [vmem:[%s8] sm:$0x1]
  %v10887 = vlaneseq
  %v10888 = vshrl.u32 %v10887, 7
  %v10889 = vsub.s32 0, %v10888
  %v10890 = vrot.slane %v10885, %v10889
  %v10892 = vadd.f32 %v10821, %v10890
  %v10893 = vadd.f32 %v10822, %v10890
  %v10894 = vadd.f32 %v10823, %v10890
  %v10895 = vadd.f32 %v10824, %v10890
  %v10896 = vadd.f32 %v10825, %v10890
  %v10897 = vadd.f32 %v10826, %v10890
  %v10898 = vadd.f32 %v10827, %v10890
  %v10899 = vadd.f32 %v10828, %v10890
  %v10900 = vadd.f32 %v10829, %v10890
  %v10901 = vadd.f32 %v10830, %v10890
  %v10902 = vadd.f32 %v10831, %v10890
  %v10903 = vadd.f32 %v10832, %v10890
  %v10904 = vadd.f32 %v10833, %v10890
  %v10905 = vadd.f32 %v10834, %v10890
  %v10906 = vadd.f32 %v10835, %v10890
  %v10907 = vadd.f32 %v10836, %v10890
  %v10908 = vadd.f32 %v10837, %v10890
  %v10909 = vadd.f32 %v10838, %v10890
  %v10910 = vadd.f32 %v10839, %v10890
  %v10911 = vadd.f32 %v10840, %v10890
  %v10912 = vadd.f32 %v10841, %v10890
  %v10913 = vadd.f32 %v10842, %v10890
  %v10914 = vadd.f32 %v10843, %v10890
  %v10915 = vadd.f32 %v10844, %v10890
  %v10916 = vadd.f32 %v10845, %v10890
  %v10917 = vadd.f32 %v10846, %v10890
  %v10918 = vadd.f32 %v10847, %v10890
  %v10919 = vadd.f32 %v10848, %v10890
  %v10920 = vadd.f32 %v10849, %v10890
  %v10921 = vadd.f32 %v10850, %v10890
  %v10922 = vadd.f32 %v10851, %v10890
  %v10923 = vadd.f32 %v10852, %v10890
  %v10924 = vadd.f32 %v10853, %v10890
  %v10925 = vadd.f32 %v10854, %v10890
  %v10926 = vadd.f32 %v10855, %v10890
  %v10927 = vadd.f32 %v10856, %v10890
  %v10928 = vadd.f32 %v10857, %v10890
  %v10929 = vadd.f32 %v10858, %v10890
  %v10930 = vadd.f32 %v10859, %v10890
  %v10931 = vadd.f32 %v10860, %v10890
  %v10932 = vadd.f32 %v10861, %v10890
  %v10933 = vadd.f32 %v10862, %v10890
  %v10934 = vadd.f32 %v10863, %v10890
  %v10935 = vadd.f32 %v10864, %v10890
  %v10936 = vadd.f32 %v10865, %v10890
  %v10937 = vadd.f32 %v10866, %v10890
  %v10938 = vadd.f32 %v10867, %v10890
  %v10939 = vadd.f32 %v10868, %v10890
  %v10940 = vadd.f32 %v10869, %v10890
  %v10941 = vadd.f32 %v10870, %v10890
  %v10942 = vadd.f32 %v10871, %v10890
  %v10943 = vadd.f32 %v10872, %v10890
  %v10944 = vadd.f32 %v10873, %v10890
  %v10945 = vadd.f32 %v10874, %v10890
  %v10946 = vadd.f32 %v10875, %v10890
  %v10947 = vadd.f32 %v10876, %v10890
  %v10948 = vadd.f32 %v10877, %v10890
  %v10949 = vadd.f32 %v10878, %v10890
  %v10950 = vadd.f32 %v10879, %v10890
  %v10951 = vadd.f32 %v10880, %v10890
  %v10952 = vadd.f32 %v10881, %v10890
  %v10953 = vadd.f32 %v10882, %v10890
  %v10954 = vadd.f32 %v10883, %v10890
  %v10955 = vadd.f32 %v10884, %v10890
  %v10956 = vadd.f32 %v37, %v10892
  %v10957 = vadd.f32 %v38, %v10893
  %v10958 = vadd.f32 %v39, %v10894
  %v10959 = vadd.f32 %v40, %v10895
  %v10960 = vadd.f32 %v41, %v10896
  %v10961 = vadd.f32 %v42, %v10897
  %v10962 = vadd.f32 %v43, %v10898
  %v10963 = vadd.f32 %v44, %v10899
  %v10964 = vadd.f32 %v45, %v10900
  %v10965 = vadd.f32 %v46, %v10901
  %v10966 = vadd.f32 %v47, %v10902
  %v10967 = vadd.f32 %v48, %v10903
  %v10968 = vadd.f32 %v49, %v10904
  %v10969 = vadd.f32 %v50, %v10905
  %v10970 = vadd.f32 %v51, %v10906
  %v10971 = vadd.f32 %v52, %v10907
  %v10972 = vadd.f32 %v53, %v10908
  %v10973 = vadd.f32 %v54, %v10909
  %v10974 = vadd.f32 %v55, %v10910
  %v10975 = vadd.f32 %v56, %v10911
  %v10976 = vadd.f32 %v57, %v10912
  %v10977 = vadd.f32 %v58, %v10913
  %v10978 = vadd.f32 %v59, %v10914
  %v10979 = vadd.f32 %v60, %v10915
  %v10980 = vadd.f32 %v61, %v10916
  %v10981 = vadd.f32 %v62, %v10917
  %v10982 = vadd.f32 %v63, %v10918
  %v10983 = vadd.f32 %v64, %v10919
  %v10984 = vadd.f32 %v65, %v10920
  %v10985 = vadd.f32 %v66, %v10921
  %v10986 = vadd.f32 %v67, %v10922
  %v10987 = vadd.f32 %v68, %v10923
  %v10988 = vadd.f32 %v69, %v10924
  %v10989 = vadd.f32 %v70, %v10925
  %v10990 = vadd.f32 %v71, %v10926
  %v10991 = vadd.f32 %v72, %v10927
  %v10992 = vadd.f32 %v73, %v10928
  %v10993 = vadd.f32 %v74, %v10929
  %v10994 = vadd.f32 %v75, %v10930
  %v10995 = vadd.f32 %v76, %v10931
  %v10996 = vadd.f32 %v77, %v10932
  %v10997 = vadd.f32 %v78, %v10933
  %v10998 = vadd.f32 %v79, %v10934
  %v10999 = vadd.f32 %v80, %v10935
  %v11000 = vadd.f32 %v81, %v10936
  %v11001 = vadd.f32 %v82, %v10937
  %v11002 = vadd.f32 %v83, %v10938
  %v11003 = vadd.f32 %v84, %v10939
  %v11004 = vadd.f32 %v85, %v10940
  %v11005 = vadd.f32 %v86, %v10941
  %v11006 = vadd.f32 %v87, %v10942
  %v11007 = vadd.f32 %v88, %v10943
  %v11008 = vadd.f32 %v89, %v10944
  %v11009 = vadd.f32 %v90, %v10945
  %v11010 = vadd.f32 %v91, %v10946
  %v11011 = vadd.f32 %v92, %v10947
  %v11012 = vadd.f32 %v93, %v10948
  %v11013 = vadd.f32 %v94, %v10949
  %v11014 = vadd.f32 %v95, %v10950
  %v11015 = vadd.f32 %v96, %v10951
  %v11016 = vadd.f32 %v97, %v10952
  %v11017 = vadd.f32 %v98, %v10953
  %v11018 = vadd.f32 %v99, %v10954
  %v11019 = vadd.f32 %v100, %v10955
  %11020 = vst.msk [vmem:[%s10] sm:$0xff] %vm4849, %v10956
  %11021 = vst.msk [vmem:[%s10 + $0x8] sm:$0xff] %vm4849, %v10957
  %11022 = vst.msk [vmem:[%s10 + $0x10] sm:$0xff] %vm4849, %v10958
  %11023 = vst.msk [vmem:[%s10 + $0x18] sm:$0xff] %vm4849, %v10959
  %11024 = vst.msk [vmem:[%s10 + $0x20] sm:$0xff] %vm4849, %v10960
  %11025 = vst.msk [vmem:[%s10 + $0x28] sm:$0xff] %vm4849, %v10961
  %11026 = vst.msk [vmem:[%s10 + $0x30] sm:$0xff] %vm4849, %v10962
  %11027 = vst.msk [vmem:[%s10 + $0x38] sm:$0xff] %vm4849, %v10963
  %11028 = vst.msk [vmem:[%s10 + $0x40] sm:$0xff] %vm4849, %v10964
  %11029 = vst.msk [vmem:[%s10 + $0x48] sm:$0xff] %vm4849, %v10965
  %11030 = vst.msk [vmem:[%s10 + $0x50] sm:$0xff] %vm4849, %v10966
  %11031 = vst.msk [vmem:[%s10 + $0x58] sm:$0xff] %vm4849, %v10967
  %11032 = vst.msk [vmem:[%s10 + $0x60] sm:$0xff] %vm4849, %v10968
  %11033 = vst.msk [vmem:[%s10 + $0x68] sm:$0xff] %vm4849, %v10969
  %11034 = vst.msk [vmem:[%s10 + $0x70] sm:$0xff] %vm4849, %v10970
  %11035 = vst.msk [vmem:[%s10 + $0x78] sm:$0xff] %vm4849, %v10971
  %11036 = vst.msk [vmem:[%s10 + $0x80] sm:$0xff] %vm4849, %v10972
  %11037 = vst.msk [vmem:[%s10 + $0x88] sm:$0xff] %vm4849, %v10973
  %11038 = vst.msk [vmem:[%s10 + $0x90] sm:$0xff] %vm4849, %v10974
  %11039 = vst.msk [vmem:[%s10 + $0x98] sm:$0xff] %vm4849, %v10975
  %11040 = vst.msk [vmem:[%s10 + $0xa0] sm:$0xff] %vm4849, %v10976
  %11041 = vst.msk [vmem:[%s10 + $0xa8] sm:$0xff] %vm4849, %v10977
  %11042 = vst.msk [vmem:[%s10 + $0xb0] sm:$0xff] %vm4849, %v10978
  %11043 = vst.msk [vmem:[%s10 + $0xb8] sm:$0xff] %vm4849, %v10979
  %11044 = vst.msk [vmem:[%s10 + $0xc0] sm:$0xff] %vm4849, %v10980
  %11045 = vst.msk [vmem:[%s10 + $0xc8] sm:$0xff] %vm4849, %v10981
  %11046 = vst.msk [vmem:[%s10 + $0xd0] sm:$0xff] %vm4849, %v10982
  %11047 = vst.msk [vmem:[%s10 + $0xd8] sm:$0xff] %vm4849, %v10983
  %11048 = vst.msk [vmem:[%s10 + $0xe0] sm:$0xff] %vm4849, %v10984
  %11049 = vst.msk [vmem:[%s10 + $0xe8] sm:$0xff] %vm4849, %v10985
  %11050 = vst.msk [vmem:[%s10 + $0xf0] sm:$0xff] %vm4849, %v10986
  %11051 = vst.msk [vmem:[%s10 + $0xf8] sm:$0xff] %vm4849, %v10987
  %11052 = vst.msk [vmem:[%s10 + $0x100] sm:$0xff] %vm4849, %v10988
  %11053 = vst.msk [vmem:[%s10 + $0x108] sm:$0xff] %vm4849, %v10989
  %11054 = vst.msk [vmem:[%s10 + $0x110] sm:$0xff] %vm4849, %v10990
  %11055 = vst.msk [vmem:[%s10 + $0x118] sm:$0xff] %vm4849, %v10991
  %11056 = vst.msk [vmem:[%s10 + $0x120] sm:$0xff] %vm4849, %v10992
  %11057 = vst.msk [vmem:[%s10 + $0x128] sm:$0xff] %vm4849, %v10993
  %11058 = vst.msk [vmem:[%s10 + $0x130] sm:$0xff] %vm4849, %v10994
  %11059 = vst.msk [vmem:[%s10 + $0x138] sm:$0xff] %vm4849, %v10995
  %11060 = vst.msk [vmem:[%s10 + $0x140] sm:$0xff] %vm4849, %v10996
  %11061 = vst.msk [vmem:[%s10 + $0x148] sm:$0xff] %vm4849, %v10997
  %11062 = vst.msk [vmem:[%s10 + $0x150] sm:$0xff] %vm4849, %v10998
  %11063 = vst.msk [vmem:[%s10 + $0x158] sm:$0xff] %vm4849, %v10999
  %11064 = vst.msk [vmem:[%s10 + $0x160] sm:$0xff] %vm4849, %v11000
  %11065 = vst.msk [vmem:[%s10 + $0x168] sm:$0xff] %vm4849, %v11001
  %11066 = vst.msk [vmem:[%s10 + $0x170] sm:$0xff] %vm4849, %v11002
  %11067 = vst.msk [vmem:[%s10 + $0x178] sm:$0xff] %vm4849, %v11003
  %11068 = vst.msk [vmem:[%s10 + $0x180] sm:$0xff] %vm4849, %v11004
  %11069 = vst.msk [vmem:[%s10 + $0x188] sm:$0xff] %vm4849, %v11005
  %11070 = vst.msk [vmem:[%s10 + $0x190] sm:$0xff] %vm4849, %v11006
  %11071 = vst.msk [vmem:[%s10 + $0x198] sm:$0xff] %vm4849, %v11007
  %11072 = vst.msk [vmem:[%s10 + $0x1a0] sm:$0xff] %vm4849, %v11008
  %11073 = vst.msk [vmem:[%s10 + $0x1a8] sm:$0xff] %vm4849, %v11009
  %11074 = vst.msk [vmem:[%s10 + $0x1b0] sm:$0xff] %vm4849, %v11010
  %11075 = vst.msk [vmem:[%s10 + $0x1b8] sm:$0xff] %vm4849, %v11011
  %11076 = vst.msk [vmem:[%s10 + $0x1c0] sm:$0xff] %vm4849, %v11012
  %11077 = vst.msk [vmem:[%s10 + $0x1c8] sm:$0xff] %vm4849, %v11013
  %11078 = vst.msk [vmem:[%s10 + $0x1d0] sm:$0xff] %vm4849, %v11014
  %11079 = vst.msk [vmem:[%s10 + $0x1d8] sm:$0xff] %vm4849, %v11015
  %11080 = vst.msk [vmem:[%s10 + $0x1e0] sm:$0xff] %vm4849, %v11016
  %11081 = vst.msk [vmem:[%s10 + $0x1e8] sm:$0xff] %vm4849, %v11017
  %11082 = vst.msk [vmem:[%s10 + $0x1f0] sm:$0xff] %vm4849, %v11018
  %11083 = vst.msk [vmem:[%s10 + $0x1f8] sm:$0xff] %vm4849, %v11019
  // Predicated region
  $region42: #{tpu_custom_call.1} parent=0 // pred_check
    _
  $region43: #{tpu_custom_call.1} parent=0 // pred_check_branch
    %11085 = sbr.rel (0) target = $region45
  $region44: #{tpu_custom_call.1} parent=0 // pred_region
    _
  $region45: #{tpu_custom_call.1} parent=0 // pred_fallthru
    _
  // Predicated region
  $region46: #{tpu_custom_call.1} parent=0 // pred_check
    _
  $region47: #{tpu_custom_call.1} parent=0 // pred_check_branch
    %11087 = sbr.rel (0) target = $region49
  $region48: #{tpu_custom_call.1} parent=0 // pred_region
    _
  $region49: #{tpu_custom_call.1} parent=0 // pred_fallthru
    _

</llo_original>
